<compile_context>
chip_gen: v7x
topology: tpu7x:2x2x1
jax: 0.10.0
libtpu: 0.0.40
codegen_flags: <defaults>
</compile_context>

<pallas_src>
import functools
import math

import jax
import jax.numpy as jnp
from jax.experimental import pallas as pl
from jax.experimental.pallas import tpu as pltpu

# ---------------- config (Electra-small semantics, shrunk for the demo) ----------------
VOCAB = 100
MAX_POS = 32
TYPE_VOCAB = 2
EMB_SIZE = 128          # electra-small embedding_size
HIDDEN = 256            # electra-small hidden_size (matches torch.nn.Linear(256, OUTPUTS_a))
NUM_HEADS = 4
HEAD_DIM = HIDDEN // NUM_HEADS
INTERMEDIATE = 1024
NUM_LAYERS = 2          # electra-small has 12; shrunk for this synthetic demo
OUTPUTS_A = 6           # len(label_names) (jigsaw: 6)
LN_EPS = 1e-12

PARAM_DTYPE = jnp.bfloat16   # matmul weights
ACT_DTYPE = jnp.bfloat16     # activations stored between kernels


def _tile_m(M, cap=256):
    """Row-tile size: <= cap (v7x VMEM headroom), multiple of 8 when tiling."""
    if M <= cap:
        return M
    for t in range(cap, 7, -8):
        if M % t == 0:
            return t
    return cap


def _cparams():
    # 32 MiB scoped VMEM is safe on all generations (v7x physical = 64 MiB) and
    # leaves headroom; one "parallel" row-tile axis shards across v7x's 2 TCs.
    return pltpu.CompilerParams(
        dimension_semantics=("parallel",),
        vmem_limit_bytes=32 * 1024 * 1024,
    )


# ---------------------------------- Pallas kernels ----------------------------------
def _dense_kernel(x_ref, w_ref, b_ref, o_ref):
    y = jnp.dot(x_ref[...], w_ref[...], preferred_element_type=jnp.float32)
    y = y + b_ref[...].astype(jnp.float32)
    o_ref[...] = y.astype(o_ref.dtype)


def dense(x, w, b, out_dtype=ACT_DTYPE):
    M, K = x.shape
    N = w.shape[1]
    tm = _tile_m(M)
    return pl.pallas_call(
        _dense_kernel,
        out_shape=jax.ShapeDtypeStruct((M, N), out_dtype),
        grid=(pl.cdiv(M, tm),),
        in_specs=[
            pl.BlockSpec((tm, K), lambda i: (i, 0)),
            pl.BlockSpec((K, N), lambda i: (0, 0)),   # weight stays VMEM-resident
            pl.BlockSpec((1, N), lambda i: (0, 0)),
        ],
        out_specs=pl.BlockSpec((tm, N), lambda i: (i, 0)),
        compiler_params=_cparams(),
    )(x, w, b.reshape(1, N))


def _layer_norm_f32(y, g, b, eps):
    mu = jnp.mean(y, axis=-1, keepdims=True)
    var = jnp.mean(jnp.square(y - mu), axis=-1, keepdims=True)
    yn = (y - mu) * jax.lax.rsqrt(var + eps)
    return yn * g + b


def _emb_ln_proj_kernel(x_ref, g_ref, b_ref, w_ref, pb_ref, o_ref, *, eps):
    # LayerNorm(embeddings) -> embeddings_project (E -> HIDDEN), fused.
    x = x_ref[...].astype(jnp.float32)
    xn = _layer_norm_f32(x, g_ref[...].astype(jnp.float32), b_ref[...].astype(jnp.float32), eps)
    y = jnp.dot(xn.astype(w_ref.dtype), w_ref[...], preferred_element_type=jnp.float32)
    o_ref[...] = (y + pb_ref[...].astype(jnp.float32)).astype(o_ref.dtype)


def emb_ln_proj(x, gamma, beta, w, b, eps=LN_EPS, out_dtype=ACT_DTYPE):
    M, E = x.shape
    N = w.shape[1]
    tm = _tile_m(M)
    return pl.pallas_call(
        functools.partial(_emb_ln_proj_kernel, eps=eps),
        out_shape=jax.ShapeDtypeStruct((M, N), out_dtype),
        grid=(pl.cdiv(M, tm),),
        in_specs=[
            pl.BlockSpec((tm, E), lambda i: (i, 0)),
            pl.BlockSpec((1, E), lambda i: (0, 0)),
            pl.BlockSpec((1, E), lambda i: (0, 0)),
            pl.BlockSpec((E, N), lambda i: (0, 0)),
            pl.BlockSpec((1, N), lambda i: (0, 0)),
        ],
        out_specs=pl.BlockSpec((tm, N), lambda i: (i, 0)),
        compiler_params=_cparams(),
    )(x, gamma.reshape(1, E), beta.reshape(1, E), w, b.reshape(1, N))


def _dense_add_ln_kernel(x_ref, w_ref, b_ref, r_ref, g_ref, bb_ref, o_ref, *, eps):
    # (x @ W + b) + residual -> LayerNorm, fused.
    y = jnp.dot(x_ref[...], w_ref[...], preferred_element_type=jnp.float32)
    y = y + b_ref[...].astype(jnp.float32) + r_ref[...].astype(jnp.float32)
    yn = _layer_norm_f32(y, g_ref[...].astype(jnp.float32), bb_ref[...].astype(jnp.float32), eps)
    o_ref[...] = yn.astype(o_ref.dtype)


def dense_add_ln(x, w, b, residual, gamma, beta, eps=LN_EPS, out_dtype=ACT_DTYPE):
    M, K = x.shape
    N = w.shape[1]
    tm = _tile_m(M)
    return pl.pallas_call(
        functools.partial(_dense_add_ln_kernel, eps=eps),
        out_shape=jax.ShapeDtypeStruct((M, N), out_dtype),
        grid=(pl.cdiv(M, tm),),
        in_specs=[
            pl.BlockSpec((tm, K), lambda i: (i, 0)),
            pl.BlockSpec((K, N), lambda i: (0, 0)),
            pl.BlockSpec((1, N), lambda i: (0, 0)),
            pl.BlockSpec((tm, N), lambda i: (i, 0)),
            pl.BlockSpec((1, N), lambda i: (0, 0)),
            pl.BlockSpec((1, N), lambda i: (0, 0)),
        ],
        out_specs=pl.BlockSpec((tm, N), lambda i: (i, 0)),
        compiler_params=_cparams(),
    )(x, w, b.reshape(1, N), residual, gamma.reshape(1, N), beta.reshape(1, N))


def _ffn_kernel(x_ref, iw_ref, ib_ref, ow_ref, ob_ref, g_ref, bb_ref, o_ref, *, eps):
    # Full FFN fused: GELU(x @ Wi + bi) @ Wo + bo + x -> LayerNorm.
    # The (tile_m, INTERMEDIATE) activation never leaves VMEM.
    x = x_ref[...]
    inter = jnp.dot(x, iw_ref[...], preferred_element_type=jnp.float32)
    inter = inter + ib_ref[...].astype(jnp.float32)
    # TODO(synk): HF Electra uses erf-based GELU; tanh approximation kept for Mosaic-safe lowering.
    inter = jax.nn.gelu(inter, approximate=True)
    y = jnp.dot(inter.astype(ow_ref.dtype), ow_ref[...], preferred_element_type=jnp.float32)
    y = y + ob_ref[...].astype(jnp.float32) + x.astype(jnp.float32)
    yn = _layer_norm_f32(y, g_ref[...].astype(jnp.float32), bb_ref[...].astype(jnp.float32), eps)
    o_ref[...] = yn.astype(o_ref.dtype)


def ffn_block(x, i_w, i_b, o_w, o_b, gamma, beta, eps=LN_EPS, out_dtype=ACT_DTYPE):
    M, H = x.shape
    I = i_w.shape[1]
    tm = _tile_m(M)
    return pl.pallas_call(
        functools.partial(_ffn_kernel, eps=eps),
        out_shape=jax.ShapeDtypeStruct((M, H), out_dtype),
        grid=(pl.cdiv(M, tm),),
        in_specs=[
            pl.BlockSpec((tm, H), lambda i: (i, 0)),
            pl.BlockSpec((H, I), lambda i: (0, 0)),
            pl.BlockSpec((1, I), lambda i: (0, 0)),
            pl.BlockSpec((I, H), lambda i: (0, 0)),
            pl.BlockSpec((1, H), lambda i: (0, 0)),
            pl.BlockSpec((1, H), lambda i: (0, 0)),
            pl.BlockSpec((1, H), lambda i: (0, 0)),
        ],
        out_specs=pl.BlockSpec((tm, H), lambda i: (i, 0)),
        compiler_params=_cparams(),
    )(x, i_w, i_b.reshape(1, I), o_w, o_b.reshape(1, H),
      gamma.reshape(1, H), beta.reshape(1, H))


def _attn_kernel(qkv_ref, m_ref, o_ref, *, scale, num_heads, head_dim):
    # One grid step per batch element; head split is done in VMEM with static lane slices.
    H = num_heads * head_dim
    bias = m_ref[0].astype(jnp.float32)                       # (1, S) additive mask (f32)
    for h in range(num_heads):
        lo, hi = h * head_dim, (h + 1) * head_dim
        q = qkv_ref[0, :, lo:hi]                              # (S, D) bf16
        k = qkv_ref[0, :, H + lo:H + hi]
        v = qkv_ref[0, :, 2 * H + lo:2 * H + hi]
        s = jax.lax.dot_general(q, k, (((1,), (1,)), ((), ())),
                                preferred_element_type=jnp.float32)
        s = s * scale + bias
        s = s - jnp.max(s, axis=-1, keepdims=True)
        p = jnp.exp(s)
        p = p * pl.reciprocal(jnp.sum(p, axis=-1, keepdims=True), approx=True)
        ctx = jnp.dot(p.astype(v.dtype), v, preferred_element_type=jnp.float32)
        o_ref[0, :, lo:hi] = ctx.astype(o_ref.dtype)          # (1, S, HIDDEN) slab output


def attention(qkv, mask_add, scale, out_dtype=ACT_DTYPE):
    B, S, threeH = qkv.shape
    H = threeH // 3
    return pl.pallas_call(
        functools.partial(_attn_kernel, scale=scale,
                          num_heads=NUM_HEADS, head_dim=HEAD_DIM),
        out_shape=jax.ShapeDtypeStruct((B, S, H), out_dtype),
        grid=(B,),
        in_specs=[
            pl.BlockSpec((1, S, threeH), lambda b: (b, 0, 0)),
            pl.BlockSpec((1, 1, S), lambda b: (b, 0, 0)),
        ],
        out_specs=pl.BlockSpec((1, S, H), lambda b: (b, 0, 0)),
        compiler_params=_cparams(),
    )(qkv, mask_add)


def _head_kernel(x_ref, w_ref, b_ref, o_ref):
    x = x_ref[...].astype(jnp.float32)                        # (B, S, H)
    pooled = jnp.mean(x, axis=1)                              # (B, H); mean commutes with affine map
    logits = jnp.dot(pooled, w_ref[...].astype(jnp.float32),
                     preferred_element_type=jnp.float32) + b_ref[...].astype(jnp.float32)
    o_ref[...] = jax.nn.sigmoid(logits).astype(o_ref.dtype)


def classifier_head(x, w, b):
    B, S, H = x.shape
    O = w.shape[1]
    return pl.pallas_call(
        _head_kernel,
        out_shape=jax.ShapeDtypeStruct((B, O), jnp.float32),
    )(x, w, b.reshape(1, O))


# ---------------------------------- parameters ----------------------------------
def init_params(key):
    keys = iter(jax.random.split(key, 256))

    def normal(shape, std=0.02, dtype=PARAM_DTYPE):
        return (std * jax.random.normal(next(keys), shape, jnp.float32)).astype(dtype)

    p = {
        "word_emb": normal((VOCAB, EMB_SIZE), dtype=jnp.float32),
        "pos_emb": normal((MAX_POS, EMB_SIZE), dtype=jnp.float32),
        "tok_emb": normal((TYPE_VOCAB, EMB_SIZE), dtype=jnp.float32),
        "emb_ln_g": jnp.ones((EMB_SIZE,), jnp.float32),
        "emb_ln_b": jnp.zeros((EMB_SIZE,), jnp.float32),
        "proj_w": normal((EMB_SIZE, HIDDEN)),
        "proj_b": jnp.zeros((HIDDEN,), jnp.float32),
        "cls_w": normal((HIDDEN, OUTPUTS_A)),
        "cls_b": jnp.zeros((OUTPUTS_A,), jnp.float32),
        "layers": [],
    }
    for _ in range(NUM_LAYERS):
        qw, kw, vw = (normal((HIDDEN, HIDDEN)) for _ in range(3))
        p["layers"].append({
            # fused QKV projection weight (HIDDEN, 3*HIDDEN)
            "qkv_w": jnp.concatenate([qw, kw, vw], axis=1),
            "qkv_b": jnp.zeros((3 * HIDDEN,), jnp.float32),
            "ao_w": normal((HIDDEN, HIDDEN)), "ao_b": jnp.zeros((HIDDEN,), jnp.float32),
            "ln1_g": jnp.ones((HIDDEN,), jnp.float32), "ln1_b": jnp.zeros((HIDDEN,), jnp.float32),
            "i_w": normal((HIDDEN, INTERMEDIATE)), "i_b": jnp.zeros((INTERMEDIATE,), jnp.float32),
            "o_w": normal((INTERMEDIATE, HIDDEN)), "o_b": jnp.zeros((HIDDEN,), jnp.float32),
            "ln2_g": jnp.ones((HIDDEN,), jnp.float32), "ln2_b": jnp.zeros((HIDDEN,), jnp.float32),
        })
    return p


# ---------------------------------- forward ----------------------------------
def electra_class_forward(params, ids, mask, token_type_ids):
    B, S = ids.shape

    # Embedding gathers are XLA glue; LayerNorm + embeddings_project fused in Pallas.
    we = params["word_emb"][ids]                                        # (B, S, E)
    pe = params["pos_emb"][:S][None]
    te = params["tok_emb"][token_type_ids]
    emb = (we + pe + te).astype(jnp.float32).reshape(B * S, EMB_SIZE)
    h = emb_ln_proj(emb, params["emb_ln_g"], params["emb_ln_b"],
                    params["proj_w"], params["proj_b"])                  # (B*S, HIDDEN) bf16

    # Extended attention mask, additive (kept in f32 inside the attention kernel).
    mask_add = ((1.0 - mask.astype(jnp.float32)) * -1e9).reshape(B, 1, S)
    scale = 1.0 / math.sqrt(HEAD_DIM)

    for lyr in params["layers"]:
        qkv = dense(h, lyr["qkv_w"], lyr["qkv_b"])                       # (B*S, 3*HIDDEN)
        ctx = attention(qkv.reshape(B, S, 3 * HIDDEN), mask_add, scale)  # (B, S, HIDDEN)
        h = dense_add_ln(ctx.reshape(B * S, HIDDEN), lyr["ao_w"], lyr["ao_b"],
                         h, lyr["ln1_g"], lyr["ln1_b"])                  # attn-out + residual + LN1
        h = ffn_block(h, lyr["i_w"], lyr["i_b"], lyr["o_w"], lyr["o_b"],
                      lyr["ln2_g"], lyr["ln2_b"])                        # fused FFN + residual + LN2

    # Dropout(p=0.3) -> identity at inference.
    hidden = h.reshape(B, S, HIDDEN)
    # Linear(256, OUTPUTS_a) -> mean over seq -> sigmoid, fused in one Pallas kernel.
    return classifier_head(hidden, params["cls_w"], params["cls_b"])     # (B, OUTPUTS_a)


# ---------------------------------- main ----------------------------------
if __name__ == "__main__":
    B, S = 2, 8
    key = jax.random.PRNGKey(0)
    k_ids, k_params = jax.random.split(key)

    ids = jax.random.randint(k_ids, (B, S), 0, VOCAB, dtype=jnp.int32)
    # attention mask: first sequence fully attended, second has 2 padding tokens
    lengths = jnp.array([S, S - 2], dtype=jnp.int32)
    mask = (jnp.arange(S)[None, :] < lengths[:, None]).astype(jnp.int32)   # (B, S)
    token_type_ids = jnp.zeros((B, S), dtype=jnp.int32)

    params = init_params(k_params)

    fwd = jax.jit(electra_class_forward)
    out = fwd(params, ids, mask, token_type_ids)
    out = jax.block_until_ready(out)

    assert out.shape == (B, OUTPUTS_A)
    assert bool(jnp.all(jnp.isfinite(out)))
    assert bool(jnp.all((out >= 0.0) & (out <= 1.0)))
    print("KERNEL_OK")
</pallas_src>

<mosaic_0001>
module attributes {stable_mosaic.version = 11 : i64} {
  func.func @_dense_kernel(%arg0: i32, %arg1: memref<16x256xbf16, #tpu.memory_space<vmem>>, %arg2: memref<256x768xbf16, #tpu.memory_space<vmem>>, %arg3: memref<1x768xf32, #tpu.memory_space<vmem>>, %arg4: memref<16x768xbf16, #tpu.memory_space<vmem>>) attributes {dimension_semantics = [#tpu.dimension_semantics<parallel>], iteration_bounds = array<i64: 1>, scalar_prefetch = 0 : i64, scratch_operands = 0 : i64, tpu.core_type = #tpu.core_type<tc>, window_params = [{transform_indices = @transform_0, window_bounds = array<i64: 16, 256>}, {pipeline_mode = #tpu.pipeline_mode<synchronous>, transform_indices = @transform_1, window_bounds = array<i64: 256, 768>}, {pipeline_mode = #tpu.pipeline_mode<synchronous>, transform_indices = @transform_2, window_bounds = array<i64: 1, 768>}, {transform_indices = @transform_3, window_bounds = array<i64: 16, 768>}]} {
    %c0 = arith.constant 0 : index
    %c0_0 = arith.constant 0 : index
    %0 = vector.load %arg1[%c0, %c0_0] : memref<16x256xbf16, #tpu.memory_space<vmem>>, vector<16x256xbf16>
    %c0_1 = arith.constant 0 : index
    %c0_2 = arith.constant 0 : index
    %1 = vector.load %arg2[%c0_1, %c0_2] : memref<256x768xbf16, #tpu.memory_space<vmem>>, vector<256x768xbf16>
    %cst = arith.constant dense<0.000000e+00> : vector<16x768xf32>
    %2 = tpu.matmul %0, %1, %cst {dimension_numbers = #tpu.dot_dimension_numbers<[1], [0], [0], [1], [0, 0, 1, 1], [], []>} : vector<16x256xbf16>, vector<256x768xbf16>, vector<16x768xf32> -> vector<16x768xf32>
    %c0_3 = arith.constant 0 : index
    %c0_4 = arith.constant 0 : index
    %3 = vector.load %arg3[%c0_3, %c0_4] : memref<1x768xf32, #tpu.memory_space<vmem>>, vector<1x768xf32>
    %4 = vector.broadcast %3 : vector<1x768xf32> to vector<16x768xf32>
    %5 = arith.addf %2, %4 : vector<16x768xf32>
    %6 = arith.truncf %5 : vector<16x768xf32> to vector<16x768xbf16>
    %c0_5 = arith.constant 0 : index
    %c0_6 = arith.constant 0 : index
    %7 = vector.load %arg4[%c0_5, %c0_6] : memref<16x768xbf16, #tpu.memory_space<vmem>>, vector<16x768xbf16>
    tpu.vector_store %arg4[%c0_5, %c0_6], %6 {strides = array<i32>} : memref<16x768xbf16, #tpu.memory_space<vmem>>, vector<16x768xbf16>,
    return
  }
  func.func @transform_0(%arg0: i32) -> (i32, i32) {
    %c0_i32 = arith.constant 0 : i32
    %c0_i32_0 = arith.constant 0 : i32
    return %arg0, %c0_i32 : i32, i32
  }
  func.func @transform_1(%arg0: i32) -> (i32, i32) {
    %c0_i32 = arith.constant 0 : i32
    %c0_i32_0 = arith.constant 0 : i32
    %c0_i32_1 = arith.constant 0 : i32
    return %c0_i32, %c0_i32_0 : i32, i32
  }
  func.func @transform_2(%arg0: i32) -> (i32, i32) {
    %c0_i32 = arith.constant 0 : i32
    %c0_i32_0 = arith.constant 0 : i32
    %c0_i32_1 = arith.constant 0 : i32
    return %c0_i32, %c0_i32_0 : i32, i32
  }
  func.func @transform_3(%arg0: i32) -> (i32, i32) {
    %c0_i32 = arith.constant 0 : i32
    %c0_i32_0 = arith.constant 0 : i32
    return %arg0, %c0_i32 : i32, i32
  }
}

module attributes {stable_mosaic.version = 11 : i64} {
  func.func @_emb_ln_proj_kernel(%arg0: i32, %arg1: memref<16x128xf32, #tpu.memory_space<vmem>>, %arg2: memref<1x128xf32, #tpu.memory_space<vmem>>, %arg3: memref<1x128xf32, #tpu.memory_space<vmem>>, %arg4: memref<128x256xbf16, #tpu.memory_space<vmem>>, %arg5: memref<1x256xf32, #tpu.memory_space<vmem>>, %arg6: memref<16x256xbf16, #tpu.memory_space<vmem>>) attributes {dimension_semantics = [#tpu.dimension_semantics<parallel>], iteration_bounds = array<i64: 1>, scalar_prefetch = 0 : i64, scratch_operands = 0 : i64, tpu.core_type = #tpu.core_type<tc>, window_params = [{transform_indices = @transform_0, window_bounds = array<i64: 16, 128>}, {pipeline_mode = #tpu.pipeline_mode<synchronous>, transform_indices = @transform_1, window_bounds = array<i64: 1, 128>}, {pipeline_mode = #tpu.pipeline_mode<synchronous>, transform_indices = @transform_2, window_bounds = array<i64: 1, 128>}, {pipeline_mode = #tpu.pipeline_mode<synchronous>, transform_indices = @transform_3, window_bounds = array<i64: 128, 256>}, {pipeline_mode = #tpu.pipeline_mode<synchronous>, transform_indices = @transform_4, window_bounds = array<i64: 1, 256>}, {transform_indices = @transform_5, window_bounds = array<i64: 16, 256>}]} {
    %c0 = arith.constant 0 : index
    %c0_0 = arith.constant 0 : index
    %0 = vector.load %arg1[%c0, %c0_0] : memref<16x128xf32, #tpu.memory_space<vmem>>, vector<16x128xf32>
    %c0_1 = arith.constant 0 : index
    %c0_2 = arith.constant 0 : index
    %1 = vector.load %arg2[%c0_1, %c0_2] : memref<1x128xf32, #tpu.memory_space<vmem>>, vector<1x128xf32>
    %c0_3 = arith.constant 0 : index
    %c0_4 = arith.constant 0 : index
    %2 = vector.load %arg3[%c0_3, %c0_4] : memref<1x128xf32, #tpu.memory_space<vmem>>, vector<1x128xf32>
    %cst = arith.constant dense<0.000000e+00> : vector<16xf32>
    %3 = vector.multi_reduction <add>, %0, %cst [1] : vector<16x128xf32> to vector<16xf32>
    %4 = vector.shape_cast %3 : vector<16xf32> to vector<16x1xf32>
    %cst_5 = arith.constant 1.280000e+02 : f32
    %5 = vector.broadcast %cst_5 : f32 to vector<16x1xf32>
    %6 = arith.divf %4, %5 : vector<16x1xf32>
    %7 = vector.broadcast %6 : vector<16x1xf32> to vector<16x128xf32>
    %8 = arith.subf %0, %7 : vector<16x128xf32>
    %9 = arith.mulf %8, %8 : vector<16x128xf32>
    %cst_6 = arith.constant dense<0.000000e+00> : vector<16xf32>
    %10 = vector.multi_reduction <add>, %9, %cst_6 [1] : vector<16x128xf32> to vector<16xf32>
    %11 = vector.shape_cast %10 : vector<16xf32> to vector<16x1xf32>
    %cst_7 = arith.constant 1.280000e+02 : f32
    %12 = vector.broadcast %cst_7 : f32 to vector<16x1xf32>
    %13 = arith.divf %11, %12 : vector<16x1xf32>
    %14 = vector.broadcast %6 : vector<16x1xf32> to vector<16x128xf32>
    %15 = arith.subf %0, %14 : vector<16x128xf32>
    %cst_8 = arith.constant 9.99999996E-13 : f32
    %16 = vector.broadcast %cst_8 : f32 to vector<16x1xf32>
    %17 = arith.addf %13, %16 : vector<16x1xf32>
    %18 = math.rsqrt %17 : vector<16x1xf32>
    %19 = vector.broadcast %18 : vector<16x1xf32> to vector<16x128xf32>
    %20 = arith.mulf %15, %19 : vector<16x128xf32>
    %21 = vector.broadcast %1 : vector<1x128xf32> to vector<16x128xf32>
    %22 = arith.mulf %20, %21 : vector<16x128xf32>
    %23 = vector.broadcast %2 : vector<1x128xf32> to vector<16x128xf32>
    %24 = arith.addf %22, %23 : vector<16x128xf32>
    %25 = arith.truncf %24 : vector<16x128xf32> to vector<16x128xbf16>
    %c0_9 = arith.constant 0 : index
    %c0_10 = arith.constant 0 : index
    %26 = vector.load %arg4[%c0_9, %c0_10] : memref<128x256xbf16, #tpu.memory_space<vmem>>, vector<128x256xbf16>
    %cst_11 = arith.constant dense<0.000000e+00> : vector<16x256xf32>
    %27 = tpu.matmul %25, %26, %cst_11 {dimension_numbers = #tpu.dot_dimension_numbers<[1], [0], [0], [1], [0, 0, 1, 1], [], []>} : vector<16x128xbf16>, vector<128x256xbf16>, vector<16x256xf32> -> vector<16x256xf32>
    %c0_12 = arith.constant 0 : index
    %c0_13 = arith.constant 0 : index
    %28 = vector.load %arg5[%c0_12, %c0_13] : memref<1x256xf32, #tpu.memory_space<vmem>>, vector<1x256xf32>
    %29 = vector.broadcast %28 : vector<1x256xf32> to vector<16x256xf32>
    %30 = arith.addf %27, %29 : vector<16x256xf32>
    %31 = arith.truncf %30 : vector<16x256xf32> to vector<16x256xbf16>
    %c0_14 = arith.constant 0 : index
    %c0_15 = arith.constant 0 : index
    %32 = vector.load %arg6[%c0_14, %c0_15] : memref<16x256xbf16, #tpu.memory_space<vmem>>, vector<16x256xbf16>
    tpu.vector_store %arg6[%c0_14, %c0_15], %31 {strides = array<i32>} : memref<16x256xbf16, #tpu.memory_space<vmem>>, vector<16x256xbf16>,
    return
  }
  func.func @transform_0(%arg0: i32) -> (i32, i32) {
    %c0_i32 = arith.constant 0 : i32
    %c0_i32_0 = arith.constant 0 : i32
    return %arg0, %c0_i32 : i32, i32
  }
  func.func @transform_1(%arg0: i32) -> (i32, i32) {
    %c0_i32 = arith.constant 0 : i32
    %c0_i32_0 = arith.constant 0 : i32
    %c0_i32_1 = arith.constant 0 : i32
    return %c0_i32, %c0_i32_0 : i32, i32
  }
  func.func @transform_2(%arg0: i32) -> (i32, i32) {
    %c0_i32 = arith.constant 0 : i32
    %c0_i32_0 = arith.constant 0 : i32
    %c0_i32_1 = arith.constant 0 : i32
    return %c0_i32, %c0_i32_0 : i32, i32
  }
  func.func @transform_3(%arg0: i32) -> (i32, i32) {
    %c0_i32 = arith.constant 0 : i32
    %c0_i32_0 = arith.constant 0 : i32
    %c0_i32_1 = arith.constant 0 : i32
    return %c0_i32, %c0_i32_0 : i32, i32
  }
  func.func @transform_4(%arg0: i32) -> (i32, i32) {
    %c0_i32 = arith.constant 0 : i32
    %c0_i32_0 = arith.constant 0 : i32
    %c0_i32_1 = arith.constant 0 : i32
    return %c0_i32, %c0_i32_0 : i32, i32
  }
  func.func @transform_5(%arg0: i32) -> (i32, i32) {
    %c0_i32 = arith.constant 0 : i32
    %c0_i32_0 = arith.constant 0 : i32
    return %arg0, %c0_i32 : i32, i32
  }
}

module attributes {stable_mosaic.version = 11 : i64} {
  func.func @_attn_kernel(%arg0: i32, %arg1: memref<1x8x768xbf16, #tpu.memory_space<vmem>>, %arg2: memref<1x1x8xf32, #tpu.memory_space<vmem>>, %arg3: memref<1x8x256xbf16, #tpu.memory_space<vmem>>) attributes {dimension_semantics = [#tpu.dimension_semantics<parallel>], iteration_bounds = array<i64: 2>, scalar_prefetch = 0 : i64, scratch_operands = 0 : i64, tpu.core_type = #tpu.core_type<tc>, window_params = [{transform_indices = @transform_0, window_bounds = array<i64: 1, 8, 768>}, {transform_indices = @transform_1, window_bounds = array<i64: 1, 1, 8>}, {transform_indices = @transform_2, window_bounds = array<i64: 1, 8, 256>}]} {
    %c0 = arith.constant 0 : index
    %c0_0 = arith.constant 0 : index
    %c0_1 = arith.constant 0 : index
    %0 = vector.load %arg2[%c0, %c0_0, %c0_1] : memref<1x1x8xf32, #tpu.memory_space<vmem>>, vector<1x1x8xf32>
    %1 = vector.shape_cast %0 : vector<1x1x8xf32> to vector<1x8xf32>
    %c0_2 = arith.constant 0 : index
    %c0_3 = arith.constant 0 : index
    %c0_4 = arith.constant 0 : index
    %2 = vector.load %arg1[%c0_2, %c0_3, %c0_4] : memref<1x8x768xbf16, #tpu.memory_space<vmem>>, vector<1x8x64xbf16>
    %3 = vector.shape_cast %2 : vector<1x8x64xbf16> to vector<8x64xbf16>
    %c0_5 = arith.constant 0 : index
    %c0_6 = arith.constant 0 : index
    %c256 = arith.constant 256 : index
    %4 = vector.load %arg1[%c0_5, %c0_6, %c256] : memref<1x8x768xbf16, #tpu.memory_space<vmem>>, vector<1x8x64xbf16>
    %5 = vector.shape_cast %4 : vector<1x8x64xbf16> to vector<8x64xbf16>
    %c0_7 = arith.constant 0 : index
    %c0_8 = arith.constant 0 : index
    %c512 = arith.constant 512 : index
    %6 = vector.load %arg1[%c0_7, %c0_8, %c512] : memref<1x8x768xbf16, #tpu.memory_space<vmem>>, vector<1x8x64xbf16>
    %7 = vector.shape_cast %6 : vector<1x8x64xbf16> to vector<8x64xbf16>
    %cst = arith.constant dense<0.000000e+00> : vector<8x8xf32>
    %8 = tpu.matmul %3, %5, %cst {dimension_numbers = #tpu.dot_dimension_numbers<[1], [1], [0], [0], [0, 0, 1, 0], [], []>} : vector<8x64xbf16>, vector<8x64xbf16>, vector<8x8xf32> -> vector<8x8xf32>
    %cst_9 = arith.constant 1.250000e-01 : f32
    %9 = vector.broadcast %cst_9 : f32 to vector<8x8xf32>
    %10 = arith.mulf %8, %9 : vector<8x8xf32>
    %11 = vector.broadcast %1 : vector<1x8xf32> to vector<8x8xf32>
    %12 = arith.addf %10, %11 : vector<8x8xf32>
    %cst_10 = arith.constant dense<0xFF800000> : vector<8xf32>
    %13 = vector.multi_reduction <maximumf>, %12, %cst_10 [1] : vector<8x8xf32> to vector<8xf32>
    %14 = vector.shape_cast %13 : vector<8xf32> to vector<8x1xf32>
    %15 = vector.broadcast %14 : vector<8x1xf32> to vector<8x8xf32>
    %16 = arith.subf %12, %15 : vector<8x8xf32>
    %17 = math.exp %16 : vector<8x8xf32>
    %cst_11 = arith.constant dense<0.000000e+00> : vector<8xf32>
    %18 = vector.multi_reduction <add>, %17, %cst_11 [1] : vector<8x8xf32> to vector<8xf32>
    %19 = vector.shape_cast %18 : vector<8xf32> to vector<8x1xf32>
    %20 = tpu.reciprocal %19 {approx = true} : vector<8x1xf32> -> vector<8x1xf32>
    %21 = vector.broadcast %20 : vector<8x1xf32> to vector<8x8xf32>
    %22 = arith.mulf %17, %21 : vector<8x8xf32>
    %23 = arith.truncf %22 : vector<8x8xf32> to vector<8x8xbf16>
    %cst_12 = arith.constant dense<0.000000e+00> : vector<8x64xf32>
    %24 = tpu.matmul %23, %7, %cst_12 {dimension_numbers = #tpu.dot_dimension_numbers<[1], [0], [0], [1], [0, 0, 1, 1], [], []>} : vector<8x8xbf16>, vector<8x64xbf16>, vector<8x64xf32> -> vector<8x64xf32>
    %25 = arith.truncf %24 : vector<8x64xf32> to vector<8x64xbf16>
    %c0_13 = arith.constant 0 : index
    %c0_14 = arith.constant 0 : index
    %c0_15 = arith.constant 0 : index
    %26 = vector.load %arg3[%c0_13, %c0_14, %c0_15] : memref<1x8x256xbf16, #tpu.memory_space<vmem>>, vector<1x8x64xbf16>
    %27 = vector.shape_cast %26 : vector<1x8x64xbf16> to vector<8x64xbf16>
    %28 = vector.shape_cast %25 : vector<8x64xbf16> to vector<1x8x64xbf16>
    tpu.vector_store %arg3[%c0_13, %c0_14, %c0_15], %28 {strides = array<i32>} : memref<1x8x256xbf16, #tpu.memory_space<vmem>>, vector<1x8x64xbf16>,
    %c0_16 = arith.constant 0 : index
    %c0_17 = arith.constant 0 : index
    %c64 = arith.constant 64 : index
    %29 = vector.load %arg1[%c0_16, %c0_17, %c64] : memref<1x8x768xbf16, #tpu.memory_space<vmem>>, vector<1x8x64xbf16>
    %30 = vector.shape_cast %29 : vector<1x8x64xbf16> to vector<8x64xbf16>
    %c0_18 = arith.constant 0 : index
    %c0_19 = arith.constant 0 : index
    %c320 = arith.constant 320 : index
    %31 = vector.load %arg1[%c0_18, %c0_19, %c320] : memref<1x8x768xbf16, #tpu.memory_space<vmem>>, vector<1x8x64xbf16>
    %32 = vector.shape_cast %31 : vector<1x8x64xbf16> to vector<8x64xbf16>
    %c0_20 = arith.constant 0 : index
    %c0_21 = arith.constant 0 : index
    %c576 = arith.constant 576 : index
    %33 = vector.load %arg1[%c0_20, %c0_21, %c576] : memref<1x8x768xbf16, #tpu.memory_space<vmem>>, vector<1x8x64xbf16>
    %34 = vector.shape_cast %33 : vector<1x8x64xbf16> to vector<8x64xbf16>
    %cst_22 = arith.constant dense<0.000000e+00> : vector<8x8xf32>
    %35 = tpu.matmul %30, %32, %cst_22 {dimension_numbers = #tpu.dot_dimension_numbers<[1], [1], [0], [0], [0, 0, 1, 0], [], []>} : vector<8x64xbf16>, vector<8x64xbf16>, vector<8x8xf32> -> vector<8x8xf32>
    %cst_23 = arith.constant 1.250000e-01 : f32
    %36 = vector.broadcast %cst_23 : f32 to vector<8x8xf32>
    %37 = arith.mulf %35, %36 : vector<8x8xf32>
    %38 = vector.broadcast %1 : vector<1x8xf32> to vector<8x8xf32>
    %39 = arith.addf %37, %38 : vector<8x8xf32>
    %cst_24 = arith.constant dense<0xFF800000> : vector<8xf32>
    %40 = vector.multi_reduction <maximumf>, %39, %cst_24 [1] : vector<8x8xf32> to vector<8xf32>
    %41 = vector.shape_cast %40 : vector<8xf32> to vector<8x1xf32>
    %42 = vector.broadcast %41 : vector<8x1xf32> to vector<8x8xf32>
    %43 = arith.subf %39, %42 : vector<8x8xf32>
    %44 = math.exp %43 : vector<8x8xf32>
    %cst_25 = arith.constant dense<0.000000e+00> : vector<8xf32>
    %45 = vector.multi_reduction <add>, %44, %cst_25 [1] : vector<8x8xf32> to vector<8xf32>
    %46 = vector.shape_cast %45 : vector<8xf32> to vector<8x1xf32>
    %47 = tpu.reciprocal %46 {approx = true} : vector<8x1xf32> -> vector<8x1xf32>
    %48 = vector.broadcast %47 : vector<8x1xf32> to vector<8x8xf32>
    %49 = arith.mulf %44, %48 : vector<8x8xf32>
    %50 = arith.truncf %49 : vector<8x8xf32> to vector<8x8xbf16>
    %cst_26 = arith.constant dense<0.000000e+00> : vector<8x64xf32>
    %51 = tpu.matmul %50, %34, %cst_26 {dimension_numbers = #tpu.dot_dimension_numbers<[1], [0], [0], [1], [0, 0, 1, 1], [], []>} : vector<8x8xbf16>, vector<8x64xbf16>, vector<8x64xf32> -> vector<8x64xf32>
    %52 = arith.truncf %51 : vector<8x64xf32> to vector<8x64xbf16>
    %c0_27 = arith.constant 0 : index
    %c0_28 = arith.constant 0 : index
    %c64_29 = arith.constant 64 : index
    %53 = vector.load %arg3[%c0_27, %c0_28, %c64_29] : memref<1x8x256xbf16, #tpu.memory_space<vmem>>, vector<1x8x64xbf16>
    %54 = vector.shape_cast %53 : vector<1x8x64xbf16> to vector<8x64xbf16>
    %55 = vector.shape_cast %52 : vector<8x64xbf16> to vector<1x8x64xbf16>
    tpu.vector_store %arg3[%c0_27, %c0_28, %c64_29], %55 {strides = array<i32>} : memref<1x8x256xbf16, #tpu.memory_space<vmem>>, vector<1x8x64xbf16>,
    %c0_30 = arith.constant 0 : index
    %c0_31 = arith.constant 0 : index
    %c128 = arith.constant 128 : index
    %56 = vector.load %arg1[%c0_30, %c0_31, %c128] : memref<1x8x768xbf16, #tpu.memory_space<vmem>>, vector<1x8x64xbf16>
    %57 = vector.shape_cast %56 : vector<1x8x64xbf16> to vector<8x64xbf16>
    %c0_32 = arith.constant 0 : index
    %c0_33 = arith.constant 0 : index
    %c384 = arith.constant 384 : index
    %58 = vector.load %arg1[%c0_32, %c0_33, %c384] : memref<1x8x768xbf16, #tpu.memory_space<vmem>>, vector<1x8x64xbf16>
    %59 = vector.shape_cast %58 : vector<1x8x64xbf16> to vector<8x64xbf16>
    %c0_34 = arith.constant 0 : index
    %c0_35 = arith.constant 0 : index
    %c640 = arith.constant 640 : index
    %60 = vector.load %arg1[%c0_34, %c0_35, %c640] : memref<1x8x768xbf16, #tpu.memory_space<vmem>>, vector<1x8x64xbf16>
    %61 = vector.shape_cast %60 : vector<1x8x64xbf16> to vector<8x64xbf16>
    %cst_36 = arith.constant dense<0.000000e+00> : vector<8x8xf32>
    %62 = tpu.matmul %57, %59, %cst_36 {dimension_numbers = #tpu.dot_dimension_numbers<[1], [1], [0], [0], [0, 0, 1, 0], [], []>} : vector<8x64xbf16>, vector<8x64xbf16>, vector<8x8xf32> -> vector<8x8xf32>
    %cst_37 = arith.constant 1.250000e-01 : f32
    %63 = vector.broadcast %cst_37 : f32 to vector<8x8xf32>
    %64 = arith.mulf %62, %63 : vector<8x8xf32>
    %65 = vector.broadcast %1 : vector<1x8xf32> to vector<8x8xf32>
    %66 = arith.addf %64, %65 : vector<8x8xf32>
    %cst_38 = arith.constant dense<0xFF800000> : vector<8xf32>
    %67 = vector.multi_reduction <maximumf>, %66, %cst_38 [1] : vector<8x8xf32> to vector<8xf32>
    %68 = vector.shape_cast %67 : vector<8xf32> to vector<8x1xf32>
    %69 = vector.broadcast %68 : vector<8x1xf32> to vector<8x8xf32>
    %70 = arith.subf %66, %69 : vector<8x8xf32>
    %71 = math.exp %70 : vector<8x8xf32>
    %cst_39 = arith.constant dense<0.000000e+00> : vector<8xf32>
    %72 = vector.multi_reduction <add>, %71, %cst_39 [1] : vector<8x8xf32> to vector<8xf32>
    %73 = vector.shape_cast %72 : vector<8xf32> to vector<8x1xf32>
    %74 = tpu.reciprocal %73 {approx = true} : vector<8x1xf32> -> vector<8x1xf32>
    %75 = vector.broadcast %74 : vector<8x1xf32> to vector<8x8xf32>
    %76 = arith.mulf %71, %75 : vector<8x8xf32>
    %77 = arith.truncf %76 : vector<8x8xf32> to vector<8x8xbf16>
    %cst_40 = arith.constant dense<0.000000e+00> : vector<8x64xf32>
    %78 = tpu.matmul %77, %61, %cst_40 {dimension_numbers = #tpu.dot_dimension_numbers<[1], [0], [0], [1], [0, 0, 1, 1], [], []>} : vector<8x8xbf16>, vector<8x64xbf16>, vector<8x64xf32> -> vector<8x64xf32>
    %79 = arith.truncf %78 : vector<8x64xf32> to vector<8x64xbf16>
    %c0_41 = arith.constant 0 : index
    %c0_42 = arith.constant 0 : index
    %c128_43 = arith.constant 128 : index
    %80 = vector.load %arg3[%c0_41, %c0_42, %c128_43] : memref<1x8x256xbf16, #tpu.memory_space<vmem>>, vector<1x8x64xbf16>
    %81 = vector.shape_cast %80 : vector<1x8x64xbf16> to vector<8x64xbf16>
    %82 = vector.shape_cast %79 : vector<8x64xbf16> to vector<1x8x64xbf16>
    tpu.vector_store %arg3[%c0_41, %c0_42, %c128_43], %82 {strides = array<i32>} : memref<1x8x256xbf16, #tpu.memory_space<vmem>>, vector<1x8x64xbf16>,
    %c0_44 = arith.constant 0 : index
    %c0_45 = arith.constant 0 : index
    %c192 = arith.constant 192 : index
    %83 = vector.load %arg1[%c0_44, %c0_45, %c192] : memref<1x8x768xbf16, #tpu.memory_space<vmem>>, vector<1x8x64xbf16>
    %84 = vector.shape_cast %83 : vector<1x8x64xbf16> to vector<8x64xbf16>
    %c0_46 = arith.constant 0 : index
    %c0_47 = arith.constant 0 : index
    %c448 = arith.constant 448 : index
    %85 = vector.load %arg1[%c0_46, %c0_47, %c448] : memref<1x8x768xbf16, #tpu.memory_space<vmem>>, vector<1x8x64xbf16>
    %86 = vector.shape_cast %85 : vector<1x8x64xbf16> to vector<8x64xbf16>
    %c0_48 = arith.constant 0 : index
    %c0_49 = arith.constant 0 : index
    %c704 = arith.constant 704 : index
    %87 = vector.load %arg1[%c0_48, %c0_49, %c704] : memref<1x8x768xbf16, #tpu.memory_space<vmem>>, vector<1x8x64xbf16>
    %88 = vector.shape_cast %87 : vector<1x8x64xbf16> to vector<8x64xbf16>
    %cst_50 = arith.constant dense<0.000000e+00> : vector<8x8xf32>
    %89 = tpu.matmul %84, %86, %cst_50 {dimension_numbers = #tpu.dot_dimension_numbers<[1], [1], [0], [0], [0, 0, 1, 0], [], []>} : vector<8x64xbf16>, vector<8x64xbf16>, vector<8x8xf32> -> vector<8x8xf32>
    %cst_51 = arith.constant 1.250000e-01 : f32
    %90 = vector.broadcast %cst_51 : f32 to vector<8x8xf32>
    %91 = arith.mulf %89, %90 : vector<8x8xf32>
    %92 = vector.broadcast %1 : vector<1x8xf32> to vector<8x8xf32>
    %93 = arith.addf %91, %92 : vector<8x8xf32>
    %cst_52 = arith.constant dense<0xFF800000> : vector<8xf32>
    %94 = vector.multi_reduction <maximumf>, %93, %cst_52 [1] : vector<8x8xf32> to vector<8xf32>
    %95 = vector.shape_cast %94 : vector<8xf32> to vector<8x1xf32>
    %96 = vector.broadcast %95 : vector<8x1xf32> to vector<8x8xf32>
    %97 = arith.subf %93, %96 : vector<8x8xf32>
    %98 = math.exp %97 : vector<8x8xf32>
    %cst_53 = arith.constant dense<0.000000e+00> : vector<8xf32>
    %99 = vector.multi_reduction <add>, %98, %cst_53 [1] : vector<8x8xf32> to vector<8xf32>
    %100 = vector.shape_cast %99 : vector<8xf32> to vector<8x1xf32>
    %101 = tpu.reciprocal %100 {approx = true} : vector<8x1xf32> -> vector<8x1xf32>
    %102 = vector.broadcast %101 : vector<8x1xf32> to vector<8x8xf32>
    %103 = arith.mulf %98, %102 : vector<8x8xf32>
    %104 = arith.truncf %103 : vector<8x8xf32> to vector<8x8xbf16>
    %cst_54 = arith.constant dense<0.000000e+00> : vector<8x64xf32>
    %105 = tpu.matmul %104, %88, %cst_54 {dimension_numbers = #tpu.dot_dimension_numbers<[1], [0], [0], [1], [0, 0, 1, 1], [], []>} : vector<8x8xbf16>, vector<8x64xbf16>, vector<8x64xf32> -> vector<8x64xf32>
    %106 = arith.truncf %105 : vector<8x64xf32> to vector<8x64xbf16>
    %c0_55 = arith.constant 0 : index
    %c0_56 = arith.constant 0 : index
    %c192_57 = arith.constant 192 : index
    %107 = vector.load %arg3[%c0_55, %c0_56, %c192_57] : memref<1x8x256xbf16, #tpu.memory_space<vmem>>, vector<1x8x64xbf16>
    %108 = vector.shape_cast %107 : vector<1x8x64xbf16> to vector<8x64xbf16>
    %109 = vector.shape_cast %106 : vector<8x64xbf16> to vector<1x8x64xbf16>
    tpu.vector_store %arg3[%c0_55, %c0_56, %c192_57], %109 {strides = array<i32>} : memref<1x8x256xbf16, #tpu.memory_space<vmem>>, vector<1x8x64xbf16>,
    return
  }
  func.func @transform_0(%arg0: i32) -> (i32, i32, i32) {
    %c0_i32 = arith.constant 0 : i32
    %c0_i32_0 = arith.constant 0 : i32
    %c0_i32_1 = arith.constant 0 : i32
    return %arg0, %c0_i32, %c0_i32_0 : i32, i32, i32
  }
  func.func @transform_1(%arg0: i32) -> (i32, i32, i32) {
    %c0_i32 = arith.constant 0 : i32
    %c0_i32_0 = arith.constant 0 : i32
    %c0_i32_1 = arith.constant 0 : i32
    return %arg0, %c0_i32, %c0_i32_0 : i32, i32, i32
  }
  func.func @transform_2(%arg0: i32) -> (i32, i32, i32) {
    %c0_i32 = arith.constant 0 : i32
    %c0_i32_0 = arith.constant 0 : i32
    %c0_i32_1 = arith.constant 0 : i32
    return %arg0, %c0_i32, %c0_i32_0 : i32, i32, i32
  }
}

module attributes {stable_mosaic.version = 11 : i64} {
  func.func @_dense_add_ln_kernel(%arg0: i32, %arg1: memref<16x256xbf16, #tpu.memory_space<vmem>>, %arg2: memref<256x256xbf16, #tpu.memory_space<vmem>>, %arg3: memref<1x256xf32, #tpu.memory_space<vmem>>, %arg4: memref<16x256xbf16, #tpu.memory_space<vmem>>, %arg5: memref<1x256xf32, #tpu.memory_space<vmem>>, %arg6: memref<1x256xf32, #tpu.memory_space<vmem>>, %arg7: memref<16x256xbf16, #tpu.memory_space<vmem>>) attributes {dimension_semantics = [#tpu.dimension_semantics<parallel>], iteration_bounds = array<i64: 1>, scalar_prefetch = 0 : i64, scratch_operands = 0 : i64, tpu.core_type = #tpu.core_type<tc>, window_params = [{transform_indices = @transform_0, window_bounds = array<i64: 16, 256>}, {pipeline_mode = #tpu.pipeline_mode<synchronous>, transform_indices = @transform_1, window_bounds = array<i64: 256, 256>}, {pipeline_mode = #tpu.pipeline_mode<synchronous>, transform_indices = @transform_2, window_bounds = array<i64: 1, 256>}, {transform_indices = @transform_3, window_bounds = array<i64: 16, 256>}, {pipeline_mode = #tpu.pipeline_mode<synchronous>, transform_indices = @transform_4, window_bounds = array<i64: 1, 256>}, {pipeline_mode = #tpu.pipeline_mode<synchronous>, transform_indices = @transform_5, window_bounds = array<i64: 1, 256>}, {transform_indices = @transform_6, window_bounds = array<i64: 16, 256>}]} {
    %c0 = arith.constant 0 : index
    %c0_0 = arith.constant 0 : index
    %0 = vector.load %arg1[%c0, %c0_0] : memref<16x256xbf16, #tpu.memory_space<vmem>>, vector<16x256xbf16>
    %c0_1 = arith.constant 0 : index
    %c0_2 = arith.constant 0 : index
    %1 = vector.load %arg2[%c0_1, %c0_2] : memref<256x256xbf16, #tpu.memory_space<vmem>>, vector<256x256xbf16>
    %cst = arith.constant dense<0.000000e+00> : vector<16x256xf32>
    %2 = tpu.matmul %0, %1, %cst {dimension_numbers = #tpu.dot_dimension_numbers<[1], [0], [0], [1], [0, 0, 1, 1], [], []>} : vector<16x256xbf16>, vector<256x256xbf16>, vector<16x256xf32> -> vector<16x256xf32>
    %c0_3 = arith.constant 0 : index
    %c0_4 = arith.constant 0 : index
    %3 = vector.load %arg3[%c0_3, %c0_4] : memref<1x256xf32, #tpu.memory_space<vmem>>, vector<1x256xf32>
    %4 = vector.broadcast %3 : vector<1x256xf32> to vector<16x256xf32>
    %5 = arith.addf %2, %4 : vector<16x256xf32>
    %c0_5 = arith.constant 0 : index
    %c0_6 = arith.constant 0 : index
    %6 = vector.load %arg4[%c0_5, %c0_6] : memref<16x256xbf16, #tpu.memory_space<vmem>>, vector<16x256xbf16>
    %7 = arith.extf %6 : vector<16x256xbf16> to vector<16x256xf32>
    %8 = arith.addf %5, %7 : vector<16x256xf32>
    %c0_7 = arith.constant 0 : index
    %c0_8 = arith.constant 0 : index
    %9 = vector.load %arg5[%c0_7, %c0_8] : memref<1x256xf32, #tpu.memory_space<vmem>>, vector<1x256xf32>
    %c0_9 = arith.constant 0 : index
    %c0_10 = arith.constant 0 : index
    %10 = vector.load %arg6[%c0_9, %c0_10] : memref<1x256xf32, #tpu.memory_space<vmem>>, vector<1x256xf32>
    %cst_11 = arith.constant dense<0.000000e+00> : vector<16xf32>
    %11 = vector.multi_reduction <add>, %8, %cst_11 [1] : vector<16x256xf32> to vector<16xf32>
    %12 = vector.shape_cast %11 : vector<16xf32> to vector<16x1xf32>
    %cst_12 = arith.constant 2.560000e+02 : f32
    %13 = vector.broadcast %cst_12 : f32 to vector<16x1xf32>
    %14 = arith.divf %12, %13 : vector<16x1xf32>
    %15 = vector.broadcast %14 : vector<16x1xf32> to vector<16x256xf32>
    %16 = arith.subf %8, %15 : vector<16x256xf32>
    %17 = arith.mulf %16, %16 : vector<16x256xf32>
    %cst_13 = arith.constant dense<0.000000e+00> : vector<16xf32>
    %18 = vector.multi_reduction <add>, %17, %cst_13 [1] : vector<16x256xf32> to vector<16xf32>
    %19 = vector.shape_cast %18 : vector<16xf32> to vector<16x1xf32>
    %cst_14 = arith.constant 2.560000e+02 : f32
    %20 = vector.broadcast %cst_14 : f32 to vector<16x1xf32>
    %21 = arith.divf %19, %20 : vector<16x1xf32>
    %22 = vector.broadcast %14 : vector<16x1xf32> to vector<16x256xf32>
    %23 = arith.subf %8, %22 : vector<16x256xf32>
    %cst_15 = arith.constant 9.99999996E-13 : f32
    %24 = vector.broadcast %cst_15 : f32 to vector<16x1xf32>
    %25 = arith.addf %21, %24 : vector<16x1xf32>
    %26 = math.rsqrt %25 : vector<16x1xf32>
    %27 = vector.broadcast %26 : vector<16x1xf32> to vector<16x256xf32>
    %28 = arith.mulf %23, %27 : vector<16x256xf32>
    %29 = vector.broadcast %9 : vector<1x256xf32> to vector<16x256xf32>
    %30 = arith.mulf %28, %29 : vector<16x256xf32>
    %31 = vector.broadcast %10 : vector<1x256xf32> to vector<16x256xf32>
    %32 = arith.addf %30, %31 : vector<16x256xf32>
    %33 = arith.truncf %32 : vector<16x256xf32> to vector<16x256xbf16>
    %c0_16 = arith.constant 0 : index
    %c0_17 = arith.constant 0 : index
    %34 = vector.load %arg7[%c0_16, %c0_17] : memref<16x256xbf16, #tpu.memory_space<vmem>>, vector<16x256xbf16>
    tpu.vector_store %arg7[%c0_16, %c0_17], %33 {strides = array<i32>} : memref<16x256xbf16, #tpu.memory_space<vmem>>, vector<16x256xbf16>,
    return
  }
  func.func @transform_0(%arg0: i32) -> (i32, i32) {
    %c0_i32 = arith.constant 0 : i32
    %c0_i32_0 = arith.constant 0 : i32
    return %arg0, %c0_i32 : i32, i32
  }
  func.func @transform_1(%arg0: i32) -> (i32, i32) {
    %c0_i32 = arith.constant 0 : i32
    %c0_i32_0 = arith.constant 0 : i32
    %c0_i32_1 = arith.constant 0 : i32
    return %c0_i32, %c0_i32_0 : i32, i32
  }
  func.func @transform_2(%arg0: i32) -> (i32, i32) {
    %c0_i32 = arith.constant 0 : i32
    %c0_i32_0 = arith.constant 0 : i32
    %c0_i32_1 = arith.constant 0 : i32
    return %c0_i32, %c0_i32_0 : i32, i32
  }
  func.func @transform_3(%arg0: i32) -> (i32, i32) {
    %c0_i32 = arith.constant 0 : i32
    %c0_i32_0 = arith.constant 0 : i32
    return %arg0, %c0_i32 : i32, i32
  }
  func.func @transform_4(%arg0: i32) -> (i32, i32) {
    %c0_i32 = arith.constant 0 : i32
    %c0_i32_0 = arith.constant 0 : i32
    %c0_i32_1 = arith.constant 0 : i32
    return %c0_i32, %c0_i32_0 : i32, i32
  }
  func.func @transform_5(%arg0: i32) -> (i32, i32) {
    %c0_i32 = arith.constant 0 : i32
    %c0_i32_0 = arith.constant 0 : i32
    %c0_i32_1 = arith.constant 0 : i32
    return %c0_i32, %c0_i32_0 : i32, i32
  }
  func.func @transform_6(%arg0: i32) -> (i32, i32) {
    %c0_i32 = arith.constant 0 : i32
    %c0_i32_0 = arith.constant 0 : i32
    return %arg0, %c0_i32 : i32, i32
  }
}

module attributes {stable_mosaic.version = 11 : i64} {
  func.func @_ffn_kernel(%arg0: i32, %arg1: memref<16x256xbf16, #tpu.memory_space<vmem>>, %arg2: memref<256x1024xbf16, #tpu.memory_space<vmem>>, %arg3: memref<1x1024xf32, #tpu.memory_space<vmem>>, %arg4: memref<1024x256xbf16, #tpu.memory_space<vmem>>, %arg5: memref<1x256xf32, #tpu.memory_space<vmem>>, %arg6: memref<1x256xf32, #tpu.memory_space<vmem>>, %arg7: memref<1x256xf32, #tpu.memory_space<vmem>>, %arg8: memref<16x256xbf16, #tpu.memory_space<vmem>>) attributes {dimension_semantics = [#tpu.dimension_semantics<parallel>], iteration_bounds = array<i64: 1>, scalar_prefetch = 0 : i64, scratch_operands = 0 : i64, tpu.core_type = #tpu.core_type<tc>, window_params = [{transform_indices = @transform_0, window_bounds = array<i64: 16, 256>}, {pipeline_mode = #tpu.pipeline_mode<synchronous>, transform_indices = @transform_1, window_bounds = array<i64: 256, 1024>}, {pipeline_mode = #tpu.pipeline_mode<synchronous>, transform_indices = @transform_2, window_bounds = array<i64: 1, 1024>}, {pipeline_mode = #tpu.pipeline_mode<synchronous>, transform_indices = @transform_3, window_bounds = array<i64: 1024, 256>}, {pipeline_mode = #tpu.pipeline_mode<synchronous>, transform_indices = @transform_4, window_bounds = array<i64: 1, 256>}, {pipeline_mode = #tpu.pipeline_mode<synchronous>, transform_indices = @transform_5, window_bounds = array<i64: 1, 256>}, {pipeline_mode = #tpu.pipeline_mode<synchronous>, transform_indices = @transform_6, window_bounds = array<i64: 1, 256>}, {transform_indices = @transform_7, window_bounds = array<i64: 16, 256>}]} {
    %c0 = arith.constant 0 : index
    %c0_0 = arith.constant 0 : index
    %0 = vector.load %arg1[%c0, %c0_0] : memref<16x256xbf16, #tpu.memory_space<vmem>>, vector<16x256xbf16>
    %c0_1 = arith.constant 0 : index
    %c0_2 = arith.constant 0 : index
    %1 = vector.load %arg2[%c0_1, %c0_2] : memref<256x1024xbf16, #tpu.memory_space<vmem>>, vector<256x1024xbf16>
    %cst = arith.constant dense<0.000000e+00> : vector<16x1024xf32>
    %2 = tpu.matmul %0, %1, %cst {dimension_numbers = #tpu.dot_dimension_numbers<[1], [0], [0], [1], [0, 0, 1, 1], [], []>} : vector<16x256xbf16>, vector<256x1024xbf16>, vector<16x1024xf32> -> vector<16x1024xf32>
    %c0_3 = arith.constant 0 : index
    %c0_4 = arith.constant 0 : index
    %3 = vector.load %arg3[%c0_3, %c0_4] : memref<1x1024xf32, #tpu.memory_space<vmem>>, vector<1x1024xf32>
    %4 = vector.broadcast %3 : vector<1x1024xf32> to vector<16x1024xf32>
    %5 = arith.addf %2, %4 : vector<16x1024xf32>
    %6 = arith.mulf %5, %5 : vector<16x1024xf32>
    %7 = arith.mulf %5, %6 : vector<16x1024xf32>
    %cst_5 = arith.constant 4.471500e-02 : f32
    %8 = vector.broadcast %cst_5 : f32 to vector<16x1024xf32>
    %9 = arith.mulf %8, %7 : vector<16x1024xf32>
    %10 = arith.addf %5, %9 : vector<16x1024xf32>
    %cst_6 = arith.constant 0.797884583 : f32
    %11 = vector.broadcast %cst_6 : f32 to vector<16x1024xf32>
    %12 = arith.mulf %11, %10 : vector<16x1024xf32>
    %13 = math.tanh %12 : vector<16x1024xf32>
    %cst_7 = arith.constant 1.000000e+00 : f32
    %14 = vector.broadcast %cst_7 : f32 to vector<16x1024xf32>
    %15 = arith.addf %14, %13 : vector<16x1024xf32>
    %cst_8 = arith.constant 5.000000e-01 : f32
    %16 = vector.broadcast %cst_8 : f32 to vector<16x1024xf32>
    %17 = arith.mulf %16, %15 : vector<16x1024xf32>
    %18 = arith.mulf %5, %17 : vector<16x1024xf32>
    %19 = arith.truncf %18 : vector<16x1024xf32> to vector<16x1024xbf16>
    %c0_9 = arith.constant 0 : index
    %c0_10 = arith.constant 0 : index
    %20 = vector.load %arg4[%c0_9, %c0_10] : memref<1024x256xbf16, #tpu.memory_space<vmem>>, vector<1024x256xbf16>
    %cst_11 = arith.constant dense<0.000000e+00> : vector<16x256xf32>
    %21 = tpu.matmul %19, %20, %cst_11 {dimension_numbers = #tpu.dot_dimension_numbers<[1], [0], [0], [1], [0, 0, 1, 1], [], []>} : vector<16x1024xbf16>, vector<1024x256xbf16>, vector<16x256xf32> -> vector<16x256xf32>
    %c0_12 = arith.constant 0 : index
    %c0_13 = arith.constant 0 : index
    %22 = vector.load %arg5[%c0_12, %c0_13] : memref<1x256xf32, #tpu.memory_space<vmem>>, vector<1x256xf32>
    %23 = vector.broadcast %22 : vector<1x256xf32> to vector<16x256xf32>
    %24 = arith.addf %21, %23 : vector<16x256xf32>
    %25 = arith.extf %0 : vector<16x256xbf16> to vector<16x256xf32>
    %26 = arith.addf %24, %25 : vector<16x256xf32>
    %c0_14 = arith.constant 0 : index
    %c0_15 = arith.constant 0 : index
    %27 = vector.load %arg6[%c0_14, %c0_15] : memref<1x256xf32, #tpu.memory_space<vmem>>, vector<1x256xf32>
    %c0_16 = arith.constant 0 : index
    %c0_17 = arith.constant 0 : index
    %28 = vector.load %arg7[%c0_16, %c0_17] : memref<1x256xf32, #tpu.memory_space<vmem>>, vector<1x256xf32>
    %cst_18 = arith.constant dense<0.000000e+00> : vector<16xf32>
    %29 = vector.multi_reduction <add>, %26, %cst_18 [1] : vector<16x256xf32> to vector<16xf32>
    %30 = vector.shape_cast %29 : vector<16xf32> to vector<16x1xf32>
    %cst_19 = arith.constant 2.560000e+02 : f32
    %31 = vector.broadcast %cst_19 : f32 to vector<16x1xf32>
    %32 = arith.divf %30, %31 : vector<16x1xf32>
    %33 = vector.broadcast %32 : vector<16x1xf32> to vector<16x256xf32>
    %34 = arith.subf %26, %33 : vector<16x256xf32>
    %35 = arith.mulf %34, %34 : vector<16x256xf32>
    %cst_20 = arith.constant dense<0.000000e+00> : vector<16xf32>
    %36 = vector.multi_reduction <add>, %35, %cst_20 [1] : vector<16x256xf32> to vector<16xf32>
    %37 = vector.shape_cast %36 : vector<16xf32> to vector<16x1xf32>
    %cst_21 = arith.constant 2.560000e+02 : f32
    %38 = vector.broadcast %cst_21 : f32 to vector<16x1xf32>
    %39 = arith.divf %37, %38 : vector<16x1xf32>
    %40 = vector.broadcast %32 : vector<16x1xf32> to vector<16x256xf32>
    %41 = arith.subf %26, %40 : vector<16x256xf32>
    %cst_22 = arith.constant 9.99999996E-13 : f32
    %42 = vector.broadcast %cst_22 : f32 to vector<16x1xf32>
    %43 = arith.addf %39, %42 : vector<16x1xf32>
    %44 = math.rsqrt %43 : vector<16x1xf32>
    %45 = vector.broadcast %44 : vector<16x1xf32> to vector<16x256xf32>
    %46 = arith.mulf %41, %45 : vector<16x256xf32>
    %47 = vector.broadcast %27 : vector<1x256xf32> to vector<16x256xf32>
    %48 = arith.mulf %46, %47 : vector<16x256xf32>
    %49 = vector.broadcast %28 : vector<1x256xf32> to vector<16x256xf32>
    %50 = arith.addf %48, %49 : vector<16x256xf32>
    %51 = arith.truncf %50 : vector<16x256xf32> to vector<16x256xbf16>
    %c0_23 = arith.constant 0 : index
    %c0_24 = arith.constant 0 : index
    %52 = vector.load %arg8[%c0_23, %c0_24] : memref<16x256xbf16, #tpu.memory_space<vmem>>, vector<16x256xbf16>
    tpu.vector_store %arg8[%c0_23, %c0_24], %51 {strides = array<i32>} : memref<16x256xbf16, #tpu.memory_space<vmem>>, vector<16x256xbf16>,
    return
  }
  func.func @transform_0(%arg0: i32) -> (i32, i32) {
    %c0_i32 = arith.constant 0 : i32
    %c0_i32_0 = arith.constant 0 : i32
    return %arg0, %c0_i32 : i32, i32
  }
  func.func @transform_1(%arg0: i32) -> (i32, i32) {
    %c0_i32 = arith.constant 0 : i32
    %c0_i32_0 = arith.constant 0 : i32
    %c0_i32_1 = arith.constant 0 : i32
    return %c0_i32, %c0_i32_0 : i32, i32
  }
  func.func @transform_2(%arg0: i32) -> (i32, i32) {
    %c0_i32 = arith.constant 0 : i32
    %c0_i32_0 = arith.constant 0 : i32
    %c0_i32_1 = arith.constant 0 : i32
    return %c0_i32, %c0_i32_0 : i32, i32
  }
  func.func @transform_3(%arg0: i32) -> (i32, i32) {
    %c0_i32 = arith.constant 0 : i32
    %c0_i32_0 = arith.constant 0 : i32
    %c0_i32_1 = arith.constant 0 : i32
    return %c0_i32, %c0_i32_0 : i32, i32
  }
  func.func @transform_4(%arg0: i32) -> (i32, i32) {
    %c0_i32 = arith.constant 0 : i32
    %c0_i32_0 = arith.constant 0 : i32
    %c0_i32_1 = arith.constant 0 : i32
    return %c0_i32, %c0_i32_0 : i32, i32
  }
  func.func @transform_5(%arg0: i32) -> (i32, i32) {
    %c0_i32 = arith.constant 0 : i32
    %c0_i32_0 = arith.constant 0 : i32
    %c0_i32_1 = arith.constant 0 : i32
    return %c0_i32, %c0_i32_0 : i32, i32
  }
  func.func @transform_6(%arg0: i32) -> (i32, i32) {
    %c0_i32 = arith.constant 0 : i32
    %c0_i32_0 = arith.constant 0 : i32
    %c0_i32_1 = arith.constant 0 : i32
    return %c0_i32, %c0_i32_0 : i32, i32
  }
  func.func @transform_7(%arg0: i32) -> (i32, i32) {
    %c0_i32 = arith.constant 0 : i32
    %c0_i32_0 = arith.constant 0 : i32
    return %arg0, %c0_i32 : i32, i32
  }
}

module attributes {stable_mosaic.version = 11 : i64} {
  func.func @_dense_kernel(%arg0: i32, %arg1: memref<16x256xbf16, #tpu.memory_space<vmem>>, %arg2: memref<256x768xbf16, #tpu.memory_space<vmem>>, %arg3: memref<1x768xf32, #tpu.memory_space<vmem>>, %arg4: memref<16x768xbf16, #tpu.memory_space<vmem>>) attributes {dimension_semantics = [#tpu.dimension_semantics<parallel>], iteration_bounds = array<i64: 1>, scalar_prefetch = 0 : i64, scratch_operands = 0 : i64, tpu.core_type = #tpu.core_type<tc>, window_params = [{transform_indices = @transform_0, window_bounds = array<i64: 16, 256>}, {pipeline_mode = #tpu.pipeline_mode<synchronous>, transform_indices = @transform_1, window_bounds = array<i64: 256, 768>}, {pipeline_mode = #tpu.pipeline_mode<synchronous>, transform_indices = @transform_2, window_bounds = array<i64: 1, 768>}, {transform_indices = @transform_3, window_bounds = array<i64: 16, 768>}]} {
    %c0 = arith.constant 0 : index
    %c0_0 = arith.constant 0 : index
    %0 = vector.load %arg1[%c0, %c0_0] : memref<16x256xbf16, #tpu.memory_space<vmem>>, vector<16x256xbf16>
    %c0_1 = arith.constant 0 : index
    %c0_2 = arith.constant 0 : index
    %1 = vector.load %arg2[%c0_1, %c0_2] : memref<256x768xbf16, #tpu.memory_space<vmem>>, vector<256x768xbf16>
    %cst = arith.constant dense<0.000000e+00> : vector<16x768xf32>
    %2 = tpu.matmul %0, %1, %cst {dimension_numbers = #tpu.dot_dimension_numbers<[1], [0], [0], [1], [0, 0, 1, 1], [], []>} : vector<16x256xbf16>, vector<256x768xbf16>, vector<16x768xf32> -> vector<16x768xf32>
    %c0_3 = arith.constant 0 : index
    %c0_4 = arith.constant 0 : index
    %3 = vector.load %arg3[%c0_3, %c0_4] : memref<1x768xf32, #tpu.memory_space<vmem>>, vector<1x768xf32>
    %4 = vector.broadcast %3 : vector<1x768xf32> to vector<16x768xf32>
    %5 = arith.addf %2, %4 : vector<16x768xf32>
    %6 = arith.truncf %5 : vector<16x768xf32> to vector<16x768xbf16>
    %c0_5 = arith.constant 0 : index
    %c0_6 = arith.constant 0 : index
    %7 = vector.load %arg4[%c0_5, %c0_6] : memref<16x768xbf16, #tpu.memory_space<vmem>>, vector<16x768xbf16>
    tpu.vector_store %arg4[%c0_5, %c0_6], %6 {strides = array<i32>} : memref<16x768xbf16, #tpu.memory_space<vmem>>, vector<16x768xbf16>,
    return
  }
  func.func @transform_0(%arg0: i32) -> (i32, i32) {
    %c0_i32 = arith.constant 0 : i32
    %c0_i32_0 = arith.constant 0 : i32
    return %arg0, %c0_i32 : i32, i32
  }
  func.func @transform_1(%arg0: i32) -> (i32, i32) {
    %c0_i32 = arith.constant 0 : i32
    %c0_i32_0 = arith.constant 0 : i32
    %c0_i32_1 = arith.constant 0 : i32
    return %c0_i32, %c0_i32_0 : i32, i32
  }
  func.func @transform_2(%arg0: i32) -> (i32, i32) {
    %c0_i32 = arith.constant 0 : i32
    %c0_i32_0 = arith.constant 0 : i32
    %c0_i32_1 = arith.constant 0 : i32
    return %c0_i32, %c0_i32_0 : i32, i32
  }
  func.func @transform_3(%arg0: i32) -> (i32, i32) {
    %c0_i32 = arith.constant 0 : i32
    %c0_i32_0 = arith.constant 0 : i32
    return %arg0, %c0_i32 : i32, i32
  }
}

module attributes {stable_mosaic.version = 11 : i64} {
  func.func @_ffn_kernel(%arg0: i32, %arg1: memref<16x256xbf16, #tpu.memory_space<vmem>>, %arg2: memref<256x1024xbf16, #tpu.memory_space<vmem>>, %arg3: memref<1x1024xf32, #tpu.memory_space<vmem>>, %arg4: memref<1024x256xbf16, #tpu.memory_space<vmem>>, %arg5: memref<1x256xf32, #tpu.memory_space<vmem>>, %arg6: memref<1x256xf32, #tpu.memory_space<vmem>>, %arg7: memref<1x256xf32, #tpu.memory_space<vmem>>, %arg8: memref<16x256xbf16, #tpu.memory_space<vmem>>) attributes {dimension_semantics = [#tpu.dimension_semantics<parallel>], iteration_bounds = array<i64: 1>, scalar_prefetch = 0 : i64, scratch_operands = 0 : i64, tpu.core_type = #tpu.core_type<tc>, window_params = [{transform_indices = @transform_0, window_bounds = array<i64: 16, 256>}, {pipeline_mode = #tpu.pipeline_mode<synchronous>, transform_indices = @transform_1, window_bounds = array<i64: 256, 1024>}, {pipeline_mode = #tpu.pipeline_mode<synchronous>, transform_indices = @transform_2, window_bounds = array<i64: 1, 1024>}, {pipeline_mode = #tpu.pipeline_mode<synchronous>, transform_indices = @transform_3, window_bounds = array<i64: 1024, 256>}, {pipeline_mode = #tpu.pipeline_mode<synchronous>, transform_indices = @transform_4, window_bounds = array<i64: 1, 256>}, {pipeline_mode = #tpu.pipeline_mode<synchronous>, transform_indices = @transform_5, window_bounds = array<i64: 1, 256>}, {pipeline_mode = #tpu.pipeline_mode<synchronous>, transform_indices = @transform_6, window_bounds = array<i64: 1, 256>}, {transform_indices = @transform_7, window_bounds = array<i64: 16, 256>}]} {
    %c0 = arith.constant 0 : index
    %c0_0 = arith.constant 0 : index
    %0 = vector.load %arg1[%c0, %c0_0] : memref<16x256xbf16, #tpu.memory_space<vmem>>, vector<16x256xbf16>
    %c0_1 = arith.constant 0 : index
    %c0_2 = arith.constant 0 : index
    %1 = vector.load %arg2[%c0_1, %c0_2] : memref<256x1024xbf16, #tpu.memory_space<vmem>>, vector<256x1024xbf16>
    %cst = arith.constant dense<0.000000e+00> : vector<16x1024xf32>
    %2 = tpu.matmul %0, %1, %cst {dimension_numbers = #tpu.dot_dimension_numbers<[1], [0], [0], [1], [0, 0, 1, 1], [], []>} : vector<16x256xbf16>, vector<256x1024xbf16>, vector<16x1024xf32> -> vector<16x1024xf32>
    %c0_3 = arith.constant 0 : index
    %c0_4 = arith.constant 0 : index
    %3 = vector.load %arg3[%c0_3, %c0_4] : memref<1x1024xf32, #tpu.memory_space<vmem>>, vector<1x1024xf32>
    %4 = vector.broadcast %3 : vector<1x1024xf32> to vector<16x1024xf32>
    %5 = arith.addf %2, %4 : vector<16x1024xf32>
    %6 = arith.mulf %5, %5 : vector<16x1024xf32>
    %7 = arith.mulf %5, %6 : vector<16x1024xf32>
    %cst_5 = arith.constant 4.471500e-02 : f32
    %8 = vector.broadcast %cst_5 : f32 to vector<16x1024xf32>
    %9 = arith.mulf %8, %7 : vector<16x1024xf32>
    %10 = arith.addf %5, %9 : vector<16x1024xf32>
    %cst_6 = arith.constant 0.797884583 : f32
    %11 = vector.broadcast %cst_6 : f32 to vector<16x1024xf32>
    %12 = arith.mulf %11, %10 : vector<16x1024xf32>
    %13 = math.tanh %12 : vector<16x1024xf32>
    %cst_7 = arith.constant 1.000000e+00 : f32
    %14 = vector.broadcast %cst_7 : f32 to vector<16x1024xf32>
    %15 = arith.addf %14, %13 : vector<16x1024xf32>
    %cst_8 = arith.constant 5.000000e-01 : f32
    %16 = vector.broadcast %cst_8 : f32 to vector<16x1024xf32>
    %17 = arith.mulf %16, %15 : vector<16x1024xf32>
    %18 = arith.mulf %5, %17 : vector<16x1024xf32>
    %19 = arith.truncf %18 : vector<16x1024xf32> to vector<16x1024xbf16>
    %c0_9 = arith.constant 0 : index
    %c0_10 = arith.constant 0 : index
    %20 = vector.load %arg4[%c0_9, %c0_10] : memref<1024x256xbf16, #tpu.memory_space<vmem>>, vector<1024x256xbf16>
    %cst_11 = arith.constant dense<0.000000e+00> : vector<16x256xf32>
    %21 = tpu.matmul %19, %20, %cst_11 {dimension_numbers = #tpu.dot_dimension_numbers<[1], [0], [0], [1], [0, 0, 1, 1], [], []>} : vector<16x1024xbf16>, vector<1024x256xbf16>, vector<16x256xf32> -> vector<16x256xf32>
    %c0_12 = arith.constant 0 : index
    %c0_13 = arith.constant 0 : index
    %22 = vector.load %arg5[%c0_12, %c0_13] : memref<1x256xf32, #tpu.memory_space<vmem>>, vector<1x256xf32>
    %23 = vector.broadcast %22 : vector<1x256xf32> to vector<16x256xf32>
    %24 = arith.addf %21, %23 : vector<16x256xf32>
    %25 = arith.extf %0 : vector<16x256xbf16> to vector<16x256xf32>
    %26 = arith.addf %24, %25 : vector<16x256xf32>
    %c0_14 = arith.constant 0 : index
    %c0_15 = arith.constant 0 : index
    %27 = vector.load %arg6[%c0_14, %c0_15] : memref<1x256xf32, #tpu.memory_space<vmem>>, vector<1x256xf32>
    %c0_16 = arith.constant 0 : index
    %c0_17 = arith.constant 0 : index
    %28 = vector.load %arg7[%c0_16, %c0_17] : memref<1x256xf32, #tpu.memory_space<vmem>>, vector<1x256xf32>
    %cst_18 = arith.constant dense<0.000000e+00> : vector<16xf32>
    %29 = vector.multi_reduction <add>, %26, %cst_18 [1] : vector<16x256xf32> to vector<16xf32>
    %30 = vector.shape_cast %29 : vector<16xf32> to vector<16x1xf32>
    %cst_19 = arith.constant 2.560000e+02 : f32
    %31 = vector.broadcast %cst_19 : f32 to vector<16x1xf32>
    %32 = arith.divf %30, %31 : vector<16x1xf32>
    %33 = vector.broadcast %32 : vector<16x1xf32> to vector<16x256xf32>
    %34 = arith.subf %26, %33 : vector<16x256xf32>
    %35 = arith.mulf %34, %34 : vector<16x256xf32>
    %cst_20 = arith.constant dense<0.000000e+00> : vector<16xf32>
    %36 = vector.multi_reduction <add>, %35, %cst_20 [1] : vector<16x256xf32> to vector<16xf32>
    %37 = vector.shape_cast %36 : vector<16xf32> to vector<16x1xf32>
    %cst_21 = arith.constant 2.560000e+02 : f32
    %38 = vector.broadcast %cst_21 : f32 to vector<16x1xf32>
    %39 = arith.divf %37, %38 : vector<16x1xf32>
    %40 = vector.broadcast %32 : vector<16x1xf32> to vector<16x256xf32>
    %41 = arith.subf %26, %40 : vector<16x256xf32>
    %cst_22 = arith.constant 9.99999996E-13 : f32
    %42 = vector.broadcast %cst_22 : f32 to vector<16x1xf32>
    %43 = arith.addf %39, %42 : vector<16x1xf32>
    %44 = math.rsqrt %43 : vector<16x1xf32>
    %45 = vector.broadcast %44 : vector<16x1xf32> to vector<16x256xf32>
    %46 = arith.mulf %41, %45 : vector<16x256xf32>
    %47 = vector.broadcast %27 : vector<1x256xf32> to vector<16x256xf32>
    %48 = arith.mulf %46, %47 : vector<16x256xf32>
    %49 = vector.broadcast %28 : vector<1x256xf32> to vector<16x256xf32>
    %50 = arith.addf %48, %49 : vector<16x256xf32>
    %51 = arith.truncf %50 : vector<16x256xf32> to vector<16x256xbf16>
    %c0_23 = arith.constant 0 : index
    %c0_24 = arith.constant 0 : index
    %52 = vector.load %arg8[%c0_23, %c0_24] : memref<16x256xbf16, #tpu.memory_space<vmem>>, vector<16x256xbf16>
    tpu.vector_store %arg8[%c0_23, %c0_24], %51 {strides = array<i32>} : memref<16x256xbf16, #tpu.memory_space<vmem>>, vector<16x256xbf16>,
    return
  }
  func.func @transform_0(%arg0: i32) -> (i32, i32) {
    %c0_i32 = arith.constant 0 : i32
    %c0_i32_0 = arith.constant 0 : i32
    return %arg0, %c0_i32 : i32, i32
  }
  func.func @transform_1(%arg0: i32) -> (i32, i32) {
    %c0_i32 = arith.constant 0 : i32
    %c0_i32_0 = arith.constant 0 : i32
    %c0_i32_1 = arith.constant 0 : i32
    return %c0_i32, %c0_i32_0 : i32, i32
  }
  func.func @transform_2(%arg0: i32) -> (i32, i32) {
    %c0_i32 = arith.constant 0 : i32
    %c0_i32_0 = arith.constant 0 : i32
    %c0_i32_1 = arith.constant 0 : i32
    return %c0_i32, %c0_i32_0 : i32, i32
  }
  func.func @transform_3(%arg0: i32) -> (i32, i32) {
    %c0_i32 = arith.constant 0 : i32
    %c0_i32_0 = arith.constant 0 : i32
    %c0_i32_1 = arith.constant 0 : i32
    return %c0_i32, %c0_i32_0 : i32, i32
  }
  func.func @transform_4(%arg0: i32) -> (i32, i32) {
    %c0_i32 = arith.constant 0 : i32
    %c0_i32_0 = arith.constant 0 : i32
    %c0_i32_1 = arith.constant 0 : i32
    return %c0_i32, %c0_i32_0 : i32, i32
  }
  func.func @transform_5(%arg0: i32) -> (i32, i32) {
    %c0_i32 = arith.constant 0 : i32
    %c0_i32_0 = arith.constant 0 : i32
    %c0_i32_1 = arith.constant 0 : i32
    return %c0_i32, %c0_i32_0 : i32, i32
  }
  func.func @transform_6(%arg0: i32) -> (i32, i32) {
    %c0_i32 = arith.constant 0 : i32
    %c0_i32_0 = arith.constant 0 : i32
    %c0_i32_1 = arith.constant 0 : i32
    return %c0_i32, %c0_i32_0 : i32, i32
  }
  func.func @transform_7(%arg0: i32) -> (i32, i32) {
    %c0_i32 = arith.constant 0 : i32
    %c0_i32_0 = arith.constant 0 : i32
    return %arg0, %c0_i32 : i32, i32
  }
}

module attributes {stable_mosaic.version = 11 : i64} {
  func.func @_head_kernel(%arg0: memref<2x8x256xbf16, #tpu.memory_space<vmem>>, %arg1: memref<256x6xbf16, #tpu.memory_space<vmem>>, %arg2: memref<1x6xf32, #tpu.memory_space<vmem>>, %arg3: memref<2x6xf32, #tpu.memory_space<vmem>>) attributes {dimension_semantics = [], scalar_prefetch = 0 : i64, scratch_operands = 0 : i64, tpu.core_type = #tpu.core_type<tc>} {
    %c0 = arith.constant 0 : index
    %c0_0 = arith.constant 0 : index
    %c0_1 = arith.constant 0 : index
    %0 = vector.load %arg0[%c0, %c0_0, %c0_1] : memref<2x8x256xbf16, #tpu.memory_space<vmem>>, vector<2x8x256xbf16>
    %1 = arith.extf %0 : vector<2x8x256xbf16> to vector<2x8x256xf32>
    %cst = arith.constant dense<0.000000e+00> : vector<2x256xf32>
    %2 = vector.multi_reduction <add>, %1, %cst [1] : vector<2x8x256xf32> to vector<2x256xf32>
    %cst_2 = arith.constant 8.000000e+00 : f32
    %3 = vector.broadcast %cst_2 : f32 to vector<2x256xf32>
    %4 = arith.divf %2, %3 : vector<2x256xf32>
    %c0_3 = arith.constant 0 : index
    %c0_4 = arith.constant 0 : index
    %5 = vector.load %arg1[%c0_3, %c0_4] : memref<256x6xbf16, #tpu.memory_space<vmem>>, vector<256x6xbf16>
    %6 = arith.extf %5 : vector<256x6xbf16> to vector<256x6xf32>
    %cst_5 = arith.constant dense<0.000000e+00> : vector<2x6xf32>
    %7 = tpu.matmul %4, %6, %cst_5 {dimension_numbers = #tpu.dot_dimension_numbers<[1], [0], [0], [1], [0, 0, 1, 1], [], []>} : vector<2x256xf32>, vector<256x6xf32>, vector<2x6xf32> -> vector<2x6xf32>
    %c0_6 = arith.constant 0 : index
    %c0_7 = arith.constant 0 : index
    %8 = vector.load %arg2[%c0_6, %c0_7] : memref<1x6xf32, #tpu.memory_space<vmem>>, vector<1x6xf32>
    %9 = vector.broadcast %8 : vector<1x6xf32> to vector<2x6xf32>
    %10 = arith.addf %7, %9 : vector<2x6xf32>
    %11 = arith.negf %10 : vector<2x6xf32>
    %12 = math.exp %11 : vector<2x6xf32>
    %cst_8 = arith.constant 1.000000e+00 : f32
    %13 = vector.broadcast %cst_8 : f32 to vector<2x6xf32>
    %14 = arith.addf %13, %12 : vector<2x6xf32>
    %15 = arith.divf %13, %14 : vector<2x6xf32>
    %c0_9 = arith.constant 0 : index
    %c0_10 = arith.constant 0 : index
    %16 = vector.load %arg3[%c0_9, %c0_10] : memref<2x6xf32, #tpu.memory_space<vmem>>, vector<2x6xf32>
    tpu.vector_store %arg3[%c0_9, %c0_10], %15 {strides = array<i32>} : memref<2x6xf32, #tpu.memory_space<vmem>>, vector<2x6xf32>,
    return
  }
}

</mosaic_0001>

<llo_original>
// kernel: electra_class_forward.10
$region0: #{electra_class_forward.10}
  #allocation0 [shape = 'u32[]', space=smem, size = 0x4, offset = 0x4, fixed_abs, tag = 'smem constant byte address 0x4 - core index']
  #allocation1 [shape = 'u32[144,128]{1,0:T(1,128)}', space=vmem, size = 0x12000, scoped, tag = 'internal scratch']
  %s0 = inlined_call_operand.vmem [shape: f32[16,128], index: 0, kind: input, shape index: {}]
  %s1 = inlined_call_operand.vmem [shape: f32[1,128], index: 1, kind: input, shape index: {}]
  %s2 = inlined_call_operand.vmem [shape: f32[1,128], index: 2, kind: input, shape index: {}]
  %s3 = inlined_call_operand.vmem [shape: bf16[128,256], index: 3, kind: input, shape index: {}]
  %s4 = inlined_call_operand.vmem [shape: f32[1,256], index: 4, kind: input, shape index: {}]
  %s5 = inlined_call_operand.vmem [shape: bf16[16,256], index: 5, kind: output, shape index: {}]
  %s6 = sld [smem:[#allocation0]]
  $region30: #{electra_class_forward.10} parent=0
    _
  %s8 = ssub.s32 1, %s6
  %s9 = scalar_select 0, %s8, %s6
  // Predicated region
  $region2: #{electra_class_forward.10} parent=0 // pred_check
    _
  $region3: #{electra_class_forward.10} parent=0 // pred_check_branch
    %11 = sbr.rel (0) target = $region5
  $region4: #{electra_class_forward.10} parent=0 // pred_region
    _
  $region5: #{electra_class_forward.10} parent=0 // pred_fallthru
    _
  // Predicated region
  $region6: #{electra_class_forward.10} parent=0 // pred_check
    _
  $region7: #{electra_class_forward.10} parent=0 // pred_check_branch
    %13 = sbr.rel (0) target = $region9
  $region8: #{electra_class_forward.10} parent=0 // pred_region
    _
  $region9: #{electra_class_forward.10} parent=0 // pred_fallthru
    _
  // Predicated region
  $region10: #{electra_class_forward.10} parent=0 // pred_check
    _
  $region11: #{electra_class_forward.10} parent=0 // pred_check_branch
    %15 = sbr.rel (0) target = $region13
  $region12: #{electra_class_forward.10} parent=0 // pred_region
    _
  $region13: #{electra_class_forward.10} parent=0 // pred_fallthru
    _
  // Predicated region
  $region14: #{electra_class_forward.10} parent=0 // pred_check
    _
  $region15: #{electra_class_forward.10} parent=0 // pred_check_branch
    %17 = sbr.rel (0) target = $region17
  $region16: #{electra_class_forward.10} parent=0 // pred_region
    _
  $region17: #{electra_class_forward.10} parent=0 // pred_fallthru
    _
  // Predicated region
  $region18: #{electra_class_forward.10} parent=0 // pred_check
    _
  $region19: #{electra_class_forward.10} parent=0 // pred_check_branch
    %19 = sbr.rel (0) target = $region21
  $region20: #{electra_class_forward.10} parent=0 // pred_region
    _
  $region21: #{electra_class_forward.10} parent=0 // pred_fallthru
    _
  %v21 = vld [vmem:[%s0] sm:$0xff]
  %v22 = vld [vmem:[%s0 + $0x8] sm:$0xff]
  %v23 = vld [vmem:[%s1] sm:$0x1]
  %v24 = vld [vmem:[%s2] sm:$0x1]
  %25 = vadd.xlane.f32.xlu0 %v21
  %v26 = vpop.xlane.xlu0 %25
  %27 = vadd.xlane.f32.xlu0 %v22
  %v28 = vpop.xlane.xlu0 %27
  %v29 = vrcp.pop 128.0
  %v30 = vmul.f32 %v26, %v29
  %v31 = vmul.f32 %v28, %v29
  %v32 = vsub.f32 %v21, %v30
  %v33 = vsub.f32 %v22, %v31
  %v34 = vmul.f32 %v32, %v32
  %v35 = vmul.f32 %v33, %v33
  %36 = vadd.xlane.f32.xlu0 %v34
  %v37 = vpop.xlane.xlu0 %36
  %38 = vadd.xlane.f32.xlu0 %v35
  %v39 = vpop.xlane.xlu0 %38
  %v40 = vmul.f32 %v37, %v29
  %v41 = vmul.f32 %v39, %v29
  %v42 = vadd.f32 %v40, 1e-12
  %v43 = vadd.f32 %v41, 1e-12
  %v44 = vrsqrt.pop %v42
  %v45 = vrsqrt.pop %v43
  %v46 = vmul.f32 %v32, %v44
  %v47 = vmul.f32 %v33, %v45
  %v49 = vlaneseq
  %v50 = vshrl.u32 %v49, 7
  %v51 = vsub.s32 0, %v50
  %v52 = vrot.slane %v23, %v51
  %v54 = vmul.f32 %v46, %v52
  %v55 = vmul.f32 %v47, %v52
  %v57 = vlaneseq
  %v58 = vshrl.u32 %v57, 7
  %v59 = vsub.s32 0, %v58
  %v60 = vrot.slane %v24, %v59
  %v62 = vadd.f32 %v54, %v60
  %v63 = vadd.f32 %v55, %v60
  %v64 = vpack.c.bf16 %v63, %v62
  %v65 = vld [vmem:[%s3] sm:$0xff]
  %v66 = vld [vmem:[%s3 + $0x8] sm:$0xff]
  %v67 = vld [vmem:[%s3 + $0x10] sm:$0xff]
  %v68 = vld [vmem:[%s3 + $0x18] sm:$0xff]
  %v69 = vld [vmem:[%s3 + $0x20] sm:$0xff]
  %v70 = vld [vmem:[%s3 + $0x28] sm:$0xff]
  %v71 = vld [vmem:[%s3 + $0x30] sm:$0xff]
  %v72 = vld [vmem:[%s3 + $0x38] sm:$0xff]
  %v73 = vld [vmem:[%s3 + $0x40] sm:$0xff]
  %v74 = vld [vmem:[%s3 + $0x48] sm:$0xff]
  %v75 = vld [vmem:[%s3 + $0x50] sm:$0xff]
  %v76 = vld [vmem:[%s3 + $0x58] sm:$0xff]
  %v77 = vld [vmem:[%s3 + $0x60] sm:$0xff]
  %v78 = vld [vmem:[%s3 + $0x68] sm:$0xff]
  %v79 = vld [vmem:[%s3 + $0x70] sm:$0xff]
  %v80 = vld [vmem:[%s3 + $0x78] sm:$0xff]
  %v81 = vld [vmem:[%s4] sm:$0x3]
  %v83 = vlaneseq
  %v84 = vshrl.u32 %v83, 7
  %v85 = vsub.s32 0, %v84
  %v86 = vrot.slane %v81, %v85
  %v87 = vlaneseq
  %v88 = vshrl.u32 %v87, 7
  %v89 = vsub.s32 1, %v88
  %v90 = vrot.slane %v81, %v89
  %v109 = vunpack.c.l.b16 %v65
  %v110 = vunpack.c.h.b16 %v65
  %v111 = vunpack.c.l.b16 %v66
  %v112 = vunpack.c.h.b16 %v66
  %v113 = vunpack.c.l.b16 %v67
  %v114 = vunpack.c.h.b16 %v67
  %v115 = vunpack.c.l.b16 %v68
  %v116 = vunpack.c.h.b16 %v68
  %v117 = vunpack.c.l.b16 %v69
  %v118 = vunpack.c.h.b16 %v69
  %v119 = vunpack.c.l.b16 %v70
  %v120 = vunpack.c.h.b16 %v70
  %v121 = vunpack.c.l.b16 %v71
  %v122 = vunpack.c.h.b16 %v71
  %v123 = vunpack.c.l.b16 %v72
  %v124 = vunpack.c.h.b16 %v72
  %v125 = vunpack.c.l.b16 %v73
  %v126 = vunpack.c.h.b16 %v73
  %v127 = vunpack.c.l.b16 %v74
  %v128 = vunpack.c.h.b16 %v74
  %v129 = vunpack.c.l.b16 %v75
  %v130 = vunpack.c.h.b16 %v75
  %v131 = vunpack.c.l.b16 %v76
  %v132 = vunpack.c.h.b16 %v76
  %v133 = vunpack.c.l.b16 %v77
  %v134 = vunpack.c.h.b16 %v77
  %v135 = vunpack.c.l.b16 %v78
  %v136 = vunpack.c.h.b16 %v78
  %v137 = vunpack.c.l.b16 %v79
  %v138 = vunpack.c.h.b16 %v79
  %v139 = vunpack.c.l.b16 %v80
  %v140 = vunpack.c.h.b16 %v80
  %v141 = vpack.c.b16 %v111, %v109
  %v142 = vpack.c.b16 %v112, %v110
  %v143 = vpack.c.b16 %v115, %v113
  %v144 = vpack.c.b16 %v116, %v114
  %v145 = vpack.c.b16 %v119, %v117
  %v146 = vpack.c.b16 %v120, %v118
  %v147 = vpack.c.b16 %v123, %v121
  %v148 = vpack.c.b16 %v124, %v122
  %v149 = vpack.c.b16 %v127, %v125
  %v150 = vpack.c.b16 %v128, %v126
  %v151 = vpack.c.b16 %v131, %v129
  %v152 = vpack.c.b16 %v132, %v130
  %v153 = vpack.c.b16 %v135, %v133
  %v154 = vpack.c.b16 %v136, %v134
  %v155 = vpack.c.b16 %v139, %v137
  %v156 = vpack.c.b16 %v140, %v138
  %173 = vmatprep.subr.bf16.mxu0 %v142
  %174 = vmatpush1.bf16.msra.mxu0 %v141
  %175 = vmatprep.subr.bf16.mxu0 %v144
  %176 = vmatpush1.bf16.msra.mxu0 %v143
  %177 = vmatprep.subr.bf16.mxu0 %v146
  %178 = vmatpush1.bf16.msra.mxu0 %v145
  %179 = vmatprep.subr.bf16.mxu0 %v148
  %180 = vmatpush1.bf16.msra.mxu0 %v147
  %181 = vmatprep.subr.bf16.mxu0 %v150
  %182 = vmatpush1.bf16.msra.mxu0 %v149
  %183 = vmatprep.subr.bf16.mxu0 %v152
  %184 = vmatpush1.bf16.msra.mxu0 %v151
  %185 = vmatprep.subr.bf16.mxu0 %v154
  %186 = vmatpush1.bf16.msra.mxu0 %v153
  %187 = vmatprep.subr.bf16.mxu0 %v156
  %188 = vmatpush1.bf16.msra.mxu0 %v155
  %189 = vmatprep.subr.bf16.mxu0 0
  %190 = vmatpush1.bf16.msra.mxu0 0
  %191 = vmatprep.subr.bf16.mxu0 0
  %192 = vmatpush1.bf16.msra.mxu0 0
  %193 = vmatprep.subr.bf16.mxu0 0
  %194 = vmatpush1.bf16.msra.mxu0 0
  %195 = vmatprep.subr.bf16.mxu0 0
  %196 = vmatpush1.bf16.msra.mxu0 0
  %197 = vmatprep.subr.bf16.mxu0 0
  %198 = vmatpush1.bf16.msra.mxu0 0
  %199 = vmatprep.subr.bf16.mxu0 0
  %200 = vmatpush1.bf16.msra.mxu0 0
  %201 = vmatprep.subr.bf16.mxu0 0
  %202 = vmatpush1.bf16.msra.mxu0 0
  %203 = vmatprep.subr.bf16.mxu0 0
  %204 = vmatpush1.bf16.msra.mxu0 0
  %205 = vmatprep.mubr.bf16.mxu0 0
  %206 = vmatmul.mubr.bf16.gmra.mrb[0].mxu0 %v64
  %v207 = vpop.f32.mrb[0].mxu0
  %v208 = vadd.f32 %v86, %v207
  %v209 = vpop.f32.mrb[0].mxu0
  %v210 = vadd.f32 %v90, %v209
  %v211 = vpop.f32.mrb[0].mxu0
  %v212 = vadd.f32 %v86, %v211
  %v213 = vpop.f32.mrb[0].mxu0
  %v214 = vadd.f32 %v90, %v213
  %215 = vdwg.mxu0
  %v216 = vpack.c.bf16 %v212, %v208
  %v217 = vpack.c.bf16 %v214, %v210
  %v220 = vunpack.c.l.b16 %v216
  %v221 = vunpack.c.l.b16 %v217
  %v222 = vunpack.c.h.b16 %v216
  %v223 = vunpack.c.h.b16 %v217
  %v224 = vpack.c.b16 %v221, %v220
  %v225 = vpack.c.b16 %v223, %v222
  %228 = vst [vmem:[%s5] sm:$0xff] %v224
  %229 = vst [vmem:[%s5 + $0x8] sm:$0xff] %v225
  // Predicated region
  $region22: #{electra_class_forward.10} parent=0 // pred_check
    _
  $region23: #{electra_class_forward.10} parent=0 // pred_check_branch
    %231 = sbr.rel (0) target = $region25
  $region24: #{electra_class_forward.10} parent=0 // pred_region
    _
  $region25: #{electra_class_forward.10} parent=0 // pred_fallthru
    _
  // Predicated region
  $region26: #{electra_class_forward.10} parent=0 // pred_check
    _
  $region27: #{electra_class_forward.10} parent=0 // pred_check_branch
    %233 = sbr.rel (0) target = $region29
  $region28: #{electra_class_forward.10} parent=0 // pred_region
    _
  $region29: #{electra_class_forward.10} parent=0 // pred_fallthru
    _

// kernel: electra_class_forward.11
$region0: #{electra_class_forward.11}
  #allocation0 [shape = 'u32[]', space=smem, size = 0x4, offset = 0x4, fixed_abs, tag = 'smem constant byte address 0x4 - core index']
  #allocation1 [shape = 'u32[144,128]{1,0:T(1,128)}', space=vmem, size = 0x12000, scoped, tag = 'internal scratch']
  %s0 = inlined_call_operand.vmem [shape: bf16[16,256], index: 0, kind: input, shape index: {}]
  %s1 = inlined_call_operand.hbm [shape: bf16[256,768], index: 1, kind: input, shape index: {}]
  %s2 = inlined_call_operand.vmem [shape: f32[1,768], index: 2, kind: input, shape index: {}]
  %s3 = inlined_call_operand.vmem [shape: bf16[16,768], index: 3, kind: output, shape index: {}]
  %s4 = sld [smem:[#allocation0]]
  $region26: #{electra_class_forward.11} parent=0
    _
  %s6 = ssub.s32 1, %s4
  %s7 = scalar_select 0, %s6, %s4
  $region1: #{electra_class_forward.11} parent=0
    #allocation2 [shape = 'u8[393216]{0}', space=vmem, size = 0x60000, scoped, tag = 'input window, operand 1, single buffered']
    #allocation3 [shape = 's32[1]{0}', space=sflag, size = 0x4, scoped, tag = 'scoped memory for electra_class_forward.11']
    %8 = vsyncpa [#allocation3], 0
    // Predicated region
    $region2: #{electra_class_forward.11} parent=1 // pred_check
      _
    $region3: #{electra_class_forward.11} parent=1 // pred_check_branch
      %10 = sbr.rel (0) target = $region5
    $region4: #{electra_class_forward.11} parent=1 // pred_region
      _
    $region5: #{electra_class_forward.11} parent=1 // pred_fallthru
      _
    // Predicated region
    $region6: #{electra_class_forward.11} parent=1 // pred_check
      _
    $region7: #{electra_class_forward.11} parent=1 // pred_check_branch
      %12 = sbr.rel (0) target = $region9
    $region8: #{electra_class_forward.11} parent=1 // pred_region
      %s14 = ssub.s32 12288, 12288
      %15 = vsyncadd [#allocation3], %s14
      %s16 = sshll.u32 [#allocation2], 4
      %s17 = int_to_ptr.vmem [resolvable:$true] %s16
      %22 = dma.hbm_to_vmem [thread:$0]  %s1, 12288, %s17, [#allocation3], 384, 384, 24
    $region9: #{electra_class_forward.11} parent=1 // pred_fallthru
      _
    // Predicated region
    $region10: #{electra_class_forward.11} parent=1 // pred_check
      _
    $region11: #{electra_class_forward.11} parent=1 // pred_check_branch
      %24 = sbr.rel (0) target = $region13
    $region12: #{electra_class_forward.11} parent=1 // pred_region
      _
    $region13: #{electra_class_forward.11} parent=1 // pred_fallthru
      _
    // Predicated region
    $region14: #{electra_class_forward.11} parent=1 // pred_check
      _
    $region15: #{electra_class_forward.11} parent=1 // pred_check_branch
      %26 = sbr.rel (0) target = $region17
    $region16: #{electra_class_forward.11} parent=1 // pred_region
      %27 = dma.done [#allocation3], 12288
    $region17: #{electra_class_forward.11} parent=1 // pred_fallthru
      _
    %v28 = vld [vmem:[%s0] sm:$0xff]
    %v29 = vld [vmem:[%s0 + $0x8] sm:$0xff]
    %v30 = vld [vmem:[#allocation2] sm:$0xff]
    %v31 = vld [vmem:[#allocation2 + $0x8] sm:$0xff]
    %v32 = vld [vmem:[#allocation2 + $0x10] sm:$0xff]
    %v33 = vld [vmem:[#allocation2 + $0x18] sm:$0xff]
    %v34 = vld [vmem:[#allocation2 + $0x20] sm:$0xff]
    %v35 = vld [vmem:[#allocation2 + $0x28] sm:$0xff]
    %v36 = vld [vmem:[#allocation2 + $0x30] sm:$0xff]
    %v37 = vld [vmem:[#allocation2 + $0x38] sm:$0xff]
    %v38 = vld [vmem:[#allocation2 + $0x40] sm:$0xff]
    %v39 = vld [vmem:[#allocation2 + $0x48] sm:$0xff]
    %v40 = vld [vmem:[#allocation2 + $0x50] sm:$0xff]
    %v41 = vld [vmem:[#allocation2 + $0x58] sm:$0xff]
    %v42 = vld [vmem:[#allocation2 + $0x60] sm:$0xff]
    %v43 = vld [vmem:[#allocation2 + $0x68] sm:$0xff]
    %v44 = vld [vmem:[#allocation2 + $0x70] sm:$0xff]
    %v45 = vld [vmem:[#allocation2 + $0x78] sm:$0xff]
    %v46 = vld [vmem:[#allocation2 + $0x80] sm:$0xff]
    %v47 = vld [vmem:[#allocation2 + $0x88] sm:$0xff]
    %v48 = vld [vmem:[#allocation2 + $0x90] sm:$0xff]
    %v49 = vld [vmem:[#allocation2 + $0x98] sm:$0xff]
    %v50 = vld [vmem:[#allocation2 + $0xa0] sm:$0xff]
    %v51 = vld [vmem:[#allocation2 + $0xa8] sm:$0xff]
    %v52 = vld [vmem:[#allocation2 + $0xb0] sm:$0xff]
    %v53 = vld [vmem:[#allocation2 + $0xb8] sm:$0xff]
    %v54 = vld [vmem:[#allocation2 + $0xc0] sm:$0xff]
    %v55 = vld [vmem:[#allocation2 + $0xc8] sm:$0xff]
    %v56 = vld [vmem:[#allocation2 + $0xd0] sm:$0xff]
    %v57 = vld [vmem:[#allocation2 + $0xd8] sm:$0xff]
    %v58 = vld [vmem:[#allocation2 + $0xe0] sm:$0xff]
    %v59 = vld [vmem:[#allocation2 + $0xe8] sm:$0xff]
    %v60 = vld [vmem:[#allocation2 + $0xf0] sm:$0xff]
    %v61 = vld [vmem:[#allocation2 + $0xf8] sm:$0xff]
    %v62 = vld [vmem:[#allocation2 + $0x100] sm:$0xff]
    %v63 = vld [vmem:[#allocation2 + $0x108] sm:$0xff]
    %v64 = vld [vmem:[#allocation2 + $0x110] sm:$0xff]
    %v65 = vld [vmem:[#allocation2 + $0x118] sm:$0xff]
    %v66 = vld [vmem:[#allocation2 + $0x120] sm:$0xff]
    %v67 = vld [vmem:[#allocation2 + $0x128] sm:$0xff]
    %v68 = vld [vmem:[#allocation2 + $0x130] sm:$0xff]
    %v69 = vld [vmem:[#allocation2 + $0x138] sm:$0xff]
    %v70 = vld [vmem:[#allocation2 + $0x140] sm:$0xff]
    %v71 = vld [vmem:[#allocation2 + $0x148] sm:$0xff]
    %v72 = vld [vmem:[#allocation2 + $0x150] sm:$0xff]
    %v73 = vld [vmem:[#allocation2 + $0x158] sm:$0xff]
    %v74 = vld [vmem:[#allocation2 + $0x160] sm:$0xff]
    %v75 = vld [vmem:[#allocation2 + $0x168] sm:$0xff]
    %v76 = vld [vmem:[#allocation2 + $0x170] sm:$0xff]
    %v77 = vld [vmem:[#allocation2 + $0x178] sm:$0xff]
    %v78 = vld [vmem:[#allocation2 + $0x180] sm:$0xff]
    %v79 = vld [vmem:[#allocation2 + $0x188] sm:$0xff]
    %v80 = vld [vmem:[#allocation2 + $0x190] sm:$0xff]
    %v81 = vld [vmem:[#allocation2 + $0x198] sm:$0xff]
    %v82 = vld [vmem:[#allocation2 + $0x1a0] sm:$0xff]
    %v83 = vld [vmem:[#allocation2 + $0x1a8] sm:$0xff]
    %v84 = vld [vmem:[#allocation2 + $0x1b0] sm:$0xff]
    %v85 = vld [vmem:[#allocation2 + $0x1b8] sm:$0xff]
    %v86 = vld [vmem:[#allocation2 + $0x1c0] sm:$0xff]
    %v87 = vld [vmem:[#allocation2 + $0x1c8] sm:$0xff]
    %v88 = vld [vmem:[#allocation2 + $0x1d0] sm:$0xff]
    %v89 = vld [vmem:[#allocation2 + $0x1d8] sm:$0xff]
    %v90 = vld [vmem:[#allocation2 + $0x1e0] sm:$0xff]
    %v91 = vld [vmem:[#allocation2 + $0x1e8] sm:$0xff]
    %v92 = vld [vmem:[#allocation2 + $0x1f0] sm:$0xff]
    %v93 = vld [vmem:[#allocation2 + $0x1f8] sm:$0xff]
    %v94 = vld [vmem:[#allocation2 + $0x200] sm:$0xff]
    %v95 = vld [vmem:[#allocation2 + $0x208] sm:$0xff]
    %v96 = vld [vmem:[#allocation2 + $0x210] sm:$0xff]
    %v97 = vld [vmem:[#allocation2 + $0x218] sm:$0xff]
    %v98 = vld [vmem:[#allocation2 + $0x220] sm:$0xff]
    %v99 = vld [vmem:[#allocation2 + $0x228] sm:$0xff]
    %v100 = vld [vmem:[#allocation2 + $0x230] sm:$0xff]
    %v101 = vld [vmem:[#allocation2 + $0x238] sm:$0xff]
    %v102 = vld [vmem:[#allocation2 + $0x240] sm:$0xff]
    %v103 = vld [vmem:[#allocation2 + $0x248] sm:$0xff]
    %v104 = vld [vmem:[#allocation2 + $0x250] sm:$0xff]
    %v105 = vld [vmem:[#allocation2 + $0x258] sm:$0xff]
    %v106 = vld [vmem:[#allocation2 + $0x260] sm:$0xff]
    %v107 = vld [vmem:[#allocation2 + $0x268] sm:$0xff]
    %v108 = vld [vmem:[#allocation2 + $0x270] sm:$0xff]
    %v109 = vld [vmem:[#allocation2 + $0x278] sm:$0xff]
    %v110 = vld [vmem:[#allocation2 + $0x280] sm:$0xff]
    %v111 = vld [vmem:[#allocation2 + $0x288] sm:$0xff]
    %v112 = vld [vmem:[#allocation2 + $0x290] sm:$0xff]
    %v113 = vld [vmem:[#allocation2 + $0x298] sm:$0xff]
    %v114 = vld [vmem:[#allocation2 + $0x2a0] sm:$0xff]
    %v115 = vld [vmem:[#allocation2 + $0x2a8] sm:$0xff]
    %v116 = vld [vmem:[#allocation2 + $0x2b0] sm:$0xff]
    %v117 = vld [vmem:[#allocation2 + $0x2b8] sm:$0xff]
    %v118 = vld [vmem:[#allocation2 + $0x2c0] sm:$0xff]
    %v119 = vld [vmem:[#allocation2 + $0x2c8] sm:$0xff]
    %v120 = vld [vmem:[#allocation2 + $0x2d0] sm:$0xff]
    %v121 = vld [vmem:[#allocation2 + $0x2d8] sm:$0xff]
    %v122 = vld [vmem:[#allocation2 + $0x2e0] sm:$0xff]
    %v123 = vld [vmem:[#allocation2 + $0x2e8] sm:$0xff]
    %v124 = vld [vmem:[#allocation2 + $0x2f0] sm:$0xff]
    %v125 = vld [vmem:[#allocation2 + $0x2f8] sm:$0xff]
    %v126 = vld [vmem:[%s2] sm:$0x3f]
    %v128 = vlaneseq
    %v129 = vshrl.u32 %v128, 7
    %v130 = vsub.s32 0, %v129
    %v131 = vrot.slane %v126, %v130
    %v132 = vlaneseq
    %v133 = vshrl.u32 %v132, 7
    %v134 = vsub.s32 1, %v133
    %v135 = vrot.slane %v126, %v134
    %v136 = vlaneseq
    %v137 = vshrl.u32 %v136, 7
    %v138 = vsub.s32 2, %v137
    %v139 = vrot.slane %v126, %v138
    %v140 = vlaneseq
    %v141 = vshrl.u32 %v140, 7
    %v142 = vsub.s32 3, %v141
    %v143 = vrot.slane %v126, %v142
    %v144 = vlaneseq
    %v145 = vshrl.u32 %v144, 7
    %v146 = vsub.s32 4, %v145
    %v147 = vrot.slane %v126, %v146
    %v148 = vlaneseq
    %v149 = vshrl.u32 %v148, 7
    %v150 = vsub.s32 5, %v149
    %v151 = vrot.slane %v126, %v150
    %v160 = vunpack.c.l.b16 %v28
    %v161 = vunpack.c.h.b16 %v28
    %v162 = vunpack.c.l.b16 %v29
    %v163 = vunpack.c.h.b16 %v29
    %v164 = vpack.c.b16 %v162, %v160
    %v165 = vpack.c.b16 %v163, %v161
    %v264 = vunpack.c.l.b16 %v30
    %v265 = vunpack.c.h.b16 %v30
    %v266 = vunpack.c.l.b16 %v31
    %v267 = vunpack.c.h.b16 %v31
    %v268 = vunpack.c.l.b16 %v32
    %v269 = vunpack.c.h.b16 %v32
    %v270 = vunpack.c.l.b16 %v33
    %v271 = vunpack.c.h.b16 %v33
    %v272 = vunpack.c.l.b16 %v34
    %v273 = vunpack.c.h.b16 %v34
    %v274 = vunpack.c.l.b16 %v35
    %v275 = vunpack.c.h.b16 %v35
    %v276 = vunpack.c.l.b16 %v36
    %v277 = vunpack.c.h.b16 %v36
    %v278 = vunpack.c.l.b16 %v37
    %v279 = vunpack.c.h.b16 %v37
    %v280 = vunpack.c.l.b16 %v38
    %v281 = vunpack.c.h.b16 %v38
    %v282 = vunpack.c.l.b16 %v39
    %v283 = vunpack.c.h.b16 %v39
    %v284 = vunpack.c.l.b16 %v40
    %v285 = vunpack.c.h.b16 %v40
    %v286 = vunpack.c.l.b16 %v41
    %v287 = vunpack.c.h.b16 %v41
    %v288 = vunpack.c.l.b16 %v42
    %v289 = vunpack.c.h.b16 %v42
    %v290 = vunpack.c.l.b16 %v43
    %v291 = vunpack.c.h.b16 %v43
    %v292 = vunpack.c.l.b16 %v44
    %v293 = vunpack.c.h.b16 %v44
    %v294 = vunpack.c.l.b16 %v45
    %v295 = vunpack.c.h.b16 %v45
    %v296 = vunpack.c.l.b16 %v46
    %v297 = vunpack.c.h.b16 %v46
    %v298 = vunpack.c.l.b16 %v47
    %v299 = vunpack.c.h.b16 %v47
    %v300 = vunpack.c.l.b16 %v48
    %v301 = vunpack.c.h.b16 %v48
    %v302 = vunpack.c.l.b16 %v49
    %v303 = vunpack.c.h.b16 %v49
    %v304 = vunpack.c.l.b16 %v50
    %v305 = vunpack.c.h.b16 %v50
    %v306 = vunpack.c.l.b16 %v51
    %v307 = vunpack.c.h.b16 %v51
    %v308 = vunpack.c.l.b16 %v52
    %v309 = vunpack.c.h.b16 %v52
    %v310 = vunpack.c.l.b16 %v53
    %v311 = vunpack.c.h.b16 %v53
    %v312 = vunpack.c.l.b16 %v54
    %v313 = vunpack.c.h.b16 %v54
    %v314 = vunpack.c.l.b16 %v55
    %v315 = vunpack.c.h.b16 %v55
    %v316 = vunpack.c.l.b16 %v56
    %v317 = vunpack.c.h.b16 %v56
    %v318 = vunpack.c.l.b16 %v57
    %v319 = vunpack.c.h.b16 %v57
    %v320 = vunpack.c.l.b16 %v58
    %v321 = vunpack.c.h.b16 %v58
    %v322 = vunpack.c.l.b16 %v59
    %v323 = vunpack.c.h.b16 %v59
    %v324 = vunpack.c.l.b16 %v60
    %v325 = vunpack.c.h.b16 %v60
    %v326 = vunpack.c.l.b16 %v61
    %v327 = vunpack.c.h.b16 %v61
    %v328 = vunpack.c.l.b16 %v62
    %v329 = vunpack.c.h.b16 %v62
    %v330 = vunpack.c.l.b16 %v63
    %v331 = vunpack.c.h.b16 %v63
    %v332 = vunpack.c.l.b16 %v64
    %v333 = vunpack.c.h.b16 %v64
    %v334 = vunpack.c.l.b16 %v65
    %v335 = vunpack.c.h.b16 %v65
    %v336 = vunpack.c.l.b16 %v66
    %v337 = vunpack.c.h.b16 %v66
    %v338 = vunpack.c.l.b16 %v67
    %v339 = vunpack.c.h.b16 %v67
    %v340 = vunpack.c.l.b16 %v68
    %v341 = vunpack.c.h.b16 %v68
    %v342 = vunpack.c.l.b16 %v69
    %v343 = vunpack.c.h.b16 %v69
    %v344 = vunpack.c.l.b16 %v70
    %v345 = vunpack.c.h.b16 %v70
    %v346 = vunpack.c.l.b16 %v71
    %v347 = vunpack.c.h.b16 %v71
    %v348 = vunpack.c.l.b16 %v72
    %v349 = vunpack.c.h.b16 %v72
    %v350 = vunpack.c.l.b16 %v73
    %v351 = vunpack.c.h.b16 %v73
    %v352 = vunpack.c.l.b16 %v74
    %v353 = vunpack.c.h.b16 %v74
    %v354 = vunpack.c.l.b16 %v75
    %v355 = vunpack.c.h.b16 %v75
    %v356 = vunpack.c.l.b16 %v76
    %v357 = vunpack.c.h.b16 %v76
    %v358 = vunpack.c.l.b16 %v77
    %v359 = vunpack.c.h.b16 %v77
    %v360 = vunpack.c.l.b16 %v78
    %v361 = vunpack.c.h.b16 %v78
    %v362 = vunpack.c.l.b16 %v79
    %v363 = vunpack.c.h.b16 %v79
    %v364 = vunpack.c.l.b16 %v80
    %v365 = vunpack.c.h.b16 %v80
    %v366 = vunpack.c.l.b16 %v81
    %v367 = vunpack.c.h.b16 %v81
    %v368 = vunpack.c.l.b16 %v82
    %v369 = vunpack.c.h.b16 %v82
    %v370 = vunpack.c.l.b16 %v83
    %v371 = vunpack.c.h.b16 %v83
    %v372 = vunpack.c.l.b16 %v84
    %v373 = vunpack.c.h.b16 %v84
    %v374 = vunpack.c.l.b16 %v85
    %v375 = vunpack.c.h.b16 %v85
    %v376 = vunpack.c.l.b16 %v86
    %v377 = vunpack.c.h.b16 %v86
    %v378 = vunpack.c.l.b16 %v87
    %v379 = vunpack.c.h.b16 %v87
    %v380 = vunpack.c.l.b16 %v88
    %v381 = vunpack.c.h.b16 %v88
    %v382 = vunpack.c.l.b16 %v89
    %v383 = vunpack.c.h.b16 %v89
    %v384 = vunpack.c.l.b16 %v90
    %v385 = vunpack.c.h.b16 %v90
    %v386 = vunpack.c.l.b16 %v91
    %v387 = vunpack.c.h.b16 %v91
    %v388 = vunpack.c.l.b16 %v92
    %v389 = vunpack.c.h.b16 %v92
    %v390 = vunpack.c.l.b16 %v93
    %v391 = vunpack.c.h.b16 %v93
    %v392 = vunpack.c.l.b16 %v94
    %v393 = vunpack.c.h.b16 %v94
    %v394 = vunpack.c.l.b16 %v95
    %v395 = vunpack.c.h.b16 %v95
    %v396 = vunpack.c.l.b16 %v96
    %v397 = vunpack.c.h.b16 %v96
    %v398 = vunpack.c.l.b16 %v97
    %v399 = vunpack.c.h.b16 %v97
    %v400 = vunpack.c.l.b16 %v98
    %v401 = vunpack.c.h.b16 %v98
    %v402 = vunpack.c.l.b16 %v99
    %v403 = vunpack.c.h.b16 %v99
    %v404 = vunpack.c.l.b16 %v100
    %v405 = vunpack.c.h.b16 %v100
    %v406 = vunpack.c.l.b16 %v101
    %v407 = vunpack.c.h.b16 %v101
    %v408 = vunpack.c.l.b16 %v102
    %v409 = vunpack.c.h.b16 %v102
    %v410 = vunpack.c.l.b16 %v103
    %v411 = vunpack.c.h.b16 %v103
    %v412 = vunpack.c.l.b16 %v104
    %v413 = vunpack.c.h.b16 %v104
    %v414 = vunpack.c.l.b16 %v105
    %v415 = vunpack.c.h.b16 %v105
    %v416 = vunpack.c.l.b16 %v106
    %v417 = vunpack.c.h.b16 %v106
    %v418 = vunpack.c.l.b16 %v107
    %v419 = vunpack.c.h.b16 %v107
    %v420 = vunpack.c.l.b16 %v108
    %v421 = vunpack.c.h.b16 %v108
    %v422 = vunpack.c.l.b16 %v109
    %v423 = vunpack.c.h.b16 %v109
    %v424 = vunpack.c.l.b16 %v110
    %v425 = vunpack.c.h.b16 %v110
    %v426 = vunpack.c.l.b16 %v111
    %v427 = vunpack.c.h.b16 %v111
    %v428 = vunpack.c.l.b16 %v112
    %v429 = vunpack.c.h.b16 %v112
    %v430 = vunpack.c.l.b16 %v113
    %v431 = vunpack.c.h.b16 %v113
    %v432 = vunpack.c.l.b16 %v114
    %v433 = vunpack.c.h.b16 %v114
    %v434 = vunpack.c.l.b16 %v115
    %v435 = vunpack.c.h.b16 %v115
    %v436 = vunpack.c.l.b16 %v116
    %v437 = vunpack.c.h.b16 %v116
    %v438 = vunpack.c.l.b16 %v117
    %v439 = vunpack.c.h.b16 %v117
    %v440 = vunpack.c.l.b16 %v118
    %v441 = vunpack.c.h.b16 %v118
    %v442 = vunpack.c.l.b16 %v119
    %v443 = vunpack.c.h.b16 %v119
    %v444 = vunpack.c.l.b16 %v120
    %v445 = vunpack.c.h.b16 %v120
    %v446 = vunpack.c.l.b16 %v121
    %v447 = vunpack.c.h.b16 %v121
    %v448 = vunpack.c.l.b16 %v122
    %v449 = vunpack.c.h.b16 %v122
    %v450 = vunpack.c.l.b16 %v123
    %v451 = vunpack.c.h.b16 %v123
    %v452 = vunpack.c.l.b16 %v124
    %v453 = vunpack.c.h.b16 %v124
    %v454 = vunpack.c.l.b16 %v125
    %v455 = vunpack.c.h.b16 %v125
    %v456 = vpack.c.b16 %v270, %v264
    %v457 = vpack.c.b16 %v271, %v265
    %v458 = vpack.c.b16 %v272, %v266
    %v459 = vpack.c.b16 %v273, %v267
    %v460 = vpack.c.b16 %v274, %v268
    %v461 = vpack.c.b16 %v275, %v269
    %v462 = vpack.c.b16 %v282, %v276
    %v463 = vpack.c.b16 %v283, %v277
    %v464 = vpack.c.b16 %v284, %v278
    %v465 = vpack.c.b16 %v285, %v279
    %v466 = vpack.c.b16 %v286, %v280
    %v467 = vpack.c.b16 %v287, %v281
    %v468 = vpack.c.b16 %v294, %v288
    %v469 = vpack.c.b16 %v295, %v289
    %v470 = vpack.c.b16 %v296, %v290
    %v471 = vpack.c.b16 %v297, %v291
    %v472 = vpack.c.b16 %v298, %v292
    %v473 = vpack.c.b16 %v299, %v293
    %v474 = vpack.c.b16 %v306, %v300
    %v475 = vpack.c.b16 %v307, %v301
    %v476 = vpack.c.b16 %v308, %v302
    %v477 = vpack.c.b16 %v309, %v303
    %v478 = vpack.c.b16 %v310, %v304
    %v479 = vpack.c.b16 %v311, %v305
    %v480 = vpack.c.b16 %v318, %v312
    %v481 = vpack.c.b16 %v319, %v313
    %v482 = vpack.c.b16 %v320, %v314
    %v483 = vpack.c.b16 %v321, %v315
    %v484 = vpack.c.b16 %v322, %v316
    %v485 = vpack.c.b16 %v323, %v317
    %v486 = vpack.c.b16 %v330, %v324
    %v487 = vpack.c.b16 %v331, %v325
    %v488 = vpack.c.b16 %v332, %v326
    %v489 = vpack.c.b16 %v333, %v327
    %v490 = vpack.c.b16 %v334, %v328
    %v491 = vpack.c.b16 %v335, %v329
    %v492 = vpack.c.b16 %v342, %v336
    %v493 = vpack.c.b16 %v343, %v337
    %v494 = vpack.c.b16 %v344, %v338
    %v495 = vpack.c.b16 %v345, %v339
    %v496 = vpack.c.b16 %v346, %v340
    %v497 = vpack.c.b16 %v347, %v341
    %v498 = vpack.c.b16 %v354, %v348
    %v499 = vpack.c.b16 %v355, %v349
    %v500 = vpack.c.b16 %v356, %v350
    %v501 = vpack.c.b16 %v357, %v351
    %v502 = vpack.c.b16 %v358, %v352
    %v503 = vpack.c.b16 %v359, %v353
    %v504 = vpack.c.b16 %v366, %v360
    %v505 = vpack.c.b16 %v367, %v361
    %v506 = vpack.c.b16 %v368, %v362
    %v507 = vpack.c.b16 %v369, %v363
    %v508 = vpack.c.b16 %v370, %v364
    %v509 = vpack.c.b16 %v371, %v365
    %v510 = vpack.c.b16 %v378, %v372
    %v511 = vpack.c.b16 %v379, %v373
    %v512 = vpack.c.b16 %v380, %v374
    %v513 = vpack.c.b16 %v381, %v375
    %v514 = vpack.c.b16 %v382, %v376
    %v515 = vpack.c.b16 %v383, %v377
    %v516 = vpack.c.b16 %v390, %v384
    %v517 = vpack.c.b16 %v391, %v385
    %v518 = vpack.c.b16 %v392, %v386
    %v519 = vpack.c.b16 %v393, %v387
    %v520 = vpack.c.b16 %v394, %v388
    %v521 = vpack.c.b16 %v395, %v389
    %v522 = vpack.c.b16 %v402, %v396
    %v523 = vpack.c.b16 %v403, %v397
    %v524 = vpack.c.b16 %v404, %v398
    %v525 = vpack.c.b16 %v405, %v399
    %v526 = vpack.c.b16 %v406, %v400
    %v527 = vpack.c.b16 %v407, %v401
    %v528 = vpack.c.b16 %v414, %v408
    %v529 = vpack.c.b16 %v415, %v409
    %v530 = vpack.c.b16 %v416, %v410
    %v531 = vpack.c.b16 %v417, %v411
    %v532 = vpack.c.b16 %v418, %v412
    %v533 = vpack.c.b16 %v419, %v413
    %v534 = vpack.c.b16 %v426, %v420
    %v535 = vpack.c.b16 %v427, %v421
    %v536 = vpack.c.b16 %v428, %v422
    %v537 = vpack.c.b16 %v429, %v423
    %v538 = vpack.c.b16 %v430, %v424
    %v539 = vpack.c.b16 %v431, %v425
    %v540 = vpack.c.b16 %v438, %v432
    %v541 = vpack.c.b16 %v439, %v433
    %v542 = vpack.c.b16 %v440, %v434
    %v543 = vpack.c.b16 %v441, %v435
    %v544 = vpack.c.b16 %v442, %v436
    %v545 = vpack.c.b16 %v443, %v437
    %v546 = vpack.c.b16 %v450, %v444
    %v547 = vpack.c.b16 %v451, %v445
    %v548 = vpack.c.b16 %v452, %v446
    %v549 = vpack.c.b16 %v453, %v447
    %v550 = vpack.c.b16 %v454, %v448
    %v551 = vpack.c.b16 %v455, %v449
    %648 = vmatprep.subr.bf16.mxu0 %v457
    %649 = vmatpush1.bf16.msra.mxu0 %v456
    %650 = vmatprep.subr.bf16.mxu0 %v463
    %651 = vmatpush1.bf16.msra.mxu0 %v462
    %652 = vmatprep.subr.bf16.mxu0 %v469
    %653 = vmatpush1.bf16.msra.mxu0 %v468
    %654 = vmatprep.subr.bf16.mxu0 %v475
    %655 = vmatpush1.bf16.msra.mxu0 %v474
    %656 = vmatprep.subr.bf16.mxu0 %v481
    %657 = vmatpush1.bf16.msra.mxu0 %v480
    %658 = vmatprep.subr.bf16.mxu0 %v487
    %659 = vmatpush1.bf16.msra.mxu0 %v486
    %660 = vmatprep.subr.bf16.mxu0 %v493
    %661 = vmatpush1.bf16.msra.mxu0 %v492
    %662 = vmatprep.subr.bf16.mxu0 %v499
    %663 = vmatpush1.bf16.msra.mxu0 %v498
    %664 = vmatprep.subr.bf16.mxu0 %v505
    %665 = vmatpush1.bf16.msra.mxu0 %v504
    %666 = vmatprep.subr.bf16.mxu0 %v511
    %667 = vmatpush1.bf16.msra.mxu0 %v510
    %668 = vmatprep.subr.bf16.mxu0 %v517
    %669 = vmatpush1.bf16.msra.mxu0 %v516
    %670 = vmatprep.subr.bf16.mxu0 %v523
    %671 = vmatpush1.bf16.msra.mxu0 %v522
    %672 = vmatprep.subr.bf16.mxu0 %v529
    %673 = vmatpush1.bf16.msra.mxu0 %v528
    %674 = vmatprep.subr.bf16.mxu0 %v535
    %675 = vmatpush1.bf16.msra.mxu0 %v534
    %676 = vmatprep.subr.bf16.mxu0 %v541
    %677 = vmatpush1.bf16.msra.mxu0 %v540
    %678 = vmatprep.subr.bf16.mxu0 %v547
    %679 = vmatpush1.bf16.msra.mxu0 %v546
    %680 = vmatprep.mubr.bf16.mxu0 %v165
    %681 = vmatmul.mubr.bf16.gmra.mrb[0].mxu0 %v164
    %v682 = vpop.f32.mrb[0].mxu0
    %v683 = vadd.f32 %v131, %v682
    %v684 = vpop.f32.mrb[0].mxu0
    %v685 = vadd.f32 %v135, %v684
    %v686 = vpop.f32.mrb[0].mxu0
    %v687 = vadd.f32 %v131, %v686
    %v688 = vpop.f32.mrb[0].mxu0
    %v689 = vadd.f32 %v135, %v688
    %690 = vdwg.mxu0
    %691 = vmatprep.subr.bf16.mxu0 %v459
    %692 = vmatpush1.bf16.msra.mxu0 %v458
    %693 = vmatprep.subr.bf16.mxu0 %v465
    %694 = vmatpush1.bf16.msra.mxu0 %v464
    %695 = vmatprep.subr.bf16.mxu0 %v471
    %696 = vmatpush1.bf16.msra.mxu0 %v470
    %697 = vmatprep.subr.bf16.mxu0 %v477
    %698 = vmatpush1.bf16.msra.mxu0 %v476
    %699 = vmatprep.subr.bf16.mxu0 %v483
    %700 = vmatpush1.bf16.msra.mxu0 %v482
    %701 = vmatprep.subr.bf16.mxu0 %v489
    %702 = vmatpush1.bf16.msra.mxu0 %v488
    %703 = vmatprep.subr.bf16.mxu0 %v495
    %704 = vmatpush1.bf16.msra.mxu0 %v494
    %705 = vmatprep.subr.bf16.mxu0 %v501
    %706 = vmatpush1.bf16.msra.mxu0 %v500
    %707 = vmatprep.subr.bf16.mxu0 %v507
    %708 = vmatpush1.bf16.msra.mxu0 %v506
    %709 = vmatprep.subr.bf16.mxu0 %v513
    %710 = vmatpush1.bf16.msra.mxu0 %v512
    %711 = vmatprep.subr.bf16.mxu0 %v519
    %712 = vmatpush1.bf16.msra.mxu0 %v518
    %713 = vmatprep.subr.bf16.mxu0 %v525
    %714 = vmatpush1.bf16.msra.mxu0 %v524
    %715 = vmatprep.subr.bf16.mxu0 %v531
    %716 = vmatpush1.bf16.msra.mxu0 %v530
    %717 = vmatprep.subr.bf16.mxu0 %v537
    %718 = vmatpush1.bf16.msra.mxu0 %v536
    %719 = vmatprep.subr.bf16.mxu0 %v543
    %720 = vmatpush1.bf16.msra.mxu0 %v542
    %721 = vmatprep.subr.bf16.mxu0 %v549
    %722 = vmatpush1.bf16.msra.mxu0 %v548
    %723 = vmatprep.mubr.bf16.mxu0 %v165
    %724 = vmatmul.mubr.bf16.gmra.mrb[0].mxu0 %v164
    %v725 = vpop.f32.mrb[0].mxu0
    %v726 = vadd.f32 %v139, %v725
    %v727 = vpop.f32.mrb[0].mxu0
    %v728 = vadd.f32 %v143, %v727
    %v729 = vpop.f32.mrb[0].mxu0
    %v730 = vadd.f32 %v139, %v729
    %v731 = vpop.f32.mrb[0].mxu0
    %v732 = vadd.f32 %v143, %v731
    %733 = vdwg.mxu0
    %734 = vmatprep.subr.bf16.mxu0 %v461
    %735 = vmatpush1.bf16.msra.mxu0 %v460
    %736 = vmatprep.subr.bf16.mxu0 %v467
    %737 = vmatpush1.bf16.msra.mxu0 %v466
    %738 = vmatprep.subr.bf16.mxu0 %v473
    %739 = vmatpush1.bf16.msra.mxu0 %v472
    %740 = vmatprep.subr.bf16.mxu0 %v479
    %741 = vmatpush1.bf16.msra.mxu0 %v478
    %742 = vmatprep.subr.bf16.mxu0 %v485
    %743 = vmatpush1.bf16.msra.mxu0 %v484
    %744 = vmatprep.subr.bf16.mxu0 %v491
    %745 = vmatpush1.bf16.msra.mxu0 %v490
    %746 = vmatprep.subr.bf16.mxu0 %v497
    %747 = vmatpush1.bf16.msra.mxu0 %v496
    %748 = vmatprep.subr.bf16.mxu0 %v503
    %749 = vmatpush1.bf16.msra.mxu0 %v502
    %750 = vmatprep.subr.bf16.mxu0 %v509
    %751 = vmatpush1.bf16.msra.mxu0 %v508
    %752 = vmatprep.subr.bf16.mxu0 %v515
    %753 = vmatpush1.bf16.msra.mxu0 %v514
    %754 = vmatprep.subr.bf16.mxu0 %v521
    %755 = vmatpush1.bf16.msra.mxu0 %v520
    %756 = vmatprep.subr.bf16.mxu0 %v527
    %757 = vmatpush1.bf16.msra.mxu0 %v526
    %758 = vmatprep.subr.bf16.mxu0 %v533
    %759 = vmatpush1.bf16.msra.mxu0 %v532
    %760 = vmatprep.subr.bf16.mxu0 %v539
    %761 = vmatpush1.bf16.msra.mxu0 %v538
    %762 = vmatprep.subr.bf16.mxu0 %v545
    %763 = vmatpush1.bf16.msra.mxu0 %v544
    %764 = vmatprep.subr.bf16.mxu0 %v551
    %765 = vmatpush1.bf16.msra.mxu0 %v550
    %766 = vmatprep.mubr.bf16.mxu0 %v165
    %767 = vmatmul.mubr.bf16.gmra.mrb[0].mxu0 %v164
    %v768 = vpop.f32.mrb[0].mxu0
    %v769 = vadd.f32 %v147, %v768
    %v770 = vpop.f32.mrb[0].mxu0
    %v771 = vadd.f32 %v151, %v770
    %v772 = vpop.f32.mrb[0].mxu0
    %v773 = vadd.f32 %v147, %v772
    %v774 = vpop.f32.mrb[0].mxu0
    %v775 = vadd.f32 %v151, %v774
    %776 = vdwg.mxu0
    %v777 = vpack.c.bf16 %v687, %v683
    %v778 = vpack.c.bf16 %v689, %v685
    %v779 = vpack.c.bf16 %v730, %v726
    %v780 = vpack.c.bf16 %v732, %v728
    %v781 = vpack.c.bf16 %v773, %v769
    %v782 = vpack.c.bf16 %v775, %v771
    %v789 = vunpack.c.l.b16 %v777
    %v790 = vunpack.c.l.b16 %v778
    %v791 = vunpack.c.l.b16 %v779
    %v792 = vunpack.c.l.b16 %v780
    %v793 = vunpack.c.l.b16 %v781
    %v794 = vunpack.c.l.b16 %v782
    %v795 = vunpack.c.h.b16 %v777
    %v796 = vunpack.c.h.b16 %v778
    %v797 = vunpack.c.h.b16 %v779
    %v798 = vunpack.c.h.b16 %v780
    %v799 = vunpack.c.h.b16 %v781
    %v800 = vunpack.c.h.b16 %v782
    %v801 = vpack.c.b16 %v790, %v789
    %v802 = vpack.c.b16 %v792, %v791
    %v803 = vpack.c.b16 %v794, %v793
    %v804 = vpack.c.b16 %v796, %v795
    %v805 = vpack.c.b16 %v798, %v797
    %v806 = vpack.c.b16 %v800, %v799
    %813 = vst [vmem:[%s3] sm:$0xff] %v801
    %814 = vst [vmem:[%s3 + $0x8] sm:$0xff] %v802
    %815 = vst [vmem:[%s3 + $0x10] sm:$0xff] %v803
    %816 = vst [vmem:[%s3 + $0x18] sm:$0xff] %v804
    %817 = vst [vmem:[%s3 + $0x20] sm:$0xff] %v805
    %818 = vst [vmem:[%s3 + $0x28] sm:$0xff] %v806
    // Predicated region
    $region18: #{electra_class_forward.11} parent=1 // pred_check
      _
    $region19: #{electra_class_forward.11} parent=1 // pred_check_branch
      %820 = sbr.rel (0) target = $region21
    $region20: #{electra_class_forward.11} parent=1 // pred_region
      _
    $region21: #{electra_class_forward.11} parent=1 // pred_fallthru
      _
    // Predicated region
    $region22: #{electra_class_forward.11} parent=1 // pred_check
      _
    $region23: #{electra_class_forward.11} parent=1 // pred_check_branch
      %822 = sbr.rel (0) target = $region25
    $region24: #{electra_class_forward.11} parent=1 // pred_region
      _
    $region25: #{electra_class_forward.11} parent=1 // pred_fallthru
      _
    %823 = vsyncpa [#allocation3], 1

// kernel: electra_class_forward.13
$region0: #{electra_class_forward.13}
  #allocation0 [shape = 'u32[]', space=smem, size = 0x4, offset = 0x4, fixed_abs, tag = 'smem constant byte address 0x4 - core index']
  #allocation1 [shape = 'u32[144,128]{1,0:T(1,128)}', space=vmem, size = 0x12000, scoped, tag = 'internal scratch']
  %s0 = inlined_call_operand.vmem [shape: bf16[16,256], index: 0, kind: input, shape index: {}]
  %s1 = inlined_call_operand.vmem [shape: bf16[256,256], index: 1, kind: input, shape index: {}]
  %s2 = inlined_call_operand.vmem [shape: f32[1,256], index: 2, kind: input, shape index: {}]
  %s3 = inlined_call_operand.vmem [shape: bf16[16,256], index: 3, kind: input, shape index: {}]
  %s4 = inlined_call_operand.vmem [shape: f32[1,256], index: 4, kind: input, shape index: {}]
  %s5 = inlined_call_operand.vmem [shape: f32[1,256], index: 5, kind: input, shape index: {}]
  %s6 = inlined_call_operand.vmem [shape: bf16[16,256], index: 6, kind: output, shape index: {}]
  %s7 = sld [smem:[#allocation0]]
  $region34: #{electra_class_forward.13} parent=0
    _
  %s9 = ssub.s32 1, %s7
  %s10 = scalar_select 0, %s9, %s7
  // Predicated region
  $region2: #{electra_class_forward.13} parent=0 // pred_check
    _
  $region3: #{electra_class_forward.13} parent=0 // pred_check_branch
    %12 = sbr.rel (0) target = $region5
  $region4: #{electra_class_forward.13} parent=0 // pred_region
    _
  $region5: #{electra_class_forward.13} parent=0 // pred_fallthru
    _
  // Predicated region
  $region6: #{electra_class_forward.13} parent=0 // pred_check
    _
  $region7: #{electra_class_forward.13} parent=0 // pred_check_branch
    %14 = sbr.rel (0) target = $region9
  $region8: #{electra_class_forward.13} parent=0 // pred_region
    _
  $region9: #{electra_class_forward.13} parent=0 // pred_fallthru
    _
  // Predicated region
  $region10: #{electra_class_forward.13} parent=0 // pred_check
    _
  $region11: #{electra_class_forward.13} parent=0 // pred_check_branch
    %16 = sbr.rel (0) target = $region13
  $region12: #{electra_class_forward.13} parent=0 // pred_region
    _
  $region13: #{electra_class_forward.13} parent=0 // pred_fallthru
    _
  // Predicated region
  $region14: #{electra_class_forward.13} parent=0 // pred_check
    _
  $region15: #{electra_class_forward.13} parent=0 // pred_check_branch
    %18 = sbr.rel (0) target = $region17
  $region16: #{electra_class_forward.13} parent=0 // pred_region
    _
  $region17: #{electra_class_forward.13} parent=0 // pred_fallthru
    _
  // Predicated region
  $region18: #{electra_class_forward.13} parent=0 // pred_check
    _
  $region19: #{electra_class_forward.13} parent=0 // pred_check_branch
    %20 = sbr.rel (0) target = $region21
  $region20: #{electra_class_forward.13} parent=0 // pred_region
    _
  $region21: #{electra_class_forward.13} parent=0 // pred_fallthru
    _
  // Predicated region
  $region22: #{electra_class_forward.13} parent=0 // pred_check
    _
  $region23: #{electra_class_forward.13} parent=0 // pred_check_branch
    %22 = sbr.rel (0) target = $region25
  $region24: #{electra_class_forward.13} parent=0 // pred_region
    _
  $region25: #{electra_class_forward.13} parent=0 // pred_fallthru
    _
  %v23 = vld [vmem:[%s0] sm:$0xff]
  %v24 = vld [vmem:[%s0 + $0x8] sm:$0xff]
  %v25 = vld [vmem:[%s1] sm:$0xff]
  %v26 = vld [vmem:[%s1 + $0x8] sm:$0xff]
  %v27 = vld [vmem:[%s1 + $0x10] sm:$0xff]
  %v28 = vld [vmem:[%s1 + $0x18] sm:$0xff]
  %v29 = vld [vmem:[%s1 + $0x20] sm:$0xff]
  %v30 = vld [vmem:[%s1 + $0x28] sm:$0xff]
  %v31 = vld [vmem:[%s1 + $0x30] sm:$0xff]
  %v32 = vld [vmem:[%s1 + $0x38] sm:$0xff]
  %v33 = vld [vmem:[%s1 + $0x40] sm:$0xff]
  %v34 = vld [vmem:[%s1 + $0x48] sm:$0xff]
  %v35 = vld [vmem:[%s1 + $0x50] sm:$0xff]
  %v36 = vld [vmem:[%s1 + $0x58] sm:$0xff]
  %v37 = vld [vmem:[%s1 + $0x60] sm:$0xff]
  %v38 = vld [vmem:[%s1 + $0x68] sm:$0xff]
  %v39 = vld [vmem:[%s1 + $0x70] sm:$0xff]
  %v40 = vld [vmem:[%s1 + $0x78] sm:$0xff]
  %v41 = vld [vmem:[%s1 + $0x80] sm:$0xff]
  %v42 = vld [vmem:[%s1 + $0x88] sm:$0xff]
  %v43 = vld [vmem:[%s1 + $0x90] sm:$0xff]
  %v44 = vld [vmem:[%s1 + $0x98] sm:$0xff]
  %v45 = vld [vmem:[%s1 + $0xa0] sm:$0xff]
  %v46 = vld [vmem:[%s1 + $0xa8] sm:$0xff]
  %v47 = vld [vmem:[%s1 + $0xb0] sm:$0xff]
  %v48 = vld [vmem:[%s1 + $0xb8] sm:$0xff]
  %v49 = vld [vmem:[%s1 + $0xc0] sm:$0xff]
  %v50 = vld [vmem:[%s1 + $0xc8] sm:$0xff]
  %v51 = vld [vmem:[%s1 + $0xd0] sm:$0xff]
  %v52 = vld [vmem:[%s1 + $0xd8] sm:$0xff]
  %v53 = vld [vmem:[%s1 + $0xe0] sm:$0xff]
  %v54 = vld [vmem:[%s1 + $0xe8] sm:$0xff]
  %v55 = vld [vmem:[%s1 + $0xf0] sm:$0xff]
  %v56 = vld [vmem:[%s1 + $0xf8] sm:$0xff]
  %v57 = vld [vmem:[%s2] sm:$0x3]
  %v59 = vlaneseq
  %v60 = vshrl.u32 %v59, 7
  %v61 = vsub.s32 0, %v60
  %v62 = vrot.slane %v57, %v61
  %v63 = vlaneseq
  %v64 = vshrl.u32 %v63, 7
  %v65 = vsub.s32 1, %v64
  %v66 = vrot.slane %v57, %v65
  %v71 = vunpack.c.l.b16 %v23
  %v72 = vunpack.c.h.b16 %v23
  %v73 = vunpack.c.l.b16 %v24
  %v74 = vunpack.c.h.b16 %v24
  %v75 = vpack.c.b16 %v73, %v71
  %v76 = vpack.c.b16 %v74, %v72
  %v111 = vunpack.c.l.b16 %v25
  %v112 = vunpack.c.h.b16 %v25
  %v113 = vunpack.c.l.b16 %v26
  %v114 = vunpack.c.h.b16 %v26
  %v115 = vunpack.c.l.b16 %v27
  %v116 = vunpack.c.h.b16 %v27
  %v117 = vunpack.c.l.b16 %v28
  %v118 = vunpack.c.h.b16 %v28
  %v119 = vunpack.c.l.b16 %v29
  %v120 = vunpack.c.h.b16 %v29
  %v121 = vunpack.c.l.b16 %v30
  %v122 = vunpack.c.h.b16 %v30
  %v123 = vunpack.c.l.b16 %v31
  %v124 = vunpack.c.h.b16 %v31
  %v125 = vunpack.c.l.b16 %v32
  %v126 = vunpack.c.h.b16 %v32
  %v127 = vunpack.c.l.b16 %v33
  %v128 = vunpack.c.h.b16 %v33
  %v129 = vunpack.c.l.b16 %v34
  %v130 = vunpack.c.h.b16 %v34
  %v131 = vunpack.c.l.b16 %v35
  %v132 = vunpack.c.h.b16 %v35
  %v133 = vunpack.c.l.b16 %v36
  %v134 = vunpack.c.h.b16 %v36
  %v135 = vunpack.c.l.b16 %v37
  %v136 = vunpack.c.h.b16 %v37
  %v137 = vunpack.c.l.b16 %v38
  %v138 = vunpack.c.h.b16 %v38
  %v139 = vunpack.c.l.b16 %v39
  %v140 = vunpack.c.h.b16 %v39
  %v141 = vunpack.c.l.b16 %v40
  %v142 = vunpack.c.h.b16 %v40
  %v143 = vunpack.c.l.b16 %v41
  %v144 = vunpack.c.h.b16 %v41
  %v145 = vunpack.c.l.b16 %v42
  %v146 = vunpack.c.h.b16 %v42
  %v147 = vunpack.c.l.b16 %v43
  %v148 = vunpack.c.h.b16 %v43
  %v149 = vunpack.c.l.b16 %v44
  %v150 = vunpack.c.h.b16 %v44
  %v151 = vunpack.c.l.b16 %v45
  %v152 = vunpack.c.h.b16 %v45
  %v153 = vunpack.c.l.b16 %v46
  %v154 = vunpack.c.h.b16 %v46
  %v155 = vunpack.c.l.b16 %v47
  %v156 = vunpack.c.h.b16 %v47
  %v157 = vunpack.c.l.b16 %v48
  %v158 = vunpack.c.h.b16 %v48
  %v159 = vunpack.c.l.b16 %v49
  %v160 = vunpack.c.h.b16 %v49
  %v161 = vunpack.c.l.b16 %v50
  %v162 = vunpack.c.h.b16 %v50
  %v163 = vunpack.c.l.b16 %v51
  %v164 = vunpack.c.h.b16 %v51
  %v165 = vunpack.c.l.b16 %v52
  %v166 = vunpack.c.h.b16 %v52
  %v167 = vunpack.c.l.b16 %v53
  %v168 = vunpack.c.h.b16 %v53
  %v169 = vunpack.c.l.b16 %v54
  %v170 = vunpack.c.h.b16 %v54
  %v171 = vunpack.c.l.b16 %v55
  %v172 = vunpack.c.h.b16 %v55
  %v173 = vunpack.c.l.b16 %v56
  %v174 = vunpack.c.h.b16 %v56
  %v175 = vpack.c.b16 %v113, %v111
  %v176 = vpack.c.b16 %v114, %v112
  %v177 = vpack.c.b16 %v117, %v115
  %v178 = vpack.c.b16 %v118, %v116
  %v179 = vpack.c.b16 %v121, %v119
  %v180 = vpack.c.b16 %v122, %v120
  %v181 = vpack.c.b16 %v125, %v123
  %v182 = vpack.c.b16 %v126, %v124
  %v183 = vpack.c.b16 %v129, %v127
  %v184 = vpack.c.b16 %v130, %v128
  %v185 = vpack.c.b16 %v133, %v131
  %v186 = vpack.c.b16 %v134, %v132
  %v187 = vpack.c.b16 %v137, %v135
  %v188 = vpack.c.b16 %v138, %v136
  %v189 = vpack.c.b16 %v141, %v139
  %v190 = vpack.c.b16 %v142, %v140
  %v191 = vpack.c.b16 %v145, %v143
  %v192 = vpack.c.b16 %v146, %v144
  %v193 = vpack.c.b16 %v149, %v147
  %v194 = vpack.c.b16 %v150, %v148
  %v195 = vpack.c.b16 %v153, %v151
  %v196 = vpack.c.b16 %v154, %v152
  %v197 = vpack.c.b16 %v157, %v155
  %v198 = vpack.c.b16 %v158, %v156
  %v199 = vpack.c.b16 %v161, %v159
  %v200 = vpack.c.b16 %v162, %v160
  %v201 = vpack.c.b16 %v165, %v163
  %v202 = vpack.c.b16 %v166, %v164
  %v203 = vpack.c.b16 %v169, %v167
  %v204 = vpack.c.b16 %v170, %v168
  %v205 = vpack.c.b16 %v173, %v171
  %v206 = vpack.c.b16 %v174, %v172
  %239 = vmatprep.subr.bf16.mxu0 %v176
  %240 = vmatpush1.bf16.msra.mxu0 %v175
  %241 = vmatprep.subr.bf16.mxu0 %v178
  %242 = vmatpush1.bf16.msra.mxu0 %v177
  %243 = vmatprep.subr.bf16.mxu0 %v180
  %244 = vmatpush1.bf16.msra.mxu0 %v179
  %245 = vmatprep.subr.bf16.mxu0 %v182
  %246 = vmatpush1.bf16.msra.mxu0 %v181
  %247 = vmatprep.subr.bf16.mxu0 %v184
  %248 = vmatpush1.bf16.msra.mxu0 %v183
  %249 = vmatprep.subr.bf16.mxu0 %v186
  %250 = vmatpush1.bf16.msra.mxu0 %v185
  %251 = vmatprep.subr.bf16.mxu0 %v188
  %252 = vmatpush1.bf16.msra.mxu0 %v187
  %253 = vmatprep.subr.bf16.mxu0 %v190
  %254 = vmatpush1.bf16.msra.mxu0 %v189
  %255 = vmatprep.subr.bf16.mxu0 %v192
  %256 = vmatpush1.bf16.msra.mxu0 %v191
  %257 = vmatprep.subr.bf16.mxu0 %v194
  %258 = vmatpush1.bf16.msra.mxu0 %v193
  %259 = vmatprep.subr.bf16.mxu0 %v196
  %260 = vmatpush1.bf16.msra.mxu0 %v195
  %261 = vmatprep.subr.bf16.mxu0 %v198
  %262 = vmatpush1.bf16.msra.mxu0 %v197
  %263 = vmatprep.subr.bf16.mxu0 %v200
  %264 = vmatpush1.bf16.msra.mxu0 %v199
  %265 = vmatprep.subr.bf16.mxu0 %v202
  %266 = vmatpush1.bf16.msra.mxu0 %v201
  %267 = vmatprep.subr.bf16.mxu0 %v204
  %268 = vmatpush1.bf16.msra.mxu0 %v203
  %269 = vmatprep.subr.bf16.mxu0 %v206
  %270 = vmatpush1.bf16.msra.mxu0 %v205
  %271 = vmatprep.mubr.bf16.mxu0 %v76
  %272 = vmatmul.mubr.bf16.gmra.mrb[0].mxu0 %v75
  %v273 = vpop.f32.mrb[0].mxu0
  %v274 = vadd.f32 %v62, %v273
  %v275 = vpop.f32.mrb[0].mxu0
  %v276 = vadd.f32 %v66, %v275
  %v277 = vpop.f32.mrb[0].mxu0
  %v278 = vadd.f32 %v62, %v277
  %v279 = vpop.f32.mrb[0].mxu0
  %v280 = vadd.f32 %v66, %v279
  %281 = vdwg.mxu0
  %v282 = vld [vmem:[%s3] sm:$0xff]
  %v283 = vld [vmem:[%s3 + $0x8] sm:$0xff]
  %v284 = vunpack.c.l.bf16 %v282
  %v285 = vunpack.c.h.bf16 %v282
  %v286 = vunpack.c.l.bf16 %v283
  %v287 = vunpack.c.h.bf16 %v283
  %v288 = vadd.f32 %v274, %v284
  %v289 = vadd.f32 %v276, %v285
  %v290 = vadd.f32 %v278, %v286
  %v291 = vadd.f32 %v280, %v287
  %v292 = vld [vmem:[%s4] sm:$0x3]
  %v293 = vld [vmem:[%s5] sm:$0x3]
  %v294 = vadd.f32 %v288, %v289
  %295 = vadd.xlane.f32.xlu0 %v294
  %v296 = vpop.xlane.xlu0 %295
  %v297 = vadd.f32 %v290, %v291
  %298 = vadd.xlane.f32.xlu0 %v297
  %v299 = vpop.xlane.xlu0 %298
  %v300 = vrcp.pop 256.0
  %v301 = vmul.f32 %v296, %v300
  %v302 = vmul.f32 %v299, %v300
  %v303 = vsub.f32 %v288, %v301
  %v304 = vsub.f32 %v289, %v301
  %v305 = vsub.f32 %v290, %v302
  %v306 = vsub.f32 %v291, %v302
  %v307 = vmul.f32 %v303, %v303
  %v308 = vmul.f32 %v304, %v304
  %v309 = vmul.f32 %v305, %v305
  %v310 = vmul.f32 %v306, %v306
  %v311 = vadd.f32 %v307, %v308
  %312 = vadd.xlane.f32.xlu0 %v311
  %v313 = vpop.xlane.xlu0 %312
  %v314 = vadd.f32 %v309, %v310
  %315 = vadd.xlane.f32.xlu0 %v314
  %v316 = vpop.xlane.xlu0 %315
  %v317 = vmul.f32 %v313, %v300
  %v318 = vmul.f32 %v316, %v300
  %v319 = vadd.f32 %v317, 1e-12
  %v320 = vadd.f32 %v318, 1e-12
  %v321 = vrsqrt.pop %v319
  %v322 = vrsqrt.pop %v320
  %v323 = vmul.f32 %v303, %v321
  %v324 = vmul.f32 %v304, %v321
  %v325 = vmul.f32 %v305, %v322
  %v326 = vmul.f32 %v306, %v322
  %v328 = vlaneseq
  %v329 = vshrl.u32 %v328, 7
  %v330 = vsub.s32 0, %v329
  %v331 = vrot.slane %v292, %v330
  %v332 = vlaneseq
  %v333 = vshrl.u32 %v332, 7
  %v334 = vsub.s32 1, %v333
  %v335 = vrot.slane %v292, %v334
  %v338 = vmul.f32 %v323, %v331
  %v339 = vmul.f32 %v324, %v335
  %v340 = vmul.f32 %v325, %v331
  %v341 = vmul.f32 %v326, %v335
  %v343 = vlaneseq
  %v344 = vshrl.u32 %v343, 7
  %v345 = vsub.s32 0, %v344
  %v346 = vrot.slane %v293, %v345
  %v347 = vlaneseq
  %v348 = vshrl.u32 %v347, 7
  %v349 = vsub.s32 1, %v348
  %v350 = vrot.slane %v293, %v349
  %v353 = vadd.f32 %v338, %v346
  %v354 = vadd.f32 %v339, %v350
  %v355 = vadd.f32 %v340, %v346
  %v356 = vadd.f32 %v341, %v350
  %v357 = vpack.c.bf16 %v355, %v353
  %v358 = vpack.c.bf16 %v356, %v354
  %v361 = vunpack.c.l.b16 %v357
  %v362 = vunpack.c.l.b16 %v358
  %v363 = vunpack.c.h.b16 %v357
  %v364 = vunpack.c.h.b16 %v358
  %v365 = vpack.c.b16 %v362, %v361
  %v366 = vpack.c.b16 %v364, %v363
  %369 = vst [vmem:[%s6] sm:$0xff] %v365
  %370 = vst [vmem:[%s6 + $0x8] sm:$0xff] %v366
  // Predicated region
  $region26: #{electra_class_forward.13} parent=0 // pred_check
    _
  $region27: #{electra_class_forward.13} parent=0 // pred_check_branch
    %372 = sbr.rel (0) target = $region29
  $region28: #{electra_class_forward.13} parent=0 // pred_region
    _
  $region29: #{electra_class_forward.13} parent=0 // pred_fallthru
    _
  // Predicated region
  $region30: #{electra_class_forward.13} parent=0 // pred_check
    _
  $region31: #{electra_class_forward.13} parent=0 // pred_check_branch
    %374 = sbr.rel (0) target = $region33
  $region32: #{electra_class_forward.13} parent=0 // pred_region
    _
  $region33: #{electra_class_forward.13} parent=0 // pred_fallthru
    _

// kernel: electra_class_forward.12
$region0: #{electra_class_forward.12}
  #allocation0 [shape = 'u32[]', space=smem, size = 0x4, offset = 0x4, fixed_abs, tag = 'smem constant byte address 0x4 - core index']
  #allocation1 [shape = 'u32[144,128]{1,0:T(1,128)}', space=vmem, size = 0x12000, scoped, tag = 'internal scratch']
  %s0 = inlined_call_operand.vmem [shape: bf16[2,8,768], index: 0, kind: input, shape index: {}]
  %s1 = inlined_call_operand.vmem [shape: f32[2,1,8], index: 1, kind: input, shape index: {}]
  %s2 = inlined_call_operand.vmem [shape: bf16[2,8,256], index: 2, kind: output, shape index: {}]
  %s3 = sld [smem:[#allocation0]]
  $region41: #{electra_class_forward.12} parent=0
    _
  %s5 = ssub.s32 1, %s3
  %s6 = scalar_select 0, %s5, %s3
  loop: start=0, step=1, limit=4
  $region2: #{electra_class_forward.12} parent=0 // loop_pre_header
    _
  $region3: #{electra_class_forward.12} parent=0 // loop_header
    %s8 = sphi 0, %s12
    %p9 = scmp.ge.s32.totalorder %s8, 4
    %s18 = sphi 0, %s20
    %s21 = sphi 0, %s18
    %s22 = sphi 0, %s21
    %s38 = sphi 0, %s22
    %s44 = sphi 0, %s46
    %s47 = sphi 0, %s44
    %s48 = sphi 0, %s47
    %s64 = sphi 0, %s48
    %s70 = sphi 0, %s72
    %s73 = sphi 0, %s70
    %s74 = sphi 0, %s73
    %s90 = sphi 0, %s74
  $region4: #{electra_class_forward.12} parent=0 // loop_header_branch
    %11 = sbr.rel (%p9) target = $region8
  $region5: #{electra_class_forward.12} parent=0 // loop_body
    %s13 = ssub.s32 %s8, 1
    %s14 = ssub.s32 %s8, 2
    %s15 = sadd.s32 %s8, 1
    %s16 = ssub.s32 %s8, %s15
    %p17 = scmp.eq.s32.totalorder %s16, 0
    %s19 = sadd.s32 %s18, 1
    %s20 = scalar_select %p17, %s18, %s19
    %p23 = pneg %p17
    %p24 = scmp.eq.s32.totalorder %s8, 1
    %p25 = por %p23, %p24
    %p26 = scmp.ne.s32.totalorder %s18, %s21
    %p27 = scmp.eq.s32.totalorder %s8, 0
    %p28 = por %p26, %p27
    %p29 = scmp.ne.s32.totalorder %s18, %s21
    %p30 = scmp.eq.s32.totalorder %s13, 1
    %p31 = por %p29, %p30
    %p32 = scmp.ne.s32.totalorder %s21, %s22
    %p33 = scmp.eq.s32.totalorder %s13, 0
    %p34 = por %p32, %p33
    %p35 = scmp.ne.s32.totalorder %s21, %s22
    %p36 = scmp.eq.s32.totalorder %s14, 1
    %p37 = por %p35, %p36
    %p39 = scmp.ne.s32.totalorder %s22, %s38
    %p40 = scmp.eq.s32.totalorder %s14, 0
    %p41 = por %p39, %p40
    %s42 = ssub.s32 %s8, %s15
    %p43 = scmp.eq.s32.totalorder %s42, 0
    %s45 = sadd.s32 %s44, 1
    %s46 = scalar_select %p43, %s44, %s45
    %p49 = pneg %p43
    %p50 = scmp.eq.s32.totalorder %s8, 1
    %p51 = por %p49, %p50
    %p52 = scmp.ne.s32.totalorder %s44, %s47
    %p53 = scmp.eq.s32.totalorder %s8, 0
    %p54 = por %p52, %p53
    %p55 = scmp.ne.s32.totalorder %s44, %s47
    %p56 = scmp.eq.s32.totalorder %s13, 1
    %p57 = por %p55, %p56
    %p58 = scmp.ne.s32.totalorder %s47, %s48
    %p59 = scmp.eq.s32.totalorder %s13, 0
    %p60 = por %p58, %p59
    %p61 = scmp.ne.s32.totalorder %s47, %s48
    %p62 = scmp.eq.s32.totalorder %s14, 1
    %p63 = por %p61, %p62
    %p65 = scmp.ne.s32.totalorder %s48, %s64
    %p66 = scmp.eq.s32.totalorder %s14, 0
    %p67 = por %p65, %p66
    %s68 = ssub.s32 %s8, %s15
    %p69 = scmp.eq.s32.totalorder %s68, 0
    %s71 = sadd.s32 %s70, 1
    %s72 = scalar_select %p69, %s70, %s71
    %p75 = pneg %p69
    %p76 = scmp.eq.s32.totalorder %s8, 1
    %p77 = por %p75, %p76
    %p78 = scmp.ne.s32.totalorder %s70, %s73
    %p79 = scmp.eq.s32.totalorder %s8, 0
    %p80 = por %p78, %p79
    %p81 = scmp.ne.s32.totalorder %s70, %s73
    %p82 = scmp.eq.s32.totalorder %s13, 1
    %p83 = por %p81, %p82
    %p84 = scmp.ne.s32.totalorder %s73, %s74
    %p85 = scmp.eq.s32.totalorder %s13, 0
    %p86 = por %p84, %p85
    %p87 = scmp.ne.s32.totalorder %s73, %s74
    %p88 = scmp.eq.s32.totalorder %s14, 1
    %p89 = por %p87, %p88
    %p91 = scmp.ne.s32.totalorder %s74, %s90
    %p92 = scmp.eq.s32.totalorder %s14, 0
    %p93 = por %p91, %p92
    %p94 = scmp.le.s32.totalorder 1, %s8
    %p95 = scmp.lt.s32.totalorder %s8, 3
    %p96 = pnand %p94, %p95
    %p97 = pneg %p96
    // Predicated region
    $region9: #{electra_class_forward.12} parent=5 // pred_check
      _
    $region10: #{electra_class_forward.12} parent=5 // pred_check_branch
      %99 = sbr.rel (%p96) target = $region12
    $region11: #{electra_class_forward.12} parent=5 // pred_region
      %s100 = ssub.s32 %s8, 1
    $region12: #{electra_class_forward.12} parent=5 // pred_fallthru
      _
    %p101 = scmp.lt.s32.totalorder %s8, 2
    // Predicated region
    $region13: #{electra_class_forward.12} parent=5 // pred_check
      %p102 = pneg %p101
    $region14: #{electra_class_forward.12} parent=5 // pred_check_branch
      %104 = sbr.rel (%p102) target = $region16
    $region15: #{electra_class_forward.12} parent=5 // pred_region
      // Predicated region
      $region17: #{electra_class_forward.12} parent=15 // pred_check
        %p105 = pneg %p28
      $region18: #{electra_class_forward.12} parent=15 // pred_check_branch
        %107 = sbr.rel (%p105) target = $region20
      $region19: #{electra_class_forward.12} parent=15 // pred_region
        %p108 = scmp.lt.s32.totalorder %s8, 1
        %s109 = scalar_select %p108, %s8, 1
        %s110 = smul.addr %s109, 6
        %s111 = smul.addr %s110, 4
        %s112 = scalar_lea.vmem %s0, %s111
      $region20: #{electra_class_forward.12} parent=15 // pred_fallthru
        _
      // Predicated region
      $region21: #{electra_class_forward.12} parent=15 // pred_check
        %p113 = pneg %p54
      $region22: #{electra_class_forward.12} parent=15 // pred_check_branch
        %115 = sbr.rel (%p113) target = $region24
      $region23: #{electra_class_forward.12} parent=15 // pred_region
        %p116 = scmp.lt.s32.totalorder %s8, 1
        %s117 = scalar_select %p116, %s8, 1
        %s118 = scalar_lea.vmem %s1, %s117
      $region24: #{electra_class_forward.12} parent=15 // pred_fallthru
        _
    $region16: #{electra_class_forward.12} parent=5 // pred_fallthru
      _
    %p119 = scmp.le.s32.totalorder 1, %s8
    %p120 = scmp.lt.s32.totalorder %s8, 3
    %p121 = pnand %p119, %p120
    %p122 = pneg %p121
    // Predicated region
    $region25: #{electra_class_forward.12} parent=5 // pred_check
      _
    $region26: #{electra_class_forward.12} parent=5 // pred_check_branch
      %124 = sbr.rel (%p121) target = $region28
    $region27: #{electra_class_forward.12} parent=5 // pred_region
      %s125 = ssub.s32 %s8, 1
      %p126 = scmp.lt.s32.totalorder %s13, 1
      %s127 = scalar_select %p126, %s13, 1
      %s128 = smul.addr %s127, 6
      %s129 = smul.addr %s128, 4
      %s130 = scalar_lea.vmem %s0, %s129
      %p131 = pneg %p34
      %p132 = pneg %p31
      %p133 = scmp.lt.s32.totalorder %s13, 1
      %s134 = scalar_select %p133, %s13, 1
      %s135 = scalar_lea.vmem %s1, %s134
      %p136 = pneg %p60
      %p137 = pneg %p57
      %p138 = pneg %p86
      %p139 = pneg %p83
      %p140 = scmp.lt.s32.totalorder %s13, 1
      %s141 = scalar_select %p140, %s13, 1
      %s142 = smul.addr %s141, 2
      %s143 = smul.addr %s142, 4
      %s144 = scalar_lea.vmem %s2, %s143
      %p145 = scmp.lt.s32.totalorder %s13, 1
      %s146 = scalar_select %p145, %s13, 1
      %s147 = smul.addr %s146, 6
      %s148 = smul.addr %s147, 4
      %s149 = scalar_lea.vmem %s0, %s148
      %p150 = scmp.lt.s32.totalorder %s13, 1
      %s151 = scalar_select %p150, %s13, 1
      %s152 = scalar_lea.vmem %s1, %s151
      %p153 = scmp.lt.s32.totalorder %s13, 1
      %s154 = scalar_select %p153, %s13, 1
      %s155 = smul.addr %s154, 2
      %s156 = smul.addr %s155, 4
      %s157 = scalar_lea.vmem %s2, %s156
      %v159 = vld [vmem:[%s152] sm:$0x1]
      %v160 = vld [vmem:[%s149] sm:$0xf]
      %v161 = vld [vmem:[%s149 + $0x8] sm:$0xf]
      %v162 = vld [vmem:[%s149 + $0x10] sm:$0xf]
      %vm163 = vcmask 523264
      %v165 = vsel %vm163, %v160, 0
      %v168 = vsel %vm163, %v161, 0
      %170 = vmatprep.subr.bf16.mxu0 0
      %171 = vmatpush1.bf16.xpose.msra.mxu0 %v168
      %172 = vmatprep.subr.bf16.mxu0 0
      %173 = vmatpush1.bf16.xpose.msra.mxu0 0
      %174 = vmatprep.subr.bf16.mxu0 0
      %175 = vmatpush1.bf16.xpose.msra.mxu0 0
      %176 = vmatprep.subr.bf16.mxu0 0
      %177 = vmatpush1.bf16.xpose.msra.mxu0 0
      %178 = vmatprep.subr.bf16.mxu0 0
      %179 = vmatpush1.bf16.xpose.msra.mxu0 0
      %180 = vmatprep.subr.bf16.mxu0 0
      %181 = vmatpush1.bf16.xpose.msra.mxu0 0
      %182 = vmatprep.subr.bf16.mxu0 0
      %183 = vmatpush1.bf16.xpose.msra.mxu0 0
      %184 = vmatprep.subr.bf16.mxu0 0
      %185 = vmatpush1.bf16.xpose.msra.mxu0 0
      %186 = vmatprep.subr.bf16.mxu0 0
      %187 = vmatpush1.bf16.xpose.msra.mxu0 0
      %188 = vmatprep.subr.bf16.mxu0 0
      %189 = vmatpush1.bf16.xpose.msra.mxu0 0
      %190 = vmatprep.subr.bf16.mxu0 0
      %191 = vmatpush1.bf16.xpose.msra.mxu0 0
      %192 = vmatprep.subr.bf16.mxu0 0
      %193 = vmatpush1.bf16.xpose.msra.mxu0 0
      %194 = vmatprep.subr.bf16.mxu0 0
      %195 = vmatpush1.bf16.xpose.msra.mxu0 0
      %196 = vmatprep.subr.bf16.mxu0 0
      %197 = vmatpush1.bf16.xpose.msra.mxu0 0
      %198 = vmatprep.subr.bf16.mxu0 0
      %199 = vmatpush1.bf16.xpose.msra.mxu0 0
      %200 = vmatprep.subr.bf16.mxu0 0
      %201 = vmatpush1.bf16.xpose.msra.mxu0 0
      %202 = vmatprep.mubr.bf16.mxu0 0
      %203 = vmatmul.mubr.bf16.gmra.mrb[0].mxu0 %v165
      %v204 = vpop.f32.mrb[0].mxu0
      %v205 = vadd.f32 0.0, %v204
      %v206 = vpop.f32.mrb[0].mxu0
      %v207 = vpop.f32.mrb[0].mxu0
      %v208 = vpop.f32.mrb[0].mxu0
      %209 = vdwg.mxu0
      %v210 = vmul.f32 %v205, 0.125
      %v212 = vlaneseq
      %v213 = vshrl.u32 %v212, 7
      %v214 = vsub.s32 0, %v213
      %v215 = vrot.slane %v159, %v214
      %v217 = vadd.f32 %v210, %v215
      %vm218 = vcmask 64512
      %v219 = vsel %vm218, %v217, -inf
      %220 = vmax.xlane.f32.xlu0 %v219
      %v221 = vpop.xlane.xlu0 %220
      %v222 = vsub.f32 %v217, %v221
      %v223 = vmul.f32 %v222, 1.442695
      %v224 = vpow.pop %v223
      %v225 = vsel %vm218, %v224, 0.0
      %226 = vadd.xlane.f32.xlu0 %v225
      %v227 = vpop.xlane.xlu0 %226
      %v228 = vrcp.pop %v227
      %v229 = vmul.f32 %v224, %v228
      %v230 = vpack.c.bf16 %v229, %v229
      %v232 = vsel %vm218, %v230, 0
      %vm234 = vcmask 1043456
      %v236 = vsel %vm234, %v162, 0
      %238 = vmatprep.subr.bf16.mxu0 0
      %239 = vmatpush1.bf16.msra.mxu0 %v236
      %240 = vmatprep.subr.bf16.mxu0 0
      %241 = vmatpush1.bf16.msra.mxu0 0
      %242 = vmatprep.subr.bf16.mxu0 0
      %243 = vmatpush1.bf16.msra.mxu0 0
      %244 = vmatprep.subr.bf16.mxu0 0
      %245 = vmatpush1.bf16.msra.mxu0 0
      %246 = vmatprep.subr.bf16.mxu0 0
      %247 = vmatpush1.bf16.msra.mxu0 0
      %248 = vmatprep.subr.bf16.mxu0 0
      %249 = vmatpush1.bf16.msra.mxu0 0
      %250 = vmatprep.subr.bf16.mxu0 0
      %251 = vmatpush1.bf16.msra.mxu0 0
      %252 = vmatprep.subr.bf16.mxu0 0
      %253 = vmatpush1.bf16.msra.mxu0 0
      %254 = vmatprep.subr.bf16.mxu0 0
      %255 = vmatpush1.bf16.msra.mxu0 0
      %256 = vmatprep.subr.bf16.mxu0 0
      %257 = vmatpush1.bf16.msra.mxu0 0
      %258 = vmatprep.subr.bf16.mxu0 0
      %259 = vmatpush1.bf16.msra.mxu0 0
      %260 = vmatprep.subr.bf16.mxu0 0
      %261 = vmatpush1.bf16.msra.mxu0 0
      %262 = vmatprep.subr.bf16.mxu0 0
      %263 = vmatpush1.bf16.msra.mxu0 0
      %264 = vmatprep.subr.bf16.mxu0 0
      %265 = vmatpush1.bf16.msra.mxu0 0
      %266 = vmatprep.subr.bf16.mxu0 0
      %267 = vmatpush1.bf16.msra.mxu0 0
      %268 = vmatprep.subr.bf16.mxu0 0
      %269 = vmatpush1.bf16.msra.mxu0 0
      %270 = vmatprep.mubr.bf16.mxu0 0
      %271 = vmatmul.mubr.bf16.gmra.mrb[0].mxu0 %v232
      %v272 = vpop.f32.mrb[0].mxu0
      %v273 = vadd.f32 0.0, %v272
      %v274 = vpop.f32.mrb[0].mxu0
      %v275 = vpop.f32.mrb[0].mxu0
      %v276 = vpop.f32.mrb[0].mxu0
      %277 = vdwg.mxu0
      %v278 = vpack.c.bf16 %v273, %v273
      %vm279 = vcmask 519168
      %280 = vst.msk [vmem:[%s157] sm:$0xf] %vm279, %v278
      %v281 = vld [vmem:[%s149] sm:$0xf]
      %v282 = vld [vmem:[%s149 + $0x8] sm:$0xf]
      %v283 = vld [vmem:[%s149 + $0x10] sm:$0xf]
      %v285 = vunpack.c.l.b16 %v281
      %v286 = vpack.c.b16 %v285, %v285
      %287 = vrot.lane.b32.xlu0 %v286, 64
      %v288 = vpop.permute.xlu0 %287
      %v290 = vunpack.c.l.b16 %v282
      %v291 = vpack.c.b16 %v290, %v290
      %292 = vrot.lane.b32.xlu0 %v291, 64
      %v293 = vpop.permute.xlu0 %292
      %v295 = vsel %vm163, %v288, 0
      %v298 = vsel %vm163, %v293, 0
      %300 = vmatprep.subr.bf16.mxu0 0
      %301 = vmatpush1.bf16.xpose.msra.mxu0 %v298
      %302 = vmatprep.subr.bf16.mxu0 0
      %303 = vmatpush1.bf16.xpose.msra.mxu0 0
      %304 = vmatprep.subr.bf16.mxu0 0
      %305 = vmatpush1.bf16.xpose.msra.mxu0 0
      %306 = vmatprep.subr.bf16.mxu0 0
      %307 = vmatpush1.bf16.xpose.msra.mxu0 0
      %308 = vmatprep.subr.bf16.mxu0 0
      %309 = vmatpush1.bf16.xpose.msra.mxu0 0
      %310 = vmatprep.subr.bf16.mxu0 0
      %311 = vmatpush1.bf16.xpose.msra.mxu0 0
      %312 = vmatprep.subr.bf16.mxu0 0
      %313 = vmatpush1.bf16.xpose.msra.mxu0 0
      %314 = vmatprep.subr.bf16.mxu0 0
      %315 = vmatpush1.bf16.xpose.msra.mxu0 0
      %316 = vmatprep.subr.bf16.mxu0 0
      %317 = vmatpush1.bf16.xpose.msra.mxu0 0
      %318 = vmatprep.subr.bf16.mxu0 0
      %319 = vmatpush1.bf16.xpose.msra.mxu0 0
      %320 = vmatprep.subr.bf16.mxu0 0
      %321 = vmatpush1.bf16.xpose.msra.mxu0 0
      %322 = vmatprep.subr.bf16.mxu0 0
      %323 = vmatpush1.bf16.xpose.msra.mxu0 0
      %324 = vmatprep.subr.bf16.mxu0 0
      %325 = vmatpush1.bf16.xpose.msra.mxu0 0
      %326 = vmatprep.subr.bf16.mxu0 0
      %327 = vmatpush1.bf16.xpose.msra.mxu0 0
      %328 = vmatprep.subr.bf16.mxu0 0
      %329 = vmatpush1.bf16.xpose.msra.mxu0 0
      %330 = vmatprep.subr.bf16.mxu0 0
      %331 = vmatpush1.bf16.xpose.msra.mxu0 0
      %332 = vmatprep.mubr.bf16.mxu0 0
      %333 = vmatmul.mubr.bf16.gmra.mrb[0].mxu0 %v295
      %v334 = vpop.f32.mrb[0].mxu0
      %v335 = vadd.f32 0.0, %v334
      %v336 = vpop.f32.mrb[0].mxu0
      %v337 = vpop.f32.mrb[0].mxu0
      %v338 = vpop.f32.mrb[0].mxu0
      %339 = vdwg.mxu0
      %v340 = vmul.f32 %v335, 0.125
      %v341 = vadd.f32 %v340, %v215
      %v342 = vsel %vm218, %v341, -inf
      %343 = vmax.xlane.f32.xlu0 %v342
      %v344 = vpop.xlane.xlu0 %343
      %v345 = vsub.f32 %v341, %v344
      %v346 = vmul.f32 %v345, 1.442695
      %v347 = vpow.pop %v346
      %v348 = vsel %vm218, %v347, 0.0
      %349 = vadd.xlane.f32.xlu0 %v348
      %v350 = vpop.xlane.xlu0 %349
      %v351 = vrcp.pop %v350
      %v352 = vmul.f32 %v347, %v351
      %v353 = vpack.c.bf16 %v352, %v352
      %v355 = vunpack.c.l.b16 %v283
      %v356 = vpack.c.b16 %v355, %v355
      %357 = vrot.lane.b32.xlu0 %v356, 64
      %v358 = vpop.permute.xlu0 %357
      %v360 = vsel %vm218, %v353, 0
      %v363 = vsel %vm234, %v358, 0
      %365 = vmatprep.subr.bf16.mxu0 0
      %366 = vmatpush1.bf16.msra.mxu0 %v363
      %367 = vmatprep.subr.bf16.mxu0 0
      %368 = vmatpush1.bf16.msra.mxu0 0
      %369 = vmatprep.subr.bf16.mxu0 0
      %370 = vmatpush1.bf16.msra.mxu0 0
      %371 = vmatprep.subr.bf16.mxu0 0
      %372 = vmatpush1.bf16.msra.mxu0 0
      %373 = vmatprep.subr.bf16.mxu0 0
      %374 = vmatpush1.bf16.msra.mxu0 0
      %375 = vmatprep.subr.bf16.mxu0 0
      %376 = vmatpush1.bf16.msra.mxu0 0
      %377 = vmatprep.subr.bf16.mxu0 0
      %378 = vmatpush1.bf16.msra.mxu0 0
      %379 = vmatprep.subr.bf16.mxu0 0
      %380 = vmatpush1.bf16.msra.mxu0 0
      %381 = vmatprep.subr.bf16.mxu0 0
      %382 = vmatpush1.bf16.msra.mxu0 0
      %383 = vmatprep.subr.bf16.mxu0 0
      %384 = vmatpush1.bf16.msra.mxu0 0
      %385 = vmatprep.subr.bf16.mxu0 0
      %386 = vmatpush1.bf16.msra.mxu0 0
      %387 = vmatprep.subr.bf16.mxu0 0
      %388 = vmatpush1.bf16.msra.mxu0 0
      %389 = vmatprep.subr.bf16.mxu0 0
      %390 = vmatpush1.bf16.msra.mxu0 0
      %391 = vmatprep.subr.bf16.mxu0 0
      %392 = vmatpush1.bf16.msra.mxu0 0
      %393 = vmatprep.subr.bf16.mxu0 0
      %394 = vmatpush1.bf16.msra.mxu0 0
      %395 = vmatprep.subr.bf16.mxu0 0
      %396 = vmatpush1.bf16.msra.mxu0 0
      %397 = vmatprep.mubr.bf16.mxu0 0
      %398 = vmatmul.mubr.bf16.gmra.mrb[0].mxu0 %v360
      %v399 = vpop.f32.mrb[0].mxu0
      %v400 = vadd.f32 0.0, %v399
      %v401 = vpop.f32.mrb[0].mxu0
      %v402 = vpop.f32.mrb[0].mxu0
      %v403 = vpop.f32.mrb[0].mxu0
      %404 = vdwg.mxu0
      %v405 = vpack.c.bf16 %v400, %v400
      %v407 = vunpack.c.l.b16 %v405
      %v408 = vpack.c.b16 %v407, %v407
      %409 = vrot.lane.b32.xlu0 %v408, 64
      %v410 = vpop.permute.xlu0 %409
      %vm412 = vcmask 1043968
      %413 = vst.msk [vmem:[%s157] sm:$0xf] %vm412, %v410
      %v414 = vld [vmem:[%s149 + $0x4] sm:$0xf]
      %v415 = vld [vmem:[%s149 + $0xc] sm:$0xf]
      %v416 = vld [vmem:[%s149 + $0x14] sm:$0xf]
      %v418 = vsel %vm163, %v414, 0
      %v421 = vsel %vm163, %v415, 0
      %423 = vmatprep.subr.bf16.mxu0 0
      %424 = vmatpush1.bf16.xpose.msra.mxu0 %v421
      %425 = vmatprep.subr.bf16.mxu0 0
      %426 = vmatpush1.bf16.xpose.msra.mxu0 0
      %427 = vmatprep.subr.bf16.mxu0 0
      %428 = vmatpush1.bf16.xpose.msra.mxu0 0
      %429 = vmatprep.subr.bf16.mxu0 0
      %430 = vmatpush1.bf16.xpose.msra.mxu0 0
      %431 = vmatprep.subr.bf16.mxu0 0
      %432 = vmatpush1.bf16.xpose.msra.mxu0 0
      %433 = vmatprep.subr.bf16.mxu0 0
      %434 = vmatpush1.bf16.xpose.msra.mxu0 0
      %435 = vmatprep.subr.bf16.mxu0 0
      %436 = vmatpush1.bf16.xpose.msra.mxu0 0
      %437 = vmatprep.subr.bf16.mxu0 0
      %438 = vmatpush1.bf16.xpose.msra.mxu0 0
      %439 = vmatprep.subr.bf16.mxu0 0
      %440 = vmatpush1.bf16.xpose.msra.mxu0 0
      %441 = vmatprep.subr.bf16.mxu0 0
      %442 = vmatpush1.bf16.xpose.msra.mxu0 0
      %443 = vmatprep.subr.bf16.mxu0 0
      %444 = vmatpush1.bf16.xpose.msra.mxu0 0
      %445 = vmatprep.subr.bf16.mxu0 0
      %446 = vmatpush1.bf16.xpose.msra.mxu0 0
      %447 = vmatprep.subr.bf16.mxu0 0
      %448 = vmatpush1.bf16.xpose.msra.mxu0 0
      %449 = vmatprep.subr.bf16.mxu0 0
      %450 = vmatpush1.bf16.xpose.msra.mxu0 0
      %451 = vmatprep.subr.bf16.mxu0 0
      %452 = vmatpush1.bf16.xpose.msra.mxu0 0
      %453 = vmatprep.subr.bf16.mxu0 0
      %454 = vmatpush1.bf16.xpose.msra.mxu0 0
      %455 = vmatprep.mubr.bf16.mxu0 0
      %456 = vmatmul.mubr.bf16.gmra.mrb[0].mxu0 %v418
      %v457 = vpop.f32.mrb[0].mxu0
      %v458 = vadd.f32 0.0, %v457
      %v459 = vpop.f32.mrb[0].mxu0
      %v460 = vpop.f32.mrb[0].mxu0
      %v461 = vpop.f32.mrb[0].mxu0
      %462 = vdwg.mxu0
      %v463 = vmul.f32 %v458, 0.125
      %v464 = vadd.f32 %v463, %v215
      %v465 = vsel %vm218, %v464, -inf
      %466 = vmax.xlane.f32.xlu0 %v465
      %v467 = vpop.xlane.xlu0 %466
      %v468 = vsub.f32 %v464, %v467
      %v469 = vmul.f32 %v468, 1.442695
      %v470 = vpow.pop %v469
      %v471 = vsel %vm218, %v470, 0.0
      %472 = vadd.xlane.f32.xlu0 %v471
      %v473 = vpop.xlane.xlu0 %472
      %v474 = vrcp.pop %v473
      %v475 = vmul.f32 %v470, %v474
      %v476 = vpack.c.bf16 %v475, %v475
      %v478 = vsel %vm218, %v476, 0
      %v481 = vsel %vm234, %v416, 0
      %483 = vmatprep.subr.bf16.mxu0 0
      %484 = vmatpush1.bf16.msra.mxu0 %v481
      %485 = vmatprep.subr.bf16.mxu0 0
      %486 = vmatpush1.bf16.msra.mxu0 0
      %487 = vmatprep.subr.bf16.mxu0 0
      %488 = vmatpush1.bf16.msra.mxu0 0
      %489 = vmatprep.subr.bf16.mxu0 0
      %490 = vmatpush1.bf16.msra.mxu0 0
      %491 = vmatprep.subr.bf16.mxu0 0
      %492 = vmatpush1.bf16.msra.mxu0 0
      %493 = vmatprep.subr.bf16.mxu0 0
      %494 = vmatpush1.bf16.msra.mxu0 0
      %495 = vmatprep.subr.bf16.mxu0 0
      %496 = vmatpush1.bf16.msra.mxu0 0
      %497 = vmatprep.subr.bf16.mxu0 0
      %498 = vmatpush1.bf16.msra.mxu0 0
      %499 = vmatprep.subr.bf16.mxu0 0
      %500 = vmatpush1.bf16.msra.mxu0 0
      %501 = vmatprep.subr.bf16.mxu0 0
      %502 = vmatpush1.bf16.msra.mxu0 0
      %503 = vmatprep.subr.bf16.mxu0 0
      %504 = vmatpush1.bf16.msra.mxu0 0
      %505 = vmatprep.subr.bf16.mxu0 0
      %506 = vmatpush1.bf16.msra.mxu0 0
      %507 = vmatprep.subr.bf16.mxu0 0
      %508 = vmatpush1.bf16.msra.mxu0 0
      %509 = vmatprep.subr.bf16.mxu0 0
      %510 = vmatpush1.bf16.msra.mxu0 0
      %511 = vmatprep.subr.bf16.mxu0 0
      %512 = vmatpush1.bf16.msra.mxu0 0
      %513 = vmatprep.subr.bf16.mxu0 0
      %514 = vmatpush1.bf16.msra.mxu0 0
      %515 = vmatprep.mubr.bf16.mxu0 0
      %516 = vmatmul.mubr.bf16.gmra.mrb[0].mxu0 %v478
      %v517 = vpop.f32.mrb[0].mxu0
      %v518 = vadd.f32 0.0, %v517
      %v519 = vpop.f32.mrb[0].mxu0
      %v520 = vpop.f32.mrb[0].mxu0
      %v521 = vpop.f32.mrb[0].mxu0
      %522 = vdwg.mxu0
      %v523 = vpack.c.bf16 %v518, %v518
      %524 = vst.msk [vmem:[%s157 + $0x4] sm:$0xf] %vm279, %v523
      %v525 = vld [vmem:[%s149 + $0x4] sm:$0xf]
      %v526 = vld [vmem:[%s149 + $0xc] sm:$0xf]
      %v527 = vld [vmem:[%s149 + $0x14] sm:$0xf]
      %v529 = vunpack.c.l.b16 %v525
      %v530 = vpack.c.b16 %v529, %v529
      %531 = vrot.lane.b32.xlu0 %v530, 64
      %v532 = vpop.permute.xlu0 %531
      %v534 = vunpack.c.l.b16 %v526
      %v535 = vpack.c.b16 %v534, %v534
      %536 = vrot.lane.b32.xlu0 %v535, 64
      %v537 = vpop.permute.xlu0 %536
      %v539 = vsel %vm163, %v532, 0
      %v542 = vsel %vm163, %v537, 0
      %544 = vmatprep.subr.bf16.mxu0 0
      %545 = vmatpush1.bf16.xpose.msra.mxu0 %v542
      %546 = vmatprep.subr.bf16.mxu0 0
      %547 = vmatpush1.bf16.xpose.msra.mxu0 0
      %548 = vmatprep.subr.bf16.mxu0 0
      %549 = vmatpush1.bf16.xpose.msra.mxu0 0
      %550 = vmatprep.subr.bf16.mxu0 0
      %551 = vmatpush1.bf16.xpose.msra.mxu0 0
      %552 = vmatprep.subr.bf16.mxu0 0
      %553 = vmatpush1.bf16.xpose.msra.mxu0 0
      %554 = vmatprep.subr.bf16.mxu0 0
      %555 = vmatpush1.bf16.xpose.msra.mxu0 0
      %556 = vmatprep.subr.bf16.mxu0 0
      %557 = vmatpush1.bf16.xpose.msra.mxu0 0
      %558 = vmatprep.subr.bf16.mxu0 0
      %559 = vmatpush1.bf16.xpose.msra.mxu0 0
      %560 = vmatprep.subr.bf16.mxu0 0
      %561 = vmatpush1.bf16.xpose.msra.mxu0 0
      %562 = vmatprep.subr.bf16.mxu0 0
      %563 = vmatpush1.bf16.xpose.msra.mxu0 0
      %564 = vmatprep.subr.bf16.mxu0 0
      %565 = vmatpush1.bf16.xpose.msra.mxu0 0
      %566 = vmatprep.subr.bf16.mxu0 0
      %567 = vmatpush1.bf16.xpose.msra.mxu0 0
      %568 = vmatprep.subr.bf16.mxu0 0
      %569 = vmatpush1.bf16.xpose.msra.mxu0 0
      %570 = vmatprep.subr.bf16.mxu0 0
      %571 = vmatpush1.bf16.xpose.msra.mxu0 0
      %572 = vmatprep.subr.bf16.mxu0 0
      %573 = vmatpush1.bf16.xpose.msra.mxu0 0
      %574 = vmatprep.subr.bf16.mxu0 0
      %575 = vmatpush1.bf16.xpose.msra.mxu0 0
      %576 = vmatprep.mubr.bf16.mxu0 0
      %577 = vmatmul.mubr.bf16.gmra.mrb[0].mxu0 %v539
      %v578 = vpop.f32.mrb[0].mxu0
      %v579 = vadd.f32 0.0, %v578
      %v580 = vpop.f32.mrb[0].mxu0
      %v581 = vpop.f32.mrb[0].mxu0
      %v582 = vpop.f32.mrb[0].mxu0
      %583 = vdwg.mxu0
      %v584 = vmul.f32 %v579, 0.125
      %v585 = vadd.f32 %v584, %v215
      %v586 = vsel %vm218, %v585, -inf
      %587 = vmax.xlane.f32.xlu0 %v586
      %v588 = vpop.xlane.xlu0 %587
      %v589 = vsub.f32 %v585, %v588
      %v590 = vmul.f32 %v589, 1.442695
      %v591 = vpow.pop %v590
      %v592 = vsel %vm218, %v591, 0.0
      %593 = vadd.xlane.f32.xlu0 %v592
      %v594 = vpop.xlane.xlu0 %593
      %v595 = vrcp.pop %v594
      %v596 = vmul.f32 %v591, %v595
      %v597 = vpack.c.bf16 %v596, %v596
      %v599 = vunpack.c.l.b16 %v527
      %v600 = vpack.c.b16 %v599, %v599
      %601 = vrot.lane.b32.xlu0 %v600, 64
      %v602 = vpop.permute.xlu0 %601
      %v604 = vsel %vm218, %v597, 0
      %v607 = vsel %vm234, %v602, 0
      %609 = vmatprep.subr.bf16.mxu0 0
      %610 = vmatpush1.bf16.msra.mxu0 %v607
      %611 = vmatprep.subr.bf16.mxu0 0
      %612 = vmatpush1.bf16.msra.mxu0 0
      %613 = vmatprep.subr.bf16.mxu0 0
      %614 = vmatpush1.bf16.msra.mxu0 0
      %615 = vmatprep.subr.bf16.mxu0 0
      %616 = vmatpush1.bf16.msra.mxu0 0
      %617 = vmatprep.subr.bf16.mxu0 0
      %618 = vmatpush1.bf16.msra.mxu0 0
      %619 = vmatprep.subr.bf16.mxu0 0
      %620 = vmatpush1.bf16.msra.mxu0 0
      %621 = vmatprep.subr.bf16.mxu0 0
      %622 = vmatpush1.bf16.msra.mxu0 0
      %623 = vmatprep.subr.bf16.mxu0 0
      %624 = vmatpush1.bf16.msra.mxu0 0
      %625 = vmatprep.subr.bf16.mxu0 0
      %626 = vmatpush1.bf16.msra.mxu0 0
      %627 = vmatprep.subr.bf16.mxu0 0
      %628 = vmatpush1.bf16.msra.mxu0 0
      %629 = vmatprep.subr.bf16.mxu0 0
      %630 = vmatpush1.bf16.msra.mxu0 0
      %631 = vmatprep.subr.bf16.mxu0 0
      %632 = vmatpush1.bf16.msra.mxu0 0
      %633 = vmatprep.subr.bf16.mxu0 0
      %634 = vmatpush1.bf16.msra.mxu0 0
      %635 = vmatprep.subr.bf16.mxu0 0
      %636 = vmatpush1.bf16.msra.mxu0 0
      %637 = vmatprep.subr.bf16.mxu0 0
      %638 = vmatpush1.bf16.msra.mxu0 0
      %639 = vmatprep.subr.bf16.mxu0 0
      %640 = vmatpush1.bf16.msra.mxu0 0
      %641 = vmatprep.mubr.bf16.mxu0 0
      %642 = vmatmul.mubr.bf16.gmra.mrb[0].mxu0 %v604
      %v643 = vpop.f32.mrb[0].mxu0
      %v644 = vadd.f32 0.0, %v643
      %v645 = vpop.f32.mrb[0].mxu0
      %v646 = vpop.f32.mrb[0].mxu0
      %v647 = vpop.f32.mrb[0].mxu0
      %648 = vdwg.mxu0
      %v649 = vpack.c.bf16 %v644, %v644
      %v651 = vunpack.c.l.b16 %v649
      %v652 = vpack.c.b16 %v651, %v651
      %653 = vrot.lane.b32.xlu0 %v652, 64
      %v654 = vpop.permute.xlu0 %653
      %656 = vst.msk [vmem:[%s157 + $0x4] sm:$0xf] %vm412, %v654
      %p657 = scmp.lt.s32.totalorder %s13, 1
      %s658 = scalar_select %p657, %s13, 1
      %s659 = smul.addr %s658, 2
      %s660 = smul.addr %s659, 4
      %s661 = scalar_lea.vmem %s2, %s660
      // Predicated region
      $region29: #{electra_class_forward.12} parent=27 // pred_check
        %p662 = pneg %p83
      $region30: #{electra_class_forward.12} parent=27 // pred_check_branch
        %664 = sbr.rel (%p662) target = $region32
      $region31: #{electra_class_forward.12} parent=27 // pred_region
        _
      $region32: #{electra_class_forward.12} parent=27 // pred_fallthru
        _
    $region28: #{electra_class_forward.12} parent=5 // pred_fallthru
      _
    %p665 = scmp.le.s32.totalorder 2, %s8
    // Predicated region
    $region33: #{electra_class_forward.12} parent=5 // pred_check
      %p666 = pneg %p665
    $region34: #{electra_class_forward.12} parent=5 // pred_check_branch
      %668 = sbr.rel (%p666) target = $region36
    $region35: #{electra_class_forward.12} parent=5 // pred_region
      %s669 = ssub.s32 %s8, 2
      // Predicated region
      $region37: #{electra_class_forward.12} parent=35 // pred_check
        %p670 = pneg %p89
      $region38: #{electra_class_forward.12} parent=35 // pred_check_branch
        %672 = sbr.rel (%p670) target = $region40
      $region39: #{electra_class_forward.12} parent=35 // pred_region
        %p673 = scmp.lt.s32.totalorder %s14, 1
        %s674 = scalar_select %p673, %s14, 1
        %s675 = smul.addr %s674, 2
        %s676 = smul.addr %s675, 4
        %s677 = scalar_lea.vmem %s2, %s676
      $region40: #{electra_class_forward.12} parent=35 // pred_fallthru
        _
    $region36: #{electra_class_forward.12} parent=5 // pred_fallthru
      _
  $region6: #{electra_class_forward.12} parent=0 // loop_footer
    %s12 = sadd.s32 1, %s8
  $region7: #{electra_class_forward.12} parent=0 // loop_footer_branch
    %7 = sbr.rel target = $region3
  $region8: #{electra_class_forward.12} parent=0 // loop_exit
    _

// kernel: electra_class_forward.15
$region0: #{electra_class_forward.15}
  #allocation0 [shape = 'u32[]', space=smem, size = 0x4, offset = 0x4, fixed_abs, tag = 'smem constant byte address 0x4 - core index']
  #allocation1 [shape = 'u32[144,128]{1,0:T(1,128)}', space=vmem, size = 0x12000, scoped, tag = 'internal scratch']
  %s0 = inlined_call_operand.vmem [shape: bf16[16,256], index: 0, kind: input, shape index: {}]
  %s1 = inlined_call_operand.vmem [shape: bf16[256,768], index: 1, kind: input, shape index: {}]
  %s2 = inlined_call_operand.vmem [shape: f32[1,768], index: 2, kind: input, shape index: {}]
  %s3 = inlined_call_operand.vmem [shape: bf16[16,768], index: 3, kind: output, shape index: {}]
  %s4 = sld [smem:[#allocation0]]
  $region22: #{electra_class_forward.15} parent=0
    _
  %s6 = ssub.s32 1, %s4
  %s7 = scalar_select 0, %s6, %s4
  // Predicated region
  $region2: #{electra_class_forward.15} parent=0 // pred_check
    _
  $region3: #{electra_class_forward.15} parent=0 // pred_check_branch
    %9 = sbr.rel (0) target = $region5
  $region4: #{electra_class_forward.15} parent=0 // pred_region
    _
  $region5: #{electra_class_forward.15} parent=0 // pred_fallthru
    _
  // Predicated region
  $region6: #{electra_class_forward.15} parent=0 // pred_check
    _
  $region7: #{electra_class_forward.15} parent=0 // pred_check_branch
    %11 = sbr.rel (0) target = $region9
  $region8: #{electra_class_forward.15} parent=0 // pred_region
    _
  $region9: #{electra_class_forward.15} parent=0 // pred_fallthru
    _
  // Predicated region
  $region10: #{electra_class_forward.15} parent=0 // pred_check
    _
  $region11: #{electra_class_forward.15} parent=0 // pred_check_branch
    %13 = sbr.rel (0) target = $region13
  $region12: #{electra_class_forward.15} parent=0 // pred_region
    _
  $region13: #{electra_class_forward.15} parent=0 // pred_fallthru
    _
  %v14 = vld [vmem:[%s0] sm:$0xff]
  %v15 = vld [vmem:[%s0 + $0x8] sm:$0xff]
  %v16 = vld [vmem:[%s1] sm:$0xff]
  %v17 = vld [vmem:[%s1 + $0x8] sm:$0xff]
  %v18 = vld [vmem:[%s1 + $0x10] sm:$0xff]
  %v19 = vld [vmem:[%s1 + $0x18] sm:$0xff]
  %v20 = vld [vmem:[%s1 + $0x20] sm:$0xff]
  %v21 = vld [vmem:[%s1 + $0x28] sm:$0xff]
  %v22 = vld [vmem:[%s1 + $0x30] sm:$0xff]
  %v23 = vld [vmem:[%s1 + $0x38] sm:$0xff]
  %v24 = vld [vmem:[%s1 + $0x40] sm:$0xff]
  %v25 = vld [vmem:[%s1 + $0x48] sm:$0xff]
  %v26 = vld [vmem:[%s1 + $0x50] sm:$0xff]
  %v27 = vld [vmem:[%s1 + $0x58] sm:$0xff]
  %v28 = vld [vmem:[%s1 + $0x60] sm:$0xff]
  %v29 = vld [vmem:[%s1 + $0x68] sm:$0xff]
  %v30 = vld [vmem:[%s1 + $0x70] sm:$0xff]
  %v31 = vld [vmem:[%s1 + $0x78] sm:$0xff]
  %v32 = vld [vmem:[%s1 + $0x80] sm:$0xff]
  %v33 = vld [vmem:[%s1 + $0x88] sm:$0xff]
  %v34 = vld [vmem:[%s1 + $0x90] sm:$0xff]
  %v35 = vld [vmem:[%s1 + $0x98] sm:$0xff]
  %v36 = vld [vmem:[%s1 + $0xa0] sm:$0xff]
  %v37 = vld [vmem:[%s1 + $0xa8] sm:$0xff]
  %v38 = vld [vmem:[%s1 + $0xb0] sm:$0xff]
  %v39 = vld [vmem:[%s1 + $0xb8] sm:$0xff]
  %v40 = vld [vmem:[%s1 + $0xc0] sm:$0xff]
  %v41 = vld [vmem:[%s1 + $0xc8] sm:$0xff]
  %v42 = vld [vmem:[%s1 + $0xd0] sm:$0xff]
  %v43 = vld [vmem:[%s1 + $0xd8] sm:$0xff]
  %v44 = vld [vmem:[%s1 + $0xe0] sm:$0xff]
  %v45 = vld [vmem:[%s1 + $0xe8] sm:$0xff]
  %v46 = vld [vmem:[%s1 + $0xf0] sm:$0xff]
  %v47 = vld [vmem:[%s1 + $0xf8] sm:$0xff]
  %v48 = vld [vmem:[%s1 + $0x100] sm:$0xff]
  %v49 = vld [vmem:[%s1 + $0x108] sm:$0xff]
  %v50 = vld [vmem:[%s1 + $0x110] sm:$0xff]
  %v51 = vld [vmem:[%s1 + $0x118] sm:$0xff]
  %v52 = vld [vmem:[%s1 + $0x120] sm:$0xff]
  %v53 = vld [vmem:[%s1 + $0x128] sm:$0xff]
  %v54 = vld [vmem:[%s1 + $0x130] sm:$0xff]
  %v55 = vld [vmem:[%s1 + $0x138] sm:$0xff]
  %v56 = vld [vmem:[%s1 + $0x140] sm:$0xff]
  %v57 = vld [vmem:[%s1 + $0x148] sm:$0xff]
  %v58 = vld [vmem:[%s1 + $0x150] sm:$0xff]
  %v59 = vld [vmem:[%s1 + $0x158] sm:$0xff]
  %v60 = vld [vmem:[%s1 + $0x160] sm:$0xff]
  %v61 = vld [vmem:[%s1 + $0x168] sm:$0xff]
  %v62 = vld [vmem:[%s1 + $0x170] sm:$0xff]
  %v63 = vld [vmem:[%s1 + $0x178] sm:$0xff]
  %v64 = vld [vmem:[%s1 + $0x180] sm:$0xff]
  %v65 = vld [vmem:[%s1 + $0x188] sm:$0xff]
  %v66 = vld [vmem:[%s1 + $0x190] sm:$0xff]
  %v67 = vld [vmem:[%s1 + $0x198] sm:$0xff]
  %v68 = vld [vmem:[%s1 + $0x1a0] sm:$0xff]
  %v69 = vld [vmem:[%s1 + $0x1a8] sm:$0xff]
  %v70 = vld [vmem:[%s1 + $0x1b0] sm:$0xff]
  %v71 = vld [vmem:[%s1 + $0x1b8] sm:$0xff]
  %v72 = vld [vmem:[%s1 + $0x1c0] sm:$0xff]
  %v73 = vld [vmem:[%s1 + $0x1c8] sm:$0xff]
  %v74 = vld [vmem:[%s1 + $0x1d0] sm:$0xff]
  %v75 = vld [vmem:[%s1 + $0x1d8] sm:$0xff]
  %v76 = vld [vmem:[%s1 + $0x1e0] sm:$0xff]
  %v77 = vld [vmem:[%s1 + $0x1e8] sm:$0xff]
  %v78 = vld [vmem:[%s1 + $0x1f0] sm:$0xff]
  %v79 = vld [vmem:[%s1 + $0x1f8] sm:$0xff]
  %v80 = vld [vmem:[%s1 + $0x200] sm:$0xff]
  %v81 = vld [vmem:[%s1 + $0x208] sm:$0xff]
  %v82 = vld [vmem:[%s1 + $0x210] sm:$0xff]
  %v83 = vld [vmem:[%s1 + $0x218] sm:$0xff]
  %v84 = vld [vmem:[%s1 + $0x220] sm:$0xff]
  %v85 = vld [vmem:[%s1 + $0x228] sm:$0xff]
  %v86 = vld [vmem:[%s1 + $0x230] sm:$0xff]
  %v87 = vld [vmem:[%s1 + $0x238] sm:$0xff]
  %v88 = vld [vmem:[%s1 + $0x240] sm:$0xff]
  %v89 = vld [vmem:[%s1 + $0x248] sm:$0xff]
  %v90 = vld [vmem:[%s1 + $0x250] sm:$0xff]
  %v91 = vld [vmem:[%s1 + $0x258] sm:$0xff]
  %v92 = vld [vmem:[%s1 + $0x260] sm:$0xff]
  %v93 = vld [vmem:[%s1 + $0x268] sm:$0xff]
  %v94 = vld [vmem:[%s1 + $0x270] sm:$0xff]
  %v95 = vld [vmem:[%s1 + $0x278] sm:$0xff]
  %v96 = vld [vmem:[%s1 + $0x280] sm:$0xff]
  %v97 = vld [vmem:[%s1 + $0x288] sm:$0xff]
  %v98 = vld [vmem:[%s1 + $0x290] sm:$0xff]
  %v99 = vld [vmem:[%s1 + $0x298] sm:$0xff]
  %v100 = vld [vmem:[%s1 + $0x2a0] sm:$0xff]
  %v101 = vld [vmem:[%s1 + $0x2a8] sm:$0xff]
  %v102 = vld [vmem:[%s1 + $0x2b0] sm:$0xff]
  %v103 = vld [vmem:[%s1 + $0x2b8] sm:$0xff]
  %v104 = vld [vmem:[%s1 + $0x2c0] sm:$0xff]
  %v105 = vld [vmem:[%s1 + $0x2c8] sm:$0xff]
  %v106 = vld [vmem:[%s1 + $0x2d0] sm:$0xff]
  %v107 = vld [vmem:[%s1 + $0x2d8] sm:$0xff]
  %v108 = vld [vmem:[%s1 + $0x2e0] sm:$0xff]
  %v109 = vld [vmem:[%s1 + $0x2e8] sm:$0xff]
  %v110 = vld [vmem:[%s1 + $0x2f0] sm:$0xff]
  %v111 = vld [vmem:[%s1 + $0x2f8] sm:$0xff]
  %v112 = vld [vmem:[%s2] sm:$0x3f]
  %v114 = vlaneseq
  %v115 = vshrl.u32 %v114, 7
  %v116 = vsub.s32 0, %v115
  %v117 = vrot.slane %v112, %v116
  %v118 = vlaneseq
  %v119 = vshrl.u32 %v118, 7
  %v120 = vsub.s32 1, %v119
  %v121 = vrot.slane %v112, %v120
  %v122 = vlaneseq
  %v123 = vshrl.u32 %v122, 7
  %v124 = vsub.s32 2, %v123
  %v125 = vrot.slane %v112, %v124
  %v126 = vlaneseq
  %v127 = vshrl.u32 %v126, 7
  %v128 = vsub.s32 3, %v127
  %v129 = vrot.slane %v112, %v128
  %v130 = vlaneseq
  %v131 = vshrl.u32 %v130, 7
  %v132 = vsub.s32 4, %v131
  %v133 = vrot.slane %v112, %v132
  %v134 = vlaneseq
  %v135 = vshrl.u32 %v134, 7
  %v136 = vsub.s32 5, %v135
  %v137 = vrot.slane %v112, %v136
  %v146 = vunpack.c.l.b16 %v14
  %v147 = vunpack.c.h.b16 %v14
  %v148 = vunpack.c.l.b16 %v15
  %v149 = vunpack.c.h.b16 %v15
  %v150 = vpack.c.b16 %v148, %v146
  %v151 = vpack.c.b16 %v149, %v147
  %v250 = vunpack.c.l.b16 %v16
  %v251 = vunpack.c.h.b16 %v16
  %v252 = vunpack.c.l.b16 %v17
  %v253 = vunpack.c.h.b16 %v17
  %v254 = vunpack.c.l.b16 %v18
  %v255 = vunpack.c.h.b16 %v18
  %v256 = vunpack.c.l.b16 %v19
  %v257 = vunpack.c.h.b16 %v19
  %v258 = vunpack.c.l.b16 %v20
  %v259 = vunpack.c.h.b16 %v20
  %v260 = vunpack.c.l.b16 %v21
  %v261 = vunpack.c.h.b16 %v21
  %v262 = vunpack.c.l.b16 %v22
  %v263 = vunpack.c.h.b16 %v22
  %v264 = vunpack.c.l.b16 %v23
  %v265 = vunpack.c.h.b16 %v23
  %v266 = vunpack.c.l.b16 %v24
  %v267 = vunpack.c.h.b16 %v24
  %v268 = vunpack.c.l.b16 %v25
  %v269 = vunpack.c.h.b16 %v25
  %v270 = vunpack.c.l.b16 %v26
  %v271 = vunpack.c.h.b16 %v26
  %v272 = vunpack.c.l.b16 %v27
  %v273 = vunpack.c.h.b16 %v27
  %v274 = vunpack.c.l.b16 %v28
  %v275 = vunpack.c.h.b16 %v28
  %v276 = vunpack.c.l.b16 %v29
  %v277 = vunpack.c.h.b16 %v29
  %v278 = vunpack.c.l.b16 %v30
  %v279 = vunpack.c.h.b16 %v30
  %v280 = vunpack.c.l.b16 %v31
  %v281 = vunpack.c.h.b16 %v31
  %v282 = vunpack.c.l.b16 %v32
  %v283 = vunpack.c.h.b16 %v32
  %v284 = vunpack.c.l.b16 %v33
  %v285 = vunpack.c.h.b16 %v33
  %v286 = vunpack.c.l.b16 %v34
  %v287 = vunpack.c.h.b16 %v34
  %v288 = vunpack.c.l.b16 %v35
  %v289 = vunpack.c.h.b16 %v35
  %v290 = vunpack.c.l.b16 %v36
  %v291 = vunpack.c.h.b16 %v36
  %v292 = vunpack.c.l.b16 %v37
  %v293 = vunpack.c.h.b16 %v37
  %v294 = vunpack.c.l.b16 %v38
  %v295 = vunpack.c.h.b16 %v38
  %v296 = vunpack.c.l.b16 %v39
  %v297 = vunpack.c.h.b16 %v39
  %v298 = vunpack.c.l.b16 %v40
  %v299 = vunpack.c.h.b16 %v40
  %v300 = vunpack.c.l.b16 %v41
  %v301 = vunpack.c.h.b16 %v41
  %v302 = vunpack.c.l.b16 %v42
  %v303 = vunpack.c.h.b16 %v42
  %v304 = vunpack.c.l.b16 %v43
  %v305 = vunpack.c.h.b16 %v43
  %v306 = vunpack.c.l.b16 %v44
  %v307 = vunpack.c.h.b16 %v44
  %v308 = vunpack.c.l.b16 %v45
  %v309 = vunpack.c.h.b16 %v45
  %v310 = vunpack.c.l.b16 %v46
  %v311 = vunpack.c.h.b16 %v46
  %v312 = vunpack.c.l.b16 %v47
  %v313 = vunpack.c.h.b16 %v47
  %v314 = vunpack.c.l.b16 %v48
  %v315 = vunpack.c.h.b16 %v48
  %v316 = vunpack.c.l.b16 %v49
  %v317 = vunpack.c.h.b16 %v49
  %v318 = vunpack.c.l.b16 %v50
  %v319 = vunpack.c.h.b16 %v50
  %v320 = vunpack.c.l.b16 %v51
  %v321 = vunpack.c.h.b16 %v51
  %v322 = vunpack.c.l.b16 %v52
  %v323 = vunpack.c.h.b16 %v52
  %v324 = vunpack.c.l.b16 %v53
  %v325 = vunpack.c.h.b16 %v53
  %v326 = vunpack.c.l.b16 %v54
  %v327 = vunpack.c.h.b16 %v54
  %v328 = vunpack.c.l.b16 %v55
  %v329 = vunpack.c.h.b16 %v55
  %v330 = vunpack.c.l.b16 %v56
  %v331 = vunpack.c.h.b16 %v56
  %v332 = vunpack.c.l.b16 %v57
  %v333 = vunpack.c.h.b16 %v57
  %v334 = vunpack.c.l.b16 %v58
  %v335 = vunpack.c.h.b16 %v58
  %v336 = vunpack.c.l.b16 %v59
  %v337 = vunpack.c.h.b16 %v59
  %v338 = vunpack.c.l.b16 %v60
  %v339 = vunpack.c.h.b16 %v60
  %v340 = vunpack.c.l.b16 %v61
  %v341 = vunpack.c.h.b16 %v61
  %v342 = vunpack.c.l.b16 %v62
  %v343 = vunpack.c.h.b16 %v62
  %v344 = vunpack.c.l.b16 %v63
  %v345 = vunpack.c.h.b16 %v63
  %v346 = vunpack.c.l.b16 %v64
  %v347 = vunpack.c.h.b16 %v64
  %v348 = vunpack.c.l.b16 %v65
  %v349 = vunpack.c.h.b16 %v65
  %v350 = vunpack.c.l.b16 %v66
  %v351 = vunpack.c.h.b16 %v66
  %v352 = vunpack.c.l.b16 %v67
  %v353 = vunpack.c.h.b16 %v67
  %v354 = vunpack.c.l.b16 %v68
  %v355 = vunpack.c.h.b16 %v68
  %v356 = vunpack.c.l.b16 %v69
  %v357 = vunpack.c.h.b16 %v69
  %v358 = vunpack.c.l.b16 %v70
  %v359 = vunpack.c.h.b16 %v70
  %v360 = vunpack.c.l.b16 %v71
  %v361 = vunpack.c.h.b16 %v71
  %v362 = vunpack.c.l.b16 %v72
  %v363 = vunpack.c.h.b16 %v72
  %v364 = vunpack.c.l.b16 %v73
  %v365 = vunpack.c.h.b16 %v73
  %v366 = vunpack.c.l.b16 %v74
  %v367 = vunpack.c.h.b16 %v74
  %v368 = vunpack.c.l.b16 %v75
  %v369 = vunpack.c.h.b16 %v75
  %v370 = vunpack.c.l.b16 %v76
  %v371 = vunpack.c.h.b16 %v76
  %v372 = vunpack.c.l.b16 %v77
  %v373 = vunpack.c.h.b16 %v77
  %v374 = vunpack.c.l.b16 %v78
  %v375 = vunpack.c.h.b16 %v78
  %v376 = vunpack.c.l.b16 %v79
  %v377 = vunpack.c.h.b16 %v79
  %v378 = vunpack.c.l.b16 %v80
  %v379 = vunpack.c.h.b16 %v80
  %v380 = vunpack.c.l.b16 %v81
  %v381 = vunpack.c.h.b16 %v81
  %v382 = vunpack.c.l.b16 %v82
  %v383 = vunpack.c.h.b16 %v82
  %v384 = vunpack.c.l.b16 %v83
  %v385 = vunpack.c.h.b16 %v83
  %v386 = vunpack.c.l.b16 %v84
  %v387 = vunpack.c.h.b16 %v84
  %v388 = vunpack.c.l.b16 %v85
  %v389 = vunpack.c.h.b16 %v85
  %v390 = vunpack.c.l.b16 %v86
  %v391 = vunpack.c.h.b16 %v86
  %v392 = vunpack.c.l.b16 %v87
  %v393 = vunpack.c.h.b16 %v87
  %v394 = vunpack.c.l.b16 %v88
  %v395 = vunpack.c.h.b16 %v88
  %v396 = vunpack.c.l.b16 %v89
  %v397 = vunpack.c.h.b16 %v89
  %v398 = vunpack.c.l.b16 %v90
  %v399 = vunpack.c.h.b16 %v90
  %v400 = vunpack.c.l.b16 %v91
  %v401 = vunpack.c.h.b16 %v91
  %v402 = vunpack.c.l.b16 %v92
  %v403 = vunpack.c.h.b16 %v92
  %v404 = vunpack.c.l.b16 %v93
  %v405 = vunpack.c.h.b16 %v93
  %v406 = vunpack.c.l.b16 %v94
  %v407 = vunpack.c.h.b16 %v94
  %v408 = vunpack.c.l.b16 %v95
  %v409 = vunpack.c.h.b16 %v95
  %v410 = vunpack.c.l.b16 %v96
  %v411 = vunpack.c.h.b16 %v96
  %v412 = vunpack.c.l.b16 %v97
  %v413 = vunpack.c.h.b16 %v97
  %v414 = vunpack.c.l.b16 %v98
  %v415 = vunpack.c.h.b16 %v98
  %v416 = vunpack.c.l.b16 %v99
  %v417 = vunpack.c.h.b16 %v99
  %v418 = vunpack.c.l.b16 %v100
  %v419 = vunpack.c.h.b16 %v100
  %v420 = vunpack.c.l.b16 %v101
  %v421 = vunpack.c.h.b16 %v101
  %v422 = vunpack.c.l.b16 %v102
  %v423 = vunpack.c.h.b16 %v102
  %v424 = vunpack.c.l.b16 %v103
  %v425 = vunpack.c.h.b16 %v103
  %v426 = vunpack.c.l.b16 %v104
  %v427 = vunpack.c.h.b16 %v104
  %v428 = vunpack.c.l.b16 %v105
  %v429 = vunpack.c.h.b16 %v105
  %v430 = vunpack.c.l.b16 %v106
  %v431 = vunpack.c.h.b16 %v106
  %v432 = vunpack.c.l.b16 %v107
  %v433 = vunpack.c.h.b16 %v107
  %v434 = vunpack.c.l.b16 %v108
  %v435 = vunpack.c.h.b16 %v108
  %v436 = vunpack.c.l.b16 %v109
  %v437 = vunpack.c.h.b16 %v109
  %v438 = vunpack.c.l.b16 %v110
  %v439 = vunpack.c.h.b16 %v110
  %v440 = vunpack.c.l.b16 %v111
  %v441 = vunpack.c.h.b16 %v111
  %v442 = vpack.c.b16 %v256, %v250
  %v443 = vpack.c.b16 %v257, %v251
  %v444 = vpack.c.b16 %v258, %v252
  %v445 = vpack.c.b16 %v259, %v253
  %v446 = vpack.c.b16 %v260, %v254
  %v447 = vpack.c.b16 %v261, %v255
  %v448 = vpack.c.b16 %v268, %v262
  %v449 = vpack.c.b16 %v269, %v263
  %v450 = vpack.c.b16 %v270, %v264
  %v451 = vpack.c.b16 %v271, %v265
  %v452 = vpack.c.b16 %v272, %v266
  %v453 = vpack.c.b16 %v273, %v267
  %v454 = vpack.c.b16 %v280, %v274
  %v455 = vpack.c.b16 %v281, %v275
  %v456 = vpack.c.b16 %v282, %v276
  %v457 = vpack.c.b16 %v283, %v277
  %v458 = vpack.c.b16 %v284, %v278
  %v459 = vpack.c.b16 %v285, %v279
  %v460 = vpack.c.b16 %v292, %v286
  %v461 = vpack.c.b16 %v293, %v287
  %v462 = vpack.c.b16 %v294, %v288
  %v463 = vpack.c.b16 %v295, %v289
  %v464 = vpack.c.b16 %v296, %v290
  %v465 = vpack.c.b16 %v297, %v291
  %v466 = vpack.c.b16 %v304, %v298
  %v467 = vpack.c.b16 %v305, %v299
  %v468 = vpack.c.b16 %v306, %v300
  %v469 = vpack.c.b16 %v307, %v301
  %v470 = vpack.c.b16 %v308, %v302
  %v471 = vpack.c.b16 %v309, %v303
  %v472 = vpack.c.b16 %v316, %v310
  %v473 = vpack.c.b16 %v317, %v311
  %v474 = vpack.c.b16 %v318, %v312
  %v475 = vpack.c.b16 %v319, %v313
  %v476 = vpack.c.b16 %v320, %v314
  %v477 = vpack.c.b16 %v321, %v315
  %v478 = vpack.c.b16 %v328, %v322
  %v479 = vpack.c.b16 %v329, %v323
  %v480 = vpack.c.b16 %v330, %v324
  %v481 = vpack.c.b16 %v331, %v325
  %v482 = vpack.c.b16 %v332, %v326
  %v483 = vpack.c.b16 %v333, %v327
  %v484 = vpack.c.b16 %v340, %v334
  %v485 = vpack.c.b16 %v341, %v335
  %v486 = vpack.c.b16 %v342, %v336
  %v487 = vpack.c.b16 %v343, %v337
  %v488 = vpack.c.b16 %v344, %v338
  %v489 = vpack.c.b16 %v345, %v339
  %v490 = vpack.c.b16 %v352, %v346
  %v491 = vpack.c.b16 %v353, %v347
  %v492 = vpack.c.b16 %v354, %v348
  %v493 = vpack.c.b16 %v355, %v349
  %v494 = vpack.c.b16 %v356, %v350
  %v495 = vpack.c.b16 %v357, %v351
  %v496 = vpack.c.b16 %v364, %v358
  %v497 = vpack.c.b16 %v365, %v359
  %v498 = vpack.c.b16 %v366, %v360
  %v499 = vpack.c.b16 %v367, %v361
  %v500 = vpack.c.b16 %v368, %v362
  %v501 = vpack.c.b16 %v369, %v363
  %v502 = vpack.c.b16 %v376, %v370
  %v503 = vpack.c.b16 %v377, %v371
  %v504 = vpack.c.b16 %v378, %v372
  %v505 = vpack.c.b16 %v379, %v373
  %v506 = vpack.c.b16 %v380, %v374
  %v507 = vpack.c.b16 %v381, %v375
  %v508 = vpack.c.b16 %v388, %v382
  %v509 = vpack.c.b16 %v389, %v383
  %v510 = vpack.c.b16 %v390, %v384
  %v511 = vpack.c.b16 %v391, %v385
  %v512 = vpack.c.b16 %v392, %v386
  %v513 = vpack.c.b16 %v393, %v387
  %v514 = vpack.c.b16 %v400, %v394
  %v515 = vpack.c.b16 %v401, %v395
  %v516 = vpack.c.b16 %v402, %v396
  %v517 = vpack.c.b16 %v403, %v397
  %v518 = vpack.c.b16 %v404, %v398
  %v519 = vpack.c.b16 %v405, %v399
  %v520 = vpack.c.b16 %v412, %v406
  %v521 = vpack.c.b16 %v413, %v407
  %v522 = vpack.c.b16 %v414, %v408
  %v523 = vpack.c.b16 %v415, %v409
  %v524 = vpack.c.b16 %v416, %v410
  %v525 = vpack.c.b16 %v417, %v411
  %v526 = vpack.c.b16 %v424, %v418
  %v527 = vpack.c.b16 %v425, %v419
  %v528 = vpack.c.b16 %v426, %v420
  %v529 = vpack.c.b16 %v427, %v421
  %v530 = vpack.c.b16 %v428, %v422
  %v531 = vpack.c.b16 %v429, %v423
  %v532 = vpack.c.b16 %v436, %v430
  %v533 = vpack.c.b16 %v437, %v431
  %v534 = vpack.c.b16 %v438, %v432
  %v535 = vpack.c.b16 %v439, %v433
  %v536 = vpack.c.b16 %v440, %v434
  %v537 = vpack.c.b16 %v441, %v435
  %634 = vmatprep.subr.bf16.mxu0 %v443
  %635 = vmatpush1.bf16.msra.mxu0 %v442
  %636 = vmatprep.subr.bf16.mxu0 %v449
  %637 = vmatpush1.bf16.msra.mxu0 %v448
  %638 = vmatprep.subr.bf16.mxu0 %v455
  %639 = vmatpush1.bf16.msra.mxu0 %v454
  %640 = vmatprep.subr.bf16.mxu0 %v461
  %641 = vmatpush1.bf16.msra.mxu0 %v460
  %642 = vmatprep.subr.bf16.mxu0 %v467
  %643 = vmatpush1.bf16.msra.mxu0 %v466
  %644 = vmatprep.subr.bf16.mxu0 %v473
  %645 = vmatpush1.bf16.msra.mxu0 %v472
  %646 = vmatprep.subr.bf16.mxu0 %v479
  %647 = vmatpush1.bf16.msra.mxu0 %v478
  %648 = vmatprep.subr.bf16.mxu0 %v485
  %649 = vmatpush1.bf16.msra.mxu0 %v484
  %650 = vmatprep.subr.bf16.mxu0 %v491
  %651 = vmatpush1.bf16.msra.mxu0 %v490
  %652 = vmatprep.subr.bf16.mxu0 %v497
  %653 = vmatpush1.bf16.msra.mxu0 %v496
  %654 = vmatprep.subr.bf16.mxu0 %v503
  %655 = vmatpush1.bf16.msra.mxu0 %v502
  %656 = vmatprep.subr.bf16.mxu0 %v509
  %657 = vmatpush1.bf16.msra.mxu0 %v508
  %658 = vmatprep.subr.bf16.mxu0 %v515
  %659 = vmatpush1.bf16.msra.mxu0 %v514
  %660 = vmatprep.subr.bf16.mxu0 %v521
  %661 = vmatpush1.bf16.msra.mxu0 %v520
  %662 = vmatprep.subr.bf16.mxu0 %v527
  %663 = vmatpush1.bf16.msra.mxu0 %v526
  %664 = vmatprep.subr.bf16.mxu0 %v533
  %665 = vmatpush1.bf16.msra.mxu0 %v532
  %666 = vmatprep.mubr.bf16.mxu0 %v151
  %667 = vmatmul.mubr.bf16.gmra.mrb[0].mxu0 %v150
  %v668 = vpop.f32.mrb[0].mxu0
  %v669 = vadd.f32 %v117, %v668
  %v670 = vpop.f32.mrb[0].mxu0
  %v671 = vadd.f32 %v121, %v670
  %v672 = vpop.f32.mrb[0].mxu0
  %v673 = vadd.f32 %v117, %v672
  %v674 = vpop.f32.mrb[0].mxu0
  %v675 = vadd.f32 %v121, %v674
  %676 = vdwg.mxu0
  %677 = vmatprep.subr.bf16.mxu0 %v445
  %678 = vmatpush1.bf16.msra.mxu0 %v444
  %679 = vmatprep.subr.bf16.mxu0 %v451
  %680 = vmatpush1.bf16.msra.mxu0 %v450
  %681 = vmatprep.subr.bf16.mxu0 %v457
  %682 = vmatpush1.bf16.msra.mxu0 %v456
  %683 = vmatprep.subr.bf16.mxu0 %v463
  %684 = vmatpush1.bf16.msra.mxu0 %v462
  %685 = vmatprep.subr.bf16.mxu0 %v469
  %686 = vmatpush1.bf16.msra.mxu0 %v468
  %687 = vmatprep.subr.bf16.mxu0 %v475
  %688 = vmatpush1.bf16.msra.mxu0 %v474
  %689 = vmatprep.subr.bf16.mxu0 %v481
  %690 = vmatpush1.bf16.msra.mxu0 %v480
  %691 = vmatprep.subr.bf16.mxu0 %v487
  %692 = vmatpush1.bf16.msra.mxu0 %v486
  %693 = vmatprep.subr.bf16.mxu0 %v493
  %694 = vmatpush1.bf16.msra.mxu0 %v492
  %695 = vmatprep.subr.bf16.mxu0 %v499
  %696 = vmatpush1.bf16.msra.mxu0 %v498
  %697 = vmatprep.subr.bf16.mxu0 %v505
  %698 = vmatpush1.bf16.msra.mxu0 %v504
  %699 = vmatprep.subr.bf16.mxu0 %v511
  %700 = vmatpush1.bf16.msra.mxu0 %v510
  %701 = vmatprep.subr.bf16.mxu0 %v517
  %702 = vmatpush1.bf16.msra.mxu0 %v516
  %703 = vmatprep.subr.bf16.mxu0 %v523
  %704 = vmatpush1.bf16.msra.mxu0 %v522
  %705 = vmatprep.subr.bf16.mxu0 %v529
  %706 = vmatpush1.bf16.msra.mxu0 %v528
  %707 = vmatprep.subr.bf16.mxu0 %v535
  %708 = vmatpush1.bf16.msra.mxu0 %v534
  %709 = vmatprep.mubr.bf16.mxu0 %v151
  %710 = vmatmul.mubr.bf16.gmra.mrb[0].mxu0 %v150
  %v711 = vpop.f32.mrb[0].mxu0
  %v712 = vadd.f32 %v125, %v711
  %v713 = vpop.f32.mrb[0].mxu0
  %v714 = vadd.f32 %v129, %v713
  %v715 = vpop.f32.mrb[0].mxu0
  %v716 = vadd.f32 %v125, %v715
  %v717 = vpop.f32.mrb[0].mxu0
  %v718 = vadd.f32 %v129, %v717
  %719 = vdwg.mxu0
  %720 = vmatprep.subr.bf16.mxu0 %v447
  %721 = vmatpush1.bf16.msra.mxu0 %v446
  %722 = vmatprep.subr.bf16.mxu0 %v453
  %723 = vmatpush1.bf16.msra.mxu0 %v452
  %724 = vmatprep.subr.bf16.mxu0 %v459
  %725 = vmatpush1.bf16.msra.mxu0 %v458
  %726 = vmatprep.subr.bf16.mxu0 %v465
  %727 = vmatpush1.bf16.msra.mxu0 %v464
  %728 = vmatprep.subr.bf16.mxu0 %v471
  %729 = vmatpush1.bf16.msra.mxu0 %v470
  %730 = vmatprep.subr.bf16.mxu0 %v477
  %731 = vmatpush1.bf16.msra.mxu0 %v476
  %732 = vmatprep.subr.bf16.mxu0 %v483
  %733 = vmatpush1.bf16.msra.mxu0 %v482
  %734 = vmatprep.subr.bf16.mxu0 %v489
  %735 = vmatpush1.bf16.msra.mxu0 %v488
  %736 = vmatprep.subr.bf16.mxu0 %v495
  %737 = vmatpush1.bf16.msra.mxu0 %v494
  %738 = vmatprep.subr.bf16.mxu0 %v501
  %739 = vmatpush1.bf16.msra.mxu0 %v500
  %740 = vmatprep.subr.bf16.mxu0 %v507
  %741 = vmatpush1.bf16.msra.mxu0 %v506
  %742 = vmatprep.subr.bf16.mxu0 %v513
  %743 = vmatpush1.bf16.msra.mxu0 %v512
  %744 = vmatprep.subr.bf16.mxu0 %v519
  %745 = vmatpush1.bf16.msra.mxu0 %v518
  %746 = vmatprep.subr.bf16.mxu0 %v525
  %747 = vmatpush1.bf16.msra.mxu0 %v524
  %748 = vmatprep.subr.bf16.mxu0 %v531
  %749 = vmatpush1.bf16.msra.mxu0 %v530
  %750 = vmatprep.subr.bf16.mxu0 %v537
  %751 = vmatpush1.bf16.msra.mxu0 %v536
  %752 = vmatprep.mubr.bf16.mxu0 %v151
  %753 = vmatmul.mubr.bf16.gmra.mrb[0].mxu0 %v150
  %v754 = vpop.f32.mrb[0].mxu0
  %v755 = vadd.f32 %v133, %v754
  %v756 = vpop.f32.mrb[0].mxu0
  %v757 = vadd.f32 %v137, %v756
  %v758 = vpop.f32.mrb[0].mxu0
  %v759 = vadd.f32 %v133, %v758
  %v760 = vpop.f32.mrb[0].mxu0
  %v761 = vadd.f32 %v137, %v760
  %762 = vdwg.mxu0
  %v763 = vpack.c.bf16 %v673, %v669
  %v764 = vpack.c.bf16 %v675, %v671
  %v765 = vpack.c.bf16 %v716, %v712
  %v766 = vpack.c.bf16 %v718, %v714
  %v767 = vpack.c.bf16 %v759, %v755
  %v768 = vpack.c.bf16 %v761, %v757
  %v775 = vunpack.c.l.b16 %v763
  %v776 = vunpack.c.l.b16 %v764
  %v777 = vunpack.c.l.b16 %v765
  %v778 = vunpack.c.l.b16 %v766
  %v779 = vunpack.c.l.b16 %v767
  %v780 = vunpack.c.l.b16 %v768
  %v781 = vunpack.c.h.b16 %v763
  %v782 = vunpack.c.h.b16 %v764
  %v783 = vunpack.c.h.b16 %v765
  %v784 = vunpack.c.h.b16 %v766
  %v785 = vunpack.c.h.b16 %v767
  %v786 = vunpack.c.h.b16 %v768
  %v787 = vpack.c.b16 %v776, %v775
  %v788 = vpack.c.b16 %v778, %v777
  %v789 = vpack.c.b16 %v780, %v779
  %v790 = vpack.c.b16 %v782, %v781
  %v791 = vpack.c.b16 %v784, %v783
  %v792 = vpack.c.b16 %v786, %v785
  %799 = vst [vmem:[%s3] sm:$0xff] %v787
  %800 = vst [vmem:[%s3 + $0x8] sm:$0xff] %v788
  %801 = vst [vmem:[%s3 + $0x10] sm:$0xff] %v789
  %802 = vst [vmem:[%s3 + $0x18] sm:$0xff] %v790
  %803 = vst [vmem:[%s3 + $0x20] sm:$0xff] %v791
  %804 = vst [vmem:[%s3 + $0x28] sm:$0xff] %v792
  // Predicated region
  $region14: #{electra_class_forward.15} parent=0 // pred_check
    _
  $region15: #{electra_class_forward.15} parent=0 // pred_check_branch
    %806 = sbr.rel (0) target = $region17
  $region16: #{electra_class_forward.15} parent=0 // pred_region
    _
  $region17: #{electra_class_forward.15} parent=0 // pred_fallthru
    _
  // Predicated region
  $region18: #{electra_class_forward.15} parent=0 // pred_check
    _
  $region19: #{electra_class_forward.15} parent=0 // pred_check_branch
    %808 = sbr.rel (0) target = $region21
  $region20: #{electra_class_forward.15} parent=0 // pred_region
    _
  $region21: #{electra_class_forward.15} parent=0 // pred_fallthru
    _

// kernel: electra_class_forward.19
$region0: #{electra_class_forward.19}
  #allocation0 [shape = 'u32[]', space=smem, size = 0x4, offset = 0x4, fixed_abs, tag = 'smem constant byte address 0x4 - core index']
  #allocation1 [shape = 'u32[144,128]{1,0:T(1,128)}', space=vmem, size = 0x12000, scoped, tag = 'internal scratch']
  %s0 = inlined_call_operand.vmem [shape: bf16[2,8,256], index: 0, kind: input, shape index: {}]
  %s1 = inlined_call_operand.vmem [shape: bf16[256,6], index: 1, kind: input, shape index: {}]
  %s2 = inlined_call_operand.vmem [shape: f32[1,6], index: 2, kind: input, shape index: {}]
  %s3 = inlined_call_operand.hbm [shape: f32[2,6], index: 3, kind: output, shape index: {}]
  %s4 = sld [smem:[#allocation0]]
  $region22: #{electra_class_forward.19} parent=0
    _
  %s6 = ssub.s32 1, %s4
  %s7 = scalar_select 0, %s6, %s4
  $region1: #{electra_class_forward.19} parent=0
    #allocation2 [shape = 'u8[1024]{0}', space=vmem, size = 0x400, scoped, tag = 'output window, operand 0, single buffered']
    #allocation3 [shape = 's32[1]{0}', space=sflag, size = 0x4, scoped, tag = 'scoped memory for electra_class_forward.19']
    %8 = vsyncpa [#allocation3], 0
    // Predicated region
    $region2: #{electra_class_forward.19} parent=1 // pred_check
      _
    $region3: #{electra_class_forward.19} parent=1 // pred_check_branch
      %10 = sbr.rel (0) target = $region5
    $region4: #{electra_class_forward.19} parent=1 // pred_region
      _
    $region5: #{electra_class_forward.19} parent=1 // pred_fallthru
      _
    // Predicated region
    $region6: #{electra_class_forward.19} parent=1 // pred_check
      _
    $region7: #{electra_class_forward.19} parent=1 // pred_check_branch
      %12 = sbr.rel (0) target = $region9
    $region8: #{electra_class_forward.19} parent=1 // pred_region
      _
    $region9: #{electra_class_forward.19} parent=1 // pred_fallthru
      _
    // Predicated region
    $region10: #{electra_class_forward.19} parent=1 // pred_check
      _
    $region11: #{electra_class_forward.19} parent=1 // pred_check_branch
      %14 = sbr.rel (0) target = $region13
    $region12: #{electra_class_forward.19} parent=1 // pred_region
      _
    $region13: #{electra_class_forward.19} parent=1 // pred_fallthru
      _
    %v15 = vld [vmem:[%s0] sm:$0xff]
    %v16 = vld [vmem:[%s0 + $0x8] sm:$0xff]
    %v17 = vunpack.c.l.bf16 %v15
    %v18 = vunpack.c.h.bf16 %v15
    %v19 = vunpack.c.l.bf16 %v16
    %v20 = vunpack.c.h.bf16 %v16
    %v21 = vrot.slane %v17, 4
    %v22 = vadd.f32 %v17, %v21
    %v23 = vrot.slane %v22, 2
    %v24 = vadd.f32 %v22, %v23
    %v25 = vrot.slane %v24, 1
    %v26 = vadd.f32 %v24, %v25
    %v27 = vrot.slane %v18, 4
    %v28 = vadd.f32 %v18, %v27
    %v29 = vrot.slane %v28, 2
    %v30 = vadd.f32 %v28, %v29
    %v31 = vrot.slane %v30, 1
    %v32 = vadd.f32 %v30, %v31
    %v33 = vrot.slane %v19, 4
    %v34 = vadd.f32 %v19, %v33
    %v35 = vrot.slane %v34, 2
    %v36 = vadd.f32 %v34, %v35
    %v37 = vrot.slane %v36, 1
    %v38 = vadd.f32 %v36, %v37
    %v39 = vrot.slane %v20, 4
    %v40 = vadd.f32 %v20, %v39
    %v41 = vrot.slane %v40, 2
    %v42 = vadd.f32 %v40, %v41
    %v43 = vrot.slane %v42, 1
    %v44 = vadd.f32 %v42, %v43
    %v45 = vrcp.pop 8.0
    %v46 = vmul.f32 %v26, %v45
    %v47 = vmul.f32 %v32, %v45
    %v48 = vmul.f32 %v38, %v45
    %v49 = vmul.f32 %v44, %v45
    %v50 = vld [vmem:[%s1] sm:$0xf]
    %v51 = vld [vmem:[%s1 + $0x4] sm:$0xf]
    %v52 = vld [vmem:[%s1 + $0x8] sm:$0xf]
    %v53 = vld [vmem:[%s1 + $0xc] sm:$0xf]
    %v54 = vld [vmem:[%s1 + $0x10] sm:$0xf]
    %v55 = vld [vmem:[%s1 + $0x14] sm:$0xf]
    %v56 = vld [vmem:[%s1 + $0x18] sm:$0xf]
    %v57 = vld [vmem:[%s1 + $0x1c] sm:$0xf]
    %v58 = vld [vmem:[%s1 + $0x20] sm:$0xf]
    %v59 = vld [vmem:[%s1 + $0x24] sm:$0xf]
    %v60 = vld [vmem:[%s1 + $0x28] sm:$0xf]
    %v61 = vld [vmem:[%s1 + $0x2c] sm:$0xf]
    %v62 = vld [vmem:[%s1 + $0x30] sm:$0xf]
    %v63 = vld [vmem:[%s1 + $0x34] sm:$0xf]
    %v64 = vld [vmem:[%s1 + $0x38] sm:$0xf]
    %v65 = vld [vmem:[%s1 + $0x3c] sm:$0xf]
    %v66 = vld [vmem:[%s1 + $0x40] sm:$0xf]
    %v67 = vld [vmem:[%s1 + $0x44] sm:$0xf]
    %v68 = vld [vmem:[%s1 + $0x48] sm:$0xf]
    %v69 = vld [vmem:[%s1 + $0x4c] sm:$0xf]
    %v70 = vld [vmem:[%s1 + $0x50] sm:$0xf]
    %v71 = vld [vmem:[%s1 + $0x54] sm:$0xf]
    %v72 = vld [vmem:[%s1 + $0x58] sm:$0xf]
    %v73 = vld [vmem:[%s1 + $0x5c] sm:$0xf]
    %v74 = vld [vmem:[%s1 + $0x60] sm:$0xf]
    %v75 = vld [vmem:[%s1 + $0x64] sm:$0xf]
    %v76 = vld [vmem:[%s1 + $0x68] sm:$0xf]
    %v77 = vld [vmem:[%s1 + $0x6c] sm:$0xf]
    %v78 = vld [vmem:[%s1 + $0x70] sm:$0xf]
    %v79 = vld [vmem:[%s1 + $0x74] sm:$0xf]
    %v80 = vld [vmem:[%s1 + $0x78] sm:$0xf]
    %v81 = vld [vmem:[%s1 + $0x7c] sm:$0xf]
    %v82 = vunpack.c.l.bf16 %v50
    %v83 = vunpack.c.l.bf16 %v51
    %v84 = vunpack.c.l.bf16 %v52
    %v85 = vunpack.c.l.bf16 %v53
    %v86 = vunpack.c.l.bf16 %v54
    %v87 = vunpack.c.l.bf16 %v55
    %v88 = vunpack.c.l.bf16 %v56
    %v89 = vunpack.c.l.bf16 %v57
    %v90 = vunpack.c.l.bf16 %v58
    %v91 = vunpack.c.l.bf16 %v59
    %v92 = vunpack.c.l.bf16 %v60
    %v93 = vunpack.c.l.bf16 %v61
    %v94 = vunpack.c.l.bf16 %v62
    %v95 = vunpack.c.l.bf16 %v63
    %v96 = vunpack.c.l.bf16 %v64
    %v97 = vunpack.c.l.bf16 %v65
    %v98 = vunpack.c.l.bf16 %v66
    %v99 = vunpack.c.l.bf16 %v67
    %v100 = vunpack.c.l.bf16 %v68
    %v101 = vunpack.c.l.bf16 %v69
    %v102 = vunpack.c.l.bf16 %v70
    %v103 = vunpack.c.l.bf16 %v71
    %v104 = vunpack.c.l.bf16 %v72
    %v105 = vunpack.c.l.bf16 %v73
    %v106 = vunpack.c.l.bf16 %v74
    %v107 = vunpack.c.l.bf16 %v75
    %v108 = vunpack.c.l.bf16 %v76
    %v109 = vunpack.c.l.bf16 %v77
    %v110 = vunpack.c.l.bf16 %v78
    %v111 = vunpack.c.l.bf16 %v79
    %v112 = vunpack.c.l.bf16 %v80
    %v113 = vunpack.c.l.bf16 %v81
    %v114 = vld [vmem:[%s2] sm:$0x1]
    %v116 = vlaneseq
    %v117 = vshrl.u32 %v116, 7
    %v118 = vsub.s32 0, %v117
    %v119 = vrot.slane %v114, %v118
    %vm125 = vcmask 1041409
    %v126 = vsel %vm125, %v48, %v46
    %v127 = vsel %vm125, %v49, %v47
    %130 = vmatprep.subr.mxu0 0.0
    %131 = vmatpush1.msra.mxu0 %v82
    %132 = vmatprep.subr.mxu0 0.0
    %133 = vmatpush1.msra.mxu0 %v83
    %134 = vmatprep.subr.mxu0 0.0
    %135 = vmatpush1.msra.mxu0 %v84
    %136 = vmatprep.subr.mxu0 0.0
    %137 = vmatpush1.msra.mxu0 %v85
    %138 = vmatprep.subr.mxu0 0.0
    %139 = vmatpush1.msra.mxu0 %v86
    %140 = vmatprep.subr.mxu0 0.0
    %141 = vmatpush1.msra.mxu0 %v87
    %142 = vmatprep.subr.mxu0 0.0
    %143 = vmatpush1.msra.mxu0 %v88
    %144 = vmatprep.subr.mxu0 0.0
    %145 = vmatpush1.msra.mxu0 %v89
    %146 = vmatprep.subr.mxu0 0.0
    %147 = vmatpush1.msra.mxu0 %v90
    %148 = vmatprep.subr.mxu0 0.0
    %149 = vmatpush1.msra.mxu0 %v91
    %150 = vmatprep.subr.mxu0 0.0
    %151 = vmatpush1.msra.mxu0 %v92
    %152 = vmatprep.subr.mxu0 0.0
    %153 = vmatpush1.msra.mxu0 %v93
    %154 = vmatprep.subr.mxu0 0.0
    %155 = vmatpush1.msra.mxu0 %v94
    %156 = vmatprep.subr.mxu0 0.0
    %157 = vmatpush1.msra.mxu0 %v95
    %158 = vmatprep.subr.mxu0 0.0
    %159 = vmatpush1.msra.mxu0 %v96
    %160 = vmatprep.subr.mxu0 0.0
    %161 = vmatpush1.msra.mxu0 %v97
    %162 = vmatprep.subr.mxu0 0.0
    %163 = vmatpush1.msra.mxu0 %v98
    %164 = vmatprep.subr.mxu0 0.0
    %165 = vmatpush1.msra.mxu0 %v99
    %166 = vmatprep.subr.mxu0 0.0
    %167 = vmatpush1.msra.mxu0 %v100
    %168 = vmatprep.subr.mxu0 0.0
    %169 = vmatpush1.msra.mxu0 %v101
    %170 = vmatprep.subr.mxu0 0.0
    %171 = vmatpush1.msra.mxu0 %v102
    %172 = vmatprep.subr.mxu0 0.0
    %173 = vmatpush1.msra.mxu0 %v103
    %174 = vmatprep.subr.mxu0 0.0
    %175 = vmatpush1.msra.mxu0 %v104
    %176 = vmatprep.subr.mxu0 0.0
    %177 = vmatpush1.msra.mxu0 %v105
    %178 = vmatprep.subr.mxu0 0.0
    %179 = vmatpush1.msra.mxu0 %v106
    %180 = vmatprep.subr.mxu0 0.0
    %181 = vmatpush1.msra.mxu0 %v107
    %182 = vmatprep.subr.mxu0 0.0
    %183 = vmatpush1.msra.mxu0 %v108
    %184 = vmatprep.subr.mxu0 0.0
    %185 = vmatpush1.msra.mxu0 %v109
    %186 = vmatprep.subr.mxu0 0.0
    %187 = vmatpush1.msra.mxu0 %v110
    %188 = vmatprep.subr.mxu0 0.0
    %189 = vmatpush1.msra.mxu0 %v111
    %190 = vmatprep.subr.mxu0 0.0
    %191 = vmatpush1.msra.mxu0 %v112
    %192 = vmatprep.subr.mxu0 0.0
    %193 = vmatpush1.msra.mxu0 %v113
    %194 = vmatprep.mubr.f32.mxu0 %v127
    %195 = vmatmul.mubr.f32.gmra.mrb[0].mxu0 %v126
    %v196 = vpop.f32.mrb[0].mxu0
    %v197 = vadd.f32 %v119, %v196
    %v198 = vpop.f32.mrb[0].mxu0
    %199 = vdwg.mxu0
    %v200 = vxor.u32 %v197, 2147483648
    %v201 = vmul.f32 %v200, 1.442695
    %v202 = vpow.pop %v201
    %v203 = vadd.f32 %v202, 1.0
    %v204 = vrcp.pop %v203
    %v205 = vmul.f32 1.0, %v204
    %vm206 = vcmask 41984
    %207 = vst.msk [vmem:[#allocation2] sm:$0x3] %vm206, %v205
    // Predicated region
    $region14: #{electra_class_forward.19} parent=1 // pred_check
      _
    $region15: #{electra_class_forward.19} parent=1 // pred_check_branch
      %209 = sbr.rel (0) target = $region17
    $region16: #{electra_class_forward.19} parent=1 // pred_region
      %s211 = ssub.s32 32, 32
      %212 = vsyncadd [#allocation3], %s211
      %s214 = sshll.u32 [#allocation2], 4
      %s215 = int_to_ptr.vmem [resolvable:$true] %s214
      %217 = dma.vmem_to_hbm [thread:$0]  %s215, 32, %s3, [#allocation3]
    $region17: #{electra_class_forward.19} parent=1 // pred_fallthru
      _
    // Predicated region
    $region18: #{electra_class_forward.19} parent=1 // pred_check
      _
    $region19: #{electra_class_forward.19} parent=1 // pred_check_branch
      %219 = sbr.rel (0) target = $region21
    $region20: #{electra_class_forward.19} parent=1 // pred_region
      %220 = dma.done [#allocation3], 32
    $region21: #{electra_class_forward.19} parent=1 // pred_fallthru
      _
    %221 = vsyncpa [#allocation3], 1

// kernel: electra_class_forward.14
$region0: #{electra_class_forward.14}
  #allocation0 [shape = 'u32[]', space=smem, size = 0x4, offset = 0x4, fixed_abs, tag = 'smem constant byte address 0x4 - core index']
  #allocation1 [shape = 'u32[144,128]{1,0:T(1,128)}', space=vmem, size = 0x12000, scoped, tag = 'internal scratch']
  %s0 = inlined_call_operand.vmem [shape: bf16[16,256], index: 0, kind: input, shape index: {}]
  %s1 = inlined_call_operand.vmem [shape: bf16[256,1024], index: 1, kind: input, shape index: {}]
  %s2 = inlined_call_operand.vmem [shape: f32[1,1024], index: 2, kind: input, shape index: {}]
  %s3 = inlined_call_operand.hbm [shape: bf16[1024,256], index: 3, kind: input, shape index: {}]
  %s4 = inlined_call_operand.vmem [shape: f32[1,256], index: 4, kind: input, shape index: {}]
  %s5 = inlined_call_operand.vmem [shape: f32[1,256], index: 5, kind: input, shape index: {}]
  %s6 = inlined_call_operand.vmem [shape: f32[1,256], index: 6, kind: input, shape index: {}]
  %s7 = inlined_call_operand.vmem [shape: bf16[16,256], index: 7, kind: output, shape index: {}]
  %s8 = sld [smem:[#allocation0]]
  $region42: #{electra_class_forward.14} parent=0
    _
  %s10 = ssub.s32 1, %s8
  %s11 = scalar_select 0, %s10, %s8
  $region1: #{electra_class_forward.14} parent=0
    #allocation2 [shape = 'u8[524288]{0}', space=vmem, size = 0x80000, scoped, tag = 'input window, operand 3, single buffered']
    #allocation3 [shape = 's32[1]{0}', space=sflag, size = 0x4, scoped, tag = 'scoped memory for electra_class_forward.14']
    %12 = vsyncpa [#allocation3], 0
    // Predicated region
    $region2: #{electra_class_forward.14} parent=1 // pred_check
      _
    $region3: #{electra_class_forward.14} parent=1 // pred_check_branch
      %14 = sbr.rel (0) target = $region5
    $region4: #{electra_class_forward.14} parent=1 // pred_region
      _
    $region5: #{electra_class_forward.14} parent=1 // pred_fallthru
      _
    // Predicated region
    $region6: #{electra_class_forward.14} parent=1 // pred_check
      _
    $region7: #{electra_class_forward.14} parent=1 // pred_check_branch
      %16 = sbr.rel (0) target = $region9
    $region8: #{electra_class_forward.14} parent=1 // pred_region
      _
    $region9: #{electra_class_forward.14} parent=1 // pred_fallthru
      _
    // Predicated region
    $region10: #{electra_class_forward.14} parent=1 // pred_check
      _
    $region11: #{electra_class_forward.14} parent=1 // pred_check_branch
      %18 = sbr.rel (0) target = $region13
    $region12: #{electra_class_forward.14} parent=1 // pred_region
      _
    $region13: #{electra_class_forward.14} parent=1 // pred_fallthru
      _
    // Predicated region
    $region14: #{electra_class_forward.14} parent=1 // pred_check
      _
    $region15: #{electra_class_forward.14} parent=1 // pred_check_branch
      %20 = sbr.rel (0) target = $region17
    $region16: #{electra_class_forward.14} parent=1 // pred_region
      %s22 = ssub.s32 16384, 16384
      %23 = vsyncadd [#allocation3], %s22
      %s24 = sshll.u32 [#allocation2], 4
      %s25 = int_to_ptr.vmem [resolvable:$true] %s24
      %30 = dma.hbm_to_vmem [thread:$0]  %s3, 16384, %s25, [#allocation3], 128, 128, 8
    $region17: #{electra_class_forward.14} parent=1 // pred_fallthru
      _
    // Predicated region
    $region18: #{electra_class_forward.14} parent=1 // pred_check
      _
    $region19: #{electra_class_forward.14} parent=1 // pred_check_branch
      %32 = sbr.rel (0) target = $region21
    $region20: #{electra_class_forward.14} parent=1 // pred_region
      _
    $region21: #{electra_class_forward.14} parent=1 // pred_fallthru
      _
    // Predicated region
    $region22: #{electra_class_forward.14} parent=1 // pred_check
      _
    $region23: #{electra_class_forward.14} parent=1 // pred_check_branch
      %34 = sbr.rel (0) target = $region25
    $region24: #{electra_class_forward.14} parent=1 // pred_region
      _
    $region25: #{electra_class_forward.14} parent=1 // pred_fallthru
      _
    // Predicated region
    $region26: #{electra_class_forward.14} parent=1 // pred_check
      _
    $region27: #{electra_class_forward.14} parent=1 // pred_check_branch
      %36 = sbr.rel (0) target = $region29
    $region28: #{electra_class_forward.14} parent=1 // pred_region
      _
    $region29: #{electra_class_forward.14} parent=1 // pred_fallthru
      _
    // Predicated region
    $region30: #{electra_class_forward.14} parent=1 // pred_check
      _
    $region31: #{electra_class_forward.14} parent=1 // pred_check_branch
      %38 = sbr.rel (0) target = $region33
    $region32: #{electra_class_forward.14} parent=1 // pred_region
      %39 = dma.done [#allocation3], 16384
    $region33: #{electra_class_forward.14} parent=1 // pred_fallthru
      _
    %v40 = vld [vmem:[%s0] sm:$0xff]
    %v41 = vld [vmem:[%s0 + $0x8] sm:$0xff]
    %v42 = vld [vmem:[%s1] sm:$0xff]
    %v43 = vld [vmem:[%s1 + $0x8] sm:$0xff]
    %v44 = vld [vmem:[%s1 + $0x10] sm:$0xff]
    %v45 = vld [vmem:[%s1 + $0x18] sm:$0xff]
    %v46 = vld [vmem:[%s1 + $0x20] sm:$0xff]
    %v47 = vld [vmem:[%s1 + $0x28] sm:$0xff]
    %v48 = vld [vmem:[%s1 + $0x30] sm:$0xff]
    %v49 = vld [vmem:[%s1 + $0x38] sm:$0xff]
    %v50 = vld [vmem:[%s1 + $0x40] sm:$0xff]
    %v51 = vld [vmem:[%s1 + $0x48] sm:$0xff]
    %v52 = vld [vmem:[%s1 + $0x50] sm:$0xff]
    %v53 = vld [vmem:[%s1 + $0x58] sm:$0xff]
    %v54 = vld [vmem:[%s1 + $0x60] sm:$0xff]
    %v55 = vld [vmem:[%s1 + $0x68] sm:$0xff]
    %v56 = vld [vmem:[%s1 + $0x70] sm:$0xff]
    %v57 = vld [vmem:[%s1 + $0x78] sm:$0xff]
    %v58 = vld [vmem:[%s1 + $0x80] sm:$0xff]
    %v59 = vld [vmem:[%s1 + $0x88] sm:$0xff]
    %v60 = vld [vmem:[%s1 + $0x90] sm:$0xff]
    %v61 = vld [vmem:[%s1 + $0x98] sm:$0xff]
    %v62 = vld [vmem:[%s1 + $0xa0] sm:$0xff]
    %v63 = vld [vmem:[%s1 + $0xa8] sm:$0xff]
    %v64 = vld [vmem:[%s1 + $0xb0] sm:$0xff]
    %v65 = vld [vmem:[%s1 + $0xb8] sm:$0xff]
    %v66 = vld [vmem:[%s1 + $0xc0] sm:$0xff]
    %v67 = vld [vmem:[%s1 + $0xc8] sm:$0xff]
    %v68 = vld [vmem:[%s1 + $0xd0] sm:$0xff]
    %v69 = vld [vmem:[%s1 + $0xd8] sm:$0xff]
    %v70 = vld [vmem:[%s1 + $0xe0] sm:$0xff]
    %v71 = vld [vmem:[%s1 + $0xe8] sm:$0xff]
    %v72 = vld [vmem:[%s1 + $0xf0] sm:$0xff]
    %v73 = vld [vmem:[%s1 + $0xf8] sm:$0xff]
    %v74 = vld [vmem:[%s1 + $0x100] sm:$0xff]
    %v75 = vld [vmem:[%s1 + $0x108] sm:$0xff]
    %v76 = vld [vmem:[%s1 + $0x110] sm:$0xff]
    %v77 = vld [vmem:[%s1 + $0x118] sm:$0xff]
    %v78 = vld [vmem:[%s1 + $0x120] sm:$0xff]
    %v79 = vld [vmem:[%s1 + $0x128] sm:$0xff]
    %v80 = vld [vmem:[%s1 + $0x130] sm:$0xff]
    %v81 = vld [vmem:[%s1 + $0x138] sm:$0xff]
    %v82 = vld [vmem:[%s1 + $0x140] sm:$0xff]
    %v83 = vld [vmem:[%s1 + $0x148] sm:$0xff]
    %v84 = vld [vmem:[%s1 + $0x150] sm:$0xff]
    %v85 = vld [vmem:[%s1 + $0x158] sm:$0xff]
    %v86 = vld [vmem:[%s1 + $0x160] sm:$0xff]
    %v87 = vld [vmem:[%s1 + $0x168] sm:$0xff]
    %v88 = vld [vmem:[%s1 + $0x170] sm:$0xff]
    %v89 = vld [vmem:[%s1 + $0x178] sm:$0xff]
    %v90 = vld [vmem:[%s1 + $0x180] sm:$0xff]
    %v91 = vld [vmem:[%s1 + $0x188] sm:$0xff]
    %v92 = vld [vmem:[%s1 + $0x190] sm:$0xff]
    %v93 = vld [vmem:[%s1 + $0x198] sm:$0xff]
    %v94 = vld [vmem:[%s1 + $0x1a0] sm:$0xff]
    %v95 = vld [vmem:[%s1 + $0x1a8] sm:$0xff]
    %v96 = vld [vmem:[%s1 + $0x1b0] sm:$0xff]
    %v97 = vld [vmem:[%s1 + $0x1b8] sm:$0xff]
    %v98 = vld [vmem:[%s1 + $0x1c0] sm:$0xff]
    %v99 = vld [vmem:[%s1 + $0x1c8] sm:$0xff]
    %v100 = vld [vmem:[%s1 + $0x1d0] sm:$0xff]
    %v101 = vld [vmem:[%s1 + $0x1d8] sm:$0xff]
    %v102 = vld [vmem:[%s1 + $0x1e0] sm:$0xff]
    %v103 = vld [vmem:[%s1 + $0x1e8] sm:$0xff]
    %v104 = vld [vmem:[%s1 + $0x1f0] sm:$0xff]
    %v105 = vld [vmem:[%s1 + $0x1f8] sm:$0xff]
    %v106 = vld [vmem:[%s1 + $0x200] sm:$0xff]
    %v107 = vld [vmem:[%s1 + $0x208] sm:$0xff]
    %v108 = vld [vmem:[%s1 + $0x210] sm:$0xff]
    %v109 = vld [vmem:[%s1 + $0x218] sm:$0xff]
    %v110 = vld [vmem:[%s1 + $0x220] sm:$0xff]
    %v111 = vld [vmem:[%s1 + $0x228] sm:$0xff]
    %v112 = vld [vmem:[%s1 + $0x230] sm:$0xff]
    %v113 = vld [vmem:[%s1 + $0x238] sm:$0xff]
    %v114 = vld [vmem:[%s1 + $0x240] sm:$0xff]
    %v115 = vld [vmem:[%s1 + $0x248] sm:$0xff]
    %v116 = vld [vmem:[%s1 + $0x250] sm:$0xff]
    %v117 = vld [vmem:[%s1 + $0x258] sm:$0xff]
    %v118 = vld [vmem:[%s1 + $0x260] sm:$0xff]
    %v119 = vld [vmem:[%s1 + $0x268] sm:$0xff]
    %v120 = vld [vmem:[%s1 + $0x270] sm:$0xff]
    %v121 = vld [vmem:[%s1 + $0x278] sm:$0xff]
    %v122 = vld [vmem:[%s1 + $0x280] sm:$0xff]
    %v123 = vld [vmem:[%s1 + $0x288] sm:$0xff]
    %v124 = vld [vmem:[%s1 + $0x290] sm:$0xff]
    %v125 = vld [vmem:[%s1 + $0x298] sm:$0xff]
    %v126 = vld [vmem:[%s1 + $0x2a0] sm:$0xff]
    %v127 = vld [vmem:[%s1 + $0x2a8] sm:$0xff]
    %v128 = vld [vmem:[%s1 + $0x2b0] sm:$0xff]
    %v129 = vld [vmem:[%s1 + $0x2b8] sm:$0xff]
    %v130 = vld [vmem:[%s1 + $0x2c0] sm:$0xff]
    %v131 = vld [vmem:[%s1 + $0x2c8] sm:$0xff]
    %v132 = vld [vmem:[%s1 + $0x2d0] sm:$0xff]
    %v133 = vld [vmem:[%s1 + $0x2d8] sm:$0xff]
    %v134 = vld [vmem:[%s1 + $0x2e0] sm:$0xff]
    %v135 = vld [vmem:[%s1 + $0x2e8] sm:$0xff]
    %v136 = vld [vmem:[%s1 + $0x2f0] sm:$0xff]
    %v137 = vld [vmem:[%s1 + $0x2f8] sm:$0xff]
    %v138 = vld [vmem:[%s1 + $0x300] sm:$0xff]
    %v139 = vld [vmem:[%s1 + $0x308] sm:$0xff]
    %v140 = vld [vmem:[%s1 + $0x310] sm:$0xff]
    %v141 = vld [vmem:[%s1 + $0x318] sm:$0xff]
    %v142 = vld [vmem:[%s1 + $0x320] sm:$0xff]
    %v143 = vld [vmem:[%s1 + $0x328] sm:$0xff]
    %v144 = vld [vmem:[%s1 + $0x330] sm:$0xff]
    %v145 = vld [vmem:[%s1 + $0x338] sm:$0xff]
    %v146 = vld [vmem:[%s1 + $0x340] sm:$0xff]
    %v147 = vld [vmem:[%s1 + $0x348] sm:$0xff]
    %v148 = vld [vmem:[%s1 + $0x350] sm:$0xff]
    %v149 = vld [vmem:[%s1 + $0x358] sm:$0xff]
    %v150 = vld [vmem:[%s1 + $0x360] sm:$0xff]
    %v151 = vld [vmem:[%s1 + $0x368] sm:$0xff]
    %v152 = vld [vmem:[%s1 + $0x370] sm:$0xff]
    %v153 = vld [vmem:[%s1 + $0x378] sm:$0xff]
    %v154 = vld [vmem:[%s1 + $0x380] sm:$0xff]
    %v155 = vld [vmem:[%s1 + $0x388] sm:$0xff]
    %v156 = vld [vmem:[%s1 + $0x390] sm:$0xff]
    %v157 = vld [vmem:[%s1 + $0x398] sm:$0xff]
    %v158 = vld [vmem:[%s1 + $0x3a0] sm:$0xff]
    %v159 = vld [vmem:[%s1 + $0x3a8] sm:$0xff]
    %v160 = vld [vmem:[%s1 + $0x3b0] sm:$0xff]
    %v161 = vld [vmem:[%s1 + $0x3b8] sm:$0xff]
    %v162 = vld [vmem:[%s1 + $0x3c0] sm:$0xff]
    %v163 = vld [vmem:[%s1 + $0x3c8] sm:$0xff]
    %v164 = vld [vmem:[%s1 + $0x3d0] sm:$0xff]
    %v165 = vld [vmem:[%s1 + $0x3d8] sm:$0xff]
    %v166 = vld [vmem:[%s1 + $0x3e0] sm:$0xff]
    %v167 = vld [vmem:[%s1 + $0x3e8] sm:$0xff]
    %v168 = vld [vmem:[%s1 + $0x3f0] sm:$0xff]
    %v169 = vld [vmem:[%s1 + $0x3f8] sm:$0xff]
    %v170 = vld [vmem:[%s2] sm:$0xff]
    %v172 = vlaneseq
    %v173 = vshrl.u32 %v172, 7
    %v174 = vsub.s32 0, %v173
    %v175 = vrot.slane %v170, %v174
    %v176 = vlaneseq
    %v177 = vshrl.u32 %v176, 7
    %v178 = vsub.s32 1, %v177
    %v179 = vrot.slane %v170, %v178
    %v180 = vlaneseq
    %v181 = vshrl.u32 %v180, 7
    %v182 = vsub.s32 2, %v181
    %v183 = vrot.slane %v170, %v182
    %v184 = vlaneseq
    %v185 = vshrl.u32 %v184, 7
    %v186 = vsub.s32 3, %v185
    %v187 = vrot.slane %v170, %v186
    %v188 = vlaneseq
    %v189 = vshrl.u32 %v188, 7
    %v190 = vsub.s32 4, %v189
    %v191 = vrot.slane %v170, %v190
    %v192 = vlaneseq
    %v193 = vshrl.u32 %v192, 7
    %v194 = vsub.s32 5, %v193
    %v195 = vrot.slane %v170, %v194
    %v196 = vlaneseq
    %v197 = vshrl.u32 %v196, 7
    %v198 = vsub.s32 6, %v197
    %v199 = vrot.slane %v170, %v198
    %v200 = vlaneseq
    %v201 = vshrl.u32 %v200, 7
    %v202 = vsub.s32 7, %v201
    %v203 = vrot.slane %v170, %v202
    %v214 = vunpack.c.l.b16 %v40
    %v215 = vunpack.c.h.b16 %v40
    %v216 = vunpack.c.l.b16 %v41
    %v217 = vunpack.c.h.b16 %v41
    %v218 = vpack.c.b16 %v216, %v214
    %v219 = vpack.c.b16 %v217, %v215
    %v350 = vunpack.c.l.b16 %v42
    %v351 = vunpack.c.h.b16 %v42
    %v352 = vunpack.c.l.b16 %v43
    %v353 = vunpack.c.h.b16 %v43
    %v354 = vunpack.c.l.b16 %v44
    %v355 = vunpack.c.h.b16 %v44
    %v356 = vunpack.c.l.b16 %v45
    %v357 = vunpack.c.h.b16 %v45
    %v358 = vunpack.c.l.b16 %v46
    %v359 = vunpack.c.h.b16 %v46
    %v360 = vunpack.c.l.b16 %v47
    %v361 = vunpack.c.h.b16 %v47
    %v362 = vunpack.c.l.b16 %v48
    %v363 = vunpack.c.h.b16 %v48
    %v364 = vunpack.c.l.b16 %v49
    %v365 = vunpack.c.h.b16 %v49
    %v366 = vunpack.c.l.b16 %v50
    %v367 = vunpack.c.h.b16 %v50
    %v368 = vunpack.c.l.b16 %v51
    %v369 = vunpack.c.h.b16 %v51
    %v370 = vunpack.c.l.b16 %v52
    %v371 = vunpack.c.h.b16 %v52
    %v372 = vunpack.c.l.b16 %v53
    %v373 = vunpack.c.h.b16 %v53
    %v374 = vunpack.c.l.b16 %v54
    %v375 = vunpack.c.h.b16 %v54
    %v376 = vunpack.c.l.b16 %v55
    %v377 = vunpack.c.h.b16 %v55
    %v378 = vunpack.c.l.b16 %v56
    %v379 = vunpack.c.h.b16 %v56
    %v380 = vunpack.c.l.b16 %v57
    %v381 = vunpack.c.h.b16 %v57
    %v382 = vunpack.c.l.b16 %v58
    %v383 = vunpack.c.h.b16 %v58
    %v384 = vunpack.c.l.b16 %v59
    %v385 = vunpack.c.h.b16 %v59
    %v386 = vunpack.c.l.b16 %v60
    %v387 = vunpack.c.h.b16 %v60
    %v388 = vunpack.c.l.b16 %v61
    %v389 = vunpack.c.h.b16 %v61
    %v390 = vunpack.c.l.b16 %v62
    %v391 = vunpack.c.h.b16 %v62
    %v392 = vunpack.c.l.b16 %v63
    %v393 = vunpack.c.h.b16 %v63
    %v394 = vunpack.c.l.b16 %v64
    %v395 = vunpack.c.h.b16 %v64
    %v396 = vunpack.c.l.b16 %v65
    %v397 = vunpack.c.h.b16 %v65
    %v398 = vunpack.c.l.b16 %v66
    %v399 = vunpack.c.h.b16 %v66
    %v400 = vunpack.c.l.b16 %v67
    %v401 = vunpack.c.h.b16 %v67
    %v402 = vunpack.c.l.b16 %v68
    %v403 = vunpack.c.h.b16 %v68
    %v404 = vunpack.c.l.b16 %v69
    %v405 = vunpack.c.h.b16 %v69
    %v406 = vunpack.c.l.b16 %v70
    %v407 = vunpack.c.h.b16 %v70
    %v408 = vunpack.c.l.b16 %v71
    %v409 = vunpack.c.h.b16 %v71
    %v410 = vunpack.c.l.b16 %v72
    %v411 = vunpack.c.h.b16 %v72
    %v412 = vunpack.c.l.b16 %v73
    %v413 = vunpack.c.h.b16 %v73
    %v414 = vunpack.c.l.b16 %v74
    %v415 = vunpack.c.h.b16 %v74
    %v416 = vunpack.c.l.b16 %v75
    %v417 = vunpack.c.h.b16 %v75
    %v418 = vunpack.c.l.b16 %v76
    %v419 = vunpack.c.h.b16 %v76
    %v420 = vunpack.c.l.b16 %v77
    %v421 = vunpack.c.h.b16 %v77
    %v422 = vunpack.c.l.b16 %v78
    %v423 = vunpack.c.h.b16 %v78
    %v424 = vunpack.c.l.b16 %v79
    %v425 = vunpack.c.h.b16 %v79
    %v426 = vunpack.c.l.b16 %v80
    %v427 = vunpack.c.h.b16 %v80
    %v428 = vunpack.c.l.b16 %v81
    %v429 = vunpack.c.h.b16 %v81
    %v430 = vunpack.c.l.b16 %v82
    %v431 = vunpack.c.h.b16 %v82
    %v432 = vunpack.c.l.b16 %v83
    %v433 = vunpack.c.h.b16 %v83
    %v434 = vunpack.c.l.b16 %v84
    %v435 = vunpack.c.h.b16 %v84
    %v436 = vunpack.c.l.b16 %v85
    %v437 = vunpack.c.h.b16 %v85
    %v438 = vunpack.c.l.b16 %v86
    %v439 = vunpack.c.h.b16 %v86
    %v440 = vunpack.c.l.b16 %v87
    %v441 = vunpack.c.h.b16 %v87
    %v442 = vunpack.c.l.b16 %v88
    %v443 = vunpack.c.h.b16 %v88
    %v444 = vunpack.c.l.b16 %v89
    %v445 = vunpack.c.h.b16 %v89
    %v446 = vunpack.c.l.b16 %v90
    %v447 = vunpack.c.h.b16 %v90
    %v448 = vunpack.c.l.b16 %v91
    %v449 = vunpack.c.h.b16 %v91
    %v450 = vunpack.c.l.b16 %v92
    %v451 = vunpack.c.h.b16 %v92
    %v452 = vunpack.c.l.b16 %v93
    %v453 = vunpack.c.h.b16 %v93
    %v454 = vunpack.c.l.b16 %v94
    %v455 = vunpack.c.h.b16 %v94
    %v456 = vunpack.c.l.b16 %v95
    %v457 = vunpack.c.h.b16 %v95
    %v458 = vunpack.c.l.b16 %v96
    %v459 = vunpack.c.h.b16 %v96
    %v460 = vunpack.c.l.b16 %v97
    %v461 = vunpack.c.h.b16 %v97
    %v462 = vunpack.c.l.b16 %v98
    %v463 = vunpack.c.h.b16 %v98
    %v464 = vunpack.c.l.b16 %v99
    %v465 = vunpack.c.h.b16 %v99
    %v466 = vunpack.c.l.b16 %v100
    %v467 = vunpack.c.h.b16 %v100
    %v468 = vunpack.c.l.b16 %v101
    %v469 = vunpack.c.h.b16 %v101
    %v470 = vunpack.c.l.b16 %v102
    %v471 = vunpack.c.h.b16 %v102
    %v472 = vunpack.c.l.b16 %v103
    %v473 = vunpack.c.h.b16 %v103
    %v474 = vunpack.c.l.b16 %v104
    %v475 = vunpack.c.h.b16 %v104
    %v476 = vunpack.c.l.b16 %v105
    %v477 = vunpack.c.h.b16 %v105
    %v478 = vunpack.c.l.b16 %v106
    %v479 = vunpack.c.h.b16 %v106
    %v480 = vunpack.c.l.b16 %v107
    %v481 = vunpack.c.h.b16 %v107
    %v482 = vunpack.c.l.b16 %v108
    %v483 = vunpack.c.h.b16 %v108
    %v484 = vunpack.c.l.b16 %v109
    %v485 = vunpack.c.h.b16 %v109
    %v486 = vunpack.c.l.b16 %v110
    %v487 = vunpack.c.h.b16 %v110
    %v488 = vunpack.c.l.b16 %v111
    %v489 = vunpack.c.h.b16 %v111
    %v490 = vunpack.c.l.b16 %v112
    %v491 = vunpack.c.h.b16 %v112
    %v492 = vunpack.c.l.b16 %v113
    %v493 = vunpack.c.h.b16 %v113
    %v494 = vunpack.c.l.b16 %v114
    %v495 = vunpack.c.h.b16 %v114
    %v496 = vunpack.c.l.b16 %v115
    %v497 = vunpack.c.h.b16 %v115
    %v498 = vunpack.c.l.b16 %v116
    %v499 = vunpack.c.h.b16 %v116
    %v500 = vunpack.c.l.b16 %v117
    %v501 = vunpack.c.h.b16 %v117
    %v502 = vunpack.c.l.b16 %v118
    %v503 = vunpack.c.h.b16 %v118
    %v504 = vunpack.c.l.b16 %v119
    %v505 = vunpack.c.h.b16 %v119
    %v506 = vunpack.c.l.b16 %v120
    %v507 = vunpack.c.h.b16 %v120
    %v508 = vunpack.c.l.b16 %v121
    %v509 = vunpack.c.h.b16 %v121
    %v510 = vunpack.c.l.b16 %v122
    %v511 = vunpack.c.h.b16 %v122
    %v512 = vunpack.c.l.b16 %v123
    %v513 = vunpack.c.h.b16 %v123
    %v514 = vunpack.c.l.b16 %v124
    %v515 = vunpack.c.h.b16 %v124
    %v516 = vunpack.c.l.b16 %v125
    %v517 = vunpack.c.h.b16 %v125
    %v518 = vunpack.c.l.b16 %v126
    %v519 = vunpack.c.h.b16 %v126
    %v520 = vunpack.c.l.b16 %v127
    %v521 = vunpack.c.h.b16 %v127
    %v522 = vunpack.c.l.b16 %v128
    %v523 = vunpack.c.h.b16 %v128
    %v524 = vunpack.c.l.b16 %v129
    %v525 = vunpack.c.h.b16 %v129
    %v526 = vunpack.c.l.b16 %v130
    %v527 = vunpack.c.h.b16 %v130
    %v528 = vunpack.c.l.b16 %v131
    %v529 = vunpack.c.h.b16 %v131
    %v530 = vunpack.c.l.b16 %v132
    %v531 = vunpack.c.h.b16 %v132
    %v532 = vunpack.c.l.b16 %v133
    %v533 = vunpack.c.h.b16 %v133
    %v534 = vunpack.c.l.b16 %v134
    %v535 = vunpack.c.h.b16 %v134
    %v536 = vunpack.c.l.b16 %v135
    %v537 = vunpack.c.h.b16 %v135
    %v538 = vunpack.c.l.b16 %v136
    %v539 = vunpack.c.h.b16 %v136
    %v540 = vunpack.c.l.b16 %v137
    %v541 = vunpack.c.h.b16 %v137
    %v542 = vunpack.c.l.b16 %v138
    %v543 = vunpack.c.h.b16 %v138
    %v544 = vunpack.c.l.b16 %v139
    %v545 = vunpack.c.h.b16 %v139
    %v546 = vunpack.c.l.b16 %v140
    %v547 = vunpack.c.h.b16 %v140
    %v548 = vunpack.c.l.b16 %v141
    %v549 = vunpack.c.h.b16 %v141
    %v550 = vunpack.c.l.b16 %v142
    %v551 = vunpack.c.h.b16 %v142
    %v552 = vunpack.c.l.b16 %v143
    %v553 = vunpack.c.h.b16 %v143
    %v554 = vunpack.c.l.b16 %v144
    %v555 = vunpack.c.h.b16 %v144
    %v556 = vunpack.c.l.b16 %v145
    %v557 = vunpack.c.h.b16 %v145
    %v558 = vunpack.c.l.b16 %v146
    %v559 = vunpack.c.h.b16 %v146
    %v560 = vunpack.c.l.b16 %v147
    %v561 = vunpack.c.h.b16 %v147
    %v562 = vunpack.c.l.b16 %v148
    %v563 = vunpack.c.h.b16 %v148
    %v564 = vunpack.c.l.b16 %v149
    %v565 = vunpack.c.h.b16 %v149
    %v566 = vunpack.c.l.b16 %v150
    %v567 = vunpack.c.h.b16 %v150
    %v568 = vunpack.c.l.b16 %v151
    %v569 = vunpack.c.h.b16 %v151
    %v570 = vunpack.c.l.b16 %v152
    %v571 = vunpack.c.h.b16 %v152
    %v572 = vunpack.c.l.b16 %v153
    %v573 = vunpack.c.h.b16 %v153
    %v574 = vunpack.c.l.b16 %v154
    %v575 = vunpack.c.h.b16 %v154
    %v576 = vunpack.c.l.b16 %v155
    %v577 = vunpack.c.h.b16 %v155
    %v578 = vunpack.c.l.b16 %v156
    %v579 = vunpack.c.h.b16 %v156
    %v580 = vunpack.c.l.b16 %v157
    %v581 = vunpack.c.h.b16 %v157
    %v582 = vunpack.c.l.b16 %v158
    %v583 = vunpack.c.h.b16 %v158
    %v584 = vunpack.c.l.b16 %v159
    %v585 = vunpack.c.h.b16 %v159
    %v586 = vunpack.c.l.b16 %v160
    %v587 = vunpack.c.h.b16 %v160
    %v588 = vunpack.c.l.b16 %v161
    %v589 = vunpack.c.h.b16 %v161
    %v590 = vunpack.c.l.b16 %v162
    %v591 = vunpack.c.h.b16 %v162
    %v592 = vunpack.c.l.b16 %v163
    %v593 = vunpack.c.h.b16 %v163
    %v594 = vunpack.c.l.b16 %v164
    %v595 = vunpack.c.h.b16 %v164
    %v596 = vunpack.c.l.b16 %v165
    %v597 = vunpack.c.h.b16 %v165
    %v598 = vunpack.c.l.b16 %v166
    %v599 = vunpack.c.h.b16 %v166
    %v600 = vunpack.c.l.b16 %v167
    %v601 = vunpack.c.h.b16 %v167
    %v602 = vunpack.c.l.b16 %v168
    %v603 = vunpack.c.h.b16 %v168
    %v604 = vunpack.c.l.b16 %v169
    %v605 = vunpack.c.h.b16 %v169
    %v606 = vpack.c.b16 %v358, %v350
    %v607 = vpack.c.b16 %v359, %v351
    %v608 = vpack.c.b16 %v360, %v352
    %v609 = vpack.c.b16 %v361, %v353
    %v610 = vpack.c.b16 %v362, %v354
    %v611 = vpack.c.b16 %v363, %v355
    %v612 = vpack.c.b16 %v364, %v356
    %v613 = vpack.c.b16 %v365, %v357
    %v614 = vpack.c.b16 %v374, %v366
    %v615 = vpack.c.b16 %v375, %v367
    %v616 = vpack.c.b16 %v376, %v368
    %v617 = vpack.c.b16 %v377, %v369
    %v618 = vpack.c.b16 %v378, %v370
    %v619 = vpack.c.b16 %v379, %v371
    %v620 = vpack.c.b16 %v380, %v372
    %v621 = vpack.c.b16 %v381, %v373
    %v622 = vpack.c.b16 %v390, %v382
    %v623 = vpack.c.b16 %v391, %v383
    %v624 = vpack.c.b16 %v392, %v384
    %v625 = vpack.c.b16 %v393, %v385
    %v626 = vpack.c.b16 %v394, %v386
    %v627 = vpack.c.b16 %v395, %v387
    %v628 = vpack.c.b16 %v396, %v388
    %v629 = vpack.c.b16 %v397, %v389
    %v630 = vpack.c.b16 %v406, %v398
    %v631 = vpack.c.b16 %v407, %v399
    %v632 = vpack.c.b16 %v408, %v400
    %v633 = vpack.c.b16 %v409, %v401
    %v634 = vpack.c.b16 %v410, %v402
    %v635 = vpack.c.b16 %v411, %v403
    %v636 = vpack.c.b16 %v412, %v404
    %v637 = vpack.c.b16 %v413, %v405
    %v638 = vpack.c.b16 %v422, %v414
    %v639 = vpack.c.b16 %v423, %v415
    %v640 = vpack.c.b16 %v424, %v416
    %v641 = vpack.c.b16 %v425, %v417
    %v642 = vpack.c.b16 %v426, %v418
    %v643 = vpack.c.b16 %v427, %v419
    %v644 = vpack.c.b16 %v428, %v420
    %v645 = vpack.c.b16 %v429, %v421
    %v646 = vpack.c.b16 %v438, %v430
    %v647 = vpack.c.b16 %v439, %v431
    %v648 = vpack.c.b16 %v440, %v432
    %v649 = vpack.c.b16 %v441, %v433
    %v650 = vpack.c.b16 %v442, %v434
    %v651 = vpack.c.b16 %v443, %v435
    %v652 = vpack.c.b16 %v444, %v436
    %v653 = vpack.c.b16 %v445, %v437
    %v654 = vpack.c.b16 %v454, %v446
    %v655 = vpack.c.b16 %v455, %v447
    %v656 = vpack.c.b16 %v456, %v448
    %v657 = vpack.c.b16 %v457, %v449
    %v658 = vpack.c.b16 %v458, %v450
    %v659 = vpack.c.b16 %v459, %v451
    %v660 = vpack.c.b16 %v460, %v452
    %v661 = vpack.c.b16 %v461, %v453
    %v662 = vpack.c.b16 %v470, %v462
    %v663 = vpack.c.b16 %v471, %v463
    %v664 = vpack.c.b16 %v472, %v464
    %v665 = vpack.c.b16 %v473, %v465
    %v666 = vpack.c.b16 %v474, %v466
    %v667 = vpack.c.b16 %v475, %v467
    %v668 = vpack.c.b16 %v476, %v468
    %v669 = vpack.c.b16 %v477, %v469
    %v670 = vpack.c.b16 %v486, %v478
    %v671 = vpack.c.b16 %v487, %v479
    %v672 = vpack.c.b16 %v488, %v480
    %v673 = vpack.c.b16 %v489, %v481
    %v674 = vpack.c.b16 %v490, %v482
    %v675 = vpack.c.b16 %v491, %v483
    %v676 = vpack.c.b16 %v492, %v484
    %v677 = vpack.c.b16 %v493, %v485
    %v678 = vpack.c.b16 %v502, %v494
    %v679 = vpack.c.b16 %v503, %v495
    %v680 = vpack.c.b16 %v504, %v496
    %v681 = vpack.c.b16 %v505, %v497
    %v682 = vpack.c.b16 %v506, %v498
    %v683 = vpack.c.b16 %v507, %v499
    %v684 = vpack.c.b16 %v508, %v500
    %v685 = vpack.c.b16 %v509, %v501
    %v686 = vpack.c.b16 %v518, %v510
    %v687 = vpack.c.b16 %v519, %v511
    %v688 = vpack.c.b16 %v520, %v512
    %v689 = vpack.c.b16 %v521, %v513
    %v690 = vpack.c.b16 %v522, %v514
    %v691 = vpack.c.b16 %v523, %v515
    %v692 = vpack.c.b16 %v524, %v516
    %v693 = vpack.c.b16 %v525, %v517
    %v694 = vpack.c.b16 %v534, %v526
    %v695 = vpack.c.b16 %v535, %v527
    %v696 = vpack.c.b16 %v536, %v528
    %v697 = vpack.c.b16 %v537, %v529
    %v698 = vpack.c.b16 %v538, %v530
    %v699 = vpack.c.b16 %v539, %v531
    %v700 = vpack.c.b16 %v540, %v532
    %v701 = vpack.c.b16 %v541, %v533
    %v702 = vpack.c.b16 %v550, %v542
    %v703 = vpack.c.b16 %v551, %v543
    %v704 = vpack.c.b16 %v552, %v544
    %v705 = vpack.c.b16 %v553, %v545
    %v706 = vpack.c.b16 %v554, %v546
    %v707 = vpack.c.b16 %v555, %v547
    %v708 = vpack.c.b16 %v556, %v548
    %v709 = vpack.c.b16 %v557, %v549
    %v710 = vpack.c.b16 %v566, %v558
    %v711 = vpack.c.b16 %v567, %v559
    %v712 = vpack.c.b16 %v568, %v560
    %v713 = vpack.c.b16 %v569, %v561
    %v714 = vpack.c.b16 %v570, %v562
    %v715 = vpack.c.b16 %v571, %v563
    %v716 = vpack.c.b16 %v572, %v564
    %v717 = vpack.c.b16 %v573, %v565
    %v718 = vpack.c.b16 %v582, %v574
    %v719 = vpack.c.b16 %v583, %v575
    %v720 = vpack.c.b16 %v584, %v576
    %v721 = vpack.c.b16 %v585, %v577
    %v722 = vpack.c.b16 %v586, %v578
    %v723 = vpack.c.b16 %v587, %v579
    %v724 = vpack.c.b16 %v588, %v580
    %v725 = vpack.c.b16 %v589, %v581
    %v726 = vpack.c.b16 %v598, %v590
    %v727 = vpack.c.b16 %v599, %v591
    %v728 = vpack.c.b16 %v600, %v592
    %v729 = vpack.c.b16 %v601, %v593
    %v730 = vpack.c.b16 %v602, %v594
    %v731 = vpack.c.b16 %v603, %v595
    %v732 = vpack.c.b16 %v604, %v596
    %v733 = vpack.c.b16 %v605, %v597
    %862 = vmatprep.subr.bf16.mxu0 %v607
    %863 = vmatpush1.bf16.msra.mxu0 %v606
    %864 = vmatprep.subr.bf16.mxu0 %v615
    %865 = vmatpush1.bf16.msra.mxu0 %v614
    %866 = vmatprep.subr.bf16.mxu0 %v623
    %867 = vmatpush1.bf16.msra.mxu0 %v622
    %868 = vmatprep.subr.bf16.mxu0 %v631
    %869 = vmatpush1.bf16.msra.mxu0 %v630
    %870 = vmatprep.subr.bf16.mxu0 %v639
    %871 = vmatpush1.bf16.msra.mxu0 %v638
    %872 = vmatprep.subr.bf16.mxu0 %v647
    %873 = vmatpush1.bf16.msra.mxu0 %v646
    %874 = vmatprep.subr.bf16.mxu0 %v655
    %875 = vmatpush1.bf16.msra.mxu0 %v654
    %876 = vmatprep.subr.bf16.mxu0 %v663
    %877 = vmatpush1.bf16.msra.mxu0 %v662
    %878 = vmatprep.subr.bf16.mxu0 %v671
    %879 = vmatpush1.bf16.msra.mxu0 %v670
    %880 = vmatprep.subr.bf16.mxu0 %v679
    %881 = vmatpush1.bf16.msra.mxu0 %v678
    %882 = vmatprep.subr.bf16.mxu0 %v687
    %883 = vmatpush1.bf16.msra.mxu0 %v686
    %884 = vmatprep.subr.bf16.mxu0 %v695
    %885 = vmatpush1.bf16.msra.mxu0 %v694
    %886 = vmatprep.subr.bf16.mxu0 %v703
    %887 = vmatpush1.bf16.msra.mxu0 %v702
    %888 = vmatprep.subr.bf16.mxu0 %v711
    %889 = vmatpush1.bf16.msra.mxu0 %v710
    %890 = vmatprep.subr.bf16.mxu0 %v719
    %891 = vmatpush1.bf16.msra.mxu0 %v718
    %892 = vmatprep.subr.bf16.mxu0 %v727
    %893 = vmatpush1.bf16.msra.mxu0 %v726
    %894 = vmatprep.mubr.bf16.mxu0 %v219
    %895 = vmatmul.mubr.bf16.gmra.mrb[0].mxu0 %v218
    %v896 = vpop.f32.mrb[0].mxu0
    %v897 = vadd.f32 %v175, %v896
    %v898 = vpop.f32.mrb[0].mxu0
    %v899 = vadd.f32 %v179, %v898
    %v900 = vpop.f32.mrb[0].mxu0
    %v901 = vadd.f32 %v175, %v900
    %v902 = vpop.f32.mrb[0].mxu0
    %v903 = vadd.f32 %v179, %v902
    %904 = vdwg.mxu0
    %905 = vmatprep.subr.bf16.mxu0 %v609
    %906 = vmatpush1.bf16.msra.mxu0 %v608
    %907 = vmatprep.subr.bf16.mxu0 %v617
    %908 = vmatpush1.bf16.msra.mxu0 %v616
    %909 = vmatprep.subr.bf16.mxu0 %v625
    %910 = vmatpush1.bf16.msra.mxu0 %v624
    %911 = vmatprep.subr.bf16.mxu0 %v633
    %912 = vmatpush1.bf16.msra.mxu0 %v632
    %913 = vmatprep.subr.bf16.mxu0 %v641
    %914 = vmatpush1.bf16.msra.mxu0 %v640
    %915 = vmatprep.subr.bf16.mxu0 %v649
    %916 = vmatpush1.bf16.msra.mxu0 %v648
    %917 = vmatprep.subr.bf16.mxu0 %v657
    %918 = vmatpush1.bf16.msra.mxu0 %v656
    %919 = vmatprep.subr.bf16.mxu0 %v665
    %920 = vmatpush1.bf16.msra.mxu0 %v664
    %921 = vmatprep.subr.bf16.mxu0 %v673
    %922 = vmatpush1.bf16.msra.mxu0 %v672
    %923 = vmatprep.subr.bf16.mxu0 %v681
    %924 = vmatpush1.bf16.msra.mxu0 %v680
    %925 = vmatprep.subr.bf16.mxu0 %v689
    %926 = vmatpush1.bf16.msra.mxu0 %v688
    %927 = vmatprep.subr.bf16.mxu0 %v697
    %928 = vmatpush1.bf16.msra.mxu0 %v696
    %929 = vmatprep.subr.bf16.mxu0 %v705
    %930 = vmatpush1.bf16.msra.mxu0 %v704
    %931 = vmatprep.subr.bf16.mxu0 %v713
    %932 = vmatpush1.bf16.msra.mxu0 %v712
    %933 = vmatprep.subr.bf16.mxu0 %v721
    %934 = vmatpush1.bf16.msra.mxu0 %v720
    %935 = vmatprep.subr.bf16.mxu0 %v729
    %936 = vmatpush1.bf16.msra.mxu0 %v728
    %937 = vmatprep.mubr.bf16.mxu0 %v219
    %938 = vmatmul.mubr.bf16.gmra.mrb[0].mxu0 %v218
    %v939 = vpop.f32.mrb[0].mxu0
    %v940 = vadd.f32 %v183, %v939
    %v941 = vpop.f32.mrb[0].mxu0
    %v942 = vadd.f32 %v187, %v941
    %v943 = vpop.f32.mrb[0].mxu0
    %v944 = vadd.f32 %v183, %v943
    %v945 = vpop.f32.mrb[0].mxu0
    %v946 = vadd.f32 %v187, %v945
    %947 = vdwg.mxu0
    %948 = vmatprep.subr.bf16.mxu0 %v611
    %949 = vmatpush1.bf16.msra.mxu0 %v610
    %950 = vmatprep.subr.bf16.mxu0 %v619
    %951 = vmatpush1.bf16.msra.mxu0 %v618
    %952 = vmatprep.subr.bf16.mxu0 %v627
    %953 = vmatpush1.bf16.msra.mxu0 %v626
    %954 = vmatprep.subr.bf16.mxu0 %v635
    %955 = vmatpush1.bf16.msra.mxu0 %v634
    %956 = vmatprep.subr.bf16.mxu0 %v643
    %957 = vmatpush1.bf16.msra.mxu0 %v642
    %958 = vmatprep.subr.bf16.mxu0 %v651
    %959 = vmatpush1.bf16.msra.mxu0 %v650
    %960 = vmatprep.subr.bf16.mxu0 %v659
    %961 = vmatpush1.bf16.msra.mxu0 %v658
    %962 = vmatprep.subr.bf16.mxu0 %v667
    %963 = vmatpush1.bf16.msra.mxu0 %v666
    %964 = vmatprep.subr.bf16.mxu0 %v675
    %965 = vmatpush1.bf16.msra.mxu0 %v674
    %966 = vmatprep.subr.bf16.mxu0 %v683
    %967 = vmatpush1.bf16.msra.mxu0 %v682
    %968 = vmatprep.subr.bf16.mxu0 %v691
    %969 = vmatpush1.bf16.msra.mxu0 %v690
    %970 = vmatprep.subr.bf16.mxu0 %v699
    %971 = vmatpush1.bf16.msra.mxu0 %v698
    %972 = vmatprep.subr.bf16.mxu0 %v707
    %973 = vmatpush1.bf16.msra.mxu0 %v706
    %974 = vmatprep.subr.bf16.mxu0 %v715
    %975 = vmatpush1.bf16.msra.mxu0 %v714
    %976 = vmatprep.subr.bf16.mxu0 %v723
    %977 = vmatpush1.bf16.msra.mxu0 %v722
    %978 = vmatprep.subr.bf16.mxu0 %v731
    %979 = vmatpush1.bf16.msra.mxu0 %v730
    %980 = vmatprep.mubr.bf16.mxu0 %v219
    %981 = vmatmul.mubr.bf16.gmra.mrb[0].mxu0 %v218
    %v982 = vpop.f32.mrb[0].mxu0
    %v983 = vadd.f32 %v191, %v982
    %v984 = vpop.f32.mrb[0].mxu0
    %v985 = vadd.f32 %v195, %v984
    %v986 = vpop.f32.mrb[0].mxu0
    %v987 = vadd.f32 %v191, %v986
    %v988 = vpop.f32.mrb[0].mxu0
    %v989 = vadd.f32 %v195, %v988
    %990 = vdwg.mxu0
    %991 = vmatprep.subr.bf16.mxu0 %v613
    %992 = vmatpush1.bf16.msra.mxu0 %v612
    %993 = vmatprep.subr.bf16.mxu0 %v621
    %994 = vmatpush1.bf16.msra.mxu0 %v620
    %995 = vmatprep.subr.bf16.mxu0 %v629
    %996 = vmatpush1.bf16.msra.mxu0 %v628
    %997 = vmatprep.subr.bf16.mxu0 %v637
    %998 = vmatpush1.bf16.msra.mxu0 %v636
    %999 = vmatprep.subr.bf16.mxu0 %v645
    %1000 = vmatpush1.bf16.msra.mxu0 %v644
    %1001 = vmatprep.subr.bf16.mxu0 %v653
    %1002 = vmatpush1.bf16.msra.mxu0 %v652
    %1003 = vmatprep.subr.bf16.mxu0 %v661
    %1004 = vmatpush1.bf16.msra.mxu0 %v660
    %1005 = vmatprep.subr.bf16.mxu0 %v669
    %1006 = vmatpush1.bf16.msra.mxu0 %v668
    %1007 = vmatprep.subr.bf16.mxu0 %v677
    %1008 = vmatpush1.bf16.msra.mxu0 %v676
    %1009 = vmatprep.subr.bf16.mxu0 %v685
    %1010 = vmatpush1.bf16.msra.mxu0 %v684
    %1011 = vmatprep.subr.bf16.mxu0 %v693
    %1012 = vmatpush1.bf16.msra.mxu0 %v692
    %1013 = vmatprep.subr.bf16.mxu0 %v701
    %1014 = vmatpush1.bf16.msra.mxu0 %v700
    %1015 = vmatprep.subr.bf16.mxu0 %v709
    %1016 = vmatpush1.bf16.msra.mxu0 %v708
    %1017 = vmatprep.subr.bf16.mxu0 %v717
    %1018 = vmatpush1.bf16.msra.mxu0 %v716
    %1019 = vmatprep.subr.bf16.mxu0 %v725
    %1020 = vmatpush1.bf16.msra.mxu0 %v724
    %1021 = vmatprep.subr.bf16.mxu0 %v733
    %1022 = vmatpush1.bf16.msra.mxu0 %v732
    %1023 = vmatprep.mubr.bf16.mxu0 %v219
    %1024 = vmatmul.mubr.bf16.gmra.mrb[0].mxu0 %v218
    %v1025 = vpop.f32.mrb[0].mxu0
    %v1026 = vadd.f32 %v199, %v1025
    %v1027 = vpop.f32.mrb[0].mxu0
    %v1028 = vadd.f32 %v203, %v1027
    %v1029 = vpop.f32.mrb[0].mxu0
    %v1030 = vadd.f32 %v199, %v1029
    %v1031 = vpop.f32.mrb[0].mxu0
    %v1032 = vadd.f32 %v203, %v1031
    %1033 = vdwg.mxu0
    %v1034 = vmul.f32 %v897, %v897
    %v1035 = vmul.f32 %v899, %v899
    %v1036 = vmul.f32 %v940, %v940
    %v1037 = vmul.f32 %v942, %v942
    %v1038 = vmul.f32 %v983, %v983
    %v1039 = vmul.f32 %v985, %v985
    %v1040 = vmul.f32 %v1026, %v1026
    %v1041 = vmul.f32 %v1028, %v1028
    %v1042 = vmul.f32 %v901, %v901
    %v1043 = vmul.f32 %v903, %v903
    %v1044 = vmul.f32 %v944, %v944
    %v1045 = vmul.f32 %v946, %v946
    %v1046 = vmul.f32 %v987, %v987
    %v1047 = vmul.f32 %v989, %v989
    %v1048 = vmul.f32 %v1030, %v1030
    %v1049 = vmul.f32 %v1032, %v1032
    %v1050 = vmul.f32 %v897, %v1034
    %v1051 = vmul.f32 %v899, %v1035
    %v1052 = vmul.f32 %v940, %v1036
    %v1053 = vmul.f32 %v942, %v1037
    %v1054 = vmul.f32 %v983, %v1038
    %v1055 = vmul.f32 %v985, %v1039
    %v1056 = vmul.f32 %v1026, %v1040
    %v1057 = vmul.f32 %v1028, %v1041
    %v1058 = vmul.f32 %v901, %v1042
    %v1059 = vmul.f32 %v903, %v1043
    %v1060 = vmul.f32 %v944, %v1044
    %v1061 = vmul.f32 %v946, %v1045
    %v1062 = vmul.f32 %v987, %v1046
    %v1063 = vmul.f32 %v989, %v1047
    %v1064 = vmul.f32 %v1030, %v1048
    %v1065 = vmul.f32 %v1032, %v1049
    %v1066 = vmul.f32 %v1050, 0.044715
    %v1067 = vmul.f32 %v1051, 0.044715
    %v1068 = vmul.f32 %v1052, 0.044715
    %v1069 = vmul.f32 %v1053, 0.044715
    %v1070 = vmul.f32 %v1054, 0.044715
    %v1071 = vmul.f32 %v1055, 0.044715
    %v1072 = vmul.f32 %v1056, 0.044715
    %v1073 = vmul.f32 %v1057, 0.044715
    %v1074 = vmul.f32 %v1058, 0.044715
    %v1075 = vmul.f32 %v1059, 0.044715
    %v1076 = vmul.f32 %v1060, 0.044715
    %v1077 = vmul.f32 %v1061, 0.044715
    %v1078 = vmul.f32 %v1062, 0.044715
    %v1079 = vmul.f32 %v1063, 0.044715
    %v1080 = vmul.f32 %v1064, 0.044715
    %v1081 = vmul.f32 %v1065, 0.044715
    %v1082 = vadd.f32 %v897, %v1066
    %v1083 = vadd.f32 %v899, %v1067
    %v1084 = vadd.f32 %v940, %v1068
    %v1085 = vadd.f32 %v942, %v1069
    %v1086 = vadd.f32 %v983, %v1070
    %v1087 = vadd.f32 %v985, %v1071
    %v1088 = vadd.f32 %v1026, %v1072
    %v1089 = vadd.f32 %v1028, %v1073
    %v1090 = vadd.f32 %v901, %v1074
    %v1091 = vadd.f32 %v903, %v1075
    %v1092 = vadd.f32 %v944, %v1076
    %v1093 = vadd.f32 %v946, %v1077
    %v1094 = vadd.f32 %v987, %v1078
    %v1095 = vadd.f32 %v989, %v1079
    %v1096 = vadd.f32 %v1030, %v1080
    %v1097 = vadd.f32 %v1032, %v1081
    %v1098 = vmul.f32 %v1082, 0.7978846
    %v1099 = vmul.f32 %v1083, 0.7978846
    %v1100 = vmul.f32 %v1084, 0.7978846
    %v1101 = vmul.f32 %v1085, 0.7978846
    %v1102 = vmul.f32 %v1086, 0.7978846
    %v1103 = vmul.f32 %v1087, 0.7978846
    %v1104 = vmul.f32 %v1088, 0.7978846
    %v1105 = vmul.f32 %v1089, 0.7978846
    %v1106 = vmul.f32 %v1090, 0.7978846
    %v1107 = vmul.f32 %v1091, 0.7978846
    %v1108 = vmul.f32 %v1092, 0.7978846
    %v1109 = vmul.f32 %v1093, 0.7978846
    %v1110 = vmul.f32 %v1094, 0.7978846
    %v1111 = vmul.f32 %v1095, 0.7978846
    %v1112 = vmul.f32 %v1096, 0.7978846
    %v1113 = vmul.f32 %v1097, 0.7978846
    %v1114 = vtanh.pop %v1098
    %v1115 = vtanh.pop %v1099
    %v1116 = vtanh.pop %v1100
    %v1117 = vtanh.pop %v1101
    %v1118 = vtanh.pop %v1102
    %v1119 = vtanh.pop %v1103
    %v1120 = vtanh.pop %v1104
    %v1121 = vtanh.pop %v1105
    %v1122 = vtanh.pop %v1106
    %v1123 = vtanh.pop %v1107
    %v1124 = vtanh.pop %v1108
    %v1125 = vtanh.pop %v1109
    %v1126 = vtanh.pop %v1110
    %v1127 = vtanh.pop %v1111
    %v1128 = vtanh.pop %v1112
    %v1129 = vtanh.pop %v1113
    %v1130 = vadd.f32 %v1114, 1.0
    %v1131 = vadd.f32 %v1115, 1.0
    %v1132 = vadd.f32 %v1116, 1.0
    %v1133 = vadd.f32 %v1117, 1.0
    %v1134 = vadd.f32 %v1118, 1.0
    %v1135 = vadd.f32 %v1119, 1.0
    %v1136 = vadd.f32 %v1120, 1.0
    %v1137 = vadd.f32 %v1121, 1.0
    %v1138 = vadd.f32 %v1122, 1.0
    %v1139 = vadd.f32 %v1123, 1.0
    %v1140 = vadd.f32 %v1124, 1.0
    %v1141 = vadd.f32 %v1125, 1.0
    %v1142 = vadd.f32 %v1126, 1.0
    %v1143 = vadd.f32 %v1127, 1.0
    %v1144 = vadd.f32 %v1128, 1.0
    %v1145 = vadd.f32 %v1129, 1.0
    %v1146 = vmul.f32 %v1130, 0.5
    %v1147 = vmul.f32 %v1131, 0.5
    %v1148 = vmul.f32 %v1132, 0.5
    %v1149 = vmul.f32 %v1133, 0.5
    %v1150 = vmul.f32 %v1134, 0.5
    %v1151 = vmul.f32 %v1135, 0.5
    %v1152 = vmul.f32 %v1136, 0.5
    %v1153 = vmul.f32 %v1137, 0.5
    %v1154 = vmul.f32 %v1138, 0.5
    %v1155 = vmul.f32 %v1139, 0.5
    %v1156 = vmul.f32 %v1140, 0.5
    %v1157 = vmul.f32 %v1141, 0.5
    %v1158 = vmul.f32 %v1142, 0.5
    %v1159 = vmul.f32 %v1143, 0.5
    %v1160 = vmul.f32 %v1144, 0.5
    %v1161 = vmul.f32 %v1145, 0.5
    %v1162 = vmul.f32 %v897, %v1146
    %v1163 = vmul.f32 %v899, %v1147
    %v1164 = vmul.f32 %v940, %v1148
    %v1165 = vmul.f32 %v942, %v1149
    %v1166 = vmul.f32 %v983, %v1150
    %v1167 = vmul.f32 %v985, %v1151
    %v1168 = vmul.f32 %v1026, %v1152
    %v1169 = vmul.f32 %v1028, %v1153
    %v1170 = vmul.f32 %v901, %v1154
    %v1171 = vmul.f32 %v903, %v1155
    %v1172 = vmul.f32 %v944, %v1156
    %v1173 = vmul.f32 %v946, %v1157
    %v1174 = vmul.f32 %v987, %v1158
    %v1175 = vmul.f32 %v989, %v1159
    %v1176 = vmul.f32 %v1030, %v1160
    %v1177 = vmul.f32 %v1032, %v1161
    %v1178 = vpack.c.bf16 %v1170, %v1162
    %v1179 = vpack.c.bf16 %v1171, %v1163
    %v1180 = vpack.c.bf16 %v1172, %v1164
    %v1181 = vpack.c.bf16 %v1173, %v1165
    %v1182 = vpack.c.bf16 %v1174, %v1166
    %v1183 = vpack.c.bf16 %v1175, %v1167
    %v1184 = vpack.c.bf16 %v1176, %v1168
    %v1185 = vpack.c.bf16 %v1177, %v1169
    %v1186 = vld [vmem:[#allocation2] sm:$0xff]
    %v1187 = vld [vmem:[#allocation2 + $0x8] sm:$0xff]
    %v1188 = vld [vmem:[#allocation2 + $0x10] sm:$0xff]
    %v1189 = vld [vmem:[#allocation2 + $0x18] sm:$0xff]
    %v1190 = vld [vmem:[#allocation2 + $0x20] sm:$0xff]
    %v1191 = vld [vmem:[#allocation2 + $0x28] sm:$0xff]
    %v1192 = vld [vmem:[#allocation2 + $0x30] sm:$0xff]
    %v1193 = vld [vmem:[#allocation2 + $0x38] sm:$0xff]
    %v1194 = vld [vmem:[#allocation2 + $0x40] sm:$0xff]
    %v1195 = vld [vmem:[#allocation2 + $0x48] sm:$0xff]
    %v1196 = vld [vmem:[#allocation2 + $0x50] sm:$0xff]
    %v1197 = vld [vmem:[#allocation2 + $0x58] sm:$0xff]
    %v1198 = vld [vmem:[#allocation2 + $0x60] sm:$0xff]
    %v1199 = vld [vmem:[#allocation2 + $0x68] sm:$0xff]
    %v1200 = vld [vmem:[#allocation2 + $0x70] sm:$0xff]
    %v1201 = vld [vmem:[#allocation2 + $0x78] sm:$0xff]
    %v1202 = vld [vmem:[#allocation2 + $0x80] sm:$0xff]
    %v1203 = vld [vmem:[#allocation2 + $0x88] sm:$0xff]
    %v1204 = vld [vmem:[#allocation2 + $0x90] sm:$0xff]
    %v1205 = vld [vmem:[#allocation2 + $0x98] sm:$0xff]
    %v1206 = vld [vmem:[#allocation2 + $0xa0] sm:$0xff]
    %v1207 = vld [vmem:[#allocation2 + $0xa8] sm:$0xff]
    %v1208 = vld [vmem:[#allocation2 + $0xb0] sm:$0xff]
    %v1209 = vld [vmem:[#allocation2 + $0xb8] sm:$0xff]
    %v1210 = vld [vmem:[#allocation2 + $0xc0] sm:$0xff]
    %v1211 = vld [vmem:[#allocation2 + $0xc8] sm:$0xff]
    %v1212 = vld [vmem:[#allocation2 + $0xd0] sm:$0xff]
    %v1213 = vld [vmem:[#allocation2 + $0xd8] sm:$0xff]
    %v1214 = vld [vmem:[#allocation2 + $0xe0] sm:$0xff]
    %v1215 = vld [vmem:[#allocation2 + $0xe8] sm:$0xff]
    %v1216 = vld [vmem:[#allocation2 + $0xf0] sm:$0xff]
    %v1217 = vld [vmem:[#allocation2 + $0xf8] sm:$0xff]
    %v1218 = vld [vmem:[#allocation2 + $0x100] sm:$0xff]
    %v1219 = vld [vmem:[#allocation2 + $0x108] sm:$0xff]
    %v1220 = vld [vmem:[#allocation2 + $0x110] sm:$0xff]
    %v1221 = vld [vmem:[#allocation2 + $0x118] sm:$0xff]
    %v1222 = vld [vmem:[#allocation2 + $0x120] sm:$0xff]
    %v1223 = vld [vmem:[#allocation2 + $0x128] sm:$0xff]
    %v1224 = vld [vmem:[#allocation2 + $0x130] sm:$0xff]
    %v1225 = vld [vmem:[#allocation2 + $0x138] sm:$0xff]
    %v1226 = vld [vmem:[#allocation2 + $0x140] sm:$0xff]
    %v1227 = vld [vmem:[#allocation2 + $0x148] sm:$0xff]
    %v1228 = vld [vmem:[#allocation2 + $0x150] sm:$0xff]
    %v1229 = vld [vmem:[#allocation2 + $0x158] sm:$0xff]
    %v1230 = vld [vmem:[#allocation2 + $0x160] sm:$0xff]
    %v1231 = vld [vmem:[#allocation2 + $0x168] sm:$0xff]
    %v1232 = vld [vmem:[#allocation2 + $0x170] sm:$0xff]
    %v1233 = vld [vmem:[#allocation2 + $0x178] sm:$0xff]
    %v1234 = vld [vmem:[#allocation2 + $0x180] sm:$0xff]
    %v1235 = vld [vmem:[#allocation2 + $0x188] sm:$0xff]
    %v1236 = vld [vmem:[#allocation2 + $0x190] sm:$0xff]
    %v1237 = vld [vmem:[#allocation2 + $0x198] sm:$0xff]
    %v1238 = vld [vmem:[#allocation2 + $0x1a0] sm:$0xff]
    %v1239 = vld [vmem:[#allocation2 + $0x1a8] sm:$0xff]
    %v1240 = vld [vmem:[#allocation2 + $0x1b0] sm:$0xff]
    %v1241 = vld [vmem:[#allocation2 + $0x1b8] sm:$0xff]
    %v1242 = vld [vmem:[#allocation2 + $0x1c0] sm:$0xff]
    %v1243 = vld [vmem:[#allocation2 + $0x1c8] sm:$0xff]
    %v1244 = vld [vmem:[#allocation2 + $0x1d0] sm:$0xff]
    %v1245 = vld [vmem:[#allocation2 + $0x1d8] sm:$0xff]
    %v1246 = vld [vmem:[#allocation2 + $0x1e0] sm:$0xff]
    %v1247 = vld [vmem:[#allocation2 + $0x1e8] sm:$0xff]
    %v1248 = vld [vmem:[#allocation2 + $0x1f0] sm:$0xff]
    %v1249 = vld [vmem:[#allocation2 + $0x1f8] sm:$0xff]
    %v1250 = vld [vmem:[#allocation2 + $0x200] sm:$0xff]
    %v1251 = vld [vmem:[#allocation2 + $0x208] sm:$0xff]
    %v1252 = vld [vmem:[#allocation2 + $0x210] sm:$0xff]
    %v1253 = vld [vmem:[#allocation2 + $0x218] sm:$0xff]
    %v1254 = vld [vmem:[#allocation2 + $0x220] sm:$0xff]
    %v1255 = vld [vmem:[#allocation2 + $0x228] sm:$0xff]
    %v1256 = vld [vmem:[#allocation2 + $0x230] sm:$0xff]
    %v1257 = vld [vmem:[#allocation2 + $0x238] sm:$0xff]
    %v1258 = vld [vmem:[#allocation2 + $0x240] sm:$0xff]
    %v1259 = vld [vmem:[#allocation2 + $0x248] sm:$0xff]
    %v1260 = vld [vmem:[#allocation2 + $0x250] sm:$0xff]
    %v1261 = vld [vmem:[#allocation2 + $0x258] sm:$0xff]
    %v1262 = vld [vmem:[#allocation2 + $0x260] sm:$0xff]
    %v1263 = vld [vmem:[#allocation2 + $0x268] sm:$0xff]
    %v1264 = vld [vmem:[#allocation2 + $0x270] sm:$0xff]
    %v1265 = vld [vmem:[#allocation2 + $0x278] sm:$0xff]
    %v1266 = vld [vmem:[#allocation2 + $0x280] sm:$0xff]
    %v1267 = vld [vmem:[#allocation2 + $0x288] sm:$0xff]
    %v1268 = vld [vmem:[#allocation2 + $0x290] sm:$0xff]
    %v1269 = vld [vmem:[#allocation2 + $0x298] sm:$0xff]
    %v1270 = vld [vmem:[#allocation2 + $0x2a0] sm:$0xff]
    %v1271 = vld [vmem:[#allocation2 + $0x2a8] sm:$0xff]
    %v1272 = vld [vmem:[#allocation2 + $0x2b0] sm:$0xff]
    %v1273 = vld [vmem:[#allocation2 + $0x2b8] sm:$0xff]
    %v1274 = vld [vmem:[#allocation2 + $0x2c0] sm:$0xff]
    %v1275 = vld [vmem:[#allocation2 + $0x2c8] sm:$0xff]
    %v1276 = vld [vmem:[#allocation2 + $0x2d0] sm:$0xff]
    %v1277 = vld [vmem:[#allocation2 + $0x2d8] sm:$0xff]
    %v1278 = vld [vmem:[#allocation2 + $0x2e0] sm:$0xff]
    %v1279 = vld [vmem:[#allocation2 + $0x2e8] sm:$0xff]
    %v1280 = vld [vmem:[#allocation2 + $0x2f0] sm:$0xff]
    %v1281 = vld [vmem:[#allocation2 + $0x2f8] sm:$0xff]
    %v1282 = vld [vmem:[#allocation2 + $0x300] sm:$0xff]
    %v1283 = vld [vmem:[#allocation2 + $0x308] sm:$0xff]
    %v1284 = vld [vmem:[#allocation2 + $0x310] sm:$0xff]
    %v1285 = vld [vmem:[#allocation2 + $0x318] sm:$0xff]
    %v1286 = vld [vmem:[#allocation2 + $0x320] sm:$0xff]
    %v1287 = vld [vmem:[#allocation2 + $0x328] sm:$0xff]
    %v1288 = vld [vmem:[#allocation2 + $0x330] sm:$0xff]
    %v1289 = vld [vmem:[#allocation2 + $0x338] sm:$0xff]
    %v1290 = vld [vmem:[#allocation2 + $0x340] sm:$0xff]
    %v1291 = vld [vmem:[#allocation2 + $0x348] sm:$0xff]
    %v1292 = vld [vmem:[#allocation2 + $0x350] sm:$0xff]
    %v1293 = vld [vmem:[#allocation2 + $0x358] sm:$0xff]
    %v1294 = vld [vmem:[#allocation2 + $0x360] sm:$0xff]
    %v1295 = vld [vmem:[#allocation2 + $0x368] sm:$0xff]
    %v1296 = vld [vmem:[#allocation2 + $0x370] sm:$0xff]
    %v1297 = vld [vmem:[#allocation2 + $0x378] sm:$0xff]
    %v1298 = vld [vmem:[#allocation2 + $0x380] sm:$0xff]
    %v1299 = vld [vmem:[#allocation2 + $0x388] sm:$0xff]
    %v1300 = vld [vmem:[#allocation2 + $0x390] sm:$0xff]
    %v1301 = vld [vmem:[#allocation2 + $0x398] sm:$0xff]
    %v1302 = vld [vmem:[#allocation2 + $0x3a0] sm:$0xff]
    %v1303 = vld [vmem:[#allocation2 + $0x3a8] sm:$0xff]
    %v1304 = vld [vmem:[#allocation2 + $0x3b0] sm:$0xff]
    %v1305 = vld [vmem:[#allocation2 + $0x3b8] sm:$0xff]
    %v1306 = vld [vmem:[#allocation2 + $0x3c0] sm:$0xff]
    %v1307 = vld [vmem:[#allocation2 + $0x3c8] sm:$0xff]
    %v1308 = vld [vmem:[#allocation2 + $0x3d0] sm:$0xff]
    %v1309 = vld [vmem:[#allocation2 + $0x3d8] sm:$0xff]
    %v1310 = vld [vmem:[#allocation2 + $0x3e0] sm:$0xff]
    %v1311 = vld [vmem:[#allocation2 + $0x3e8] sm:$0xff]
    %v1312 = vld [vmem:[#allocation2 + $0x3f0] sm:$0xff]
    %v1313 = vld [vmem:[#allocation2 + $0x3f8] sm:$0xff]
    %v1314 = vld [vmem:[%s4] sm:$0x3]
    %v1316 = vlaneseq
    %v1317 = vshrl.u32 %v1316, 7
    %v1318 = vsub.s32 0, %v1317
    %v1319 = vrot.slane %v1314, %v1318
    %v1320 = vlaneseq
    %v1321 = vshrl.u32 %v1320, 7
    %v1322 = vsub.s32 1, %v1321
    %v1323 = vrot.slane %v1314, %v1322
    %v1454 = vunpack.c.l.b16 %v1186
    %v1455 = vunpack.c.h.b16 %v1186
    %v1456 = vunpack.c.l.b16 %v1187
    %v1457 = vunpack.c.h.b16 %v1187
    %v1458 = vunpack.c.l.b16 %v1188
    %v1459 = vunpack.c.h.b16 %v1188
    %v1460 = vunpack.c.l.b16 %v1189
    %v1461 = vunpack.c.h.b16 %v1189
    %v1462 = vunpack.c.l.b16 %v1190
    %v1463 = vunpack.c.h.b16 %v1190
    %v1464 = vunpack.c.l.b16 %v1191
    %v1465 = vunpack.c.h.b16 %v1191
    %v1466 = vunpack.c.l.b16 %v1192
    %v1467 = vunpack.c.h.b16 %v1192
    %v1468 = vunpack.c.l.b16 %v1193
    %v1469 = vunpack.c.h.b16 %v1193
    %v1470 = vunpack.c.l.b16 %v1194
    %v1471 = vunpack.c.h.b16 %v1194
    %v1472 = vunpack.c.l.b16 %v1195
    %v1473 = vunpack.c.h.b16 %v1195
    %v1474 = vunpack.c.l.b16 %v1196
    %v1475 = vunpack.c.h.b16 %v1196
    %v1476 = vunpack.c.l.b16 %v1197
    %v1477 = vunpack.c.h.b16 %v1197
    %v1478 = vunpack.c.l.b16 %v1198
    %v1479 = vunpack.c.h.b16 %v1198
    %v1480 = vunpack.c.l.b16 %v1199
    %v1481 = vunpack.c.h.b16 %v1199
    %v1482 = vunpack.c.l.b16 %v1200
    %v1483 = vunpack.c.h.b16 %v1200
    %v1484 = vunpack.c.l.b16 %v1201
    %v1485 = vunpack.c.h.b16 %v1201
    %v1486 = vunpack.c.l.b16 %v1202
    %v1487 = vunpack.c.h.b16 %v1202
    %v1488 = vunpack.c.l.b16 %v1203
    %v1489 = vunpack.c.h.b16 %v1203
    %v1490 = vunpack.c.l.b16 %v1204
    %v1491 = vunpack.c.h.b16 %v1204
    %v1492 = vunpack.c.l.b16 %v1205
    %v1493 = vunpack.c.h.b16 %v1205
    %v1494 = vunpack.c.l.b16 %v1206
    %v1495 = vunpack.c.h.b16 %v1206
    %v1496 = vunpack.c.l.b16 %v1207
    %v1497 = vunpack.c.h.b16 %v1207
    %v1498 = vunpack.c.l.b16 %v1208
    %v1499 = vunpack.c.h.b16 %v1208
    %v1500 = vunpack.c.l.b16 %v1209
    %v1501 = vunpack.c.h.b16 %v1209
    %v1502 = vunpack.c.l.b16 %v1210
    %v1503 = vunpack.c.h.b16 %v1210
    %v1504 = vunpack.c.l.b16 %v1211
    %v1505 = vunpack.c.h.b16 %v1211
    %v1506 = vunpack.c.l.b16 %v1212
    %v1507 = vunpack.c.h.b16 %v1212
    %v1508 = vunpack.c.l.b16 %v1213
    %v1509 = vunpack.c.h.b16 %v1213
    %v1510 = vunpack.c.l.b16 %v1214
    %v1511 = vunpack.c.h.b16 %v1214
    %v1512 = vunpack.c.l.b16 %v1215
    %v1513 = vunpack.c.h.b16 %v1215
    %v1514 = vunpack.c.l.b16 %v1216
    %v1515 = vunpack.c.h.b16 %v1216
    %v1516 = vunpack.c.l.b16 %v1217
    %v1517 = vunpack.c.h.b16 %v1217
    %v1518 = vunpack.c.l.b16 %v1218
    %v1519 = vunpack.c.h.b16 %v1218
    %v1520 = vunpack.c.l.b16 %v1219
    %v1521 = vunpack.c.h.b16 %v1219
    %v1522 = vunpack.c.l.b16 %v1220
    %v1523 = vunpack.c.h.b16 %v1220
    %v1524 = vunpack.c.l.b16 %v1221
    %v1525 = vunpack.c.h.b16 %v1221
    %v1526 = vunpack.c.l.b16 %v1222
    %v1527 = vunpack.c.h.b16 %v1222
    %v1528 = vunpack.c.l.b16 %v1223
    %v1529 = vunpack.c.h.b16 %v1223
    %v1530 = vunpack.c.l.b16 %v1224
    %v1531 = vunpack.c.h.b16 %v1224
    %v1532 = vunpack.c.l.b16 %v1225
    %v1533 = vunpack.c.h.b16 %v1225
    %v1534 = vunpack.c.l.b16 %v1226
    %v1535 = vunpack.c.h.b16 %v1226
    %v1536 = vunpack.c.l.b16 %v1227
    %v1537 = vunpack.c.h.b16 %v1227
    %v1538 = vunpack.c.l.b16 %v1228
    %v1539 = vunpack.c.h.b16 %v1228
    %v1540 = vunpack.c.l.b16 %v1229
    %v1541 = vunpack.c.h.b16 %v1229
    %v1542 = vunpack.c.l.b16 %v1230
    %v1543 = vunpack.c.h.b16 %v1230
    %v1544 = vunpack.c.l.b16 %v1231
    %v1545 = vunpack.c.h.b16 %v1231
    %v1546 = vunpack.c.l.b16 %v1232
    %v1547 = vunpack.c.h.b16 %v1232
    %v1548 = vunpack.c.l.b16 %v1233
    %v1549 = vunpack.c.h.b16 %v1233
    %v1550 = vunpack.c.l.b16 %v1234
    %v1551 = vunpack.c.h.b16 %v1234
    %v1552 = vunpack.c.l.b16 %v1235
    %v1553 = vunpack.c.h.b16 %v1235
    %v1554 = vunpack.c.l.b16 %v1236
    %v1555 = vunpack.c.h.b16 %v1236
    %v1556 = vunpack.c.l.b16 %v1237
    %v1557 = vunpack.c.h.b16 %v1237
    %v1558 = vunpack.c.l.b16 %v1238
    %v1559 = vunpack.c.h.b16 %v1238
    %v1560 = vunpack.c.l.b16 %v1239
    %v1561 = vunpack.c.h.b16 %v1239
    %v1562 = vunpack.c.l.b16 %v1240
    %v1563 = vunpack.c.h.b16 %v1240
    %v1564 = vunpack.c.l.b16 %v1241
    %v1565 = vunpack.c.h.b16 %v1241
    %v1566 = vunpack.c.l.b16 %v1242
    %v1567 = vunpack.c.h.b16 %v1242
    %v1568 = vunpack.c.l.b16 %v1243
    %v1569 = vunpack.c.h.b16 %v1243
    %v1570 = vunpack.c.l.b16 %v1244
    %v1571 = vunpack.c.h.b16 %v1244
    %v1572 = vunpack.c.l.b16 %v1245
    %v1573 = vunpack.c.h.b16 %v1245
    %v1574 = vunpack.c.l.b16 %v1246
    %v1575 = vunpack.c.h.b16 %v1246
    %v1576 = vunpack.c.l.b16 %v1247
    %v1577 = vunpack.c.h.b16 %v1247
    %v1578 = vunpack.c.l.b16 %v1248
    %v1579 = vunpack.c.h.b16 %v1248
    %v1580 = vunpack.c.l.b16 %v1249
    %v1581 = vunpack.c.h.b16 %v1249
    %v1582 = vunpack.c.l.b16 %v1250
    %v1583 = vunpack.c.h.b16 %v1250
    %v1584 = vunpack.c.l.b16 %v1251
    %v1585 = vunpack.c.h.b16 %v1251
    %v1586 = vunpack.c.l.b16 %v1252
    %v1587 = vunpack.c.h.b16 %v1252
    %v1588 = vunpack.c.l.b16 %v1253
    %v1589 = vunpack.c.h.b16 %v1253
    %v1590 = vunpack.c.l.b16 %v1254
    %v1591 = vunpack.c.h.b16 %v1254
    %v1592 = vunpack.c.l.b16 %v1255
    %v1593 = vunpack.c.h.b16 %v1255
    %v1594 = vunpack.c.l.b16 %v1256
    %v1595 = vunpack.c.h.b16 %v1256
    %v1596 = vunpack.c.l.b16 %v1257
    %v1597 = vunpack.c.h.b16 %v1257
    %v1598 = vunpack.c.l.b16 %v1258
    %v1599 = vunpack.c.h.b16 %v1258
    %v1600 = vunpack.c.l.b16 %v1259
    %v1601 = vunpack.c.h.b16 %v1259
    %v1602 = vunpack.c.l.b16 %v1260
    %v1603 = vunpack.c.h.b16 %v1260
    %v1604 = vunpack.c.l.b16 %v1261
    %v1605 = vunpack.c.h.b16 %v1261
    %v1606 = vunpack.c.l.b16 %v1262
    %v1607 = vunpack.c.h.b16 %v1262
    %v1608 = vunpack.c.l.b16 %v1263
    %v1609 = vunpack.c.h.b16 %v1263
    %v1610 = vunpack.c.l.b16 %v1264
    %v1611 = vunpack.c.h.b16 %v1264
    %v1612 = vunpack.c.l.b16 %v1265
    %v1613 = vunpack.c.h.b16 %v1265
    %v1614 = vunpack.c.l.b16 %v1266
    %v1615 = vunpack.c.h.b16 %v1266
    %v1616 = vunpack.c.l.b16 %v1267
    %v1617 = vunpack.c.h.b16 %v1267
    %v1618 = vunpack.c.l.b16 %v1268
    %v1619 = vunpack.c.h.b16 %v1268
    %v1620 = vunpack.c.l.b16 %v1269
    %v1621 = vunpack.c.h.b16 %v1269
    %v1622 = vunpack.c.l.b16 %v1270
    %v1623 = vunpack.c.h.b16 %v1270
    %v1624 = vunpack.c.l.b16 %v1271
    %v1625 = vunpack.c.h.b16 %v1271
    %v1626 = vunpack.c.l.b16 %v1272
    %v1627 = vunpack.c.h.b16 %v1272
    %v1628 = vunpack.c.l.b16 %v1273
    %v1629 = vunpack.c.h.b16 %v1273
    %v1630 = vunpack.c.l.b16 %v1274
    %v1631 = vunpack.c.h.b16 %v1274
    %v1632 = vunpack.c.l.b16 %v1275
    %v1633 = vunpack.c.h.b16 %v1275
    %v1634 = vunpack.c.l.b16 %v1276
    %v1635 = vunpack.c.h.b16 %v1276
    %v1636 = vunpack.c.l.b16 %v1277
    %v1637 = vunpack.c.h.b16 %v1277
    %v1638 = vunpack.c.l.b16 %v1278
    %v1639 = vunpack.c.h.b16 %v1278
    %v1640 = vunpack.c.l.b16 %v1279
    %v1641 = vunpack.c.h.b16 %v1279
    %v1642 = vunpack.c.l.b16 %v1280
    %v1643 = vunpack.c.h.b16 %v1280
    %v1644 = vunpack.c.l.b16 %v1281
    %v1645 = vunpack.c.h.b16 %v1281
    %v1646 = vunpack.c.l.b16 %v1282
    %v1647 = vunpack.c.h.b16 %v1282
    %v1648 = vunpack.c.l.b16 %v1283
    %v1649 = vunpack.c.h.b16 %v1283
    %v1650 = vunpack.c.l.b16 %v1284
    %v1651 = vunpack.c.h.b16 %v1284
    %v1652 = vunpack.c.l.b16 %v1285
    %v1653 = vunpack.c.h.b16 %v1285
    %v1654 = vunpack.c.l.b16 %v1286
    %v1655 = vunpack.c.h.b16 %v1286
    %v1656 = vunpack.c.l.b16 %v1287
    %v1657 = vunpack.c.h.b16 %v1287
    %v1658 = vunpack.c.l.b16 %v1288
    %v1659 = vunpack.c.h.b16 %v1288
    %v1660 = vunpack.c.l.b16 %v1289
    %v1661 = vunpack.c.h.b16 %v1289
    %v1662 = vunpack.c.l.b16 %v1290
    %v1663 = vunpack.c.h.b16 %v1290
    %v1664 = vunpack.c.l.b16 %v1291
    %v1665 = vunpack.c.h.b16 %v1291
    %v1666 = vunpack.c.l.b16 %v1292
    %v1667 = vunpack.c.h.b16 %v1292
    %v1668 = vunpack.c.l.b16 %v1293
    %v1669 = vunpack.c.h.b16 %v1293
    %v1670 = vunpack.c.l.b16 %v1294
    %v1671 = vunpack.c.h.b16 %v1294
    %v1672 = vunpack.c.l.b16 %v1295
    %v1673 = vunpack.c.h.b16 %v1295
    %v1674 = vunpack.c.l.b16 %v1296
    %v1675 = vunpack.c.h.b16 %v1296
    %v1676 = vunpack.c.l.b16 %v1297
    %v1677 = vunpack.c.h.b16 %v1297
    %v1678 = vunpack.c.l.b16 %v1298
    %v1679 = vunpack.c.h.b16 %v1298
    %v1680 = vunpack.c.l.b16 %v1299
    %v1681 = vunpack.c.h.b16 %v1299
    %v1682 = vunpack.c.l.b16 %v1300
    %v1683 = vunpack.c.h.b16 %v1300
    %v1684 = vunpack.c.l.b16 %v1301
    %v1685 = vunpack.c.h.b16 %v1301
    %v1686 = vunpack.c.l.b16 %v1302
    %v1687 = vunpack.c.h.b16 %v1302
    %v1688 = vunpack.c.l.b16 %v1303
    %v1689 = vunpack.c.h.b16 %v1303
    %v1690 = vunpack.c.l.b16 %v1304
    %v1691 = vunpack.c.h.b16 %v1304
    %v1692 = vunpack.c.l.b16 %v1305
    %v1693 = vunpack.c.h.b16 %v1305
    %v1694 = vunpack.c.l.b16 %v1306
    %v1695 = vunpack.c.h.b16 %v1306
    %v1696 = vunpack.c.l.b16 %v1307
    %v1697 = vunpack.c.h.b16 %v1307
    %v1698 = vunpack.c.l.b16 %v1308
    %v1699 = vunpack.c.h.b16 %v1308
    %v1700 = vunpack.c.l.b16 %v1309
    %v1701 = vunpack.c.h.b16 %v1309
    %v1702 = vunpack.c.l.b16 %v1310
    %v1703 = vunpack.c.h.b16 %v1310
    %v1704 = vunpack.c.l.b16 %v1311
    %v1705 = vunpack.c.h.b16 %v1311
    %v1706 = vunpack.c.l.b16 %v1312
    %v1707 = vunpack.c.h.b16 %v1312
    %v1708 = vunpack.c.l.b16 %v1313
    %v1709 = vunpack.c.h.b16 %v1313
    %v1710 = vpack.c.b16 %v1456, %v1454
    %v1711 = vpack.c.b16 %v1457, %v1455
    %v1712 = vpack.c.b16 %v1460, %v1458
    %v1713 = vpack.c.b16 %v1461, %v1459
    %v1714 = vpack.c.b16 %v1464, %v1462
    %v1715 = vpack.c.b16 %v1465, %v1463
    %v1716 = vpack.c.b16 %v1468, %v1466
    %v1717 = vpack.c.b16 %v1469, %v1467
    %v1718 = vpack.c.b16 %v1472, %v1470
    %v1719 = vpack.c.b16 %v1473, %v1471
    %v1720 = vpack.c.b16 %v1476, %v1474
    %v1721 = vpack.c.b16 %v1477, %v1475
    %v1722 = vpack.c.b16 %v1480, %v1478
    %v1723 = vpack.c.b16 %v1481, %v1479
    %v1724 = vpack.c.b16 %v1484, %v1482
    %v1725 = vpack.c.b16 %v1485, %v1483
    %v1726 = vpack.c.b16 %v1488, %v1486
    %v1727 = vpack.c.b16 %v1489, %v1487
    %v1728 = vpack.c.b16 %v1492, %v1490
    %v1729 = vpack.c.b16 %v1493, %v1491
    %v1730 = vpack.c.b16 %v1496, %v1494
    %v1731 = vpack.c.b16 %v1497, %v1495
    %v1732 = vpack.c.b16 %v1500, %v1498
    %v1733 = vpack.c.b16 %v1501, %v1499
    %v1734 = vpack.c.b16 %v1504, %v1502
    %v1735 = vpack.c.b16 %v1505, %v1503
    %v1736 = vpack.c.b16 %v1508, %v1506
    %v1737 = vpack.c.b16 %v1509, %v1507
    %v1738 = vpack.c.b16 %v1512, %v1510
    %v1739 = vpack.c.b16 %v1513, %v1511
    %v1740 = vpack.c.b16 %v1516, %v1514
    %v1741 = vpack.c.b16 %v1517, %v1515
    %v1742 = vpack.c.b16 %v1520, %v1518
    %v1743 = vpack.c.b16 %v1521, %v1519
    %v1744 = vpack.c.b16 %v1524, %v1522
    %v1745 = vpack.c.b16 %v1525, %v1523
    %v1746 = vpack.c.b16 %v1528, %v1526
    %v1747 = vpack.c.b16 %v1529, %v1527
    %v1748 = vpack.c.b16 %v1532, %v1530
    %v1749 = vpack.c.b16 %v1533, %v1531
    %v1750 = vpack.c.b16 %v1536, %v1534
    %v1751 = vpack.c.b16 %v1537, %v1535
    %v1752 = vpack.c.b16 %v1540, %v1538
    %v1753 = vpack.c.b16 %v1541, %v1539
    %v1754 = vpack.c.b16 %v1544, %v1542
    %v1755 = vpack.c.b16 %v1545, %v1543
    %v1756 = vpack.c.b16 %v1548, %v1546
    %v1757 = vpack.c.b16 %v1549, %v1547
    %v1758 = vpack.c.b16 %v1552, %v1550
    %v1759 = vpack.c.b16 %v1553, %v1551
    %v1760 = vpack.c.b16 %v1556, %v1554
    %v1761 = vpack.c.b16 %v1557, %v1555
    %v1762 = vpack.c.b16 %v1560, %v1558
    %v1763 = vpack.c.b16 %v1561, %v1559
    %v1764 = vpack.c.b16 %v1564, %v1562
    %v1765 = vpack.c.b16 %v1565, %v1563
    %v1766 = vpack.c.b16 %v1568, %v1566
    %v1767 = vpack.c.b16 %v1569, %v1567
    %v1768 = vpack.c.b16 %v1572, %v1570
    %v1769 = vpack.c.b16 %v1573, %v1571
    %v1770 = vpack.c.b16 %v1576, %v1574
    %v1771 = vpack.c.b16 %v1577, %v1575
    %v1772 = vpack.c.b16 %v1580, %v1578
    %v1773 = vpack.c.b16 %v1581, %v1579
    %v1774 = vpack.c.b16 %v1584, %v1582
    %v1775 = vpack.c.b16 %v1585, %v1583
    %v1776 = vpack.c.b16 %v1588, %v1586
    %v1777 = vpack.c.b16 %v1589, %v1587
    %v1778 = vpack.c.b16 %v1592, %v1590
    %v1779 = vpack.c.b16 %v1593, %v1591
    %v1780 = vpack.c.b16 %v1596, %v1594
    %v1781 = vpack.c.b16 %v1597, %v1595
    %v1782 = vpack.c.b16 %v1600, %v1598
    %v1783 = vpack.c.b16 %v1601, %v1599
    %v1784 = vpack.c.b16 %v1604, %v1602
    %v1785 = vpack.c.b16 %v1605, %v1603
    %v1786 = vpack.c.b16 %v1608, %v1606
    %v1787 = vpack.c.b16 %v1609, %v1607
    %v1788 = vpack.c.b16 %v1612, %v1610
    %v1789 = vpack.c.b16 %v1613, %v1611
    %v1790 = vpack.c.b16 %v1616, %v1614
    %v1791 = vpack.c.b16 %v1617, %v1615
    %v1792 = vpack.c.b16 %v1620, %v1618
    %v1793 = vpack.c.b16 %v1621, %v1619
    %v1794 = vpack.c.b16 %v1624, %v1622
    %v1795 = vpack.c.b16 %v1625, %v1623
    %v1796 = vpack.c.b16 %v1628, %v1626
    %v1797 = vpack.c.b16 %v1629, %v1627
    %v1798 = vpack.c.b16 %v1632, %v1630
    %v1799 = vpack.c.b16 %v1633, %v1631
    %v1800 = vpack.c.b16 %v1636, %v1634
    %v1801 = vpack.c.b16 %v1637, %v1635
    %v1802 = vpack.c.b16 %v1640, %v1638
    %v1803 = vpack.c.b16 %v1641, %v1639
    %v1804 = vpack.c.b16 %v1644, %v1642
    %v1805 = vpack.c.b16 %v1645, %v1643
    %v1806 = vpack.c.b16 %v1648, %v1646
    %v1807 = vpack.c.b16 %v1649, %v1647
    %v1808 = vpack.c.b16 %v1652, %v1650
    %v1809 = vpack.c.b16 %v1653, %v1651
    %v1810 = vpack.c.b16 %v1656, %v1654
    %v1811 = vpack.c.b16 %v1657, %v1655
    %v1812 = vpack.c.b16 %v1660, %v1658
    %v1813 = vpack.c.b16 %v1661, %v1659
    %v1814 = vpack.c.b16 %v1664, %v1662
    %v1815 = vpack.c.b16 %v1665, %v1663
    %v1816 = vpack.c.b16 %v1668, %v1666
    %v1817 = vpack.c.b16 %v1669, %v1667
    %v1818 = vpack.c.b16 %v1672, %v1670
    %v1819 = vpack.c.b16 %v1673, %v1671
    %v1820 = vpack.c.b16 %v1676, %v1674
    %v1821 = vpack.c.b16 %v1677, %v1675
    %v1822 = vpack.c.b16 %v1680, %v1678
    %v1823 = vpack.c.b16 %v1681, %v1679
    %v1824 = vpack.c.b16 %v1684, %v1682
    %v1825 = vpack.c.b16 %v1685, %v1683
    %v1826 = vpack.c.b16 %v1688, %v1686
    %v1827 = vpack.c.b16 %v1689, %v1687
    %v1828 = vpack.c.b16 %v1692, %v1690
    %v1829 = vpack.c.b16 %v1693, %v1691
    %v1830 = vpack.c.b16 %v1696, %v1694
    %v1831 = vpack.c.b16 %v1697, %v1695
    %v1832 = vpack.c.b16 %v1700, %v1698
    %v1833 = vpack.c.b16 %v1701, %v1699
    %v1834 = vpack.c.b16 %v1704, %v1702
    %v1835 = vpack.c.b16 %v1705, %v1703
    %v1836 = vpack.c.b16 %v1708, %v1706
    %v1837 = vpack.c.b16 %v1709, %v1707
    %1966 = vmatprep.subr.bf16.mxu0 %v1711
    %1967 = vmatpush1.bf16.msra.mxu0 %v1710
    %1968 = vmatprep.subr.bf16.mxu0 %v1713
    %1969 = vmatpush1.bf16.msra.mxu0 %v1712
    %1970 = vmatprep.subr.bf16.mxu0 %v1715
    %1971 = vmatpush1.bf16.msra.mxu0 %v1714
    %1972 = vmatprep.subr.bf16.mxu0 %v1717
    %1973 = vmatpush1.bf16.msra.mxu0 %v1716
    %1974 = vmatprep.subr.bf16.mxu0 %v1719
    %1975 = vmatpush1.bf16.msra.mxu0 %v1718
    %1976 = vmatprep.subr.bf16.mxu0 %v1721
    %1977 = vmatpush1.bf16.msra.mxu0 %v1720
    %1978 = vmatprep.subr.bf16.mxu0 %v1723
    %1979 = vmatpush1.bf16.msra.mxu0 %v1722
    %1980 = vmatprep.subr.bf16.mxu0 %v1725
    %1981 = vmatpush1.bf16.msra.mxu0 %v1724
    %1982 = vmatprep.subr.bf16.mxu0 %v1727
    %1983 = vmatpush1.bf16.msra.mxu0 %v1726
    %1984 = vmatprep.subr.bf16.mxu0 %v1729
    %1985 = vmatpush1.bf16.msra.mxu0 %v1728
    %1986 = vmatprep.subr.bf16.mxu0 %v1731
    %1987 = vmatpush1.bf16.msra.mxu0 %v1730
    %1988 = vmatprep.subr.bf16.mxu0 %v1733
    %1989 = vmatpush1.bf16.msra.mxu0 %v1732
    %1990 = vmatprep.subr.bf16.mxu0 %v1735
    %1991 = vmatpush1.bf16.msra.mxu0 %v1734
    %1992 = vmatprep.subr.bf16.mxu0 %v1737
    %1993 = vmatpush1.bf16.msra.mxu0 %v1736
    %1994 = vmatprep.subr.bf16.mxu0 %v1739
    %1995 = vmatpush1.bf16.msra.mxu0 %v1738
    %1996 = vmatprep.subr.bf16.mxu0 %v1741
    %1997 = vmatpush1.bf16.msra.mxu0 %v1740
    %1998 = vmatprep.mubr.bf16.mxu0 %v1179
    %1999 = vmatmul.mubr.bf16.gmra.mrb[0].mxu0 %v1178
    %v2000 = vpop.f32.mrb[0].mxu0
    %v2001 = vadd.f32 %v1319, %v2000
    %v2002 = vpop.f32.mrb[0].mxu0
    %v2003 = vadd.f32 %v1323, %v2002
    %v2004 = vpop.f32.mrb[0].mxu0
    %v2005 = vadd.f32 %v1319, %v2004
    %v2006 = vpop.f32.mrb[0].mxu0
    %v2007 = vadd.f32 %v1323, %v2006
    %2008 = vdwg.mxu0
    %2009 = vmatprep.subr.bf16.mxu0 %v1743
    %2010 = vmatpush1.bf16.msra.mxu0 %v1742
    %2011 = vmatprep.subr.bf16.mxu0 %v1745
    %2012 = vmatpush1.bf16.msra.mxu0 %v1744
    %2013 = vmatprep.subr.bf16.mxu0 %v1747
    %2014 = vmatpush1.bf16.msra.mxu0 %v1746
    %2015 = vmatprep.subr.bf16.mxu0 %v1749
    %2016 = vmatpush1.bf16.msra.mxu0 %v1748
    %2017 = vmatprep.subr.bf16.mxu0 %v1751
    %2018 = vmatpush1.bf16.msra.mxu0 %v1750
    %2019 = vmatprep.subr.bf16.mxu0 %v1753
    %2020 = vmatpush1.bf16.msra.mxu0 %v1752
    %2021 = vmatprep.subr.bf16.mxu0 %v1755
    %2022 = vmatpush1.bf16.msra.mxu0 %v1754
    %2023 = vmatprep.subr.bf16.mxu0 %v1757
    %2024 = vmatpush1.bf16.msra.mxu0 %v1756
    %2025 = vmatprep.subr.bf16.mxu0 %v1759
    %2026 = vmatpush1.bf16.msra.mxu0 %v1758
    %2027 = vmatprep.subr.bf16.mxu0 %v1761
    %2028 = vmatpush1.bf16.msra.mxu0 %v1760
    %2029 = vmatprep.subr.bf16.mxu0 %v1763
    %2030 = vmatpush1.bf16.msra.mxu0 %v1762
    %2031 = vmatprep.subr.bf16.mxu0 %v1765
    %2032 = vmatpush1.bf16.msra.mxu0 %v1764
    %2033 = vmatprep.subr.bf16.mxu0 %v1767
    %2034 = vmatpush1.bf16.msra.mxu0 %v1766
    %2035 = vmatprep.subr.bf16.mxu0 %v1769
    %2036 = vmatpush1.bf16.msra.mxu0 %v1768
    %2037 = vmatprep.subr.bf16.mxu0 %v1771
    %2038 = vmatpush1.bf16.msra.mxu0 %v1770
    %2039 = vmatprep.subr.bf16.mxu0 %v1773
    %2040 = vmatpush1.bf16.msra.mxu0 %v1772
    %2041 = vmatprep.mubr.bf16.mxu0 %v1181
    %2042 = vmatmul.mubr.bf16.gmra.mrb[0].mxu0 %v1180
    %v2043 = vpop.f32.mrb[0].mxu0
    %v2044 = vadd.f32 %v2001, %v2043
    %v2045 = vpop.f32.mrb[0].mxu0
    %v2046 = vadd.f32 %v2003, %v2045
    %v2047 = vpop.f32.mrb[0].mxu0
    %v2048 = vadd.f32 %v2005, %v2047
    %v2049 = vpop.f32.mrb[0].mxu0
    %v2050 = vadd.f32 %v2007, %v2049
    %2051 = vdwg.mxu0
    %2052 = vmatprep.subr.bf16.mxu0 %v1775
    %2053 = vmatpush1.bf16.msra.mxu0 %v1774
    %2054 = vmatprep.subr.bf16.mxu0 %v1777
    %2055 = vmatpush1.bf16.msra.mxu0 %v1776
    %2056 = vmatprep.subr.bf16.mxu0 %v1779
    %2057 = vmatpush1.bf16.msra.mxu0 %v1778
    %2058 = vmatprep.subr.bf16.mxu0 %v1781
    %2059 = vmatpush1.bf16.msra.mxu0 %v1780
    %2060 = vmatprep.subr.bf16.mxu0 %v1783
    %2061 = vmatpush1.bf16.msra.mxu0 %v1782
    %2062 = vmatprep.subr.bf16.mxu0 %v1785
    %2063 = vmatpush1.bf16.msra.mxu0 %v1784
    %2064 = vmatprep.subr.bf16.mxu0 %v1787
    %2065 = vmatpush1.bf16.msra.mxu0 %v1786
    %2066 = vmatprep.subr.bf16.mxu0 %v1789
    %2067 = vmatpush1.bf16.msra.mxu0 %v1788
    %2068 = vmatprep.subr.bf16.mxu0 %v1791
    %2069 = vmatpush1.bf16.msra.mxu0 %v1790
    %2070 = vmatprep.subr.bf16.mxu0 %v1793
    %2071 = vmatpush1.bf16.msra.mxu0 %v1792
    %2072 = vmatprep.subr.bf16.mxu0 %v1795
    %2073 = vmatpush1.bf16.msra.mxu0 %v1794
    %2074 = vmatprep.subr.bf16.mxu0 %v1797
    %2075 = vmatpush1.bf16.msra.mxu0 %v1796
    %2076 = vmatprep.subr.bf16.mxu0 %v1799
    %2077 = vmatpush1.bf16.msra.mxu0 %v1798
    %2078 = vmatprep.subr.bf16.mxu0 %v1801
    %2079 = vmatpush1.bf16.msra.mxu0 %v1800
    %2080 = vmatprep.subr.bf16.mxu0 %v1803
    %2081 = vmatpush1.bf16.msra.mxu0 %v1802
    %2082 = vmatprep.subr.bf16.mxu0 %v1805
    %2083 = vmatpush1.bf16.msra.mxu0 %v1804
    %2084 = vmatprep.mubr.bf16.mxu0 %v1183
    %2085 = vmatmul.mubr.bf16.gmra.mrb[0].mxu0 %v1182
    %v2086 = vpop.f32.mrb[0].mxu0
    %v2087 = vadd.f32 %v2044, %v2086
    %v2088 = vpop.f32.mrb[0].mxu0
    %v2089 = vadd.f32 %v2046, %v2088
    %v2090 = vpop.f32.mrb[0].mxu0
    %v2091 = vadd.f32 %v2048, %v2090
    %v2092 = vpop.f32.mrb[0].mxu0
    %v2093 = vadd.f32 %v2050, %v2092
    %2094 = vdwg.mxu0
    %2095 = vmatprep.subr.bf16.mxu0 %v1807
    %2096 = vmatpush1.bf16.msra.mxu0 %v1806
    %2097 = vmatprep.subr.bf16.mxu0 %v1809
    %2098 = vmatpush1.bf16.msra.mxu0 %v1808
    %2099 = vmatprep.subr.bf16.mxu0 %v1811
    %2100 = vmatpush1.bf16.msra.mxu0 %v1810
    %2101 = vmatprep.subr.bf16.mxu0 %v1813
    %2102 = vmatpush1.bf16.msra.mxu0 %v1812
    %2103 = vmatprep.subr.bf16.mxu0 %v1815
    %2104 = vmatpush1.bf16.msra.mxu0 %v1814
    %2105 = vmatprep.subr.bf16.mxu0 %v1817
    %2106 = vmatpush1.bf16.msra.mxu0 %v1816
    %2107 = vmatprep.subr.bf16.mxu0 %v1819
    %2108 = vmatpush1.bf16.msra.mxu0 %v1818
    %2109 = vmatprep.subr.bf16.mxu0 %v1821
    %2110 = vmatpush1.bf16.msra.mxu0 %v1820
    %2111 = vmatprep.subr.bf16.mxu0 %v1823
    %2112 = vmatpush1.bf16.msra.mxu0 %v1822
    %2113 = vmatprep.subr.bf16.mxu0 %v1825
    %2114 = vmatpush1.bf16.msra.mxu0 %v1824
    %2115 = vmatprep.subr.bf16.mxu0 %v1827
    %2116 = vmatpush1.bf16.msra.mxu0 %v1826
    %2117 = vmatprep.subr.bf16.mxu0 %v1829
    %2118 = vmatpush1.bf16.msra.mxu0 %v1828
    %2119 = vmatprep.subr.bf16.mxu0 %v1831
    %2120 = vmatpush1.bf16.msra.mxu0 %v1830
    %2121 = vmatprep.subr.bf16.mxu0 %v1833
    %2122 = vmatpush1.bf16.msra.mxu0 %v1832
    %2123 = vmatprep.subr.bf16.mxu0 %v1835
    %2124 = vmatpush1.bf16.msra.mxu0 %v1834
    %2125 = vmatprep.subr.bf16.mxu0 %v1837
    %2126 = vmatpush1.bf16.msra.mxu0 %v1836
    %2127 = vmatprep.mubr.bf16.mxu0 %v1185
    %2128 = vmatmul.mubr.bf16.gmra.mrb[0].mxu0 %v1184
    %v2129 = vpop.f32.mrb[0].mxu0
    %v2130 = vadd.f32 %v2087, %v2129
    %v2131 = vpop.f32.mrb[0].mxu0
    %v2132 = vadd.f32 %v2089, %v2131
    %v2133 = vpop.f32.mrb[0].mxu0
    %v2134 = vadd.f32 %v2091, %v2133
    %v2135 = vpop.f32.mrb[0].mxu0
    %v2136 = vadd.f32 %v2093, %v2135
    %2137 = vdwg.mxu0
    %v2138 = vunpack.c.l.bf16 %v40
    %v2139 = vunpack.c.h.bf16 %v40
    %v2140 = vunpack.c.l.bf16 %v41
    %v2141 = vunpack.c.h.bf16 %v41
    %v2142 = vadd.f32 %v2130, %v2138
    %v2143 = vadd.f32 %v2132, %v2139
    %v2144 = vadd.f32 %v2134, %v2140
    %v2145 = vadd.f32 %v2136, %v2141
    %v2146 = vld [vmem:[%s5] sm:$0x3]
    %v2147 = vld [vmem:[%s6] sm:$0x3]
    %v2148 = vadd.f32 %v2142, %v2143
    %2149 = vadd.xlane.f32.xlu0 %v2148
    %v2150 = vpop.xlane.xlu0 %2149
    %v2151 = vadd.f32 %v2144, %v2145
    %2152 = vadd.xlane.f32.xlu0 %v2151
    %v2153 = vpop.xlane.xlu0 %2152
    %v2154 = vrcp.pop 256.0
    %v2155 = vmul.f32 %v2150, %v2154
    %v2156 = vmul.f32 %v2153, %v2154
    %v2157 = vsub.f32 %v2142, %v2155
    %v2158 = vsub.f32 %v2143, %v2155
    %v2159 = vsub.f32 %v2144, %v2156
    %v2160 = vsub.f32 %v2145, %v2156
    %v2161 = vmul.f32 %v2157, %v2157
    %v2162 = vmul.f32 %v2158, %v2158
    %v2163 = vmul.f32 %v2159, %v2159
    %v2164 = vmul.f32 %v2160, %v2160
    %v2165 = vadd.f32 %v2161, %v2162
    %2166 = vadd.xlane.f32.xlu0 %v2165
    %v2167 = vpop.xlane.xlu0 %2166
    %v2168 = vadd.f32 %v2163, %v2164
    %2169 = vadd.xlane.f32.xlu0 %v2168
    %v2170 = vpop.xlane.xlu0 %2169
    %v2171 = vmul.f32 %v2167, %v2154
    %v2172 = vmul.f32 %v2170, %v2154
    %v2173 = vadd.f32 %v2171, 1e-12
    %v2174 = vadd.f32 %v2172, 1e-12
    %v2175 = vrsqrt.pop %v2173
    %v2176 = vrsqrt.pop %v2174
    %v2177 = vmul.f32 %v2157, %v2175
    %v2178 = vmul.f32 %v2158, %v2175
    %v2179 = vmul.f32 %v2159, %v2176
    %v2180 = vmul.f32 %v2160, %v2176
    %v2182 = vlaneseq
    %v2183 = vshrl.u32 %v2182, 7
    %v2184 = vsub.s32 0, %v2183
    %v2185 = vrot.slane %v2146, %v2184
    %v2186 = vlaneseq
    %v2187 = vshrl.u32 %v2186, 7
    %v2188 = vsub.s32 1, %v2187
    %v2189 = vrot.slane %v2146, %v2188
    %v2192 = vmul.f32 %v2177, %v2185
    %v2193 = vmul.f32 %v2178, %v2189
    %v2194 = vmul.f32 %v2179, %v2185
    %v2195 = vmul.f32 %v2180, %v2189
    %v2197 = vlaneseq
    %v2198 = vshrl.u32 %v2197, 7
    %v2199 = vsub.s32 0, %v2198
    %v2200 = vrot.slane %v2147, %v2199
    %v2201 = vlaneseq
    %v2202 = vshrl.u32 %v2201, 7
    %v2203 = vsub.s32 1, %v2202
    %v2204 = vrot.slane %v2147, %v2203
    %v2207 = vadd.f32 %v2192, %v2200
    %v2208 = vadd.f32 %v2193, %v2204
    %v2209 = vadd.f32 %v2194, %v2200
    %v2210 = vadd.f32 %v2195, %v2204
    %v2211 = vpack.c.bf16 %v2209, %v2207
    %v2212 = vpack.c.bf16 %v2210, %v2208
    %v2215 = vunpack.c.l.b16 %v2211
    %v2216 = vunpack.c.l.b16 %v2212
    %v2217 = vunpack.c.h.b16 %v2211
    %v2218 = vunpack.c.h.b16 %v2212
    %v2219 = vpack.c.b16 %v2216, %v2215
    %v2220 = vpack.c.b16 %v2218, %v2217
    %2223 = vst [vmem:[%s7] sm:$0xff] %v2219
    %2224 = vst [vmem:[%s7 + $0x8] sm:$0xff] %v2220
    // Predicated region
    $region34: #{electra_class_forward.14} parent=1 // pred_check
      _
    $region35: #{electra_class_forward.14} parent=1 // pred_check_branch
      %2226 = sbr.rel (0) target = $region37
    $region36: #{electra_class_forward.14} parent=1 // pred_region
      _
    $region37: #{electra_class_forward.14} parent=1 // pred_fallthru
      _
    // Predicated region
    $region38: #{electra_class_forward.14} parent=1 // pred_check
      _
    $region39: #{electra_class_forward.14} parent=1 // pred_check_branch
      %2228 = sbr.rel (0) target = $region41
    $region40: #{electra_class_forward.14} parent=1 // pred_region
      _
    $region41: #{electra_class_forward.14} parent=1 // pred_fallthru
      _
    %2229 = vsyncpa [#allocation3], 1

// kernel: electra_class_forward.18
$region0: #{electra_class_forward.18}
  #allocation0 [shape = 'u32[]', space=smem, size = 0x4, offset = 0x4, fixed_abs, tag = 'smem constant byte address 0x4 - core index']
  #allocation1 [shape = 'u32[144,128]{1,0:T(1,128)}', space=vmem, size = 0x12000, scoped, tag = 'internal scratch']
  %s0 = inlined_call_operand.vmem [shape: bf16[16,256], index: 0, kind: input, shape index: {}]
  %s1 = inlined_call_operand.vmem [shape: bf16[256,1024], index: 1, kind: input, shape index: {}]
  %s2 = inlined_call_operand.vmem [shape: f32[1,1024], index: 2, kind: input, shape index: {}]
  %s3 = inlined_call_operand.vmem [shape: bf16[1024,256], index: 3, kind: input, shape index: {}]
  %s4 = inlined_call_operand.vmem [shape: f32[1,256], index: 4, kind: input, shape index: {}]
  %s5 = inlined_call_operand.vmem [shape: f32[1,256], index: 5, kind: input, shape index: {}]
  %s6 = inlined_call_operand.vmem [shape: f32[1,256], index: 6, kind: input, shape index: {}]
  %s7 = inlined_call_operand.vmem [shape: bf16[16,256], index: 7, kind: output, shape index: {}]
  %s8 = sld [smem:[#allocation0]]
  $region38: #{electra_class_forward.18} parent=0
    _
  %s10 = ssub.s32 1, %s8
  %s11 = scalar_select 0, %s10, %s8
  // Predicated region
  $region2: #{electra_class_forward.18} parent=0 // pred_check
    _
  $region3: #{electra_class_forward.18} parent=0 // pred_check_branch
    %13 = sbr.rel (0) target = $region5
  $region4: #{electra_class_forward.18} parent=0 // pred_region
    _
  $region5: #{electra_class_forward.18} parent=0 // pred_fallthru
    _
  // Predicated region
  $region6: #{electra_class_forward.18} parent=0 // pred_check
    _
  $region7: #{electra_class_forward.18} parent=0 // pred_check_branch
    %15 = sbr.rel (0) target = $region9
  $region8: #{electra_class_forward.18} parent=0 // pred_region
    _
  $region9: #{electra_class_forward.18} parent=0 // pred_fallthru
    _
  // Predicated region
  $region10: #{electra_class_forward.18} parent=0 // pred_check
    _
  $region11: #{electra_class_forward.18} parent=0 // pred_check_branch
    %17 = sbr.rel (0) target = $region13
  $region12: #{electra_class_forward.18} parent=0 // pred_region
    _
  $region13: #{electra_class_forward.18} parent=0 // pred_fallthru
    _
  // Predicated region
  $region14: #{electra_class_forward.18} parent=0 // pred_check
    _
  $region15: #{electra_class_forward.18} parent=0 // pred_check_branch
    %19 = sbr.rel (0) target = $region17
  $region16: #{electra_class_forward.18} parent=0 // pred_region
    _
  $region17: #{electra_class_forward.18} parent=0 // pred_fallthru
    _
  // Predicated region
  $region18: #{electra_class_forward.18} parent=0 // pred_check
    _
  $region19: #{electra_class_forward.18} parent=0 // pred_check_branch
    %21 = sbr.rel (0) target = $region21
  $region20: #{electra_class_forward.18} parent=0 // pred_region
    _
  $region21: #{electra_class_forward.18} parent=0 // pred_fallthru
    _
  // Predicated region
  $region22: #{electra_class_forward.18} parent=0 // pred_check
    _
  $region23: #{electra_class_forward.18} parent=0 // pred_check_branch
    %23 = sbr.rel (0) target = $region25
  $region24: #{electra_class_forward.18} parent=0 // pred_region
    _
  $region25: #{electra_class_forward.18} parent=0 // pred_fallthru
    _
  // Predicated region
  $region26: #{electra_class_forward.18} parent=0 // pred_check
    _
  $region27: #{electra_class_forward.18} parent=0 // pred_check_branch
    %25 = sbr.rel (0) target = $region29
  $region28: #{electra_class_forward.18} parent=0 // pred_region
    _
  $region29: #{electra_class_forward.18} parent=0 // pred_fallthru
    _
  %v26 = vld [vmem:[%s0] sm:$0xff]
  %v27 = vld [vmem:[%s0 + $0x8] sm:$0xff]
  %v28 = vld [vmem:[%s1] sm:$0xff]
  %v29 = vld [vmem:[%s1 + $0x8] sm:$0xff]
  %v30 = vld [vmem:[%s1 + $0x10] sm:$0xff]
  %v31 = vld [vmem:[%s1 + $0x18] sm:$0xff]
  %v32 = vld [vmem:[%s1 + $0x20] sm:$0xff]
  %v33 = vld [vmem:[%s1 + $0x28] sm:$0xff]
  %v34 = vld [vmem:[%s1 + $0x30] sm:$0xff]
  %v35 = vld [vmem:[%s1 + $0x38] sm:$0xff]
  %v36 = vld [vmem:[%s1 + $0x40] sm:$0xff]
  %v37 = vld [vmem:[%s1 + $0x48] sm:$0xff]
  %v38 = vld [vmem:[%s1 + $0x50] sm:$0xff]
  %v39 = vld [vmem:[%s1 + $0x58] sm:$0xff]
  %v40 = vld [vmem:[%s1 + $0x60] sm:$0xff]
  %v41 = vld [vmem:[%s1 + $0x68] sm:$0xff]
  %v42 = vld [vmem:[%s1 + $0x70] sm:$0xff]
  %v43 = vld [vmem:[%s1 + $0x78] sm:$0xff]
  %v44 = vld [vmem:[%s1 + $0x80] sm:$0xff]
  %v45 = vld [vmem:[%s1 + $0x88] sm:$0xff]
  %v46 = vld [vmem:[%s1 + $0x90] sm:$0xff]
  %v47 = vld [vmem:[%s1 + $0x98] sm:$0xff]
  %v48 = vld [vmem:[%s1 + $0xa0] sm:$0xff]
  %v49 = vld [vmem:[%s1 + $0xa8] sm:$0xff]
  %v50 = vld [vmem:[%s1 + $0xb0] sm:$0xff]
  %v51 = vld [vmem:[%s1 + $0xb8] sm:$0xff]
  %v52 = vld [vmem:[%s1 + $0xc0] sm:$0xff]
  %v53 = vld [vmem:[%s1 + $0xc8] sm:$0xff]
  %v54 = vld [vmem:[%s1 + $0xd0] sm:$0xff]
  %v55 = vld [vmem:[%s1 + $0xd8] sm:$0xff]
  %v56 = vld [vmem:[%s1 + $0xe0] sm:$0xff]
  %v57 = vld [vmem:[%s1 + $0xe8] sm:$0xff]
  %v58 = vld [vmem:[%s1 + $0xf0] sm:$0xff]
  %v59 = vld [vmem:[%s1 + $0xf8] sm:$0xff]
  %v60 = vld [vmem:[%s1 + $0x100] sm:$0xff]
  %v61 = vld [vmem:[%s1 + $0x108] sm:$0xff]
  %v62 = vld [vmem:[%s1 + $0x110] sm:$0xff]
  %v63 = vld [vmem:[%s1 + $0x118] sm:$0xff]
  %v64 = vld [vmem:[%s1 + $0x120] sm:$0xff]
  %v65 = vld [vmem:[%s1 + $0x128] sm:$0xff]
  %v66 = vld [vmem:[%s1 + $0x130] sm:$0xff]
  %v67 = vld [vmem:[%s1 + $0x138] sm:$0xff]
  %v68 = vld [vmem:[%s1 + $0x140] sm:$0xff]
  %v69 = vld [vmem:[%s1 + $0x148] sm:$0xff]
  %v70 = vld [vmem:[%s1 + $0x150] sm:$0xff]
  %v71 = vld [vmem:[%s1 + $0x158] sm:$0xff]
  %v72 = vld [vmem:[%s1 + $0x160] sm:$0xff]
  %v73 = vld [vmem:[%s1 + $0x168] sm:$0xff]
  %v74 = vld [vmem:[%s1 + $0x170] sm:$0xff]
  %v75 = vld [vmem:[%s1 + $0x178] sm:$0xff]
  %v76 = vld [vmem:[%s1 + $0x180] sm:$0xff]
  %v77 = vld [vmem:[%s1 + $0x188] sm:$0xff]
  %v78 = vld [vmem:[%s1 + $0x190] sm:$0xff]
  %v79 = vld [vmem:[%s1 + $0x198] sm:$0xff]
  %v80 = vld [vmem:[%s1 + $0x1a0] sm:$0xff]
  %v81 = vld [vmem:[%s1 + $0x1a8] sm:$0xff]
  %v82 = vld [vmem:[%s1 + $0x1b0] sm:$0xff]
  %v83 = vld [vmem:[%s1 + $0x1b8] sm:$0xff]
  %v84 = vld [vmem:[%s1 + $0x1c0] sm:$0xff]
  %v85 = vld [vmem:[%s1 + $0x1c8] sm:$0xff]
  %v86 = vld [vmem:[%s1 + $0x1d0] sm:$0xff]
  %v87 = vld [vmem:[%s1 + $0x1d8] sm:$0xff]
  %v88 = vld [vmem:[%s1 + $0x1e0] sm:$0xff]
  %v89 = vld [vmem:[%s1 + $0x1e8] sm:$0xff]
  %v90 = vld [vmem:[%s1 + $0x1f0] sm:$0xff]
  %v91 = vld [vmem:[%s1 + $0x1f8] sm:$0xff]
  %v92 = vld [vmem:[%s1 + $0x200] sm:$0xff]
  %v93 = vld [vmem:[%s1 + $0x208] sm:$0xff]
  %v94 = vld [vmem:[%s1 + $0x210] sm:$0xff]
  %v95 = vld [vmem:[%s1 + $0x218] sm:$0xff]
  %v96 = vld [vmem:[%s1 + $0x220] sm:$0xff]
  %v97 = vld [vmem:[%s1 + $0x228] sm:$0xff]
  %v98 = vld [vmem:[%s1 + $0x230] sm:$0xff]
  %v99 = vld [vmem:[%s1 + $0x238] sm:$0xff]
  %v100 = vld [vmem:[%s1 + $0x240] sm:$0xff]
  %v101 = vld [vmem:[%s1 + $0x248] sm:$0xff]
  %v102 = vld [vmem:[%s1 + $0x250] sm:$0xff]
  %v103 = vld [vmem:[%s1 + $0x258] sm:$0xff]
  %v104 = vld [vmem:[%s1 + $0x260] sm:$0xff]
  %v105 = vld [vmem:[%s1 + $0x268] sm:$0xff]
  %v106 = vld [vmem:[%s1 + $0x270] sm:$0xff]
  %v107 = vld [vmem:[%s1 + $0x278] sm:$0xff]
  %v108 = vld [vmem:[%s1 + $0x280] sm:$0xff]
  %v109 = vld [vmem:[%s1 + $0x288] sm:$0xff]
  %v110 = vld [vmem:[%s1 + $0x290] sm:$0xff]
  %v111 = vld [vmem:[%s1 + $0x298] sm:$0xff]
  %v112 = vld [vmem:[%s1 + $0x2a0] sm:$0xff]
  %v113 = vld [vmem:[%s1 + $0x2a8] sm:$0xff]
  %v114 = vld [vmem:[%s1 + $0x2b0] sm:$0xff]
  %v115 = vld [vmem:[%s1 + $0x2b8] sm:$0xff]
  %v116 = vld [vmem:[%s1 + $0x2c0] sm:$0xff]
  %v117 = vld [vmem:[%s1 + $0x2c8] sm:$0xff]
  %v118 = vld [vmem:[%s1 + $0x2d0] sm:$0xff]
  %v119 = vld [vmem:[%s1 + $0x2d8] sm:$0xff]
  %v120 = vld [vmem:[%s1 + $0x2e0] sm:$0xff]
  %v121 = vld [vmem:[%s1 + $0x2e8] sm:$0xff]
  %v122 = vld [vmem:[%s1 + $0x2f0] sm:$0xff]
  %v123 = vld [vmem:[%s1 + $0x2f8] sm:$0xff]
  %v124 = vld [vmem:[%s1 + $0x300] sm:$0xff]
  %v125 = vld [vmem:[%s1 + $0x308] sm:$0xff]
  %v126 = vld [vmem:[%s1 + $0x310] sm:$0xff]
  %v127 = vld [vmem:[%s1 + $0x318] sm:$0xff]
  %v128 = vld [vmem:[%s1 + $0x320] sm:$0xff]
  %v129 = vld [vmem:[%s1 + $0x328] sm:$0xff]
  %v130 = vld [vmem:[%s1 + $0x330] sm:$0xff]
  %v131 = vld [vmem:[%s1 + $0x338] sm:$0xff]
  %v132 = vld [vmem:[%s1 + $0x340] sm:$0xff]
  %v133 = vld [vmem:[%s1 + $0x348] sm:$0xff]
  %v134 = vld [vmem:[%s1 + $0x350] sm:$0xff]
  %v135 = vld [vmem:[%s1 + $0x358] sm:$0xff]
  %v136 = vld [vmem:[%s1 + $0x360] sm:$0xff]
  %v137 = vld [vmem:[%s1 + $0x368] sm:$0xff]
  %v138 = vld [vmem:[%s1 + $0x370] sm:$0xff]
  %v139 = vld [vmem:[%s1 + $0x378] sm:$0xff]
  %v140 = vld [vmem:[%s1 + $0x380] sm:$0xff]
  %v141 = vld [vmem:[%s1 + $0x388] sm:$0xff]
  %v142 = vld [vmem:[%s1 + $0x390] sm:$0xff]
  %v143 = vld [vmem:[%s1 + $0x398] sm:$0xff]
  %v144 = vld [vmem:[%s1 + $0x3a0] sm:$0xff]
  %v145 = vld [vmem:[%s1 + $0x3a8] sm:$0xff]
  %v146 = vld [vmem:[%s1 + $0x3b0] sm:$0xff]
  %v147 = vld [vmem:[%s1 + $0x3b8] sm:$0xff]
  %v148 = vld [vmem:[%s1 + $0x3c0] sm:$0xff]
  %v149 = vld [vmem:[%s1 + $0x3c8] sm:$0xff]
  %v150 = vld [vmem:[%s1 + $0x3d0] sm:$0xff]
  %v151 = vld [vmem:[%s1 + $0x3d8] sm:$0xff]
  %v152 = vld [vmem:[%s1 + $0x3e0] sm:$0xff]
  %v153 = vld [vmem:[%s1 + $0x3e8] sm:$0xff]
  %v154 = vld [vmem:[%s1 + $0x3f0] sm:$0xff]
  %v155 = vld [vmem:[%s1 + $0x3f8] sm:$0xff]
  %v156 = vld [vmem:[%s2] sm:$0xff]
  %v158 = vlaneseq
  %v159 = vshrl.u32 %v158, 7
  %v160 = vsub.s32 0, %v159
  %v161 = vrot.slane %v156, %v160
  %v162 = vlaneseq
  %v163 = vshrl.u32 %v162, 7
  %v164 = vsub.s32 1, %v163
  %v165 = vrot.slane %v156, %v164
  %v166 = vlaneseq
  %v167 = vshrl.u32 %v166, 7
  %v168 = vsub.s32 2, %v167
  %v169 = vrot.slane %v156, %v168
  %v170 = vlaneseq
  %v171 = vshrl.u32 %v170, 7
  %v172 = vsub.s32 3, %v171
  %v173 = vrot.slane %v156, %v172
  %v174 = vlaneseq
  %v175 = vshrl.u32 %v174, 7
  %v176 = vsub.s32 4, %v175
  %v177 = vrot.slane %v156, %v176
  %v178 = vlaneseq
  %v179 = vshrl.u32 %v178, 7
  %v180 = vsub.s32 5, %v179
  %v181 = vrot.slane %v156, %v180
  %v182 = vlaneseq
  %v183 = vshrl.u32 %v182, 7
  %v184 = vsub.s32 6, %v183
  %v185 = vrot.slane %v156, %v184
  %v186 = vlaneseq
  %v187 = vshrl.u32 %v186, 7
  %v188 = vsub.s32 7, %v187
  %v189 = vrot.slane %v156, %v188
  %v200 = vunpack.c.l.b16 %v26
  %v201 = vunpack.c.h.b16 %v26
  %v202 = vunpack.c.l.b16 %v27
  %v203 = vunpack.c.h.b16 %v27
  %v204 = vpack.c.b16 %v202, %v200
  %v205 = vpack.c.b16 %v203, %v201
  %v336 = vunpack.c.l.b16 %v28
  %v337 = vunpack.c.h.b16 %v28
  %v338 = vunpack.c.l.b16 %v29
  %v339 = vunpack.c.h.b16 %v29
  %v340 = vunpack.c.l.b16 %v30
  %v341 = vunpack.c.h.b16 %v30
  %v342 = vunpack.c.l.b16 %v31
  %v343 = vunpack.c.h.b16 %v31
  %v344 = vunpack.c.l.b16 %v32
  %v345 = vunpack.c.h.b16 %v32
  %v346 = vunpack.c.l.b16 %v33
  %v347 = vunpack.c.h.b16 %v33
  %v348 = vunpack.c.l.b16 %v34
  %v349 = vunpack.c.h.b16 %v34
  %v350 = vunpack.c.l.b16 %v35
  %v351 = vunpack.c.h.b16 %v35
  %v352 = vunpack.c.l.b16 %v36
  %v353 = vunpack.c.h.b16 %v36
  %v354 = vunpack.c.l.b16 %v37
  %v355 = vunpack.c.h.b16 %v37
  %v356 = vunpack.c.l.b16 %v38
  %v357 = vunpack.c.h.b16 %v38
  %v358 = vunpack.c.l.b16 %v39
  %v359 = vunpack.c.h.b16 %v39
  %v360 = vunpack.c.l.b16 %v40
  %v361 = vunpack.c.h.b16 %v40
  %v362 = vunpack.c.l.b16 %v41
  %v363 = vunpack.c.h.b16 %v41
  %v364 = vunpack.c.l.b16 %v42
  %v365 = vunpack.c.h.b16 %v42
  %v366 = vunpack.c.l.b16 %v43
  %v367 = vunpack.c.h.b16 %v43
  %v368 = vunpack.c.l.b16 %v44
  %v369 = vunpack.c.h.b16 %v44
  %v370 = vunpack.c.l.b16 %v45
  %v371 = vunpack.c.h.b16 %v45
  %v372 = vunpack.c.l.b16 %v46
  %v373 = vunpack.c.h.b16 %v46
  %v374 = vunpack.c.l.b16 %v47
  %v375 = vunpack.c.h.b16 %v47
  %v376 = vunpack.c.l.b16 %v48
  %v377 = vunpack.c.h.b16 %v48
  %v378 = vunpack.c.l.b16 %v49
  %v379 = vunpack.c.h.b16 %v49
  %v380 = vunpack.c.l.b16 %v50
  %v381 = vunpack.c.h.b16 %v50
  %v382 = vunpack.c.l.b16 %v51
  %v383 = vunpack.c.h.b16 %v51
  %v384 = vunpack.c.l.b16 %v52
  %v385 = vunpack.c.h.b16 %v52
  %v386 = vunpack.c.l.b16 %v53
  %v387 = vunpack.c.h.b16 %v53
  %v388 = vunpack.c.l.b16 %v54
  %v389 = vunpack.c.h.b16 %v54
  %v390 = vunpack.c.l.b16 %v55
  %v391 = vunpack.c.h.b16 %v55
  %v392 = vunpack.c.l.b16 %v56
  %v393 = vunpack.c.h.b16 %v56
  %v394 = vunpack.c.l.b16 %v57
  %v395 = vunpack.c.h.b16 %v57
  %v396 = vunpack.c.l.b16 %v58
  %v397 = vunpack.c.h.b16 %v58
  %v398 = vunpack.c.l.b16 %v59
  %v399 = vunpack.c.h.b16 %v59
  %v400 = vunpack.c.l.b16 %v60
  %v401 = vunpack.c.h.b16 %v60
  %v402 = vunpack.c.l.b16 %v61
  %v403 = vunpack.c.h.b16 %v61
  %v404 = vunpack.c.l.b16 %v62
  %v405 = vunpack.c.h.b16 %v62
  %v406 = vunpack.c.l.b16 %v63
  %v407 = vunpack.c.h.b16 %v63
  %v408 = vunpack.c.l.b16 %v64
  %v409 = vunpack.c.h.b16 %v64
  %v410 = vunpack.c.l.b16 %v65
  %v411 = vunpack.c.h.b16 %v65
  %v412 = vunpack.c.l.b16 %v66
  %v413 = vunpack.c.h.b16 %v66
  %v414 = vunpack.c.l.b16 %v67
  %v415 = vunpack.c.h.b16 %v67
  %v416 = vunpack.c.l.b16 %v68
  %v417 = vunpack.c.h.b16 %v68
  %v418 = vunpack.c.l.b16 %v69
  %v419 = vunpack.c.h.b16 %v69
  %v420 = vunpack.c.l.b16 %v70
  %v421 = vunpack.c.h.b16 %v70
  %v422 = vunpack.c.l.b16 %v71
  %v423 = vunpack.c.h.b16 %v71
  %v424 = vunpack.c.l.b16 %v72
  %v425 = vunpack.c.h.b16 %v72
  %v426 = vunpack.c.l.b16 %v73
  %v427 = vunpack.c.h.b16 %v73
  %v428 = vunpack.c.l.b16 %v74
  %v429 = vunpack.c.h.b16 %v74
  %v430 = vunpack.c.l.b16 %v75
  %v431 = vunpack.c.h.b16 %v75
  %v432 = vunpack.c.l.b16 %v76
  %v433 = vunpack.c.h.b16 %v76
  %v434 = vunpack.c.l.b16 %v77
  %v435 = vunpack.c.h.b16 %v77
  %v436 = vunpack.c.l.b16 %v78
  %v437 = vunpack.c.h.b16 %v78
  %v438 = vunpack.c.l.b16 %v79
  %v439 = vunpack.c.h.b16 %v79
  %v440 = vunpack.c.l.b16 %v80
  %v441 = vunpack.c.h.b16 %v80
  %v442 = vunpack.c.l.b16 %v81
  %v443 = vunpack.c.h.b16 %v81
  %v444 = vunpack.c.l.b16 %v82
  %v445 = vunpack.c.h.b16 %v82
  %v446 = vunpack.c.l.b16 %v83
  %v447 = vunpack.c.h.b16 %v83
  %v448 = vunpack.c.l.b16 %v84
  %v449 = vunpack.c.h.b16 %v84
  %v450 = vunpack.c.l.b16 %v85
  %v451 = vunpack.c.h.b16 %v85
  %v452 = vunpack.c.l.b16 %v86
  %v453 = vunpack.c.h.b16 %v86
  %v454 = vunpack.c.l.b16 %v87
  %v455 = vunpack.c.h.b16 %v87
  %v456 = vunpack.c.l.b16 %v88
  %v457 = vunpack.c.h.b16 %v88
  %v458 = vunpack.c.l.b16 %v89
  %v459 = vunpack.c.h.b16 %v89
  %v460 = vunpack.c.l.b16 %v90
  %v461 = vunpack.c.h.b16 %v90
  %v462 = vunpack.c.l.b16 %v91
  %v463 = vunpack.c.h.b16 %v91
  %v464 = vunpack.c.l.b16 %v92
  %v465 = vunpack.c.h.b16 %v92
  %v466 = vunpack.c.l.b16 %v93
  %v467 = vunpack.c.h.b16 %v93
  %v468 = vunpack.c.l.b16 %v94
  %v469 = vunpack.c.h.b16 %v94
  %v470 = vunpack.c.l.b16 %v95
  %v471 = vunpack.c.h.b16 %v95
  %v472 = vunpack.c.l.b16 %v96
  %v473 = vunpack.c.h.b16 %v96
  %v474 = vunpack.c.l.b16 %v97
  %v475 = vunpack.c.h.b16 %v97
  %v476 = vunpack.c.l.b16 %v98
  %v477 = vunpack.c.h.b16 %v98
  %v478 = vunpack.c.l.b16 %v99
  %v479 = vunpack.c.h.b16 %v99
  %v480 = vunpack.c.l.b16 %v100
  %v481 = vunpack.c.h.b16 %v100
  %v482 = vunpack.c.l.b16 %v101
  %v483 = vunpack.c.h.b16 %v101
  %v484 = vunpack.c.l.b16 %v102
  %v485 = vunpack.c.h.b16 %v102
  %v486 = vunpack.c.l.b16 %v103
  %v487 = vunpack.c.h.b16 %v103
  %v488 = vunpack.c.l.b16 %v104
  %v489 = vunpack.c.h.b16 %v104
  %v490 = vunpack.c.l.b16 %v105
  %v491 = vunpack.c.h.b16 %v105
  %v492 = vunpack.c.l.b16 %v106
  %v493 = vunpack.c.h.b16 %v106
  %v494 = vunpack.c.l.b16 %v107
  %v495 = vunpack.c.h.b16 %v107
  %v496 = vunpack.c.l.b16 %v108
  %v497 = vunpack.c.h.b16 %v108
  %v498 = vunpack.c.l.b16 %v109
  %v499 = vunpack.c.h.b16 %v109
  %v500 = vunpack.c.l.b16 %v110
  %v501 = vunpack.c.h.b16 %v110
  %v502 = vunpack.c.l.b16 %v111
  %v503 = vunpack.c.h.b16 %v111
  %v504 = vunpack.c.l.b16 %v112
  %v505 = vunpack.c.h.b16 %v112
  %v506 = vunpack.c.l.b16 %v113
  %v507 = vunpack.c.h.b16 %v113
  %v508 = vunpack.c.l.b16 %v114
  %v509 = vunpack.c.h.b16 %v114
  %v510 = vunpack.c.l.b16 %v115
  %v511 = vunpack.c.h.b16 %v115
  %v512 = vunpack.c.l.b16 %v116
  %v513 = vunpack.c.h.b16 %v116
  %v514 = vunpack.c.l.b16 %v117
  %v515 = vunpack.c.h.b16 %v117
  %v516 = vunpack.c.l.b16 %v118
  %v517 = vunpack.c.h.b16 %v118
  %v518 = vunpack.c.l.b16 %v119
  %v519 = vunpack.c.h.b16 %v119
  %v520 = vunpack.c.l.b16 %v120
  %v521 = vunpack.c.h.b16 %v120
  %v522 = vunpack.c.l.b16 %v121
  %v523 = vunpack.c.h.b16 %v121
  %v524 = vunpack.c.l.b16 %v122
  %v525 = vunpack.c.h.b16 %v122
  %v526 = vunpack.c.l.b16 %v123
  %v527 = vunpack.c.h.b16 %v123
  %v528 = vunpack.c.l.b16 %v124
  %v529 = vunpack.c.h.b16 %v124
  %v530 = vunpack.c.l.b16 %v125
  %v531 = vunpack.c.h.b16 %v125
  %v532 = vunpack.c.l.b16 %v126
  %v533 = vunpack.c.h.b16 %v126
  %v534 = vunpack.c.l.b16 %v127
  %v535 = vunpack.c.h.b16 %v127
  %v536 = vunpack.c.l.b16 %v128
  %v537 = vunpack.c.h.b16 %v128
  %v538 = vunpack.c.l.b16 %v129
  %v539 = vunpack.c.h.b16 %v129
  %v540 = vunpack.c.l.b16 %v130
  %v541 = vunpack.c.h.b16 %v130
  %v542 = vunpack.c.l.b16 %v131
  %v543 = vunpack.c.h.b16 %v131
  %v544 = vunpack.c.l.b16 %v132
  %v545 = vunpack.c.h.b16 %v132
  %v546 = vunpack.c.l.b16 %v133
  %v547 = vunpack.c.h.b16 %v133
  %v548 = vunpack.c.l.b16 %v134
  %v549 = vunpack.c.h.b16 %v134
  %v550 = vunpack.c.l.b16 %v135
  %v551 = vunpack.c.h.b16 %v135
  %v552 = vunpack.c.l.b16 %v136
  %v553 = vunpack.c.h.b16 %v136
  %v554 = vunpack.c.l.b16 %v137
  %v555 = vunpack.c.h.b16 %v137
  %v556 = vunpack.c.l.b16 %v138
  %v557 = vunpack.c.h.b16 %v138
  %v558 = vunpack.c.l.b16 %v139
  %v559 = vunpack.c.h.b16 %v139
  %v560 = vunpack.c.l.b16 %v140
  %v561 = vunpack.c.h.b16 %v140
  %v562 = vunpack.c.l.b16 %v141
  %v563 = vunpack.c.h.b16 %v141
  %v564 = vunpack.c.l.b16 %v142
  %v565 = vunpack.c.h.b16 %v142
  %v566 = vunpack.c.l.b16 %v143
  %v567 = vunpack.c.h.b16 %v143
  %v568 = vunpack.c.l.b16 %v144
  %v569 = vunpack.c.h.b16 %v144
  %v570 = vunpack.c.l.b16 %v145
  %v571 = vunpack.c.h.b16 %v145
  %v572 = vunpack.c.l.b16 %v146
  %v573 = vunpack.c.h.b16 %v146
  %v574 = vunpack.c.l.b16 %v147
  %v575 = vunpack.c.h.b16 %v147
  %v576 = vunpack.c.l.b16 %v148
  %v577 = vunpack.c.h.b16 %v148
  %v578 = vunpack.c.l.b16 %v149
  %v579 = vunpack.c.h.b16 %v149
  %v580 = vunpack.c.l.b16 %v150
  %v581 = vunpack.c.h.b16 %v150
  %v582 = vunpack.c.l.b16 %v151
  %v583 = vunpack.c.h.b16 %v151
  %v584 = vunpack.c.l.b16 %v152
  %v585 = vunpack.c.h.b16 %v152
  %v586 = vunpack.c.l.b16 %v153
  %v587 = vunpack.c.h.b16 %v153
  %v588 = vunpack.c.l.b16 %v154
  %v589 = vunpack.c.h.b16 %v154
  %v590 = vunpack.c.l.b16 %v155
  %v591 = vunpack.c.h.b16 %v155
  %v592 = vpack.c.b16 %v344, %v336
  %v593 = vpack.c.b16 %v345, %v337
  %v594 = vpack.c.b16 %v346, %v338
  %v595 = vpack.c.b16 %v347, %v339
  %v596 = vpack.c.b16 %v348, %v340
  %v597 = vpack.c.b16 %v349, %v341
  %v598 = vpack.c.b16 %v350, %v342
  %v599 = vpack.c.b16 %v351, %v343
  %v600 = vpack.c.b16 %v360, %v352
  %v601 = vpack.c.b16 %v361, %v353
  %v602 = vpack.c.b16 %v362, %v354
  %v603 = vpack.c.b16 %v363, %v355
  %v604 = vpack.c.b16 %v364, %v356
  %v605 = vpack.c.b16 %v365, %v357
  %v606 = vpack.c.b16 %v366, %v358
  %v607 = vpack.c.b16 %v367, %v359
  %v608 = vpack.c.b16 %v376, %v368
  %v609 = vpack.c.b16 %v377, %v369
  %v610 = vpack.c.b16 %v378, %v370
  %v611 = vpack.c.b16 %v379, %v371
  %v612 = vpack.c.b16 %v380, %v372
  %v613 = vpack.c.b16 %v381, %v373
  %v614 = vpack.c.b16 %v382, %v374
  %v615 = vpack.c.b16 %v383, %v375
  %v616 = vpack.c.b16 %v392, %v384
  %v617 = vpack.c.b16 %v393, %v385
  %v618 = vpack.c.b16 %v394, %v386
  %v619 = vpack.c.b16 %v395, %v387
  %v620 = vpack.c.b16 %v396, %v388
  %v621 = vpack.c.b16 %v397, %v389
  %v622 = vpack.c.b16 %v398, %v390
  %v623 = vpack.c.b16 %v399, %v391
  %v624 = vpack.c.b16 %v408, %v400
  %v625 = vpack.c.b16 %v409, %v401
  %v626 = vpack.c.b16 %v410, %v402
  %v627 = vpack.c.b16 %v411, %v403
  %v628 = vpack.c.b16 %v412, %v404
  %v629 = vpack.c.b16 %v413, %v405
  %v630 = vpack.c.b16 %v414, %v406
  %v631 = vpack.c.b16 %v415, %v407
  %v632 = vpack.c.b16 %v424, %v416
  %v633 = vpack.c.b16 %v425, %v417
  %v634 = vpack.c.b16 %v426, %v418
  %v635 = vpack.c.b16 %v427, %v419
  %v636 = vpack.c.b16 %v428, %v420
  %v637 = vpack.c.b16 %v429, %v421
  %v638 = vpack.c.b16 %v430, %v422
  %v639 = vpack.c.b16 %v431, %v423
  %v640 = vpack.c.b16 %v440, %v432
  %v641 = vpack.c.b16 %v441, %v433
  %v642 = vpack.c.b16 %v442, %v434
  %v643 = vpack.c.b16 %v443, %v435
  %v644 = vpack.c.b16 %v444, %v436
  %v645 = vpack.c.b16 %v445, %v437
  %v646 = vpack.c.b16 %v446, %v438
  %v647 = vpack.c.b16 %v447, %v439
  %v648 = vpack.c.b16 %v456, %v448
  %v649 = vpack.c.b16 %v457, %v449
  %v650 = vpack.c.b16 %v458, %v450
  %v651 = vpack.c.b16 %v459, %v451
  %v652 = vpack.c.b16 %v460, %v452
  %v653 = vpack.c.b16 %v461, %v453
  %v654 = vpack.c.b16 %v462, %v454
  %v655 = vpack.c.b16 %v463, %v455
  %v656 = vpack.c.b16 %v472, %v464
  %v657 = vpack.c.b16 %v473, %v465
  %v658 = vpack.c.b16 %v474, %v466
  %v659 = vpack.c.b16 %v475, %v467
  %v660 = vpack.c.b16 %v476, %v468
  %v661 = vpack.c.b16 %v477, %v469
  %v662 = vpack.c.b16 %v478, %v470
  %v663 = vpack.c.b16 %v479, %v471
  %v664 = vpack.c.b16 %v488, %v480
  %v665 = vpack.c.b16 %v489, %v481
  %v666 = vpack.c.b16 %v490, %v482
  %v667 = vpack.c.b16 %v491, %v483
  %v668 = vpack.c.b16 %v492, %v484
  %v669 = vpack.c.b16 %v493, %v485
  %v670 = vpack.c.b16 %v494, %v486
  %v671 = vpack.c.b16 %v495, %v487
  %v672 = vpack.c.b16 %v504, %v496
  %v673 = vpack.c.b16 %v505, %v497
  %v674 = vpack.c.b16 %v506, %v498
  %v675 = vpack.c.b16 %v507, %v499
  %v676 = vpack.c.b16 %v508, %v500
  %v677 = vpack.c.b16 %v509, %v501
  %v678 = vpack.c.b16 %v510, %v502
  %v679 = vpack.c.b16 %v511, %v503
  %v680 = vpack.c.b16 %v520, %v512
  %v681 = vpack.c.b16 %v521, %v513
  %v682 = vpack.c.b16 %v522, %v514
  %v683 = vpack.c.b16 %v523, %v515
  %v684 = vpack.c.b16 %v524, %v516
  %v685 = vpack.c.b16 %v525, %v517
  %v686 = vpack.c.b16 %v526, %v518
  %v687 = vpack.c.b16 %v527, %v519
  %v688 = vpack.c.b16 %v536, %v528
  %v689 = vpack.c.b16 %v537, %v529
  %v690 = vpack.c.b16 %v538, %v530
  %v691 = vpack.c.b16 %v539, %v531
  %v692 = vpack.c.b16 %v540, %v532
  %v693 = vpack.c.b16 %v541, %v533
  %v694 = vpack.c.b16 %v542, %v534
  %v695 = vpack.c.b16 %v543, %v535
  %v696 = vpack.c.b16 %v552, %v544
  %v697 = vpack.c.b16 %v553, %v545
  %v698 = vpack.c.b16 %v554, %v546
  %v699 = vpack.c.b16 %v555, %v547
  %v700 = vpack.c.b16 %v556, %v548
  %v701 = vpack.c.b16 %v557, %v549
  %v702 = vpack.c.b16 %v558, %v550
  %v703 = vpack.c.b16 %v559, %v551
  %v704 = vpack.c.b16 %v568, %v560
  %v705 = vpack.c.b16 %v569, %v561
  %v706 = vpack.c.b16 %v570, %v562
  %v707 = vpack.c.b16 %v571, %v563
  %v708 = vpack.c.b16 %v572, %v564
  %v709 = vpack.c.b16 %v573, %v565
  %v710 = vpack.c.b16 %v574, %v566
  %v711 = vpack.c.b16 %v575, %v567
  %v712 = vpack.c.b16 %v584, %v576
  %v713 = vpack.c.b16 %v585, %v577
  %v714 = vpack.c.b16 %v586, %v578
  %v715 = vpack.c.b16 %v587, %v579
  %v716 = vpack.c.b16 %v588, %v580
  %v717 = vpack.c.b16 %v589, %v581
  %v718 = vpack.c.b16 %v590, %v582
  %v719 = vpack.c.b16 %v591, %v583
  %848 = vmatprep.subr.bf16.mxu0 %v593
  %849 = vmatpush1.bf16.msra.mxu0 %v592
  %850 = vmatprep.subr.bf16.mxu0 %v601
  %851 = vmatpush1.bf16.msra.mxu0 %v600
  %852 = vmatprep.subr.bf16.mxu0 %v609
  %853 = vmatpush1.bf16.msra.mxu0 %v608
  %854 = vmatprep.subr.bf16.mxu0 %v617
  %855 = vmatpush1.bf16.msra.mxu0 %v616
  %856 = vmatprep.subr.bf16.mxu0 %v625
  %857 = vmatpush1.bf16.msra.mxu0 %v624
  %858 = vmatprep.subr.bf16.mxu0 %v633
  %859 = vmatpush1.bf16.msra.mxu0 %v632
  %860 = vmatprep.subr.bf16.mxu0 %v641
  %861 = vmatpush1.bf16.msra.mxu0 %v640
  %862 = vmatprep.subr.bf16.mxu0 %v649
  %863 = vmatpush1.bf16.msra.mxu0 %v648
  %864 = vmatprep.subr.bf16.mxu0 %v657
  %865 = vmatpush1.bf16.msra.mxu0 %v656
  %866 = vmatprep.subr.bf16.mxu0 %v665
  %867 = vmatpush1.bf16.msra.mxu0 %v664
  %868 = vmatprep.subr.bf16.mxu0 %v673
  %869 = vmatpush1.bf16.msra.mxu0 %v672
  %870 = vmatprep.subr.bf16.mxu0 %v681
  %871 = vmatpush1.bf16.msra.mxu0 %v680
  %872 = vmatprep.subr.bf16.mxu0 %v689
  %873 = vmatpush1.bf16.msra.mxu0 %v688
  %874 = vmatprep.subr.bf16.mxu0 %v697
  %875 = vmatpush1.bf16.msra.mxu0 %v696
  %876 = vmatprep.subr.bf16.mxu0 %v705
  %877 = vmatpush1.bf16.msra.mxu0 %v704
  %878 = vmatprep.subr.bf16.mxu0 %v713
  %879 = vmatpush1.bf16.msra.mxu0 %v712
  %880 = vmatprep.mubr.bf16.mxu0 %v205
  %881 = vmatmul.mubr.bf16.gmra.mrb[0].mxu0 %v204
  %v882 = vpop.f32.mrb[0].mxu0
  %v883 = vadd.f32 %v161, %v882
  %v884 = vpop.f32.mrb[0].mxu0
  %v885 = vadd.f32 %v165, %v884
  %v886 = vpop.f32.mrb[0].mxu0
  %v887 = vadd.f32 %v161, %v886
  %v888 = vpop.f32.mrb[0].mxu0
  %v889 = vadd.f32 %v165, %v888
  %890 = vdwg.mxu0
  %891 = vmatprep.subr.bf16.mxu0 %v595
  %892 = vmatpush1.bf16.msra.mxu0 %v594
  %893 = vmatprep.subr.bf16.mxu0 %v603
  %894 = vmatpush1.bf16.msra.mxu0 %v602
  %895 = vmatprep.subr.bf16.mxu0 %v611
  %896 = vmatpush1.bf16.msra.mxu0 %v610
  %897 = vmatprep.subr.bf16.mxu0 %v619
  %898 = vmatpush1.bf16.msra.mxu0 %v618
  %899 = vmatprep.subr.bf16.mxu0 %v627
  %900 = vmatpush1.bf16.msra.mxu0 %v626
  %901 = vmatprep.subr.bf16.mxu0 %v635
  %902 = vmatpush1.bf16.msra.mxu0 %v634
  %903 = vmatprep.subr.bf16.mxu0 %v643
  %904 = vmatpush1.bf16.msra.mxu0 %v642
  %905 = vmatprep.subr.bf16.mxu0 %v651
  %906 = vmatpush1.bf16.msra.mxu0 %v650
  %907 = vmatprep.subr.bf16.mxu0 %v659
  %908 = vmatpush1.bf16.msra.mxu0 %v658
  %909 = vmatprep.subr.bf16.mxu0 %v667
  %910 = vmatpush1.bf16.msra.mxu0 %v666
  %911 = vmatprep.subr.bf16.mxu0 %v675
  %912 = vmatpush1.bf16.msra.mxu0 %v674
  %913 = vmatprep.subr.bf16.mxu0 %v683
  %914 = vmatpush1.bf16.msra.mxu0 %v682
  %915 = vmatprep.subr.bf16.mxu0 %v691
  %916 = vmatpush1.bf16.msra.mxu0 %v690
  %917 = vmatprep.subr.bf16.mxu0 %v699
  %918 = vmatpush1.bf16.msra.mxu0 %v698
  %919 = vmatprep.subr.bf16.mxu0 %v707
  %920 = vmatpush1.bf16.msra.mxu0 %v706
  %921 = vmatprep.subr.bf16.mxu0 %v715
  %922 = vmatpush1.bf16.msra.mxu0 %v714
  %923 = vmatprep.mubr.bf16.mxu0 %v205
  %924 = vmatmul.mubr.bf16.gmra.mrb[0].mxu0 %v204
  %v925 = vpop.f32.mrb[0].mxu0
  %v926 = vadd.f32 %v169, %v925
  %v927 = vpop.f32.mrb[0].mxu0
  %v928 = vadd.f32 %v173, %v927
  %v929 = vpop.f32.mrb[0].mxu0
  %v930 = vadd.f32 %v169, %v929
  %v931 = vpop.f32.mrb[0].mxu0
  %v932 = vadd.f32 %v173, %v931
  %933 = vdwg.mxu0
  %934 = vmatprep.subr.bf16.mxu0 %v597
  %935 = vmatpush1.bf16.msra.mxu0 %v596
  %936 = vmatprep.subr.bf16.mxu0 %v605
  %937 = vmatpush1.bf16.msra.mxu0 %v604
  %938 = vmatprep.subr.bf16.mxu0 %v613
  %939 = vmatpush1.bf16.msra.mxu0 %v612
  %940 = vmatprep.subr.bf16.mxu0 %v621
  %941 = vmatpush1.bf16.msra.mxu0 %v620
  %942 = vmatprep.subr.bf16.mxu0 %v629
  %943 = vmatpush1.bf16.msra.mxu0 %v628
  %944 = vmatprep.subr.bf16.mxu0 %v637
  %945 = vmatpush1.bf16.msra.mxu0 %v636
  %946 = vmatprep.subr.bf16.mxu0 %v645
  %947 = vmatpush1.bf16.msra.mxu0 %v644
  %948 = vmatprep.subr.bf16.mxu0 %v653
  %949 = vmatpush1.bf16.msra.mxu0 %v652
  %950 = vmatprep.subr.bf16.mxu0 %v661
  %951 = vmatpush1.bf16.msra.mxu0 %v660
  %952 = vmatprep.subr.bf16.mxu0 %v669
  %953 = vmatpush1.bf16.msra.mxu0 %v668
  %954 = vmatprep.subr.bf16.mxu0 %v677
  %955 = vmatpush1.bf16.msra.mxu0 %v676
  %956 = vmatprep.subr.bf16.mxu0 %v685
  %957 = vmatpush1.bf16.msra.mxu0 %v684
  %958 = vmatprep.subr.bf16.mxu0 %v693
  %959 = vmatpush1.bf16.msra.mxu0 %v692
  %960 = vmatprep.subr.bf16.mxu0 %v701
  %961 = vmatpush1.bf16.msra.mxu0 %v700
  %962 = vmatprep.subr.bf16.mxu0 %v709
  %963 = vmatpush1.bf16.msra.mxu0 %v708
  %964 = vmatprep.subr.bf16.mxu0 %v717
  %965 = vmatpush1.bf16.msra.mxu0 %v716
  %966 = vmatprep.mubr.bf16.mxu0 %v205
  %967 = vmatmul.mubr.bf16.gmra.mrb[0].mxu0 %v204
  %v968 = vpop.f32.mrb[0].mxu0
  %v969 = vadd.f32 %v177, %v968
  %v970 = vpop.f32.mrb[0].mxu0
  %v971 = vadd.f32 %v181, %v970
  %v972 = vpop.f32.mrb[0].mxu0
  %v973 = vadd.f32 %v177, %v972
  %v974 = vpop.f32.mrb[0].mxu0
  %v975 = vadd.f32 %v181, %v974
  %976 = vdwg.mxu0
  %977 = vmatprep.subr.bf16.mxu0 %v599
  %978 = vmatpush1.bf16.msra.mxu0 %v598
  %979 = vmatprep.subr.bf16.mxu0 %v607
  %980 = vmatpush1.bf16.msra.mxu0 %v606
  %981 = vmatprep.subr.bf16.mxu0 %v615
  %982 = vmatpush1.bf16.msra.mxu0 %v614
  %983 = vmatprep.subr.bf16.mxu0 %v623
  %984 = vmatpush1.bf16.msra.mxu0 %v622
  %985 = vmatprep.subr.bf16.mxu0 %v631
  %986 = vmatpush1.bf16.msra.mxu0 %v630
  %987 = vmatprep.subr.bf16.mxu0 %v639
  %988 = vmatpush1.bf16.msra.mxu0 %v638
  %989 = vmatprep.subr.bf16.mxu0 %v647
  %990 = vmatpush1.bf16.msra.mxu0 %v646
  %991 = vmatprep.subr.bf16.mxu0 %v655
  %992 = vmatpush1.bf16.msra.mxu0 %v654
  %993 = vmatprep.subr.bf16.mxu0 %v663
  %994 = vmatpush1.bf16.msra.mxu0 %v662
  %995 = vmatprep.subr.bf16.mxu0 %v671
  %996 = vmatpush1.bf16.msra.mxu0 %v670
  %997 = vmatprep.subr.bf16.mxu0 %v679
  %998 = vmatpush1.bf16.msra.mxu0 %v678
  %999 = vmatprep.subr.bf16.mxu0 %v687
  %1000 = vmatpush1.bf16.msra.mxu0 %v686
  %1001 = vmatprep.subr.bf16.mxu0 %v695
  %1002 = vmatpush1.bf16.msra.mxu0 %v694
  %1003 = vmatprep.subr.bf16.mxu0 %v703
  %1004 = vmatpush1.bf16.msra.mxu0 %v702
  %1005 = vmatprep.subr.bf16.mxu0 %v711
  %1006 = vmatpush1.bf16.msra.mxu0 %v710
  %1007 = vmatprep.subr.bf16.mxu0 %v719
  %1008 = vmatpush1.bf16.msra.mxu0 %v718
  %1009 = vmatprep.mubr.bf16.mxu0 %v205
  %1010 = vmatmul.mubr.bf16.gmra.mrb[0].mxu0 %v204
  %v1011 = vpop.f32.mrb[0].mxu0
  %v1012 = vadd.f32 %v185, %v1011
  %v1013 = vpop.f32.mrb[0].mxu0
  %v1014 = vadd.f32 %v189, %v1013
  %v1015 = vpop.f32.mrb[0].mxu0
  %v1016 = vadd.f32 %v185, %v1015
  %v1017 = vpop.f32.mrb[0].mxu0
  %v1018 = vadd.f32 %v189, %v1017
  %1019 = vdwg.mxu0
  %v1020 = vmul.f32 %v883, %v883
  %v1021 = vmul.f32 %v885, %v885
  %v1022 = vmul.f32 %v926, %v926
  %v1023 = vmul.f32 %v928, %v928
  %v1024 = vmul.f32 %v969, %v969
  %v1025 = vmul.f32 %v971, %v971
  %v1026 = vmul.f32 %v1012, %v1012
  %v1027 = vmul.f32 %v1014, %v1014
  %v1028 = vmul.f32 %v887, %v887
  %v1029 = vmul.f32 %v889, %v889
  %v1030 = vmul.f32 %v930, %v930
  %v1031 = vmul.f32 %v932, %v932
  %v1032 = vmul.f32 %v973, %v973
  %v1033 = vmul.f32 %v975, %v975
  %v1034 = vmul.f32 %v1016, %v1016
  %v1035 = vmul.f32 %v1018, %v1018
  %v1036 = vmul.f32 %v883, %v1020
  %v1037 = vmul.f32 %v885, %v1021
  %v1038 = vmul.f32 %v926, %v1022
  %v1039 = vmul.f32 %v928, %v1023
  %v1040 = vmul.f32 %v969, %v1024
  %v1041 = vmul.f32 %v971, %v1025
  %v1042 = vmul.f32 %v1012, %v1026
  %v1043 = vmul.f32 %v1014, %v1027
  %v1044 = vmul.f32 %v887, %v1028
  %v1045 = vmul.f32 %v889, %v1029
  %v1046 = vmul.f32 %v930, %v1030
  %v1047 = vmul.f32 %v932, %v1031
  %v1048 = vmul.f32 %v973, %v1032
  %v1049 = vmul.f32 %v975, %v1033
  %v1050 = vmul.f32 %v1016, %v1034
  %v1051 = vmul.f32 %v1018, %v1035
  %v1052 = vmul.f32 %v1036, 0.044715
  %v1053 = vmul.f32 %v1037, 0.044715
  %v1054 = vmul.f32 %v1038, 0.044715
  %v1055 = vmul.f32 %v1039, 0.044715
  %v1056 = vmul.f32 %v1040, 0.044715
  %v1057 = vmul.f32 %v1041, 0.044715
  %v1058 = vmul.f32 %v1042, 0.044715
  %v1059 = vmul.f32 %v1043, 0.044715
  %v1060 = vmul.f32 %v1044, 0.044715
  %v1061 = vmul.f32 %v1045, 0.044715
  %v1062 = vmul.f32 %v1046, 0.044715
  %v1063 = vmul.f32 %v1047, 0.044715
  %v1064 = vmul.f32 %v1048, 0.044715
  %v1065 = vmul.f32 %v1049, 0.044715
  %v1066 = vmul.f32 %v1050, 0.044715
  %v1067 = vmul.f32 %v1051, 0.044715
  %v1068 = vadd.f32 %v883, %v1052
  %v1069 = vadd.f32 %v885, %v1053
  %v1070 = vadd.f32 %v926, %v1054
  %v1071 = vadd.f32 %v928, %v1055
  %v1072 = vadd.f32 %v969, %v1056
  %v1073 = vadd.f32 %v971, %v1057
  %v1074 = vadd.f32 %v1012, %v1058
  %v1075 = vadd.f32 %v1014, %v1059
  %v1076 = vadd.f32 %v887, %v1060
  %v1077 = vadd.f32 %v889, %v1061
  %v1078 = vadd.f32 %v930, %v1062
  %v1079 = vadd.f32 %v932, %v1063
  %v1080 = vadd.f32 %v973, %v1064
  %v1081 = vadd.f32 %v975, %v1065
  %v1082 = vadd.f32 %v1016, %v1066
  %v1083 = vadd.f32 %v1018, %v1067
  %v1084 = vmul.f32 %v1068, 0.7978846
  %v1085 = vmul.f32 %v1069, 0.7978846
  %v1086 = vmul.f32 %v1070, 0.7978846
  %v1087 = vmul.f32 %v1071, 0.7978846
  %v1088 = vmul.f32 %v1072, 0.7978846
  %v1089 = vmul.f32 %v1073, 0.7978846
  %v1090 = vmul.f32 %v1074, 0.7978846
  %v1091 = vmul.f32 %v1075, 0.7978846
  %v1092 = vmul.f32 %v1076, 0.7978846
  %v1093 = vmul.f32 %v1077, 0.7978846
  %v1094 = vmul.f32 %v1078, 0.7978846
  %v1095 = vmul.f32 %v1079, 0.7978846
  %v1096 = vmul.f32 %v1080, 0.7978846
  %v1097 = vmul.f32 %v1081, 0.7978846
  %v1098 = vmul.f32 %v1082, 0.7978846
  %v1099 = vmul.f32 %v1083, 0.7978846
  %v1100 = vtanh.pop %v1084
  %v1101 = vtanh.pop %v1085
  %v1102 = vtanh.pop %v1086
  %v1103 = vtanh.pop %v1087
  %v1104 = vtanh.pop %v1088
  %v1105 = vtanh.pop %v1089
  %v1106 = vtanh.pop %v1090
  %v1107 = vtanh.pop %v1091
  %v1108 = vtanh.pop %v1092
  %v1109 = vtanh.pop %v1093
  %v1110 = vtanh.pop %v1094
  %v1111 = vtanh.pop %v1095
  %v1112 = vtanh.pop %v1096
  %v1113 = vtanh.pop %v1097
  %v1114 = vtanh.pop %v1098
  %v1115 = vtanh.pop %v1099
  %v1116 = vadd.f32 %v1100, 1.0
  %v1117 = vadd.f32 %v1101, 1.0
  %v1118 = vadd.f32 %v1102, 1.0
  %v1119 = vadd.f32 %v1103, 1.0
  %v1120 = vadd.f32 %v1104, 1.0
  %v1121 = vadd.f32 %v1105, 1.0
  %v1122 = vadd.f32 %v1106, 1.0
  %v1123 = vadd.f32 %v1107, 1.0
  %v1124 = vadd.f32 %v1108, 1.0
  %v1125 = vadd.f32 %v1109, 1.0
  %v1126 = vadd.f32 %v1110, 1.0
  %v1127 = vadd.f32 %v1111, 1.0
  %v1128 = vadd.f32 %v1112, 1.0
  %v1129 = vadd.f32 %v1113, 1.0
  %v1130 = vadd.f32 %v1114, 1.0
  %v1131 = vadd.f32 %v1115, 1.0
  %v1132 = vmul.f32 %v1116, 0.5
  %v1133 = vmul.f32 %v1117, 0.5
  %v1134 = vmul.f32 %v1118, 0.5
  %v1135 = vmul.f32 %v1119, 0.5
  %v1136 = vmul.f32 %v1120, 0.5
  %v1137 = vmul.f32 %v1121, 0.5
  %v1138 = vmul.f32 %v1122, 0.5
  %v1139 = vmul.f32 %v1123, 0.5
  %v1140 = vmul.f32 %v1124, 0.5
  %v1141 = vmul.f32 %v1125, 0.5
  %v1142 = vmul.f32 %v1126, 0.5
  %v1143 = vmul.f32 %v1127, 0.5
  %v1144 = vmul.f32 %v1128, 0.5
  %v1145 = vmul.f32 %v1129, 0.5
  %v1146 = vmul.f32 %v1130, 0.5
  %v1147 = vmul.f32 %v1131, 0.5
  %v1148 = vmul.f32 %v883, %v1132
  %v1149 = vmul.f32 %v885, %v1133
  %v1150 = vmul.f32 %v926, %v1134
  %v1151 = vmul.f32 %v928, %v1135
  %v1152 = vmul.f32 %v969, %v1136
  %v1153 = vmul.f32 %v971, %v1137
  %v1154 = vmul.f32 %v1012, %v1138
  %v1155 = vmul.f32 %v1014, %v1139
  %v1156 = vmul.f32 %v887, %v1140
  %v1157 = vmul.f32 %v889, %v1141
  %v1158 = vmul.f32 %v930, %v1142
  %v1159 = vmul.f32 %v932, %v1143
  %v1160 = vmul.f32 %v973, %v1144
  %v1161 = vmul.f32 %v975, %v1145
  %v1162 = vmul.f32 %v1016, %v1146
  %v1163 = vmul.f32 %v1018, %v1147
  %v1164 = vpack.c.bf16 %v1156, %v1148
  %v1165 = vpack.c.bf16 %v1157, %v1149
  %v1166 = vpack.c.bf16 %v1158, %v1150
  %v1167 = vpack.c.bf16 %v1159, %v1151
  %v1168 = vpack.c.bf16 %v1160, %v1152
  %v1169 = vpack.c.bf16 %v1161, %v1153
  %v1170 = vpack.c.bf16 %v1162, %v1154
  %v1171 = vpack.c.bf16 %v1163, %v1155
  %v1172 = vld [vmem:[%s3] sm:$0xff]
  %v1173 = vld [vmem:[%s3 + $0x8] sm:$0xff]
  %v1174 = vld [vmem:[%s3 + $0x10] sm:$0xff]
  %v1175 = vld [vmem:[%s3 + $0x18] sm:$0xff]
  %v1176 = vld [vmem:[%s3 + $0x20] sm:$0xff]
  %v1177 = vld [vmem:[%s3 + $0x28] sm:$0xff]
  %v1178 = vld [vmem:[%s3 + $0x30] sm:$0xff]
  %v1179 = vld [vmem:[%s3 + $0x38] sm:$0xff]
  %v1180 = vld [vmem:[%s3 + $0x40] sm:$0xff]
  %v1181 = vld [vmem:[%s3 + $0x48] sm:$0xff]
  %v1182 = vld [vmem:[%s3 + $0x50] sm:$0xff]
  %v1183 = vld [vmem:[%s3 + $0x58] sm:$0xff]
  %v1184 = vld [vmem:[%s3 + $0x60] sm:$0xff]
  %v1185 = vld [vmem:[%s3 + $0x68] sm:$0xff]
  %v1186 = vld [vmem:[%s3 + $0x70] sm:$0xff]
  %v1187 = vld [vmem:[%s3 + $0x78] sm:$0xff]
  %v1188 = vld [vmem:[%s3 + $0x80] sm:$0xff]
  %v1189 = vld [vmem:[%s3 + $0x88] sm:$0xff]
  %v1190 = vld [vmem:[%s3 + $0x90] sm:$0xff]
  %v1191 = vld [vmem:[%s3 + $0x98] sm:$0xff]
  %v1192 = vld [vmem:[%s3 + $0xa0] sm:$0xff]
  %v1193 = vld [vmem:[%s3 + $0xa8] sm:$0xff]
  %v1194 = vld [vmem:[%s3 + $0xb0] sm:$0xff]
  %v1195 = vld [vmem:[%s3 + $0xb8] sm:$0xff]
  %v1196 = vld [vmem:[%s3 + $0xc0] sm:$0xff]
  %v1197 = vld [vmem:[%s3 + $0xc8] sm:$0xff]
  %v1198 = vld [vmem:[%s3 + $0xd0] sm:$0xff]
  %v1199 = vld [vmem:[%s3 + $0xd8] sm:$0xff]
  %v1200 = vld [vmem:[%s3 + $0xe0] sm:$0xff]
  %v1201 = vld [vmem:[%s3 + $0xe8] sm:$0xff]
  %v1202 = vld [vmem:[%s3 + $0xf0] sm:$0xff]
  %v1203 = vld [vmem:[%s3 + $0xf8] sm:$0xff]
  %v1204 = vld [vmem:[%s3 + $0x100] sm:$0xff]
  %v1205 = vld [vmem:[%s3 + $0x108] sm:$0xff]
  %v1206 = vld [vmem:[%s3 + $0x110] sm:$0xff]
  %v1207 = vld [vmem:[%s3 + $0x118] sm:$0xff]
  %v1208 = vld [vmem:[%s3 + $0x120] sm:$0xff]
  %v1209 = vld [vmem:[%s3 + $0x128] sm:$0xff]
  %v1210 = vld [vmem:[%s3 + $0x130] sm:$0xff]
  %v1211 = vld [vmem:[%s3 + $0x138] sm:$0xff]
  %v1212 = vld [vmem:[%s3 + $0x140] sm:$0xff]
  %v1213 = vld [vmem:[%s3 + $0x148] sm:$0xff]
  %v1214 = vld [vmem:[%s3 + $0x150] sm:$0xff]
  %v1215 = vld [vmem:[%s3 + $0x158] sm:$0xff]
  %v1216 = vld [vmem:[%s3 + $0x160] sm:$0xff]
  %v1217 = vld [vmem:[%s3 + $0x168] sm:$0xff]
  %v1218 = vld [vmem:[%s3 + $0x170] sm:$0xff]
  %v1219 = vld [vmem:[%s3 + $0x178] sm:$0xff]
  %v1220 = vld [vmem:[%s3 + $0x180] sm:$0xff]
  %v1221 = vld [vmem:[%s3 + $0x188] sm:$0xff]
  %v1222 = vld [vmem:[%s3 + $0x190] sm:$0xff]
  %v1223 = vld [vmem:[%s3 + $0x198] sm:$0xff]
  %v1224 = vld [vmem:[%s3 + $0x1a0] sm:$0xff]
  %v1225 = vld [vmem:[%s3 + $0x1a8] sm:$0xff]
  %v1226 = vld [vmem:[%s3 + $0x1b0] sm:$0xff]
  %v1227 = vld [vmem:[%s3 + $0x1b8] sm:$0xff]
  %v1228 = vld [vmem:[%s3 + $0x1c0] sm:$0xff]
  %v1229 = vld [vmem:[%s3 + $0x1c8] sm:$0xff]
  %v1230 = vld [vmem:[%s3 + $0x1d0] sm:$0xff]
  %v1231 = vld [vmem:[%s3 + $0x1d8] sm:$0xff]
  %v1232 = vld [vmem:[%s3 + $0x1e0] sm:$0xff]
  %v1233 = vld [vmem:[%s3 + $0x1e8] sm:$0xff]
  %v1234 = vld [vmem:[%s3 + $0x1f0] sm:$0xff]
  %v1235 = vld [vmem:[%s3 + $0x1f8] sm:$0xff]
  %v1236 = vld [vmem:[%s3 + $0x200] sm:$0xff]
  %v1237 = vld [vmem:[%s3 + $0x208] sm:$0xff]
  %v1238 = vld [vmem:[%s3 + $0x210] sm:$0xff]
  %v1239 = vld [vmem:[%s3 + $0x218] sm:$0xff]
  %v1240 = vld [vmem:[%s3 + $0x220] sm:$0xff]
  %v1241 = vld [vmem:[%s3 + $0x228] sm:$0xff]
  %v1242 = vld [vmem:[%s3 + $0x230] sm:$0xff]
  %v1243 = vld [vmem:[%s3 + $0x238] sm:$0xff]
  %v1244 = vld [vmem:[%s3 + $0x240] sm:$0xff]
  %v1245 = vld [vmem:[%s3 + $0x248] sm:$0xff]
  %v1246 = vld [vmem:[%s3 + $0x250] sm:$0xff]
  %v1247 = vld [vmem:[%s3 + $0x258] sm:$0xff]
  %v1248 = vld [vmem:[%s3 + $0x260] sm:$0xff]
  %v1249 = vld [vmem:[%s3 + $0x268] sm:$0xff]
  %v1250 = vld [vmem:[%s3 + $0x270] sm:$0xff]
  %v1251 = vld [vmem:[%s3 + $0x278] sm:$0xff]
  %v1252 = vld [vmem:[%s3 + $0x280] sm:$0xff]
  %v1253 = vld [vmem:[%s3 + $0x288] sm:$0xff]
  %v1254 = vld [vmem:[%s3 + $0x290] sm:$0xff]
  %v1255 = vld [vmem:[%s3 + $0x298] sm:$0xff]
  %v1256 = vld [vmem:[%s3 + $0x2a0] sm:$0xff]
  %v1257 = vld [vmem:[%s3 + $0x2a8] sm:$0xff]
  %v1258 = vld [vmem:[%s3 + $0x2b0] sm:$0xff]
  %v1259 = vld [vmem:[%s3 + $0x2b8] sm:$0xff]
  %v1260 = vld [vmem:[%s3 + $0x2c0] sm:$0xff]
  %v1261 = vld [vmem:[%s3 + $0x2c8] sm:$0xff]
  %v1262 = vld [vmem:[%s3 + $0x2d0] sm:$0xff]
  %v1263 = vld [vmem:[%s3 + $0x2d8] sm:$0xff]
  %v1264 = vld [vmem:[%s3 + $0x2e0] sm:$0xff]
  %v1265 = vld [vmem:[%s3 + $0x2e8] sm:$0xff]
  %v1266 = vld [vmem:[%s3 + $0x2f0] sm:$0xff]
  %v1267 = vld [vmem:[%s3 + $0x2f8] sm:$0xff]
  %v1268 = vld [vmem:[%s3 + $0x300] sm:$0xff]
  %v1269 = vld [vmem:[%s3 + $0x308] sm:$0xff]
  %v1270 = vld [vmem:[%s3 + $0x310] sm:$0xff]
  %v1271 = vld [vmem:[%s3 + $0x318] sm:$0xff]
  %v1272 = vld [vmem:[%s3 + $0x320] sm:$0xff]
  %v1273 = vld [vmem:[%s3 + $0x328] sm:$0xff]
  %v1274 = vld [vmem:[%s3 + $0x330] sm:$0xff]
  %v1275 = vld [vmem:[%s3 + $0x338] sm:$0xff]
  %v1276 = vld [vmem:[%s3 + $0x340] sm:$0xff]
  %v1277 = vld [vmem:[%s3 + $0x348] sm:$0xff]
  %v1278 = vld [vmem:[%s3 + $0x350] sm:$0xff]
  %v1279 = vld [vmem:[%s3 + $0x358] sm:$0xff]
  %v1280 = vld [vmem:[%s3 + $0x360] sm:$0xff]
  %v1281 = vld [vmem:[%s3 + $0x368] sm:$0xff]
  %v1282 = vld [vmem:[%s3 + $0x370] sm:$0xff]
  %v1283 = vld [vmem:[%s3 + $0x378] sm:$0xff]
  %v1284 = vld [vmem:[%s3 + $0x380] sm:$0xff]
  %v1285 = vld [vmem:[%s3 + $0x388] sm:$0xff]
  %v1286 = vld [vmem:[%s3 + $0x390] sm:$0xff]
  %v1287 = vld [vmem:[%s3 + $0x398] sm:$0xff]
  %v1288 = vld [vmem:[%s3 + $0x3a0] sm:$0xff]
  %v1289 = vld [vmem:[%s3 + $0x3a8] sm:$0xff]
  %v1290 = vld [vmem:[%s3 + $0x3b0] sm:$0xff]
  %v1291 = vld [vmem:[%s3 + $0x3b8] sm:$0xff]
  %v1292 = vld [vmem:[%s3 + $0x3c0] sm:$0xff]
  %v1293 = vld [vmem:[%s3 + $0x3c8] sm:$0xff]
  %v1294 = vld [vmem:[%s3 + $0x3d0] sm:$0xff]
  %v1295 = vld [vmem:[%s3 + $0x3d8] sm:$0xff]
  %v1296 = vld [vmem:[%s3 + $0x3e0] sm:$0xff]
  %v1297 = vld [vmem:[%s3 + $0x3e8] sm:$0xff]
  %v1298 = vld [vmem:[%s3 + $0x3f0] sm:$0xff]
  %v1299 = vld [vmem:[%s3 + $0x3f8] sm:$0xff]
  %v1300 = vld [vmem:[%s4] sm:$0x3]
  %v1302 = vlaneseq
  %v1303 = vshrl.u32 %v1302, 7
  %v1304 = vsub.s32 0, %v1303
  %v1305 = vrot.slane %v1300, %v1304
  %v1306 = vlaneseq
  %v1307 = vshrl.u32 %v1306, 7
  %v1308 = vsub.s32 1, %v1307
  %v1309 = vrot.slane %v1300, %v1308
  %v1440 = vunpack.c.l.b16 %v1172
  %v1441 = vunpack.c.h.b16 %v1172
  %v1442 = vunpack.c.l.b16 %v1173
  %v1443 = vunpack.c.h.b16 %v1173
  %v1444 = vunpack.c.l.b16 %v1174
  %v1445 = vunpack.c.h.b16 %v1174
  %v1446 = vunpack.c.l.b16 %v1175
  %v1447 = vunpack.c.h.b16 %v1175
  %v1448 = vunpack.c.l.b16 %v1176
  %v1449 = vunpack.c.h.b16 %v1176
  %v1450 = vunpack.c.l.b16 %v1177
  %v1451 = vunpack.c.h.b16 %v1177
  %v1452 = vunpack.c.l.b16 %v1178
  %v1453 = vunpack.c.h.b16 %v1178
  %v1454 = vunpack.c.l.b16 %v1179
  %v1455 = vunpack.c.h.b16 %v1179
  %v1456 = vunpack.c.l.b16 %v1180
  %v1457 = vunpack.c.h.b16 %v1180
  %v1458 = vunpack.c.l.b16 %v1181
  %v1459 = vunpack.c.h.b16 %v1181
  %v1460 = vunpack.c.l.b16 %v1182
  %v1461 = vunpack.c.h.b16 %v1182
  %v1462 = vunpack.c.l.b16 %v1183
  %v1463 = vunpack.c.h.b16 %v1183
  %v1464 = vunpack.c.l.b16 %v1184
  %v1465 = vunpack.c.h.b16 %v1184
  %v1466 = vunpack.c.l.b16 %v1185
  %v1467 = vunpack.c.h.b16 %v1185
  %v1468 = vunpack.c.l.b16 %v1186
  %v1469 = vunpack.c.h.b16 %v1186
  %v1470 = vunpack.c.l.b16 %v1187
  %v1471 = vunpack.c.h.b16 %v1187
  %v1472 = vunpack.c.l.b16 %v1188
  %v1473 = vunpack.c.h.b16 %v1188
  %v1474 = vunpack.c.l.b16 %v1189
  %v1475 = vunpack.c.h.b16 %v1189
  %v1476 = vunpack.c.l.b16 %v1190
  %v1477 = vunpack.c.h.b16 %v1190
  %v1478 = vunpack.c.l.b16 %v1191
  %v1479 = vunpack.c.h.b16 %v1191
  %v1480 = vunpack.c.l.b16 %v1192
  %v1481 = vunpack.c.h.b16 %v1192
  %v1482 = vunpack.c.l.b16 %v1193
  %v1483 = vunpack.c.h.b16 %v1193
  %v1484 = vunpack.c.l.b16 %v1194
  %v1485 = vunpack.c.h.b16 %v1194
  %v1486 = vunpack.c.l.b16 %v1195
  %v1487 = vunpack.c.h.b16 %v1195
  %v1488 = vunpack.c.l.b16 %v1196
  %v1489 = vunpack.c.h.b16 %v1196
  %v1490 = vunpack.c.l.b16 %v1197
  %v1491 = vunpack.c.h.b16 %v1197
  %v1492 = vunpack.c.l.b16 %v1198
  %v1493 = vunpack.c.h.b16 %v1198
  %v1494 = vunpack.c.l.b16 %v1199
  %v1495 = vunpack.c.h.b16 %v1199
  %v1496 = vunpack.c.l.b16 %v1200
  %v1497 = vunpack.c.h.b16 %v1200
  %v1498 = vunpack.c.l.b16 %v1201
  %v1499 = vunpack.c.h.b16 %v1201
  %v1500 = vunpack.c.l.b16 %v1202
  %v1501 = vunpack.c.h.b16 %v1202
  %v1502 = vunpack.c.l.b16 %v1203
  %v1503 = vunpack.c.h.b16 %v1203
  %v1504 = vunpack.c.l.b16 %v1204
  %v1505 = vunpack.c.h.b16 %v1204
  %v1506 = vunpack.c.l.b16 %v1205
  %v1507 = vunpack.c.h.b16 %v1205
  %v1508 = vunpack.c.l.b16 %v1206
  %v1509 = vunpack.c.h.b16 %v1206
  %v1510 = vunpack.c.l.b16 %v1207
  %v1511 = vunpack.c.h.b16 %v1207
  %v1512 = vunpack.c.l.b16 %v1208
  %v1513 = vunpack.c.h.b16 %v1208
  %v1514 = vunpack.c.l.b16 %v1209
  %v1515 = vunpack.c.h.b16 %v1209
  %v1516 = vunpack.c.l.b16 %v1210
  %v1517 = vunpack.c.h.b16 %v1210
  %v1518 = vunpack.c.l.b16 %v1211
  %v1519 = vunpack.c.h.b16 %v1211
  %v1520 = vunpack.c.l.b16 %v1212
  %v1521 = vunpack.c.h.b16 %v1212
  %v1522 = vunpack.c.l.b16 %v1213
  %v1523 = vunpack.c.h.b16 %v1213
  %v1524 = vunpack.c.l.b16 %v1214
  %v1525 = vunpack.c.h.b16 %v1214
  %v1526 = vunpack.c.l.b16 %v1215
  %v1527 = vunpack.c.h.b16 %v1215
  %v1528 = vunpack.c.l.b16 %v1216
  %v1529 = vunpack.c.h.b16 %v1216
  %v1530 = vunpack.c.l.b16 %v1217
  %v1531 = vunpack.c.h.b16 %v1217
  %v1532 = vunpack.c.l.b16 %v1218
  %v1533 = vunpack.c.h.b16 %v1218
  %v1534 = vunpack.c.l.b16 %v1219
  %v1535 = vunpack.c.h.b16 %v1219
  %v1536 = vunpack.c.l.b16 %v1220
  %v1537 = vunpack.c.h.b16 %v1220
  %v1538 = vunpack.c.l.b16 %v1221
  %v1539 = vunpack.c.h.b16 %v1221
  %v1540 = vunpack.c.l.b16 %v1222
  %v1541 = vunpack.c.h.b16 %v1222
  %v1542 = vunpack.c.l.b16 %v1223
  %v1543 = vunpack.c.h.b16 %v1223
  %v1544 = vunpack.c.l.b16 %v1224
  %v1545 = vunpack.c.h.b16 %v1224
  %v1546 = vunpack.c.l.b16 %v1225
  %v1547 = vunpack.c.h.b16 %v1225
  %v1548 = vunpack.c.l.b16 %v1226
  %v1549 = vunpack.c.h.b16 %v1226
  %v1550 = vunpack.c.l.b16 %v1227
  %v1551 = vunpack.c.h.b16 %v1227
  %v1552 = vunpack.c.l.b16 %v1228
  %v1553 = vunpack.c.h.b16 %v1228
  %v1554 = vunpack.c.l.b16 %v1229
  %v1555 = vunpack.c.h.b16 %v1229
  %v1556 = vunpack.c.l.b16 %v1230
  %v1557 = vunpack.c.h.b16 %v1230
  %v1558 = vunpack.c.l.b16 %v1231
  %v1559 = vunpack.c.h.b16 %v1231
  %v1560 = vunpack.c.l.b16 %v1232
  %v1561 = vunpack.c.h.b16 %v1232
  %v1562 = vunpack.c.l.b16 %v1233
  %v1563 = vunpack.c.h.b16 %v1233
  %v1564 = vunpack.c.l.b16 %v1234
  %v1565 = vunpack.c.h.b16 %v1234
  %v1566 = vunpack.c.l.b16 %v1235
  %v1567 = vunpack.c.h.b16 %v1235
  %v1568 = vunpack.c.l.b16 %v1236
  %v1569 = vunpack.c.h.b16 %v1236
  %v1570 = vunpack.c.l.b16 %v1237
  %v1571 = vunpack.c.h.b16 %v1237
  %v1572 = vunpack.c.l.b16 %v1238
  %v1573 = vunpack.c.h.b16 %v1238
  %v1574 = vunpack.c.l.b16 %v1239
  %v1575 = vunpack.c.h.b16 %v1239
  %v1576 = vunpack.c.l.b16 %v1240
  %v1577 = vunpack.c.h.b16 %v1240
  %v1578 = vunpack.c.l.b16 %v1241
  %v1579 = vunpack.c.h.b16 %v1241
  %v1580 = vunpack.c.l.b16 %v1242
  %v1581 = vunpack.c.h.b16 %v1242
  %v1582 = vunpack.c.l.b16 %v1243
  %v1583 = vunpack.c.h.b16 %v1243
  %v1584 = vunpack.c.l.b16 %v1244
  %v1585 = vunpack.c.h.b16 %v1244
  %v1586 = vunpack.c.l.b16 %v1245
  %v1587 = vunpack.c.h.b16 %v1245
  %v1588 = vunpack.c.l.b16 %v1246
  %v1589 = vunpack.c.h.b16 %v1246
  %v1590 = vunpack.c.l.b16 %v1247
  %v1591 = vunpack.c.h.b16 %v1247
  %v1592 = vunpack.c.l.b16 %v1248
  %v1593 = vunpack.c.h.b16 %v1248
  %v1594 = vunpack.c.l.b16 %v1249
  %v1595 = vunpack.c.h.b16 %v1249
  %v1596 = vunpack.c.l.b16 %v1250
  %v1597 = vunpack.c.h.b16 %v1250
  %v1598 = vunpack.c.l.b16 %v1251
  %v1599 = vunpack.c.h.b16 %v1251
  %v1600 = vunpack.c.l.b16 %v1252
  %v1601 = vunpack.c.h.b16 %v1252
  %v1602 = vunpack.c.l.b16 %v1253
  %v1603 = vunpack.c.h.b16 %v1253
  %v1604 = vunpack.c.l.b16 %v1254
  %v1605 = vunpack.c.h.b16 %v1254
  %v1606 = vunpack.c.l.b16 %v1255
  %v1607 = vunpack.c.h.b16 %v1255
  %v1608 = vunpack.c.l.b16 %v1256
  %v1609 = vunpack.c.h.b16 %v1256
  %v1610 = vunpack.c.l.b16 %v1257
  %v1611 = vunpack.c.h.b16 %v1257
  %v1612 = vunpack.c.l.b16 %v1258
  %v1613 = vunpack.c.h.b16 %v1258
  %v1614 = vunpack.c.l.b16 %v1259
  %v1615 = vunpack.c.h.b16 %v1259
  %v1616 = vunpack.c.l.b16 %v1260
  %v1617 = vunpack.c.h.b16 %v1260
  %v1618 = vunpack.c.l.b16 %v1261
  %v1619 = vunpack.c.h.b16 %v1261
  %v1620 = vunpack.c.l.b16 %v1262
  %v1621 = vunpack.c.h.b16 %v1262
  %v1622 = vunpack.c.l.b16 %v1263
  %v1623 = vunpack.c.h.b16 %v1263
  %v1624 = vunpack.c.l.b16 %v1264
  %v1625 = vunpack.c.h.b16 %v1264
  %v1626 = vunpack.c.l.b16 %v1265
  %v1627 = vunpack.c.h.b16 %v1265
  %v1628 = vunpack.c.l.b16 %v1266
  %v1629 = vunpack.c.h.b16 %v1266
  %v1630 = vunpack.c.l.b16 %v1267
  %v1631 = vunpack.c.h.b16 %v1267
  %v1632 = vunpack.c.l.b16 %v1268
  %v1633 = vunpack.c.h.b16 %v1268
  %v1634 = vunpack.c.l.b16 %v1269
  %v1635 = vunpack.c.h.b16 %v1269
  %v1636 = vunpack.c.l.b16 %v1270
  %v1637 = vunpack.c.h.b16 %v1270
  %v1638 = vunpack.c.l.b16 %v1271
  %v1639 = vunpack.c.h.b16 %v1271
  %v1640 = vunpack.c.l.b16 %v1272
  %v1641 = vunpack.c.h.b16 %v1272
  %v1642 = vunpack.c.l.b16 %v1273
  %v1643 = vunpack.c.h.b16 %v1273
  %v1644 = vunpack.c.l.b16 %v1274
  %v1645 = vunpack.c.h.b16 %v1274
  %v1646 = vunpack.c.l.b16 %v1275
  %v1647 = vunpack.c.h.b16 %v1275
  %v1648 = vunpack.c.l.b16 %v1276
  %v1649 = vunpack.c.h.b16 %v1276
  %v1650 = vunpack.c.l.b16 %v1277
  %v1651 = vunpack.c.h.b16 %v1277
  %v1652 = vunpack.c.l.b16 %v1278
  %v1653 = vunpack.c.h.b16 %v1278
  %v1654 = vunpack.c.l.b16 %v1279
  %v1655 = vunpack.c.h.b16 %v1279
  %v1656 = vunpack.c.l.b16 %v1280
  %v1657 = vunpack.c.h.b16 %v1280
  %v1658 = vunpack.c.l.b16 %v1281
  %v1659 = vunpack.c.h.b16 %v1281
  %v1660 = vunpack.c.l.b16 %v1282
  %v1661 = vunpack.c.h.b16 %v1282
  %v1662 = vunpack.c.l.b16 %v1283
  %v1663 = vunpack.c.h.b16 %v1283
  %v1664 = vunpack.c.l.b16 %v1284
  %v1665 = vunpack.c.h.b16 %v1284
  %v1666 = vunpack.c.l.b16 %v1285
  %v1667 = vunpack.c.h.b16 %v1285
  %v1668 = vunpack.c.l.b16 %v1286
  %v1669 = vunpack.c.h.b16 %v1286
  %v1670 = vunpack.c.l.b16 %v1287
  %v1671 = vunpack.c.h.b16 %v1287
  %v1672 = vunpack.c.l.b16 %v1288
  %v1673 = vunpack.c.h.b16 %v1288
  %v1674 = vunpack.c.l.b16 %v1289
  %v1675 = vunpack.c.h.b16 %v1289
  %v1676 = vunpack.c.l.b16 %v1290
  %v1677 = vunpack.c.h.b16 %v1290
  %v1678 = vunpack.c.l.b16 %v1291
  %v1679 = vunpack.c.h.b16 %v1291
  %v1680 = vunpack.c.l.b16 %v1292
  %v1681 = vunpack.c.h.b16 %v1292
  %v1682 = vunpack.c.l.b16 %v1293
  %v1683 = vunpack.c.h.b16 %v1293
  %v1684 = vunpack.c.l.b16 %v1294
  %v1685 = vunpack.c.h.b16 %v1294
  %v1686 = vunpack.c.l.b16 %v1295
  %v1687 = vunpack.c.h.b16 %v1295
  %v1688 = vunpack.c.l.b16 %v1296
  %v1689 = vunpack.c.h.b16 %v1296
  %v1690 = vunpack.c.l.b16 %v1297
  %v1691 = vunpack.c.h.b16 %v1297
  %v1692 = vunpack.c.l.b16 %v1298
  %v1693 = vunpack.c.h.b16 %v1298
  %v1694 = vunpack.c.l.b16 %v1299
  %v1695 = vunpack.c.h.b16 %v1299
  %v1696 = vpack.c.b16 %v1442, %v1440
  %v1697 = vpack.c.b16 %v1443, %v1441
  %v1698 = vpack.c.b16 %v1446, %v1444
  %v1699 = vpack.c.b16 %v1447, %v1445
  %v1700 = vpack.c.b16 %v1450, %v1448
  %v1701 = vpack.c.b16 %v1451, %v1449
  %v1702 = vpack.c.b16 %v1454, %v1452
  %v1703 = vpack.c.b16 %v1455, %v1453
  %v1704 = vpack.c.b16 %v1458, %v1456
  %v1705 = vpack.c.b16 %v1459, %v1457
  %v1706 = vpack.c.b16 %v1462, %v1460
  %v1707 = vpack.c.b16 %v1463, %v1461
  %v1708 = vpack.c.b16 %v1466, %v1464
  %v1709 = vpack.c.b16 %v1467, %v1465
  %v1710 = vpack.c.b16 %v1470, %v1468
  %v1711 = vpack.c.b16 %v1471, %v1469
  %v1712 = vpack.c.b16 %v1474, %v1472
  %v1713 = vpack.c.b16 %v1475, %v1473
  %v1714 = vpack.c.b16 %v1478, %v1476
  %v1715 = vpack.c.b16 %v1479, %v1477
  %v1716 = vpack.c.b16 %v1482, %v1480
  %v1717 = vpack.c.b16 %v1483, %v1481
  %v1718 = vpack.c.b16 %v1486, %v1484
  %v1719 = vpack.c.b16 %v1487, %v1485
  %v1720 = vpack.c.b16 %v1490, %v1488
  %v1721 = vpack.c.b16 %v1491, %v1489
  %v1722 = vpack.c.b16 %v1494, %v1492
  %v1723 = vpack.c.b16 %v1495, %v1493
  %v1724 = vpack.c.b16 %v1498, %v1496
  %v1725 = vpack.c.b16 %v1499, %v1497
  %v1726 = vpack.c.b16 %v1502, %v1500
  %v1727 = vpack.c.b16 %v1503, %v1501
  %v1728 = vpack.c.b16 %v1506, %v1504
  %v1729 = vpack.c.b16 %v1507, %v1505
  %v1730 = vpack.c.b16 %v1510, %v1508
  %v1731 = vpack.c.b16 %v1511, %v1509
  %v1732 = vpack.c.b16 %v1514, %v1512
  %v1733 = vpack.c.b16 %v1515, %v1513
  %v1734 = vpack.c.b16 %v1518, %v1516
  %v1735 = vpack.c.b16 %v1519, %v1517
  %v1736 = vpack.c.b16 %v1522, %v1520
  %v1737 = vpack.c.b16 %v1523, %v1521
  %v1738 = vpack.c.b16 %v1526, %v1524
  %v1739 = vpack.c.b16 %v1527, %v1525
  %v1740 = vpack.c.b16 %v1530, %v1528
  %v1741 = vpack.c.b16 %v1531, %v1529
  %v1742 = vpack.c.b16 %v1534, %v1532
  %v1743 = vpack.c.b16 %v1535, %v1533
  %v1744 = vpack.c.b16 %v1538, %v1536
  %v1745 = vpack.c.b16 %v1539, %v1537
  %v1746 = vpack.c.b16 %v1542, %v1540
  %v1747 = vpack.c.b16 %v1543, %v1541
  %v1748 = vpack.c.b16 %v1546, %v1544
  %v1749 = vpack.c.b16 %v1547, %v1545
  %v1750 = vpack.c.b16 %v1550, %v1548
  %v1751 = vpack.c.b16 %v1551, %v1549
  %v1752 = vpack.c.b16 %v1554, %v1552
  %v1753 = vpack.c.b16 %v1555, %v1553
  %v1754 = vpack.c.b16 %v1558, %v1556
  %v1755 = vpack.c.b16 %v1559, %v1557
  %v1756 = vpack.c.b16 %v1562, %v1560
  %v1757 = vpack.c.b16 %v1563, %v1561
  %v1758 = vpack.c.b16 %v1566, %v1564
  %v1759 = vpack.c.b16 %v1567, %v1565
  %v1760 = vpack.c.b16 %v1570, %v1568
  %v1761 = vpack.c.b16 %v1571, %v1569
  %v1762 = vpack.c.b16 %v1574, %v1572
  %v1763 = vpack.c.b16 %v1575, %v1573
  %v1764 = vpack.c.b16 %v1578, %v1576
  %v1765 = vpack.c.b16 %v1579, %v1577
  %v1766 = vpack.c.b16 %v1582, %v1580
  %v1767 = vpack.c.b16 %v1583, %v1581
  %v1768 = vpack.c.b16 %v1586, %v1584
  %v1769 = vpack.c.b16 %v1587, %v1585
  %v1770 = vpack.c.b16 %v1590, %v1588
  %v1771 = vpack.c.b16 %v1591, %v1589
  %v1772 = vpack.c.b16 %v1594, %v1592
  %v1773 = vpack.c.b16 %v1595, %v1593
  %v1774 = vpack.c.b16 %v1598, %v1596
  %v1775 = vpack.c.b16 %v1599, %v1597
  %v1776 = vpack.c.b16 %v1602, %v1600
  %v1777 = vpack.c.b16 %v1603, %v1601
  %v1778 = vpack.c.b16 %v1606, %v1604
  %v1779 = vpack.c.b16 %v1607, %v1605
  %v1780 = vpack.c.b16 %v1610, %v1608
  %v1781 = vpack.c.b16 %v1611, %v1609
  %v1782 = vpack.c.b16 %v1614, %v1612
  %v1783 = vpack.c.b16 %v1615, %v1613
  %v1784 = vpack.c.b16 %v1618, %v1616
  %v1785 = vpack.c.b16 %v1619, %v1617
  %v1786 = vpack.c.b16 %v1622, %v1620
  %v1787 = vpack.c.b16 %v1623, %v1621
  %v1788 = vpack.c.b16 %v1626, %v1624
  %v1789 = vpack.c.b16 %v1627, %v1625
  %v1790 = vpack.c.b16 %v1630, %v1628
  %v1791 = vpack.c.b16 %v1631, %v1629
  %v1792 = vpack.c.b16 %v1634, %v1632
  %v1793 = vpack.c.b16 %v1635, %v1633
  %v1794 = vpack.c.b16 %v1638, %v1636
  %v1795 = vpack.c.b16 %v1639, %v1637
  %v1796 = vpack.c.b16 %v1642, %v1640
  %v1797 = vpack.c.b16 %v1643, %v1641
  %v1798 = vpack.c.b16 %v1646, %v1644
  %v1799 = vpack.c.b16 %v1647, %v1645
  %v1800 = vpack.c.b16 %v1650, %v1648
  %v1801 = vpack.c.b16 %v1651, %v1649
  %v1802 = vpack.c.b16 %v1654, %v1652
  %v1803 = vpack.c.b16 %v1655, %v1653
  %v1804 = vpack.c.b16 %v1658, %v1656
  %v1805 = vpack.c.b16 %v1659, %v1657
  %v1806 = vpack.c.b16 %v1662, %v1660
  %v1807 = vpack.c.b16 %v1663, %v1661
  %v1808 = vpack.c.b16 %v1666, %v1664
  %v1809 = vpack.c.b16 %v1667, %v1665
  %v1810 = vpack.c.b16 %v1670, %v1668
  %v1811 = vpack.c.b16 %v1671, %v1669
  %v1812 = vpack.c.b16 %v1674, %v1672
  %v1813 = vpack.c.b16 %v1675, %v1673
  %v1814 = vpack.c.b16 %v1678, %v1676
  %v1815 = vpack.c.b16 %v1679, %v1677
  %v1816 = vpack.c.b16 %v1682, %v1680
  %v1817 = vpack.c.b16 %v1683, %v1681
  %v1818 = vpack.c.b16 %v1686, %v1684
  %v1819 = vpack.c.b16 %v1687, %v1685
  %v1820 = vpack.c.b16 %v1690, %v1688
  %v1821 = vpack.c.b16 %v1691, %v1689
  %v1822 = vpack.c.b16 %v1694, %v1692
  %v1823 = vpack.c.b16 %v1695, %v1693
  %1952 = vmatprep.subr.bf16.mxu0 %v1697
  %1953 = vmatpush1.bf16.msra.mxu0 %v1696
  %1954 = vmatprep.subr.bf16.mxu0 %v1699
  %1955 = vmatpush1.bf16.msra.mxu0 %v1698
  %1956 = vmatprep.subr.bf16.mxu0 %v1701
  %1957 = vmatpush1.bf16.msra.mxu0 %v1700
  %1958 = vmatprep.subr.bf16.mxu0 %v1703
  %1959 = vmatpush1.bf16.msra.mxu0 %v1702
  %1960 = vmatprep.subr.bf16.mxu0 %v1705
  %1961 = vmatpush1.bf16.msra.mxu0 %v1704
  %1962 = vmatprep.subr.bf16.mxu0 %v1707
  %1963 = vmatpush1.bf16.msra.mxu0 %v1706
  %1964 = vmatprep.subr.bf16.mxu0 %v1709
  %1965 = vmatpush1.bf16.msra.mxu0 %v1708
  %1966 = vmatprep.subr.bf16.mxu0 %v1711
  %1967 = vmatpush1.bf16.msra.mxu0 %v1710
  %1968 = vmatprep.subr.bf16.mxu0 %v1713
  %1969 = vmatpush1.bf16.msra.mxu0 %v1712
  %1970 = vmatprep.subr.bf16.mxu0 %v1715
  %1971 = vmatpush1.bf16.msra.mxu0 %v1714
  %1972 = vmatprep.subr.bf16.mxu0 %v1717
  %1973 = vmatpush1.bf16.msra.mxu0 %v1716
  %1974 = vmatprep.subr.bf16.mxu0 %v1719
  %1975 = vmatpush1.bf16.msra.mxu0 %v1718
  %1976 = vmatprep.subr.bf16.mxu0 %v1721
  %1977 = vmatpush1.bf16.msra.mxu0 %v1720
  %1978 = vmatprep.subr.bf16.mxu0 %v1723
  %1979 = vmatpush1.bf16.msra.mxu0 %v1722
  %1980 = vmatprep.subr.bf16.mxu0 %v1725
  %1981 = vmatpush1.bf16.msra.mxu0 %v1724
  %1982 = vmatprep.subr.bf16.mxu0 %v1727
  %1983 = vmatpush1.bf16.msra.mxu0 %v1726
  %1984 = vmatprep.mubr.bf16.mxu0 %v1165
  %1985 = vmatmul.mubr.bf16.gmra.mrb[0].mxu0 %v1164
  %v1986 = vpop.f32.mrb[0].mxu0
  %v1987 = vadd.f32 %v1305, %v1986
  %v1988 = vpop.f32.mrb[0].mxu0
  %v1989 = vadd.f32 %v1309, %v1988
  %v1990 = vpop.f32.mrb[0].mxu0
  %v1991 = vadd.f32 %v1305, %v1990
  %v1992 = vpop.f32.mrb[0].mxu0
  %v1993 = vadd.f32 %v1309, %v1992
  %1994 = vdwg.mxu0
  %1995 = vmatprep.subr.bf16.mxu0 %v1729
  %1996 = vmatpush1.bf16.msra.mxu0 %v1728
  %1997 = vmatprep.subr.bf16.mxu0 %v1731
  %1998 = vmatpush1.bf16.msra.mxu0 %v1730
  %1999 = vmatprep.subr.bf16.mxu0 %v1733
  %2000 = vmatpush1.bf16.msra.mxu0 %v1732
  %2001 = vmatprep.subr.bf16.mxu0 %v1735
  %2002 = vmatpush1.bf16.msra.mxu0 %v1734
  %2003 = vmatprep.subr.bf16.mxu0 %v1737
  %2004 = vmatpush1.bf16.msra.mxu0 %v1736
  %2005 = vmatprep.subr.bf16.mxu0 %v1739
  %2006 = vmatpush1.bf16.msra.mxu0 %v1738
  %2007 = vmatprep.subr.bf16.mxu0 %v1741
  %2008 = vmatpush1.bf16.msra.mxu0 %v1740
  %2009 = vmatprep.subr.bf16.mxu0 %v1743
  %2010 = vmatpush1.bf16.msra.mxu0 %v1742
  %2011 = vmatprep.subr.bf16.mxu0 %v1745
  %2012 = vmatpush1.bf16.msra.mxu0 %v1744
  %2013 = vmatprep.subr.bf16.mxu0 %v1747
  %2014 = vmatpush1.bf16.msra.mxu0 %v1746
  %2015 = vmatprep.subr.bf16.mxu0 %v1749
  %2016 = vmatpush1.bf16.msra.mxu0 %v1748
  %2017 = vmatprep.subr.bf16.mxu0 %v1751
  %2018 = vmatpush1.bf16.msra.mxu0 %v1750
  %2019 = vmatprep.subr.bf16.mxu0 %v1753
  %2020 = vmatpush1.bf16.msra.mxu0 %v1752
  %2021 = vmatprep.subr.bf16.mxu0 %v1755
  %2022 = vmatpush1.bf16.msra.mxu0 %v1754
  %2023 = vmatprep.subr.bf16.mxu0 %v1757
  %2024 = vmatpush1.bf16.msra.mxu0 %v1756
  %2025 = vmatprep.subr.bf16.mxu0 %v1759
  %2026 = vmatpush1.bf16.msra.mxu0 %v1758
  %2027 = vmatprep.mubr.bf16.mxu0 %v1167
  %2028 = vmatmul.mubr.bf16.gmra.mrb[0].mxu0 %v1166
  %v2029 = vpop.f32.mrb[0].mxu0
  %v2030 = vadd.f32 %v1987, %v2029
  %v2031 = vpop.f32.mrb[0].mxu0
  %v2032 = vadd.f32 %v1989, %v2031
  %v2033 = vpop.f32.mrb[0].mxu0
  %v2034 = vadd.f32 %v1991, %v2033
  %v2035 = vpop.f32.mrb[0].mxu0
  %v2036 = vadd.f32 %v1993, %v2035
  %2037 = vdwg.mxu0
  %2038 = vmatprep.subr.bf16.mxu0 %v1761
  %2039 = vmatpush1.bf16.msra.mxu0 %v1760
  %2040 = vmatprep.subr.bf16.mxu0 %v1763
  %2041 = vmatpush1.bf16.msra.mxu0 %v1762
  %2042 = vmatprep.subr.bf16.mxu0 %v1765
  %2043 = vmatpush1.bf16.msra.mxu0 %v1764
  %2044 = vmatprep.subr.bf16.mxu0 %v1767
  %2045 = vmatpush1.bf16.msra.mxu0 %v1766
  %2046 = vmatprep.subr.bf16.mxu0 %v1769
  %2047 = vmatpush1.bf16.msra.mxu0 %v1768
  %2048 = vmatprep.subr.bf16.mxu0 %v1771
  %2049 = vmatpush1.bf16.msra.mxu0 %v1770
  %2050 = vmatprep.subr.bf16.mxu0 %v1773
  %2051 = vmatpush1.bf16.msra.mxu0 %v1772
  %2052 = vmatprep.subr.bf16.mxu0 %v1775
  %2053 = vmatpush1.bf16.msra.mxu0 %v1774
  %2054 = vmatprep.subr.bf16.mxu0 %v1777
  %2055 = vmatpush1.bf16.msra.mxu0 %v1776
  %2056 = vmatprep.subr.bf16.mxu0 %v1779
  %2057 = vmatpush1.bf16.msra.mxu0 %v1778
  %2058 = vmatprep.subr.bf16.mxu0 %v1781
  %2059 = vmatpush1.bf16.msra.mxu0 %v1780
  %2060 = vmatprep.subr.bf16.mxu0 %v1783
  %2061 = vmatpush1.bf16.msra.mxu0 %v1782
  %2062 = vmatprep.subr.bf16.mxu0 %v1785
  %2063 = vmatpush1.bf16.msra.mxu0 %v1784
  %2064 = vmatprep.subr.bf16.mxu0 %v1787
  %2065 = vmatpush1.bf16.msra.mxu0 %v1786
  %2066 = vmatprep.subr.bf16.mxu0 %v1789
  %2067 = vmatpush1.bf16.msra.mxu0 %v1788
  %2068 = vmatprep.subr.bf16.mxu0 %v1791
  %2069 = vmatpush1.bf16.msra.mxu0 %v1790
  %2070 = vmatprep.mubr.bf16.mxu0 %v1169
  %2071 = vmatmul.mubr.bf16.gmra.mrb[0].mxu0 %v1168
  %v2072 = vpop.f32.mrb[0].mxu0
  %v2073 = vadd.f32 %v2030, %v2072
  %v2074 = vpop.f32.mrb[0].mxu0
  %v2075 = vadd.f32 %v2032, %v2074
  %v2076 = vpop.f32.mrb[0].mxu0
  %v2077 = vadd.f32 %v2034, %v2076
  %v2078 = vpop.f32.mrb[0].mxu0
  %v2079 = vadd.f32 %v2036, %v2078
  %2080 = vdwg.mxu0
  %2081 = vmatprep.subr.bf16.mxu0 %v1793
  %2082 = vmatpush1.bf16.msra.mxu0 %v1792
  %2083 = vmatprep.subr.bf16.mxu0 %v1795
  %2084 = vmatpush1.bf16.msra.mxu0 %v1794
  %2085 = vmatprep.subr.bf16.mxu0 %v1797
  %2086 = vmatpush1.bf16.msra.mxu0 %v1796
  %2087 = vmatprep.subr.bf16.mxu0 %v1799
  %2088 = vmatpush1.bf16.msra.mxu0 %v1798
  %2089 = vmatprep.subr.bf16.mxu0 %v1801
  %2090 = vmatpush1.bf16.msra.mxu0 %v1800
  %2091 = vmatprep.subr.bf16.mxu0 %v1803
  %2092 = vmatpush1.bf16.msra.mxu0 %v1802
  %2093 = vmatprep.subr.bf16.mxu0 %v1805
  %2094 = vmatpush1.bf16.msra.mxu0 %v1804
  %2095 = vmatprep.subr.bf16.mxu0 %v1807
  %2096 = vmatpush1.bf16.msra.mxu0 %v1806
  %2097 = vmatprep.subr.bf16.mxu0 %v1809
  %2098 = vmatpush1.bf16.msra.mxu0 %v1808
  %2099 = vmatprep.subr.bf16.mxu0 %v1811
  %2100 = vmatpush1.bf16.msra.mxu0 %v1810
  %2101 = vmatprep.subr.bf16.mxu0 %v1813
  %2102 = vmatpush1.bf16.msra.mxu0 %v1812
  %2103 = vmatprep.subr.bf16.mxu0 %v1815
  %2104 = vmatpush1.bf16.msra.mxu0 %v1814
  %2105 = vmatprep.subr.bf16.mxu0 %v1817
  %2106 = vmatpush1.bf16.msra.mxu0 %v1816
  %2107 = vmatprep.subr.bf16.mxu0 %v1819
  %2108 = vmatpush1.bf16.msra.mxu0 %v1818
  %2109 = vmatprep.subr.bf16.mxu0 %v1821
  %2110 = vmatpush1.bf16.msra.mxu0 %v1820
  %2111 = vmatprep.subr.bf16.mxu0 %v1823
  %2112 = vmatpush1.bf16.msra.mxu0 %v1822
  %2113 = vmatprep.mubr.bf16.mxu0 %v1171
  %2114 = vmatmul.mubr.bf16.gmra.mrb[0].mxu0 %v1170
  %v2115 = vpop.f32.mrb[0].mxu0
  %v2116 = vadd.f32 %v2073, %v2115
  %v2117 = vpop.f32.mrb[0].mxu0
  %v2118 = vadd.f32 %v2075, %v2117
  %v2119 = vpop.f32.mrb[0].mxu0
  %v2120 = vadd.f32 %v2077, %v2119
  %v2121 = vpop.f32.mrb[0].mxu0
  %v2122 = vadd.f32 %v2079, %v2121
  %2123 = vdwg.mxu0
  %v2124 = vunpack.c.l.bf16 %v26
  %v2125 = vunpack.c.h.bf16 %v26
  %v2126 = vunpack.c.l.bf16 %v27
  %v2127 = vunpack.c.h.bf16 %v27
  %v2128 = vadd.f32 %v2116, %v2124
  %v2129 = vadd.f32 %v2118, %v2125
  %v2130 = vadd.f32 %v2120, %v2126
  %v2131 = vadd.f32 %v2122, %v2127
  %v2132 = vld [vmem:[%s5] sm:$0x3]
  %v2133 = vld [vmem:[%s6] sm:$0x3]
  %v2134 = vadd.f32 %v2128, %v2129
  %2135 = vadd.xlane.f32.xlu0 %v2134
  %v2136 = vpop.xlane.xlu0 %2135
  %v2137 = vadd.f32 %v2130, %v2131
  %2138 = vadd.xlane.f32.xlu0 %v2137
  %v2139 = vpop.xlane.xlu0 %2138
  %v2140 = vrcp.pop 256.0
  %v2141 = vmul.f32 %v2136, %v2140
  %v2142 = vmul.f32 %v2139, %v2140
  %v2143 = vsub.f32 %v2128, %v2141
  %v2144 = vsub.f32 %v2129, %v2141
  %v2145 = vsub.f32 %v2130, %v2142
  %v2146 = vsub.f32 %v2131, %v2142
  %v2147 = vmul.f32 %v2143, %v2143
  %v2148 = vmul.f32 %v2144, %v2144
  %v2149 = vmul.f32 %v2145, %v2145
  %v2150 = vmul.f32 %v2146, %v2146
  %v2151 = vadd.f32 %v2147, %v2148
  %2152 = vadd.xlane.f32.xlu0 %v2151
  %v2153 = vpop.xlane.xlu0 %2152
  %v2154 = vadd.f32 %v2149, %v2150
  %2155 = vadd.xlane.f32.xlu0 %v2154
  %v2156 = vpop.xlane.xlu0 %2155
  %v2157 = vmul.f32 %v2153, %v2140
  %v2158 = vmul.f32 %v2156, %v2140
  %v2159 = vadd.f32 %v2157, 1e-12
  %v2160 = vadd.f32 %v2158, 1e-12
  %v2161 = vrsqrt.pop %v2159
  %v2162 = vrsqrt.pop %v2160
  %v2163 = vmul.f32 %v2143, %v2161
  %v2164 = vmul.f32 %v2144, %v2161
  %v2165 = vmul.f32 %v2145, %v2162
  %v2166 = vmul.f32 %v2146, %v2162
  %v2168 = vlaneseq
  %v2169 = vshrl.u32 %v2168, 7
  %v2170 = vsub.s32 0, %v2169
  %v2171 = vrot.slane %v2132, %v2170
  %v2172 = vlaneseq
  %v2173 = vshrl.u32 %v2172, 7
  %v2174 = vsub.s32 1, %v2173
  %v2175 = vrot.slane %v2132, %v2174
  %v2178 = vmul.f32 %v2163, %v2171
  %v2179 = vmul.f32 %v2164, %v2175
  %v2180 = vmul.f32 %v2165, %v2171
  %v2181 = vmul.f32 %v2166, %v2175
  %v2183 = vlaneseq
  %v2184 = vshrl.u32 %v2183, 7
  %v2185 = vsub.s32 0, %v2184
  %v2186 = vrot.slane %v2133, %v2185
  %v2187 = vlaneseq
  %v2188 = vshrl.u32 %v2187, 7
  %v2189 = vsub.s32 1, %v2188
  %v2190 = vrot.slane %v2133, %v2189
  %v2193 = vadd.f32 %v2178, %v2186
  %v2194 = vadd.f32 %v2179, %v2190
  %v2195 = vadd.f32 %v2180, %v2186
  %v2196 = vadd.f32 %v2181, %v2190
  %v2197 = vpack.c.bf16 %v2195, %v2193
  %v2198 = vpack.c.bf16 %v2196, %v2194
  %v2201 = vunpack.c.l.b16 %v2197
  %v2202 = vunpack.c.l.b16 %v2198
  %v2203 = vunpack.c.h.b16 %v2197
  %v2204 = vunpack.c.h.b16 %v2198
  %v2205 = vpack.c.b16 %v2202, %v2201
  %v2206 = vpack.c.b16 %v2204, %v2203
  %2209 = vst [vmem:[%s7] sm:$0xff] %v2205
  %2210 = vst [vmem:[%s7 + $0x8] sm:$0xff] %v2206
  // Predicated region
  $region30: #{electra_class_forward.18} parent=0 // pred_check
    _
  $region31: #{electra_class_forward.18} parent=0 // pred_check_branch
    %2212 = sbr.rel (0) target = $region33
  $region32: #{electra_class_forward.18} parent=0 // pred_region
    _
  $region33: #{electra_class_forward.18} parent=0 // pred_fallthru
    _
  // Predicated region
  $region34: #{electra_class_forward.18} parent=0 // pred_check
    _
  $region35: #{electra_class_forward.18} parent=0 // pred_check_branch
    %2214 = sbr.rel (0) target = $region37
  $region36: #{electra_class_forward.18} parent=0 // pred_region
    _
  $region37: #{electra_class_forward.18} parent=0 // pred_fallthru
    _

</llo_original>
